<compile_context>
chip_gen: v5e
topology: v5e:2x2
jax: 0.10.0
libtpu: 0.0.40
codegen_flags: <defaults>
</compile_context>

<pallas_src>
import functools
import math

import jax
import jax.numpy as jnp
from jax import lax
from jax.experimental import pallas as pl
from jax.experimental.pallas import tpu as pltpu

_VMEM_LIMIT = 32 * 1024 * 1024   # generation-safe scoped VMEM (<= v7x 64 MiB physical)
_TM = 256                        # row tile for the fused linear kernel
_TK = 512                        # K tile (only engaged when K > 1024)


def _round_up(x, m):
    return ((x + m - 1) // m) * m


# ----------------------------------------------------------------------------
# Fused, tiled linear kernel:  out = epilogue(x @ w + b)
#   grid = (M_tiles, K_tiles); f32 VMEM accumulator; pl.when init / finalize.
#   epilogues: "none" | "relu" | "ln_relu" (LayerNorm over N, then ReLU)
#              | "res_ln" (add residual, then LayerNorm over N)
# ----------------------------------------------------------------------------
def _ln_rows(y, g, b, eps):
    mu = jnp.mean(y, axis=-1, keepdims=True)
    var = jnp.mean((y - mu) ** 2, axis=-1, keepdims=True)
    return (y - mu) * lax.rsqrt(var + eps) * g + b


def _linear_kernel(x_ref, w_ref, b_ref, *rest, mode, eps):
    o_ref, acc_ref = rest[-2], rest[-1]
    k = pl.program_id(1)

    @pl.when(k == 0)
    def _():
        acc_ref[...] = jnp.zeros_like(acc_ref)

    acc_ref[...] += jnp.dot(x_ref[...], w_ref[...],
                            preferred_element_type=jnp.float32)

    @pl.when(k == pl.num_programs(1) - 1)
    def _():
        y = acc_ref[...] + b_ref[...]
        if mode == "relu":
            y = jnp.maximum(y, 0.0)
        elif mode == "ln_relu":
            g_ref, be_ref = rest[0], rest[1]
            y = jnp.maximum(_ln_rows(y, g_ref[...], be_ref[...], eps), 0.0)
        elif mode == "res_ln":
            r_ref, g_ref, be_ref = rest[0], rest[1], rest[2]
            y = _ln_rows(y + r_ref[...].astype(jnp.float32),
                         g_ref[...], be_ref[...], eps)
        o_ref[...] = y.astype(o_ref.dtype)


def linear_fused(x2d, w, b, *, mode="none", residual=None, gamma=None,
                 beta=None, eps=1e-6, out_dtype=jnp.bfloat16):
    """epilogue(x @ w + b); x2d (M,K) bf16, w (K,N) bf16, b (1,N) f32."""
    M, K = x2d.shape
    N = w.shape[1]

    tm = _TM if M >= _TM else _round_up(M, 8)
    Mp = _round_up(M, tm)
    if K > 1024:
        tk = _TK
        Kp = _round_up(K, tk)
    else:
        tk, Kp = K, K

    x = x2d
    if Mp != M or Kp != K:
        x = jnp.pad(x, ((0, Mp - M), (0, Kp - K)))
    if Kp != K:
        w = jnp.pad(w, ((0, Kp - K), (0, 0)))

    in_specs = [
        pl.BlockSpec((tm, tk), lambda i, k: (i, k)),
        pl.BlockSpec((tk, N), lambda i, k: (k, 0)),
        pl.BlockSpec((1, N), lambda i, k: (0, 0)),
    ]
    args = [x, w, b]
    if mode == "res_ln":
        r = residual if Mp == M else jnp.pad(residual, ((0, Mp - M), (0, 0)))
        in_specs.append(pl.BlockSpec((tm, N), lambda i, k: (i, 0)))
        args.append(r)
    if mode in ("ln_relu", "res_ln"):
        in_specs.append(pl.BlockSpec((1, N), lambda i, k: (0, 0)))
        in_specs.append(pl.BlockSpec((1, N), lambda i, k: (0, 0)))
        args.extend([gamma, beta])

    out = pl.pallas_call(
        functools.partial(_linear_kernel, mode=mode, eps=eps),
        grid=(Mp // tm, Kp // tk),
        in_specs=in_specs,
        out_specs=pl.BlockSpec((tm, N), lambda i, k: (i, 0)),
        out_shape=jax.ShapeDtypeStruct((Mp, N), out_dtype),
        scratch_shapes=[pltpu.VMEM((tm, N), jnp.float32)],
        compiler_params=pltpu.CompilerParams(
            dimension_semantics=("parallel", "arbitrary"),
            vmem_limit_bytes=_VMEM_LIMIT),
    )(*args)
    return out[:M] if Mp != M else out


# ----------------------------------------------------------------------------
# Standalone LayerNorm (+ optional ReLU) over the last dim, row-tiled.
# ----------------------------------------------------------------------------
def _layernorm_kernel(x_ref, g_ref, b_ref, o_ref, *, eps, relu):
    y = _ln_rows(x_ref[...].astype(jnp.float32), g_ref[...], b_ref[...], eps)
    if relu:
        y = jnp.maximum(y, 0.0)
    o_ref[...] = y.astype(o_ref.dtype)


def layer_norm(x2d, gamma, beta, *, eps=1e-6, relu=False, out_dtype=jnp.float32):
    M, D = x2d.shape
    tm = _TM if M >= _TM else _round_up(M, 8)
    Mp = _round_up(M, tm)
    x = jnp.pad(x2d, ((0, Mp - M), (0, 0))) if Mp != M else x2d
    out = pl.pallas_call(
        functools.partial(_layernorm_kernel, eps=eps, relu=relu),
        grid=(Mp // tm,),
        in_specs=[pl.BlockSpec((tm, D), lambda i: (i, 0)),
                  pl.BlockSpec((1, D), lambda i: (0, 0)),
                  pl.BlockSpec((1, D), lambda i: (0, 0))],
        out_specs=pl.BlockSpec((tm, D), lambda i: (i, 0)),
        out_shape=jax.ShapeDtypeStruct((Mp, D), out_dtype),
        compiler_params=pltpu.CompilerParams(
            dimension_semantics=("parallel",), vmem_limit_bytes=_VMEM_LIMIT),
    )(x, gamma, beta)
    return out[:M] if Mp != M else out


# ----------------------------------------------------------------------------
# Head-batched attention: one grid step per batch element, all heads at once.
# Mask is built in-kernel (key-padding bias row + static causal flag).
# ----------------------------------------------------------------------------
def _attention_kernel(q_ref, k_ref, v_ref, kb_ref, o_ref, *, scale, causal):
    q = q_ref[0]            # (H, Tq, dh) bf16
    k = k_ref[0]            # (H, Tk, dh) bf16
    v = v_ref[0]            # (H, Tk, dh) bf16
    s = jnp.einsum("hqd,hkd->hqk", q, k,
                   preferred_element_type=jnp.float32) * scale
    s = s + kb_ref[...]     # (1, 1, Tk) additive key-padding bias (f32)
    if causal:
        Tq, Tk = s.shape[1], s.shape[2]
        row = lax.broadcasted_iota(jnp.int32, (Tq, Tk), 0)
        col = lax.broadcasted_iota(jnp.int32, (Tq, Tk), 1)
        s = s + jnp.where(col > row, -1e9, 0.0)
    s = s - jnp.max(s, axis=-1, keepdims=True)
    p = jnp.exp(s)
    p = p * pl.reciprocal(jnp.sum(p, axis=-1, keepdims=True), approx=True)
    o = jnp.einsum("hqk,hkd->hqd", p.astype(v.dtype), v,
                   preferred_element_type=jnp.float32)
    o_ref[0] = o.astype(o_ref.dtype)


def attention(q, k, v, key_bias, *, scale, causal):
    """q,k,v: (B, H, T, dh) bf16; key_bias: (B, 1, Tk) f32 additive bias."""
    B, H, Tq, dh = q.shape
    Tk = k.shape[2]
    return pl.pallas_call(
        functools.partial(_attention_kernel, scale=scale, causal=causal),
        grid=(B,),
        in_specs=[pl.BlockSpec((1, H, Tq, dh), lambda b: (b, 0, 0, 0)),
                  pl.BlockSpec((1, H, Tk, dh), lambda b: (b, 0, 0, 0)),
                  pl.BlockSpec((1, H, Tk, dh), lambda b: (b, 0, 0, 0)),
                  pl.BlockSpec((1, 1, Tk), lambda b: (b, 0, 0))],
        out_specs=pl.BlockSpec((1, H, Tq, dh), lambda b: (b, 0, 0, 0)),
        out_shape=jax.ShapeDtypeStruct((B, H, Tq, dh), jnp.bfloat16),
        compiler_params=pltpu.CompilerParams(
            dimension_semantics=("parallel",), vmem_limit_bytes=_VMEM_LIMIT),
    )(q, k, v, key_bias)
    # TODO(synk): switch to the online-softmax (flash) kv-tiled variant for long
    # encoder sequences so the (Tq,Tk) score tile never lives whole in VMEM (v7x).


# ----------------------------------------------------------------------------
# Composite ops (patch extraction / pooling / reshapes are JAX glue)
# ----------------------------------------------------------------------------
def conv2d_3x3_same_nhwc(x, w9, b):
    """3x3 'same' conv on NHWC via shifted-patch concat + tiled Pallas matmul."""
    B, T, F, C = x.shape
    Cout = w9.shape[1]
    xp = jnp.pad(x, ((0, 0), (1, 1), (1, 1), (0, 0)))
    # TODO(synk): build the 9 taps inside the matmul kernel (shifted BlockSpec
    # windows) to avoid materializing the 9x patch tensor in HBM.
    p = jnp.concatenate([xp[:, dh:dh + T, dw:dw + F, :]
                         for dh in range(3) for dw in range(3)], axis=-1)
    y = linear_fused(p.reshape(B * T * F, 9 * C), w9, b)
    return y.reshape(B, T, F, Cout)


def feature_layer_norm_relu(x, gamma, beta):
    """LayerNorm over the feature axis F of NHWC activations, fused with ReLU."""
    B, T, F, C = x.shape
    xt = x.transpose(0, 1, 3, 2).reshape(B * T * C, F)
    y = layer_norm(xt, gamma, beta, eps=1e-5, relu=True, out_dtype=jnp.bfloat16)
    return y.reshape(B, T, C, F).transpose(0, 1, 3, 2)


def max_pool_2x2_ceil_nhwc(x):
    """MaxPool2d(kernel=2, stride=2, ceil_mode=True) over (T, F): pure-XLA reduce_window."""
    B, T, F, C = x.shape
    To, Fo = -(-T // 2), -(-F // 2)
    return lax.reduce_window(
        x, jnp.array(-jnp.inf, x.dtype), lax.max,
        window_dimensions=(1, 2, 2, 1), window_strides=(1, 2, 2, 1),
        padding=((0, 0), (0, To * 2 - T), (0, Fo * 2 - F), (0, 0)))


def vgg_block(x, blk_p):
    """fairseq VGGBlock: [Conv2d -> LayerNorm(feat) -> ReLU] * n, then MaxPool2d(2, ceil)."""
    for cp in blk_p["convs"]:
        x = conv2d_3x3_same_nhwc(x, cp["w"], cp["b"])
        x = feature_layer_norm_relu(x, cp["ln_g"], cp["ln_b"])
    return max_pool_2x2_ceil_nhwc(x)


def causal_conv1d_k3_ln_relu(y, cp):
    """LinearizedConv1d(k=3, padding=2) + LayerNorm(Cout) + ReLU (LN fused in epilogue)."""
    B, T, C = y.shape
    Cout = cp["w"].shape[1]
    yp = jnp.pad(y, ((0, 0), (2, 0), (0, 0)))
    p = jnp.concatenate([yp[:, j:j + T, :] for j in range(3)], axis=-1)
    out = linear_fused(p.reshape(B * T, 3 * C), cp["w"], cp["b"],
                       mode="ln_relu", gamma=cp["ln_g"], beta=cp["ln_b"], eps=1e-5)
    return out.reshape(B, T, Cout)


def _split_heads(x2d, B, T, nhead, dh, n):
    """(B*T, n*nhead*dh) -> n tensors of shape (B, nhead, T, dh)."""
    t = x2d.reshape(B, T, n, nhead, dh).transpose(2, 0, 3, 1, 4)
    return tuple(t[i] for i in range(n))


def encoder_layer(x, p, nhead, key_bias):
    """Post-norm speechbrain TransformerEncoderLayer (fused QKV / FFN / residual+LN)."""
    B, T, D = x.shape
    dh = D // nhead
    scale = 1.0 / math.sqrt(dh)
    x2 = x.reshape(B * T, D)

    qkv = linear_fused(x2, p["w_qkv"], p["b_qkv"])                 # (B*T, 3D)
    q, k, v = _split_heads(qkv, B, T, nhead, dh, 3)
    o = attention(q, k, v, key_bias, scale=scale, causal=False)
    o = o.transpose(0, 2, 1, 3).reshape(B * T, D)

    x1 = linear_fused(o, p["wo"], p["bo"], mode="res_ln", residual=x2,
                      gamma=p["norm1_g"], beta=p["norm1_b"], eps=1e-6)
    h = linear_fused(x1, p["ffn_w1"], p["ffn_b1"], mode="relu")
    x_out = linear_fused(h, p["ffn_w2"], p["ffn_b2"], mode="res_ln", residual=x1,
                         gamma=p["norm2_g"], beta=p["norm2_b"], eps=1e-6)
    return x_out.reshape(B, T, D)


def decoder_layer(y, mem, p, nhead, tgt_key_bias, mem_key_bias):
    """Post-norm speechbrain TransformerDecoderLayer (causal self-attn + cross-attn)."""
    B, T, D = y.shape
    Tm = mem.shape[1]
    dh = D // nhead
    scale = 1.0 / math.sqrt(dh)
    y2 = y.reshape(B * T, D)
    mem2 = mem.reshape(B * Tm, D)

    qkv = linear_fused(y2, p["self_w_qkv"], p["self_b_qkv"])
    q, k, v = _split_heads(qkv, B, T, nhead, dh, 3)
    o = attention(q, k, v, tgt_key_bias, scale=scale, causal=True)
    o = o.transpose(0, 2, 1, 3).reshape(B * T, D)
    y1 = linear_fused(o, p["self_wo"], p["self_bo"], mode="res_ln", residual=y2,
                      gamma=p["norm1_g"], beta=p["norm1_b"], eps=1e-6)

    q = linear_fused(y1, p["cross_wq"], p["cross_bq"])
    q = q.reshape(B, T, nhead, dh).transpose(0, 2, 1, 3)
    kv = linear_fused(mem2, p["cross_w_kv"], p["cross_b_kv"])
    k, v = _split_heads(kv, B, Tm, nhead, dh, 2)
    o = attention(q, k, v, mem_key_bias, scale=scale, causal=False)
    o = o.transpose(0, 2, 1, 3).reshape(B * T, D)
    y2b = linear_fused(o, p["cross_wo"], p["cross_bo"], mode="res_ln", residual=y1,
                       gamma=p["norm2_g"], beta=p["norm2_b"], eps=1e-6)

    h = linear_fused(y2b, p["ffn_w1"], p["ffn_b1"], mode="relu")
    y3 = linear_fused(h, p["ffn_w2"], p["ffn_b2"], mode="res_ln", residual=y2b,
                      gamma=p["norm3_g"], beta=p["norm3_b"], eps=1e-6)
    return y3.reshape(B, T, D)


# ----------------------------------------------------------------------------
# Full model forward (== VGGTransformerEncoderDecoder.forward, eval mode)
# ----------------------------------------------------------------------------
def model_forward(params, src, tgt, wav_len, cfg):
    B = src.shape[0]
    d_model = cfg["d_model"]
    nhead = cfg["nhead"]

    # ---- VGG conv front-end (channels-last NHWC) ----
    x = src.astype(jnp.bfloat16)[:, :, :, None]          # (B, T, F, 1)
    for blk_p in params["vgg_enc"]:
        x = vgg_block(x, blk_p)
    _, Tt, Ff, C = x.shape
    # match torch permute(0,2,1,3).view(bsz, time, c*feat): channel-major flatten
    x = x.transpose(0, 1, 3, 2).reshape(B, Tt, C * Ff)

    # ---- masks: tiny additive key-padding bias rows; causal handled in-kernel ----
    abs_len = jnp.round(wav_len * Tt)
    enc_key_bias = jnp.where(jnp.arange(Tt)[None, :] >= abs_len[:, None],
                             -1e9, 0.0).astype(jnp.float32).reshape(B, 1, Tt)
    Ttgt = tgt.shape[1]
    tgt_key_bias = jnp.where(tgt == cfg["pad_idx"], -1e9, 0.0
                             ).astype(jnp.float32).reshape(B, 1, Ttgt)

    # ---- custom_src_module (Linear; Dropout=identity) + Transformer encoder ----
    x = linear_fused(x.reshape(B * Tt, C * Ff), params["src_lin_w"],
                     params["src_lin_b"]).reshape(B, Tt, d_model)
    # TODO(synk): dropout / encoder layerdrop omitted (inference semantics).
    for lp in params["enc_layers"]:
        x = encoder_layer(x, lp, nhead, enc_key_bias)
    encoder_out = layer_norm(x.reshape(B * Tt, d_model), params["enc_norm_g"],
                             params["enc_norm_b"], eps=1e-6,
                             out_dtype=jnp.float32).reshape(B, Tt, d_model)

    # ---- target path: NormalizedEmbedding + causal conv stack (LN+ReLU fused) ----
    y = params["tgt_emb"][tgt] * math.sqrt(d_model)       # (B, Ttgt, D) bf16
    for cp in params["dec_convs"]:
        y = causal_conv1d_k3_ln_relu(y, cp)

    # ---- Transformer decoder ----
    mem = encoder_out.astype(jnp.bfloat16)
    for lp in params["dec_layers"]:
        y = decoder_layer(y, mem, lp, nhead, tgt_key_bias, enc_key_bias)
    decoder_out = layer_norm(y.reshape(B * Ttgt, d_model), params["dec_norm_g"],
                             params["dec_norm_b"], eps=1e-6,
                             out_dtype=jnp.float32).reshape(B, Ttgt, d_model)
    return encoder_out, decoder_out


# ----------------------------------------------------------------------------
# Deterministic synthetic parameters, pre-cast once (weights bf16, bias/LN f32)
# ----------------------------------------------------------------------------
def init_params(key, cfg):
    kit = iter(jax.random.split(key, 512))

    def w_init(shape, std):
        return (jax.random.normal(next(kit), shape, jnp.float32) * std
                ).astype(jnp.bfloat16)

    def b_zero(n):
        return jnp.zeros((1, n), jnp.float32)

    def ln_pair(n):
        return jnp.ones((1, n), jnp.float32), jnp.zeros((1, n), jnp.float32)

    d = cfg["d_model"]
    dffn = cfg["d_ffn"]
    s = 1.0 / math.sqrt(d)

    def enc_layer_params():
        n1g, n1b = ln_pair(d)
        n2g, n2b = ln_pair(d)
        return {
            "w_qkv": w_init((d, 3 * d), s), "b_qkv": b_zero(3 * d),
            "wo": w_init((d, d), s), "bo": b_zero(d),
            "norm1_g": n1g, "norm1_b": n1b,
            "ffn_w1": w_init((d, dffn), s), "ffn_b1": b_zero(dffn),
            "ffn_w2": w_init((dffn, d), 1.0 / math.sqrt(dffn)), "ffn_b2": b_zero(d),
            "norm2_g": n2g, "norm2_b": n2b,
        }

    def dec_layer_params():
        p = enc_layer_params()
        p["self_w_qkv"] = p.pop("w_qkv"); p["self_b_qkv"] = p.pop("b_qkv")
        p["self_wo"] = p.pop("wo"); p["self_bo"] = p.pop("bo")
        p["cross_wq"] = w_init((d, d), s); p["cross_bq"] = b_zero(d)
        p["cross_w_kv"] = w_init((d, 2 * d), s); p["cross_b_kv"] = b_zero(2 * d)
        p["cross_wo"] = w_init((d, d), s); p["cross_bo"] = b_zero(d)
        n3g, n3b = ln_pair(d)
        p["norm3_g"] = n3g; p["norm3_b"] = n3b
        return p

    # VGG encoder blocks (conv weights stored as (9*Cin, Cout) for the im2col matmul)
    vgg_enc = []
    in_ch = cfg["in_channels"]
    feat = cfg["input_feat_per_channel"]
    for (out_ch, ksz, pool, n_conv, _use_ln) in cfg["vgg_enc"]:
        convs = []
        c_in = in_ch
        for _ in range(n_conv):
            fan_in = c_in * ksz * ksz
            g, bb = ln_pair(feat)
            convs.append({
                "w": w_init((ksz * ksz * c_in, out_ch), 1.0 / math.sqrt(fan_in)),
                "b": b_zero(out_ch),
                "ln_g": g, "ln_b": bb,
            })
            c_in = out_ch
        vgg_enc.append({"convs": convs})
        in_ch = out_ch
        feat = -(-feat // pool)

    # decoder causal conv stack (LinearizedConv1d weights stored as (3*Cin, Cout))
    dec_convs = []
    c_in = d
    for (out_ch, ksz, _use_ln) in cfg["vgg_dec"]:
        std = math.sqrt(4.0 * (1.0 - cfg["dropout"]) / (ksz * c_in))
        g, bb = ln_pair(out_ch)
        dec_convs.append({
            "w": w_init((ksz * c_in, out_ch), std),
            "b": b_zero(out_ch),
            "ln_g": g, "ln_b": bb,
        })
        c_in = out_ch

    enc_ng, enc_nb = ln_pair(d)
    dec_ng, dec_nb = ln_pair(d)
    return {
        "vgg_enc": vgg_enc,
        "src_lin_w": w_init((cfg["input_size"], d), 1.0 / math.sqrt(cfg["input_size"])),
        "src_lin_b": b_zero(d),
        "enc_layers": [enc_layer_params() for _ in range(cfg["num_encoder_layers"])],
        "enc_norm_g": enc_ng, "enc_norm_b": enc_nb,
        "tgt_emb": jax.random.normal(next(kit), (cfg["tgt_vocab"], d),
                                     jnp.float32).astype(jnp.bfloat16),
        "dec_convs": dec_convs,
        "dec_layers": [dec_layer_params() for _ in range(cfg["num_decoder_layers"])],
        "dec_norm_g": dec_ng, "dec_norm_b": dec_nb,
    }


# ----------------------------------------------------------------------------
if __name__ == "__main__":
    # Scaled-down but structurally faithful hyper-parameters.
    cfg = {
        "in_channels": 1,
        "input_feat_per_channel": 16,                 # features per frame
        "vgg_enc": [(8, 3, 2, 2, True), (16, 3, 2, 2, True)],
        "vgg_dec": [(64, 3, True), (64, 3, True)],
        "input_size": 16 * (16 // 2 // 2),            # C * F' = 64 after two VGG blocks
        "d_model": 64,
        "nhead": 4,
        "num_encoder_layers": 2,
        "num_decoder_layers": 2,
        "d_ffn": 128,
        "dropout": 0.1,
        "tgt_vocab": 50,
        "pad_idx": 0,
    }

    B, T0, F0, Ttgt = 2, 32, cfg["input_feat_per_channel"], 8

    key = jax.random.PRNGKey(0)
    kp, kx, kt = jax.random.split(key, 3)
    params = init_params(kp, cfg)

    src = jax.random.normal(kx, (B, T0, F0), jnp.float32)
    src = src.at[1, 24:, :].set(0.0)                  # simulate padding on example 1

    # compute_wav_len_from_src(src.unsqueeze(2), threshold=0.1)
    energy = jnp.sum(jnp.abs(src[:, :, None, :]), axis=(2, 3))
    wav_len = (energy > 0.1).sum(axis=1).astype(jnp.float32) / T0

    # target tokens (avoid pad_idx=0 so no fully-masked softmax rows)
    tgt = jax.random.randint(kt, (B, Ttgt), 1, cfg["tgt_vocab"], jnp.int32)

    fwd = jax.jit(lambda p, s, t, w: model_forward(p, s, t, w, cfg))
    encoder_out, decoder_out = fwd(params, src, tgt, wav_len)
    jax.block_until_ready((encoder_out, decoder_out))

    assert encoder_out.shape == (B, T0 // 4, cfg["d_model"])
    assert decoder_out.shape == (B, Ttgt, cfg["d_model"])
    print("KERNEL_OK")
</pallas_src>

<mosaic_0001>
module attributes {stable_mosaic.version = 11 : i64} {
  func.func @_linear_kernel(%arg0: i32, %arg1: i32, %arg2: memref<256x9xbf16, #tpu.memory_space<vmem>>, %arg3: memref<9x8xbf16, #tpu.memory_space<vmem>>, %arg4: memref<1x8xf32, #tpu.memory_space<vmem>>, %arg5: memref<256x8xbf16, #tpu.memory_space<vmem>>, %arg6: memref<256x8xf32, #tpu.memory_space<vmem>>) attributes {dimension_semantics = [#tpu.dimension_semantics<parallel>, #tpu.dimension_semantics<arbitrary>], iteration_bounds = array<i64: 4, 1>, scalar_prefetch = 0 : i64, scratch_operands = 1 : i64, tpu.core_type = #tpu.core_type<tc>, window_params = [{transform_indices = @transform_0, window_bounds = array<i64: 256, 9>}, {transform_indices = @transform_1, window_bounds = array<i64: 9, 8>}, {pipeline_mode = #tpu.pipeline_mode<synchronous>, transform_indices = @transform_2, window_bounds = array<i64: 1, 8>}, {transform_indices = @transform_3, window_bounds = array<i64: 256, 8>}]} {
    %c0_i32 = arith.constant 0 : i32
    %0 = arith.cmpi eq, %arg1, %c0_i32 : i32
    %1 = arith.extui %0 : i1 to i32
    %c0_i32_0 = arith.constant 0 : i32
    %2 = arith.cmpi ne, %1, %c0_i32_0 : i32
    scf.if %2 {
      %cst_10 = arith.constant 0.000000e+00 : f32
      %12 = vector.broadcast %cst_10 : f32 to vector<256x8xf32>
      %c0_11 = arith.constant 0 : index
      %c0_12 = arith.constant 0 : index
      %13 = vector.load %arg6[%c0_11, %c0_12] : memref<256x8xf32, #tpu.memory_space<vmem>>, vector<256x8xf32>
      tpu.vector_store %arg6[%c0_11, %c0_12], %12 {strides = array<i32>} : memref<256x8xf32, #tpu.memory_space<vmem>>, vector<256x8xf32>,
    } else {
    }
    %c0 = arith.constant 0 : index
    %c0_1 = arith.constant 0 : index
    %3 = vector.load %arg6[%c0, %c0_1] : memref<256x8xf32, #tpu.memory_space<vmem>>, vector<256x8xf32>
    %c0_2 = arith.constant 0 : index
    %c0_3 = arith.constant 0 : index
    %4 = vector.load %arg2[%c0_2, %c0_3] : memref<256x9xbf16, #tpu.memory_space<vmem>>, vector<256x9xbf16>
    %c0_4 = arith.constant 0 : index
    %c0_5 = arith.constant 0 : index
    %5 = vector.load %arg3[%c0_4, %c0_5] : memref<9x8xbf16, #tpu.memory_space<vmem>>, vector<9x8xbf16>
    %cst = arith.constant dense<0.000000e+00> : vector<256x8xf32>
    %6 = tpu.matmul %4, %5, %cst {dimension_numbers = #tpu.dot_dimension_numbers<[1], [0], [0], [1], [0, 0, 1, 1], [], []>} : vector<256x9xbf16>, vector<9x8xbf16>, vector<256x8xf32> -> vector<256x8xf32>
    %7 = arith.addf %3, %6 : vector<256x8xf32>
    %c0_6 = arith.constant 0 : index
    %c0_7 = arith.constant 0 : index
    %8 = vector.load %arg6[%c0_6, %c0_7] : memref<256x8xf32, #tpu.memory_space<vmem>>, vector<256x8xf32>
    tpu.vector_store %arg6[%c0_6, %c0_7], %7 {strides = array<i32>} : memref<256x8xf32, #tpu.memory_space<vmem>>, vector<256x8xf32>,
    %c0_i32_8 = arith.constant 0 : i32
    %9 = arith.cmpi eq, %arg1, %c0_i32_8 : i32
    %10 = arith.extui %9 : i1 to i32
    %c0_i32_9 = arith.constant 0 : i32
    %11 = arith.cmpi ne, %10, %c0_i32_9 : i32
    scf.if %11 {
      %c0_10 = arith.constant 0 : index
      %c0_11 = arith.constant 0 : index
      %12 = vector.load %arg6[%c0_10, %c0_11] : memref<256x8xf32, #tpu.memory_space<vmem>>, vector<256x8xf32>
      %c0_12 = arith.constant 0 : index
      %c0_13 = arith.constant 0 : index
      %13 = vector.load %arg4[%c0_12, %c0_13] : memref<1x8xf32, #tpu.memory_space<vmem>>, vector<1x8xf32>
      %14 = vector.broadcast %13 : vector<1x8xf32> to vector<256x8xf32>
      %15 = arith.addf %12, %14 : vector<256x8xf32>
      %16 = arith.truncf %15 : vector<256x8xf32> to vector<256x8xbf16>
      %c0_14 = arith.constant 0 : index
      %c0_15 = arith.constant 0 : index
      %17 = vector.load %arg5[%c0_14, %c0_15] : memref<256x8xbf16, #tpu.memory_space<vmem>>, vector<256x8xbf16>
      tpu.vector_store %arg5[%c0_14, %c0_15], %16 {strides = array<i32>} : memref<256x8xbf16, #tpu.memory_space<vmem>>, vector<256x8xbf16>,
    } else {
    }
    return
  }
  func.func @transform_0(%arg0: i32, %arg1: i32) -> (i32, i32) {
    %c0_i32 = arith.constant 0 : i32
    return %arg0, %arg1 : i32, i32
  }
  func.func @transform_1(%arg0: i32, %arg1: i32) -> (i32, i32) {
    %c0_i32 = arith.constant 0 : i32
    %c0_i32_0 = arith.constant 0 : i32
    return %arg1, %c0_i32 : i32, i32
  }
  func.func @transform_2(%arg0: i32, %arg1: i32) -> (i32, i32) {
    %c0_i32 = arith.constant 0 : i32
    %c0_i32_0 = arith.constant 0 : i32
    %c0_i32_1 = arith.constant 0 : i32
    return %c0_i32, %c0_i32_0 : i32, i32
  }
  func.func @transform_3(%arg0: i32, %arg1: i32) -> (i32, i32) {
    %c0_i32 = arith.constant 0 : i32
    %c0_i32_0 = arith.constant 0 : i32
    return %arg0, %c0_i32 : i32, i32
  }
}

module attributes {stable_mosaic.version = 11 : i64} {
  func.func @_layernorm_kernel(%arg0: i32, %arg1: memref<256x16xbf16, #tpu.memory_space<vmem>>, %arg2: memref<1x16xf32, #tpu.memory_space<vmem>>, %arg3: memref<1x16xf32, #tpu.memory_space<vmem>>, %arg4: memref<256x16xbf16, #tpu.memory_space<vmem>>) attributes {dimension_semantics = [#tpu.dimension_semantics<parallel>], iteration_bounds = array<i64: 2>, scalar_prefetch = 0 : i64, scratch_operands = 0 : i64, tpu.core_type = #tpu.core_type<tc>, window_params = [{transform_indices = @transform_0, window_bounds = array<i64: 256, 16>}, {pipeline_mode = #tpu.pipeline_mode<synchronous>, transform_indices = @transform_1, window_bounds = array<i64: 1, 16>}, {pipeline_mode = #tpu.pipeline_mode<synchronous>, transform_indices = @transform_2, window_bounds = array<i64: 1, 16>}, {transform_indices = @transform_3, window_bounds = array<i64: 256, 16>}]} {
    %c0 = arith.constant 0 : index
    %c0_0 = arith.constant 0 : index
    %0 = vector.load %arg1[%c0, %c0_0] : memref<256x16xbf16, #tpu.memory_space<vmem>>, vector<256x16xbf16>
    %1 = arith.extf %0 : vector<256x16xbf16> to vector<256x16xf32>
    %c0_1 = arith.constant 0 : index
    %c0_2 = arith.constant 0 : index
    %2 = vector.load %arg2[%c0_1, %c0_2] : memref<1x16xf32, #tpu.memory_space<vmem>>, vector<1x16xf32>
    %c0_3 = arith.constant 0 : index
    %c0_4 = arith.constant 0 : index
    %3 = vector.load %arg3[%c0_3, %c0_4] : memref<1x16xf32, #tpu.memory_space<vmem>>, vector<1x16xf32>
    %cst = arith.constant dense<0.000000e+00> : vector<256xf32>
    %4 = vector.multi_reduction <add>, %1, %cst [1] : vector<256x16xf32> to vector<256xf32>
    %5 = vector.shape_cast %4 : vector<256xf32> to vector<256x1xf32>
    %cst_5 = arith.constant 1.600000e+01 : f32
    %6 = vector.broadcast %cst_5 : f32 to vector<256x1xf32>
    %7 = arith.divf %5, %6 : vector<256x1xf32>
    %8 = vector.broadcast %7 : vector<256x1xf32> to vector<256x16xf32>
    %9 = arith.subf %1, %8 : vector<256x16xf32>
    %10 = arith.mulf %9, %9 : vector<256x16xf32>
    %cst_6 = arith.constant dense<0.000000e+00> : vector<256xf32>
    %11 = vector.multi_reduction <add>, %10, %cst_6 [1] : vector<256x16xf32> to vector<256xf32>
    %12 = vector.shape_cast %11 : vector<256xf32> to vector<256x1xf32>
    %cst_7 = arith.constant 1.600000e+01 : f32
    %13 = vector.broadcast %cst_7 : f32 to vector<256x1xf32>
    %14 = arith.divf %12, %13 : vector<256x1xf32>
    %15 = vector.broadcast %7 : vector<256x1xf32> to vector<256x16xf32>
    %16 = arith.subf %1, %15 : vector<256x16xf32>
    %cst_8 = arith.constant 9.99999974E-6 : f32
    %17 = vector.broadcast %cst_8 : f32 to vector<256x1xf32>
    %18 = arith.addf %14, %17 : vector<256x1xf32>
    %19 = math.rsqrt %18 : vector<256x1xf32>
    %20 = vector.broadcast %19 : vector<256x1xf32> to vector<256x16xf32>
    %21 = arith.mulf %16, %20 : vector<256x16xf32>
    %22 = vector.broadcast %2 : vector<1x16xf32> to vector<256x16xf32>
    %23 = arith.mulf %21, %22 : vector<256x16xf32>
    %24 = vector.broadcast %3 : vector<1x16xf32> to vector<256x16xf32>
    %25 = arith.addf %23, %24 : vector<256x16xf32>
    %cst_9 = arith.constant 0.000000e+00 : f32
    %26 = vector.broadcast %cst_9 : f32 to vector<256x16xf32>
    %27 = arith.maximumf %25, %26 : vector<256x16xf32>
    %28 = arith.truncf %27 : vector<256x16xf32> to vector<256x16xbf16>
    %c0_10 = arith.constant 0 : index
    %c0_11 = arith.constant 0 : index
    %29 = vector.load %arg4[%c0_10, %c0_11] : memref<256x16xbf16, #tpu.memory_space<vmem>>, vector<256x16xbf16>
    tpu.vector_store %arg4[%c0_10, %c0_11], %28 {strides = array<i32>} : memref<256x16xbf16, #tpu.memory_space<vmem>>, vector<256x16xbf16>,
    return
  }
  func.func @transform_0(%arg0: i32) -> (i32, i32) {
    %c0_i32 = arith.constant 0 : i32
    %c0_i32_0 = arith.constant 0 : i32
    return %arg0, %c0_i32 : i32, i32
  }
  func.func @transform_1(%arg0: i32) -> (i32, i32) {
    %c0_i32 = arith.constant 0 : i32
    %c0_i32_0 = arith.constant 0 : i32
    %c0_i32_1 = arith.constant 0 : i32
    return %c0_i32, %c0_i32_0 : i32, i32
  }
  func.func @transform_2(%arg0: i32) -> (i32, i32) {
    %c0_i32 = arith.constant 0 : i32
    %c0_i32_0 = arith.constant 0 : i32
    %c0_i32_1 = arith.constant 0 : i32
    return %c0_i32, %c0_i32_0 : i32, i32
  }
  func.func @transform_3(%arg0: i32) -> (i32, i32) {
    %c0_i32 = arith.constant 0 : i32
    %c0_i32_0 = arith.constant 0 : i32
    return %arg0, %c0_i32 : i32, i32
  }
}

module attributes {stable_mosaic.version = 11 : i64} {
  func.func @_linear_kernel(%arg0: i32, %arg1: i32, %arg2: memref<256x72xbf16, #tpu.memory_space<vmem>>, %arg3: memref<72x8xbf16, #tpu.memory_space<vmem>>, %arg4: memref<1x8xf32, #tpu.memory_space<vmem>>, %arg5: memref<256x8xbf16, #tpu.memory_space<vmem>>, %arg6: memref<256x8xf32, #tpu.memory_space<vmem>>) attributes {dimension_semantics = [#tpu.dimension_semantics<parallel>, #tpu.dimension_semantics<arbitrary>], iteration_bounds = array<i64: 4, 1>, scalar_prefetch = 0 : i64, scratch_operands = 1 : i64, tpu.core_type = #tpu.core_type<tc>, window_params = [{transform_indices = @transform_0, window_bounds = array<i64: 256, 72>}, {transform_indices = @transform_1, window_bounds = array<i64: 72, 8>}, {pipeline_mode = #tpu.pipeline_mode<synchronous>, transform_indices = @transform_2, window_bounds = array<i64: 1, 8>}, {transform_indices = @transform_3, window_bounds = array<i64: 256, 8>}]} {
    %c0_i32 = arith.constant 0 : i32
    %0 = arith.cmpi eq, %arg1, %c0_i32 : i32
    %1 = arith.extui %0 : i1 to i32
    %c0_i32_0 = arith.constant 0 : i32
    %2 = arith.cmpi ne, %1, %c0_i32_0 : i32
    scf.if %2 {
      %cst_10 = arith.constant 0.000000e+00 : f32
      %12 = vector.broadcast %cst_10 : f32 to vector<256x8xf32>
      %c0_11 = arith.constant 0 : index
      %c0_12 = arith.constant 0 : index
      %13 = vector.load %arg6[%c0_11, %c0_12] : memref<256x8xf32, #tpu.memory_space<vmem>>, vector<256x8xf32>
      tpu.vector_store %arg6[%c0_11, %c0_12], %12 {strides = array<i32>} : memref<256x8xf32, #tpu.memory_space<vmem>>, vector<256x8xf32>,
    } else {
    }
    %c0 = arith.constant 0 : index
    %c0_1 = arith.constant 0 : index
    %3 = vector.load %arg6[%c0, %c0_1] : memref<256x8xf32, #tpu.memory_space<vmem>>, vector<256x8xf32>
    %c0_2 = arith.constant 0 : index
    %c0_3 = arith.constant 0 : index
    %4 = vector.load %arg2[%c0_2, %c0_3] : memref<256x72xbf16, #tpu.memory_space<vmem>>, vector<256x72xbf16>
    %c0_4 = arith.constant 0 : index
    %c0_5 = arith.constant 0 : index
    %5 = vector.load %arg3[%c0_4, %c0_5] : memref<72x8xbf16, #tpu.memory_space<vmem>>, vector<72x8xbf16>
    %cst = arith.constant dense<0.000000e+00> : vector<256x8xf32>
    %6 = tpu.matmul %4, %5, %cst {dimension_numbers = #tpu.dot_dimension_numbers<[1], [0], [0], [1], [0, 0, 1, 1], [], []>} : vector<256x72xbf16>, vector<72x8xbf16>, vector<256x8xf32> -> vector<256x8xf32>
    %7 = arith.addf %3, %6 : vector<256x8xf32>
    %c0_6 = arith.constant 0 : index
    %c0_7 = arith.constant 0 : index
    %8 = vector.load %arg6[%c0_6, %c0_7] : memref<256x8xf32, #tpu.memory_space<vmem>>, vector<256x8xf32>
    tpu.vector_store %arg6[%c0_6, %c0_7], %7 {strides = array<i32>} : memref<256x8xf32, #tpu.memory_space<vmem>>, vector<256x8xf32>,
    %c0_i32_8 = arith.constant 0 : i32
    %9 = arith.cmpi eq, %arg1, %c0_i32_8 : i32
    %10 = arith.extui %9 : i1 to i32
    %c0_i32_9 = arith.constant 0 : i32
    %11 = arith.cmpi ne, %10, %c0_i32_9 : i32
    scf.if %11 {
      %c0_10 = arith.constant 0 : index
      %c0_11 = arith.constant 0 : index
      %12 = vector.load %arg6[%c0_10, %c0_11] : memref<256x8xf32, #tpu.memory_space<vmem>>, vector<256x8xf32>
      %c0_12 = arith.constant 0 : index
      %c0_13 = arith.constant 0 : index
      %13 = vector.load %arg4[%c0_12, %c0_13] : memref<1x8xf32, #tpu.memory_space<vmem>>, vector<1x8xf32>
      %14 = vector.broadcast %13 : vector<1x8xf32> to vector<256x8xf32>
      %15 = arith.addf %12, %14 : vector<256x8xf32>
      %16 = arith.truncf %15 : vector<256x8xf32> to vector<256x8xbf16>
      %c0_14 = arith.constant 0 : index
      %c0_15 = arith.constant 0 : index
      %17 = vector.load %arg5[%c0_14, %c0_15] : memref<256x8xbf16, #tpu.memory_space<vmem>>, vector<256x8xbf16>
      tpu.vector_store %arg5[%c0_14, %c0_15], %16 {strides = array<i32>} : memref<256x8xbf16, #tpu.memory_space<vmem>>, vector<256x8xbf16>,
    } else {
    }
    return
  }
  func.func @transform_0(%arg0: i32, %arg1: i32) -> (i32, i32) {
    %c0_i32 = arith.constant 0 : i32
    return %arg0, %arg1 : i32, i32
  }
  func.func @transform_1(%arg0: i32, %arg1: i32) -> (i32, i32) {
    %c0_i32 = arith.constant 0 : i32
    %c0_i32_0 = arith.constant 0 : i32
    return %arg1, %c0_i32 : i32, i32
  }
  func.func @transform_2(%arg0: i32, %arg1: i32) -> (i32, i32) {
    %c0_i32 = arith.constant 0 : i32
    %c0_i32_0 = arith.constant 0 : i32
    %c0_i32_1 = arith.constant 0 : i32
    return %c0_i32, %c0_i32_0 : i32, i32
  }
  func.func @transform_3(%arg0: i32, %arg1: i32) -> (i32, i32) {
    %c0_i32 = arith.constant 0 : i32
    %c0_i32_0 = arith.constant 0 : i32
    return %arg0, %c0_i32 : i32, i32
  }
}

module attributes {stable_mosaic.version = 11 : i64} {
  func.func @_linear_kernel(%arg0: i32, %arg1: i32, %arg2: memref<256x72xbf16, #tpu.memory_space<vmem>>, %arg3: memref<72x16xbf16, #tpu.memory_space<vmem>>, %arg4: memref<1x16xf32, #tpu.memory_space<vmem>>, %arg5: memref<256x16xbf16, #tpu.memory_space<vmem>>, %arg6: memref<256x16xf32, #tpu.memory_space<vmem>>) attributes {dimension_semantics = [#tpu.dimension_semantics<parallel>, #tpu.dimension_semantics<arbitrary>], iteration_bounds = array<i64: 1, 1>, scalar_prefetch = 0 : i64, scratch_operands = 1 : i64, tpu.core_type = #tpu.core_type<tc>, window_params = [{transform_indices = @transform_0, window_bounds = array<i64: 256, 72>}, {transform_indices = @transform_1, window_bounds = array<i64: 72, 16>}, {pipeline_mode = #tpu.pipeline_mode<synchronous>, transform_indices = @transform_2, window_bounds = array<i64: 1, 16>}, {transform_indices = @transform_3, window_bounds = array<i64: 256, 16>}]} {
    %c0_i32 = arith.constant 0 : i32
    %0 = arith.cmpi eq, %arg1, %c0_i32 : i32
    %1 = arith.extui %0 : i1 to i32
    %c0_i32_0 = arith.constant 0 : i32
    %2 = arith.cmpi ne, %1, %c0_i32_0 : i32
    scf.if %2 {
      %cst_10 = arith.constant 0.000000e+00 : f32
      %12 = vector.broadcast %cst_10 : f32 to vector<256x16xf32>
      %c0_11 = arith.constant 0 : index
      %c0_12 = arith.constant 0 : index
      %13 = vector.load %arg6[%c0_11, %c0_12] : memref<256x16xf32, #tpu.memory_space<vmem>>, vector<256x16xf32>
      tpu.vector_store %arg6[%c0_11, %c0_12], %12 {strides = array<i32>} : memref<256x16xf32, #tpu.memory_space<vmem>>, vector<256x16xf32>,
    } else {
    }
    %c0 = arith.constant 0 : index
    %c0_1 = arith.constant 0 : index
    %3 = vector.load %arg6[%c0, %c0_1] : memref<256x16xf32, #tpu.memory_space<vmem>>, vector<256x16xf32>
    %c0_2 = arith.constant 0 : index
    %c0_3 = arith.constant 0 : index
    %4 = vector.load %arg2[%c0_2, %c0_3] : memref<256x72xbf16, #tpu.memory_space<vmem>>, vector<256x72xbf16>
    %c0_4 = arith.constant 0 : index
    %c0_5 = arith.constant 0 : index
    %5 = vector.load %arg3[%c0_4, %c0_5] : memref<72x16xbf16, #tpu.memory_space<vmem>>, vector<72x16xbf16>
    %cst = arith.constant dense<0.000000e+00> : vector<256x16xf32>
    %6 = tpu.matmul %4, %5, %cst {dimension_numbers = #tpu.dot_dimension_numbers<[1], [0], [0], [1], [0, 0, 1, 1], [], []>} : vector<256x72xbf16>, vector<72x16xbf16>, vector<256x16xf32> -> vector<256x16xf32>
    %7 = arith.addf %3, %6 : vector<256x16xf32>
    %c0_6 = arith.constant 0 : index
    %c0_7 = arith.constant 0 : index
    %8 = vector.load %arg6[%c0_6, %c0_7] : memref<256x16xf32, #tpu.memory_space<vmem>>, vector<256x16xf32>
    tpu.vector_store %arg6[%c0_6, %c0_7], %7 {strides = array<i32>} : memref<256x16xf32, #tpu.memory_space<vmem>>, vector<256x16xf32>,
    %c0_i32_8 = arith.constant 0 : i32
    %9 = arith.cmpi eq, %arg1, %c0_i32_8 : i32
    %10 = arith.extui %9 : i1 to i32
    %c0_i32_9 = arith.constant 0 : i32
    %11 = arith.cmpi ne, %10, %c0_i32_9 : i32
    scf.if %11 {
      %c0_10 = arith.constant 0 : index
      %c0_11 = arith.constant 0 : index
      %12 = vector.load %arg6[%c0_10, %c0_11] : memref<256x16xf32, #tpu.memory_space<vmem>>, vector<256x16xf32>
      %c0_12 = arith.constant 0 : index
      %c0_13 = arith.constant 0 : index
      %13 = vector.load %arg4[%c0_12, %c0_13] : memref<1x16xf32, #tpu.memory_space<vmem>>, vector<1x16xf32>
      %14 = vector.broadcast %13 : vector<1x16xf32> to vector<256x16xf32>
      %15 = arith.addf %12, %14 : vector<256x16xf32>
      %16 = arith.truncf %15 : vector<256x16xf32> to vector<256x16xbf16>
      %c0_14 = arith.constant 0 : index
      %c0_15 = arith.constant 0 : index
      %17 = vector.load %arg5[%c0_14, %c0_15] : memref<256x16xbf16, #tpu.memory_space<vmem>>, vector<256x16xbf16>
      tpu.vector_store %arg5[%c0_14, %c0_15], %16 {strides = array<i32>} : memref<256x16xbf16, #tpu.memory_space<vmem>>, vector<256x16xbf16>,
    } else {
    }
    return
  }
  func.func @transform_0(%arg0: i32, %arg1: i32) -> (i32, i32) {
    %c0_i32 = arith.constant 0 : i32
    return %arg0, %arg1 : i32, i32
  }
  func.func @transform_1(%arg0: i32, %arg1: i32) -> (i32, i32) {
    %c0_i32 = arith.constant 0 : i32
    %c0_i32_0 = arith.constant 0 : i32
    return %arg1, %c0_i32 : i32, i32
  }
  func.func @transform_2(%arg0: i32, %arg1: i32) -> (i32, i32) {
    %c0_i32 = arith.constant 0 : i32
    %c0_i32_0 = arith.constant 0 : i32
    %c0_i32_1 = arith.constant 0 : i32
    return %c0_i32, %c0_i32_0 : i32, i32
  }
  func.func @transform_3(%arg0: i32, %arg1: i32) -> (i32, i32) {
    %c0_i32 = arith.constant 0 : i32
    %c0_i32_0 = arith.constant 0 : i32
    return %arg0, %c0_i32 : i32, i32
  }
}

module attributes {stable_mosaic.version = 11 : i64} {
  func.func @_layernorm_kernel(%arg0: i32, %arg1: memref<256x8xbf16, #tpu.memory_space<vmem>>, %arg2: memref<1x8xf32, #tpu.memory_space<vmem>>, %arg3: memref<1x8xf32, #tpu.memory_space<vmem>>, %arg4: memref<256x8xbf16, #tpu.memory_space<vmem>>) attributes {dimension_semantics = [#tpu.dimension_semantics<parallel>], iteration_bounds = array<i64: 2>, scalar_prefetch = 0 : i64, scratch_operands = 0 : i64, tpu.core_type = #tpu.core_type<tc>, window_params = [{transform_indices = @transform_0, window_bounds = array<i64: 256, 8>}, {pipeline_mode = #tpu.pipeline_mode<synchronous>, transform_indices = @transform_1, window_bounds = array<i64: 1, 8>}, {pipeline_mode = #tpu.pipeline_mode<synchronous>, transform_indices = @transform_2, window_bounds = array<i64: 1, 8>}, {transform_indices = @transform_3, window_bounds = array<i64: 256, 8>}]} {
    %c0 = arith.constant 0 : index
    %c0_0 = arith.constant 0 : index
    %0 = vector.load %arg1[%c0, %c0_0] : memref<256x8xbf16, #tpu.memory_space<vmem>>, vector<256x8xbf16>
    %1 = arith.extf %0 : vector<256x8xbf16> to vector<256x8xf32>
    %c0_1 = arith.constant 0 : index
    %c0_2 = arith.constant 0 : index
    %2 = vector.load %arg2[%c0_1, %c0_2] : memref<1x8xf32, #tpu.memory_space<vmem>>, vector<1x8xf32>
    %c0_3 = arith.constant 0 : index
    %c0_4 = arith.constant 0 : index
    %3 = vector.load %arg3[%c0_3, %c0_4] : memref<1x8xf32, #tpu.memory_space<vmem>>, vector<1x8xf32>
    %cst = arith.constant dense<0.000000e+00> : vector<256xf32>
    %4 = vector.multi_reduction <add>, %1, %cst [1] : vector<256x8xf32> to vector<256xf32>
    %5 = vector.shape_cast %4 : vector<256xf32> to vector<256x1xf32>
    %cst_5 = arith.constant 8.000000e+00 : f32
    %6 = vector.broadcast %cst_5 : f32 to vector<256x1xf32>
    %7 = arith.divf %5, %6 : vector<256x1xf32>
    %8 = vector.broadcast %7 : vector<256x1xf32> to vector<256x8xf32>
    %9 = arith.subf %1, %8 : vector<256x8xf32>
    %10 = arith.mulf %9, %9 : vector<256x8xf32>
    %cst_6 = arith.constant dense<0.000000e+00> : vector<256xf32>
    %11 = vector.multi_reduction <add>, %10, %cst_6 [1] : vector<256x8xf32> to vector<256xf32>
    %12 = vector.shape_cast %11 : vector<256xf32> to vector<256x1xf32>
    %cst_7 = arith.constant 8.000000e+00 : f32
    %13 = vector.broadcast %cst_7 : f32 to vector<256x1xf32>
    %14 = arith.divf %12, %13 : vector<256x1xf32>
    %15 = vector.broadcast %7 : vector<256x1xf32> to vector<256x8xf32>
    %16 = arith.subf %1, %15 : vector<256x8xf32>
    %cst_8 = arith.constant 9.99999974E-6 : f32
    %17 = vector.broadcast %cst_8 : f32 to vector<256x1xf32>
    %18 = arith.addf %14, %17 : vector<256x1xf32>
    %19 = math.rsqrt %18 : vector<256x1xf32>
    %20 = vector.broadcast %19 : vector<256x1xf32> to vector<256x8xf32>
    %21 = arith.mulf %16, %20 : vector<256x8xf32>
    %22 = vector.broadcast %2 : vector<1x8xf32> to vector<256x8xf32>
    %23 = arith.mulf %21, %22 : vector<256x8xf32>
    %24 = vector.broadcast %3 : vector<1x8xf32> to vector<256x8xf32>
    %25 = arith.addf %23, %24 : vector<256x8xf32>
    %cst_9 = arith.constant 0.000000e+00 : f32
    %26 = vector.broadcast %cst_9 : f32 to vector<256x8xf32>
    %27 = arith.maximumf %25, %26 : vector<256x8xf32>
    %28 = arith.truncf %27 : vector<256x8xf32> to vector<256x8xbf16>
    %c0_10 = arith.constant 0 : index
    %c0_11 = arith.constant 0 : index
    %29 = vector.load %arg4[%c0_10, %c0_11] : memref<256x8xbf16, #tpu.memory_space<vmem>>, vector<256x8xbf16>
    tpu.vector_store %arg4[%c0_10, %c0_11], %28 {strides = array<i32>} : memref<256x8xbf16, #tpu.memory_space<vmem>>, vector<256x8xbf16>,
    return
  }
  func.func @transform_0(%arg0: i32) -> (i32, i32) {
    %c0_i32 = arith.constant 0 : i32
    %c0_i32_0 = arith.constant 0 : i32
    return %arg0, %c0_i32 : i32, i32
  }
  func.func @transform_1(%arg0: i32) -> (i32, i32) {
    %c0_i32 = arith.constant 0 : i32
    %c0_i32_0 = arith.constant 0 : i32
    %c0_i32_1 = arith.constant 0 : i32
    return %c0_i32, %c0_i32_0 : i32, i32
  }
  func.func @transform_2(%arg0: i32) -> (i32, i32) {
    %c0_i32 = arith.constant 0 : i32
    %c0_i32_0 = arith.constant 0 : i32
    %c0_i32_1 = arith.constant 0 : i32
    return %c0_i32, %c0_i32_0 : i32, i32
  }
  func.func @transform_3(%arg0: i32) -> (i32, i32) {
    %c0_i32 = arith.constant 0 : i32
    %c0_i32_0 = arith.constant 0 : i32
    return %arg0, %c0_i32 : i32, i32
  }
}

module attributes {stable_mosaic.version = 11 : i64} {
  func.func @_linear_kernel(%arg0: i32, %arg1: i32, %arg2: memref<256x144xbf16, #tpu.memory_space<vmem>>, %arg3: memref<144x16xbf16, #tpu.memory_space<vmem>>, %arg4: memref<1x16xf32, #tpu.memory_space<vmem>>, %arg5: memref<256x16xbf16, #tpu.memory_space<vmem>>, %arg6: memref<256x16xf32, #tpu.memory_space<vmem>>) attributes {dimension_semantics = [#tpu.dimension_semantics<parallel>, #tpu.dimension_semantics<arbitrary>], iteration_bounds = array<i64: 1, 1>, scalar_prefetch = 0 : i64, scratch_operands = 1 : i64, tpu.core_type = #tpu.core_type<tc>, window_params = [{transform_indices = @transform_0, window_bounds = array<i64: 256, 144>}, {transform_indices = @transform_1, window_bounds = array<i64: 144, 16>}, {pipeline_mode = #tpu.pipeline_mode<synchronous>, transform_indices = @transform_2, window_bounds = array<i64: 1, 16>}, {transform_indices = @transform_3, window_bounds = array<i64: 256, 16>}]} {
    %c0_i32 = arith.constant 0 : i32
    %0 = arith.cmpi eq, %arg1, %c0_i32 : i32
    %1 = arith.extui %0 : i1 to i32
    %c0_i32_0 = arith.constant 0 : i32
    %2 = arith.cmpi ne, %1, %c0_i32_0 : i32
    scf.if %2 {
      %cst_10 = arith.constant 0.000000e+00 : f32
      %12 = vector.broadcast %cst_10 : f32 to vector<256x16xf32>
      %c0_11 = arith.constant 0 : index
      %c0_12 = arith.constant 0 : index
      %13 = vector.load %arg6[%c0_11, %c0_12] : memref<256x16xf32, #tpu.memory_space<vmem>>, vector<256x16xf32>
      tpu.vector_store %arg6[%c0_11, %c0_12], %12 {strides = array<i32>} : memref<256x16xf32, #tpu.memory_space<vmem>>, vector<256x16xf32>,
    } else {
    }
    %c0 = arith.constant 0 : index
    %c0_1 = arith.constant 0 : index
    %3 = vector.load %arg6[%c0, %c0_1] : memref<256x16xf32, #tpu.memory_space<vmem>>, vector<256x16xf32>
    %c0_2 = arith.constant 0 : index
    %c0_3 = arith.constant 0 : index
    %4 = vector.load %arg2[%c0_2, %c0_3] : memref<256x144xbf16, #tpu.memory_space<vmem>>, vector<256x144xbf16>
    %c0_4 = arith.constant 0 : index
    %c0_5 = arith.constant 0 : index
    %5 = vector.load %arg3[%c0_4, %c0_5] : memref<144x16xbf16, #tpu.memory_space<vmem>>, vector<144x16xbf16>
    %cst = arith.constant dense<0.000000e+00> : vector<256x16xf32>
    %6 = tpu.matmul %4, %5, %cst {dimension_numbers = #tpu.dot_dimension_numbers<[1], [0], [0], [1], [0, 0, 1, 1], [], []>} : vector<256x144xbf16>, vector<144x16xbf16>, vector<256x16xf32> -> vector<256x16xf32>
    %7 = arith.addf %3, %6 : vector<256x16xf32>
    %c0_6 = arith.constant 0 : index
    %c0_7 = arith.constant 0 : index
    %8 = vector.load %arg6[%c0_6, %c0_7] : memref<256x16xf32, #tpu.memory_space<vmem>>, vector<256x16xf32>
    tpu.vector_store %arg6[%c0_6, %c0_7], %7 {strides = array<i32>} : memref<256x16xf32, #tpu.memory_space<vmem>>, vector<256x16xf32>,
    %c0_i32_8 = arith.constant 0 : i32
    %9 = arith.cmpi eq, %arg1, %c0_i32_8 : i32
    %10 = arith.extui %9 : i1 to i32
    %c0_i32_9 = arith.constant 0 : i32
    %11 = arith.cmpi ne, %10, %c0_i32_9 : i32
    scf.if %11 {
      %c0_10 = arith.constant 0 : index
      %c0_11 = arith.constant 0 : index
      %12 = vector.load %arg6[%c0_10, %c0_11] : memref<256x16xf32, #tpu.memory_space<vmem>>, vector<256x16xf32>
      %c0_12 = arith.constant 0 : index
      %c0_13 = arith.constant 0 : index
      %13 = vector.load %arg4[%c0_12, %c0_13] : memref<1x16xf32, #tpu.memory_space<vmem>>, vector<1x16xf32>
      %14 = vector.broadcast %13 : vector<1x16xf32> to vector<256x16xf32>
      %15 = arith.addf %12, %14 : vector<256x16xf32>
      %16 = arith.truncf %15 : vector<256x16xf32> to vector<256x16xbf16>
      %c0_14 = arith.constant 0 : index
      %c0_15 = arith.constant 0 : index
      %17 = vector.load %arg5[%c0_14, %c0_15] : memref<256x16xbf16, #tpu.memory_space<vmem>>, vector<256x16xbf16>
      tpu.vector_store %arg5[%c0_14, %c0_15], %16 {strides = array<i32>} : memref<256x16xbf16, #tpu.memory_space<vmem>>, vector<256x16xbf16>,
    } else {
    }
    return
  }
  func.func @transform_0(%arg0: i32, %arg1: i32) -> (i32, i32) {
    %c0_i32 = arith.constant 0 : i32
    return %arg0, %arg1 : i32, i32
  }
  func.func @transform_1(%arg0: i32, %arg1: i32) -> (i32, i32) {
    %c0_i32 = arith.constant 0 : i32
    %c0_i32_0 = arith.constant 0 : i32
    return %arg1, %c0_i32 : i32, i32
  }
  func.func @transform_2(%arg0: i32, %arg1: i32) -> (i32, i32) {
    %c0_i32 = arith.constant 0 : i32
    %c0_i32_0 = arith.constant 0 : i32
    %c0_i32_1 = arith.constant 0 : i32
    return %c0_i32, %c0_i32_0 : i32, i32
  }
  func.func @transform_3(%arg0: i32, %arg1: i32) -> (i32, i32) {
    %c0_i32 = arith.constant 0 : i32
    %c0_i32_0 = arith.constant 0 : i32
    return %arg0, %c0_i32 : i32, i32
  }
}

module attributes {stable_mosaic.version = 11 : i64} {
  func.func @_linear_kernel(%arg0: i32, %arg1: i32, %arg2: memref<16x64xbf16, #tpu.memory_space<vmem>>, %arg3: memref<64x192xbf16, #tpu.memory_space<vmem>>, %arg4: memref<1x192xf32, #tpu.memory_space<vmem>>, %arg5: memref<16x192xbf16, #tpu.memory_space<vmem>>, %arg6: memref<16x192xf32, #tpu.memory_space<vmem>>) attributes {dimension_semantics = [#tpu.dimension_semantics<parallel>, #tpu.dimension_semantics<arbitrary>], iteration_bounds = array<i64: 1, 1>, scalar_prefetch = 0 : i64, scratch_operands = 1 : i64, tpu.core_type = #tpu.core_type<tc>, window_params = [{transform_indices = @transform_0, window_bounds = array<i64: 16, 64>}, {transform_indices = @transform_1, window_bounds = array<i64: 64, 192>}, {pipeline_mode = #tpu.pipeline_mode<synchronous>, transform_indices = @transform_2, window_bounds = array<i64: 1, 192>}, {transform_indices = @transform_3, window_bounds = array<i64: 16, 192>}]} {
    %c0_i32 = arith.constant 0 : i32
    %0 = arith.cmpi eq, %arg1, %c0_i32 : i32
    %1 = arith.extui %0 : i1 to i32
    %c0_i32_0 = arith.constant 0 : i32
    %2 = arith.cmpi ne, %1, %c0_i32_0 : i32
    scf.if %2 {
      %cst_10 = arith.constant 0.000000e+00 : f32
      %12 = vector.broadcast %cst_10 : f32 to vector<16x192xf32>
      %c0_11 = arith.constant 0 : index
      %c0_12 = arith.constant 0 : index
      %13 = vector.load %arg6[%c0_11, %c0_12] : memref<16x192xf32, #tpu.memory_space<vmem>>, vector<16x192xf32>
      tpu.vector_store %arg6[%c0_11, %c0_12], %12 {strides = array<i32>} : memref<16x192xf32, #tpu.memory_space<vmem>>, vector<16x192xf32>,
    } else {
    }
    %c0 = arith.constant 0 : index
    %c0_1 = arith.constant 0 : index
    %3 = vector.load %arg6[%c0, %c0_1] : memref<16x192xf32, #tpu.memory_space<vmem>>, vector<16x192xf32>
    %c0_2 = arith.constant 0 : index
    %c0_3 = arith.constant 0 : index
    %4 = vector.load %arg2[%c0_2, %c0_3] : memref<16x64xbf16, #tpu.memory_space<vmem>>, vector<16x64xbf16>
    %c0_4 = arith.constant 0 : index
    %c0_5 = arith.constant 0 : index
    %5 = vector.load %arg3[%c0_4, %c0_5] : memref<64x192xbf16, #tpu.memory_space<vmem>>, vector<64x192xbf16>
    %cst = arith.constant dense<0.000000e+00> : vector<16x192xf32>
    %6 = tpu.matmul %4, %5, %cst {dimension_numbers = #tpu.dot_dimension_numbers<[1], [0], [0], [1], [0, 0, 1, 1], [], []>} : vector<16x64xbf16>, vector<64x192xbf16>, vector<16x192xf32> -> vector<16x192xf32>
    %7 = arith.addf %3, %6 : vector<16x192xf32>
    %c0_6 = arith.constant 0 : index
    %c0_7 = arith.constant 0 : index
    %8 = vector.load %arg6[%c0_6, %c0_7] : memref<16x192xf32, #tpu.memory_space<vmem>>, vector<16x192xf32>
    tpu.vector_store %arg6[%c0_6, %c0_7], %7 {strides = array<i32>} : memref<16x192xf32, #tpu.memory_space<vmem>>, vector<16x192xf32>,
    %c0_i32_8 = arith.constant 0 : i32
    %9 = arith.cmpi eq, %arg1, %c0_i32_8 : i32
    %10 = arith.extui %9 : i1 to i32
    %c0_i32_9 = arith.constant 0 : i32
    %11 = arith.cmpi ne, %10, %c0_i32_9 : i32
    scf.if %11 {
      %c0_10 = arith.constant 0 : index
      %c0_11 = arith.constant 0 : index
      %12 = vector.load %arg6[%c0_10, %c0_11] : memref<16x192xf32, #tpu.memory_space<vmem>>, vector<16x192xf32>
      %c0_12 = arith.constant 0 : index
      %c0_13 = arith.constant 0 : index
      %13 = vector.load %arg4[%c0_12, %c0_13] : memref<1x192xf32, #tpu.memory_space<vmem>>, vector<1x192xf32>
      %14 = vector.broadcast %13 : vector<1x192xf32> to vector<16x192xf32>
      %15 = arith.addf %12, %14 : vector<16x192xf32>
      %16 = arith.truncf %15 : vector<16x192xf32> to vector<16x192xbf16>
      %c0_14 = arith.constant 0 : index
      %c0_15 = arith.constant 0 : index
      %17 = vector.load %arg5[%c0_14, %c0_15] : memref<16x192xbf16, #tpu.memory_space<vmem>>, vector<16x192xbf16>
      tpu.vector_store %arg5[%c0_14, %c0_15], %16 {strides = array<i32>} : memref<16x192xbf16, #tpu.memory_space<vmem>>, vector<16x192xbf16>,
    } else {
    }
    return
  }
  func.func @transform_0(%arg0: i32, %arg1: i32) -> (i32, i32) {
    %c0_i32 = arith.constant 0 : i32
    return %arg0, %arg1 : i32, i32
  }
  func.func @transform_1(%arg0: i32, %arg1: i32) -> (i32, i32) {
    %c0_i32 = arith.constant 0 : i32
    %c0_i32_0 = arith.constant 0 : i32
    return %arg1, %c0_i32 : i32, i32
  }
  func.func @transform_2(%arg0: i32, %arg1: i32) -> (i32, i32) {
    %c0_i32 = arith.constant 0 : i32
    %c0_i32_0 = arith.constant 0 : i32
    %c0_i32_1 = arith.constant 0 : i32
    return %c0_i32, %c0_i32_0 : i32, i32
  }
  func.func @transform_3(%arg0: i32, %arg1: i32) -> (i32, i32) {
    %c0_i32 = arith.constant 0 : i32
    %c0_i32_0 = arith.constant 0 : i32
    return %arg0, %c0_i32 : i32, i32
  }
}

module attributes {stable_mosaic.version = 11 : i64} {
  func.func @_linear_kernel(%arg0: i32, %arg1: i32, %arg2: memref<16x64xbf16, #tpu.memory_space<vmem>>, %arg3: memref<64x64xbf16, #tpu.memory_space<vmem>>, %arg4: memref<1x64xf32, #tpu.memory_space<vmem>>, %arg5: memref<16x64xbf16, #tpu.memory_space<vmem>>, %arg6: memref<16x64xf32, #tpu.memory_space<vmem>>) attributes {dimension_semantics = [#tpu.dimension_semantics<parallel>, #tpu.dimension_semantics<arbitrary>], iteration_bounds = array<i64: 1, 1>, scalar_prefetch = 0 : i64, scratch_operands = 1 : i64, tpu.core_type = #tpu.core_type<tc>, window_params = [{transform_indices = @transform_0, window_bounds = array<i64: 16, 64>}, {transform_indices = @transform_1, window_bounds = array<i64: 64, 64>}, {pipeline_mode = #tpu.pipeline_mode<synchronous>, transform_indices = @transform_2, window_bounds = array<i64: 1, 64>}, {transform_indices = @transform_3, window_bounds = array<i64: 16, 64>}]} {
    %c0_i32 = arith.constant 0 : i32
    %0 = arith.cmpi eq, %arg1, %c0_i32 : i32
    %1 = arith.extui %0 : i1 to i32
    %c0_i32_0 = arith.constant 0 : i32
    %2 = arith.cmpi ne, %1, %c0_i32_0 : i32
    scf.if %2 {
      %cst_10 = arith.constant 0.000000e+00 : f32
      %12 = vector.broadcast %cst_10 : f32 to vector<16x64xf32>
      %c0_11 = arith.constant 0 : index
      %c0_12 = arith.constant 0 : index
      %13 = vector.load %arg6[%c0_11, %c0_12] : memref<16x64xf32, #tpu.memory_space<vmem>>, vector<16x64xf32>
      tpu.vector_store %arg6[%c0_11, %c0_12], %12 {strides = array<i32>} : memref<16x64xf32, #tpu.memory_space<vmem>>, vector<16x64xf32>,
    } else {
    }
    %c0 = arith.constant 0 : index
    %c0_1 = arith.constant 0 : index
    %3 = vector.load %arg6[%c0, %c0_1] : memref<16x64xf32, #tpu.memory_space<vmem>>, vector<16x64xf32>
    %c0_2 = arith.constant 0 : index
    %c0_3 = arith.constant 0 : index
    %4 = vector.load %arg2[%c0_2, %c0_3] : memref<16x64xbf16, #tpu.memory_space<vmem>>, vector<16x64xbf16>
    %c0_4 = arith.constant 0 : index
    %c0_5 = arith.constant 0 : index
    %5 = vector.load %arg3[%c0_4, %c0_5] : memref<64x64xbf16, #tpu.memory_space<vmem>>, vector<64x64xbf16>
    %cst = arith.constant dense<0.000000e+00> : vector<16x64xf32>
    %6 = tpu.matmul %4, %5, %cst {dimension_numbers = #tpu.dot_dimension_numbers<[1], [0], [0], [1], [0, 0, 1, 1], [], []>} : vector<16x64xbf16>, vector<64x64xbf16>, vector<16x64xf32> -> vector<16x64xf32>
    %7 = arith.addf %3, %6 : vector<16x64xf32>
    %c0_6 = arith.constant 0 : index
    %c0_7 = arith.constant 0 : index
    %8 = vector.load %arg6[%c0_6, %c0_7] : memref<16x64xf32, #tpu.memory_space<vmem>>, vector<16x64xf32>
    tpu.vector_store %arg6[%c0_6, %c0_7], %7 {strides = array<i32>} : memref<16x64xf32, #tpu.memory_space<vmem>>, vector<16x64xf32>,
    %c0_i32_8 = arith.constant 0 : i32
    %9 = arith.cmpi eq, %arg1, %c0_i32_8 : i32
    %10 = arith.extui %9 : i1 to i32
    %c0_i32_9 = arith.constant 0 : i32
    %11 = arith.cmpi ne, %10, %c0_i32_9 : i32
    scf.if %11 {
      %c0_10 = arith.constant 0 : index
      %c0_11 = arith.constant 0 : index
      %12 = vector.load %arg6[%c0_10, %c0_11] : memref<16x64xf32, #tpu.memory_space<vmem>>, vector<16x64xf32>
      %c0_12 = arith.constant 0 : index
      %c0_13 = arith.constant 0 : index
      %13 = vector.load %arg4[%c0_12, %c0_13] : memref<1x64xf32, #tpu.memory_space<vmem>>, vector<1x64xf32>
      %14 = vector.broadcast %13 : vector<1x64xf32> to vector<16x64xf32>
      %15 = arith.addf %12, %14 : vector<16x64xf32>
      %16 = arith.truncf %15 : vector<16x64xf32> to vector<16x64xbf16>
      %c0_14 = arith.constant 0 : index
      %c0_15 = arith.constant 0 : index
      %17 = vector.load %arg5[%c0_14, %c0_15] : memref<16x64xbf16, #tpu.memory_space<vmem>>, vector<16x64xbf16>
      tpu.vector_store %arg5[%c0_14, %c0_15], %16 {strides = array<i32>} : memref<16x64xbf16, #tpu.memory_space<vmem>>, vector<16x64xbf16>,
    } else {
    }
    return
  }
  func.func @transform_0(%arg0: i32, %arg1: i32) -> (i32, i32) {
    %c0_i32 = arith.constant 0 : i32
    return %arg0, %arg1 : i32, i32
  }
  func.func @transform_1(%arg0: i32, %arg1: i32) -> (i32, i32) {
    %c0_i32 = arith.constant 0 : i32
    %c0_i32_0 = arith.constant 0 : i32
    return %arg1, %c0_i32 : i32, i32
  }
  func.func @transform_2(%arg0: i32, %arg1: i32) -> (i32, i32) {
    %c0_i32 = arith.constant 0 : i32
    %c0_i32_0 = arith.constant 0 : i32
    %c0_i32_1 = arith.constant 0 : i32
    return %c0_i32, %c0_i32_0 : i32, i32
  }
  func.func @transform_3(%arg0: i32, %arg1: i32) -> (i32, i32) {
    %c0_i32 = arith.constant 0 : i32
    %c0_i32_0 = arith.constant 0 : i32
    return %arg0, %c0_i32 : i32, i32
  }
}

module attributes {stable_mosaic.version = 11 : i64} {
  func.func @_linear_kernel(%arg0: i32, %arg1: i32, %arg2: memref<16x64xbf16, #tpu.memory_space<vmem>>, %arg3: memref<64x64xbf16, #tpu.memory_space<vmem>>, %arg4: memref<1x64xf32, #tpu.memory_space<vmem>>, %arg5: memref<16x64xbf16, #tpu.memory_space<vmem>>, %arg6: memref<1x64xf32, #tpu.memory_space<vmem>>, %arg7: memref<1x64xf32, #tpu.memory_space<vmem>>, %arg8: memref<16x64xbf16, #tpu.memory_space<vmem>>, %arg9: memref<16x64xf32, #tpu.memory_space<vmem>>) attributes {dimension_semantics = [#tpu.dimension_semantics<parallel>, #tpu.dimension_semantics<arbitrary>], iteration_bounds = array<i64: 1, 1>, scalar_prefetch = 0 : i64, scratch_operands = 1 : i64, tpu.core_type = #tpu.core_type<tc>, window_params = [{transform_indices = @transform_0, window_bounds = array<i64: 16, 64>}, {transform_indices = @transform_1, window_bounds = array<i64: 64, 64>}, {pipeline_mode = #tpu.pipeline_mode<synchronous>, transform_indices = @transform_2, window_bounds = array<i64: 1, 64>}, {transform_indices = @transform_3, window_bounds = array<i64: 16, 64>}, {pipeline_mode = #tpu.pipeline_mode<synchronous>, transform_indices = @transform_4, window_bounds = array<i64: 1, 64>}, {pipeline_mode = #tpu.pipeline_mode<synchronous>, transform_indices = @transform_5, window_bounds = array<i64: 1, 64>}, {transform_indices = @transform_6, window_bounds = array<i64: 16, 64>}]} {
    %c0_i32 = arith.constant 0 : i32
    %0 = arith.cmpi eq, %arg1, %c0_i32 : i32
    %1 = arith.extui %0 : i1 to i32
    %c0_i32_0 = arith.constant 0 : i32
    %2 = arith.cmpi ne, %1, %c0_i32_0 : i32
    scf.if %2 {
      %cst_10 = arith.constant 0.000000e+00 : f32
      %12 = vector.broadcast %cst_10 : f32 to vector<16x64xf32>
      %c0_11 = arith.constant 0 : index
      %c0_12 = arith.constant 0 : index
      %13 = vector.load %arg9[%c0_11, %c0_12] : memref<16x64xf32, #tpu.memory_space<vmem>>, vector<16x64xf32>
      tpu.vector_store %arg9[%c0_11, %c0_12], %12 {strides = array<i32>} : memref<16x64xf32, #tpu.memory_space<vmem>>, vector<16x64xf32>,
    } else {
    }
    %c0 = arith.constant 0 : index
    %c0_1 = arith.constant 0 : index
    %3 = vector.load %arg9[%c0, %c0_1] : memref<16x64xf32, #tpu.memory_space<vmem>>, vector<16x64xf32>
    %c0_2 = arith.constant 0 : index
    %c0_3 = arith.constant 0 : index
    %4 = vector.load %arg2[%c0_2, %c0_3] : memref<16x64xbf16, #tpu.memory_space<vmem>>, vector<16x64xbf16>
    %c0_4 = arith.constant 0 : index
    %c0_5 = arith.constant 0 : index
    %5 = vector.load %arg3[%c0_4, %c0_5] : memref<64x64xbf16, #tpu.memory_space<vmem>>, vector<64x64xbf16>
    %cst = arith.constant dense<0.000000e+00> : vector<16x64xf32>
    %6 = tpu.matmul %4, %5, %cst {dimension_numbers = #tpu.dot_dimension_numbers<[1], [0], [0], [1], [0, 0, 1, 1], [], []>} : vector<16x64xbf16>, vector<64x64xbf16>, vector<16x64xf32> -> vector<16x64xf32>
    %7 = arith.addf %3, %6 : vector<16x64xf32>
    %c0_6 = arith.constant 0 : index
    %c0_7 = arith.constant 0 : index
    %8 = vector.load %arg9[%c0_6, %c0_7] : memref<16x64xf32, #tpu.memory_space<vmem>>, vector<16x64xf32>
    tpu.vector_store %arg9[%c0_6, %c0_7], %7 {strides = array<i32>} : memref<16x64xf32, #tpu.memory_space<vmem>>, vector<16x64xf32>,
    %c0_i32_8 = arith.constant 0 : i32
    %9 = arith.cmpi eq, %arg1, %c0_i32_8 : i32
    %10 = arith.extui %9 : i1 to i32
    %c0_i32_9 = arith.constant 0 : i32
    %11 = arith.cmpi ne, %10, %c0_i32_9 : i32
    scf.if %11 {
      %c0_10 = arith.constant 0 : index
      %c0_11 = arith.constant 0 : index
      %12 = vector.load %arg9[%c0_10, %c0_11] : memref<16x64xf32, #tpu.memory_space<vmem>>, vector<16x64xf32>
      %c0_12 = arith.constant 0 : index
      %c0_13 = arith.constant 0 : index
      %13 = vector.load %arg4[%c0_12, %c0_13] : memref<1x64xf32, #tpu.memory_space<vmem>>, vector<1x64xf32>
      %14 = vector.broadcast %13 : vector<1x64xf32> to vector<16x64xf32>
      %15 = arith.addf %12, %14 : vector<16x64xf32>
      %c0_14 = arith.constant 0 : index
      %c0_15 = arith.constant 0 : index
      %16 = vector.load %arg5[%c0_14, %c0_15] : memref<16x64xbf16, #tpu.memory_space<vmem>>, vector<16x64xbf16>
      %17 = arith.extf %16 : vector<16x64xbf16> to vector<16x64xf32>
      %18 = arith.addf %15, %17 : vector<16x64xf32>
      %c0_16 = arith.constant 0 : index
      %c0_17 = arith.constant 0 : index
      %19 = vector.load %arg6[%c0_16, %c0_17] : memref<1x64xf32, #tpu.memory_space<vmem>>, vector<1x64xf32>
      %c0_18 = arith.constant 0 : index
      %c0_19 = arith.constant 0 : index
      %20 = vector.load %arg7[%c0_18, %c0_19] : memref<1x64xf32, #tpu.memory_space<vmem>>, vector<1x64xf32>
      %cst_20 = arith.constant dense<0.000000e+00> : vector<16xf32>
      %21 = vector.multi_reduction <add>, %18, %cst_20 [1] : vector<16x64xf32> to vector<16xf32>
      %22 = vector.shape_cast %21 : vector<16xf32> to vector<16x1xf32>
      %cst_21 = arith.constant 6.400000e+01 : f32
      %23 = vector.broadcast %cst_21 : f32 to vector<16x1xf32>
      %24 = arith.divf %22, %23 : vector<16x1xf32>
      %25 = vector.broadcast %24 : vector<16x1xf32> to vector<16x64xf32>
      %26 = arith.subf %18, %25 : vector<16x64xf32>
      %27 = arith.mulf %26, %26 : vector<16x64xf32>
      %cst_22 = arith.constant dense<0.000000e+00> : vector<16xf32>
      %28 = vector.multi_reduction <add>, %27, %cst_22 [1] : vector<16x64xf32> to vector<16xf32>
      %29 = vector.shape_cast %28 : vector<16xf32> to vector<16x1xf32>
      %cst_23 = arith.constant 6.400000e+01 : f32
      %30 = vector.broadcast %cst_23 : f32 to vector<16x1xf32>
      %31 = arith.divf %29, %30 : vector<16x1xf32>
      %32 = vector.broadcast %24 : vector<16x1xf32> to vector<16x64xf32>
      %33 = arith.subf %18, %32 : vector<16x64xf32>
      %cst_24 = arith.constant 9.99999997E-7 : f32
      %34 = vector.broadcast %cst_24 : f32 to vector<16x1xf32>
      %35 = arith.addf %31, %34 : vector<16x1xf32>
      %36 = math.rsqrt %35 : vector<16x1xf32>
      %37 = vector.broadcast %36 : vector<16x1xf32> to vector<16x64xf32>
      %38 = arith.mulf %33, %37 : vector<16x64xf32>
      %39 = vector.broadcast %19 : vector<1x64xf32> to vector<16x64xf32>
      %40 = arith.mulf %38, %39 : vector<16x64xf32>
      %41 = vector.broadcast %20 : vector<1x64xf32> to vector<16x64xf32>
      %42 = arith.addf %40, %41 : vector<16x64xf32>
      %43 = arith.truncf %42 : vector<16x64xf32> to vector<16x64xbf16>
      %c0_25 = arith.constant 0 : index
      %c0_26 = arith.constant 0 : index
      %44 = vector.load %arg8[%c0_25, %c0_26] : memref<16x64xbf16, #tpu.memory_space<vmem>>, vector<16x64xbf16>
      tpu.vector_store %arg8[%c0_25, %c0_26], %43 {strides = array<i32>} : memref<16x64xbf16, #tpu.memory_space<vmem>>, vector<16x64xbf16>,
    } else {
    }
    return
  }
  func.func @transform_0(%arg0: i32, %arg1: i32) -> (i32, i32) {
    %c0_i32 = arith.constant 0 : i32
    return %arg0, %arg1 : i32, i32
  }
  func.func @transform_1(%arg0: i32, %arg1: i32) -> (i32, i32) {
    %c0_i32 = arith.constant 0 : i32
    %c0_i32_0 = arith.constant 0 : i32
    return %arg1, %c0_i32 : i32, i32
  }
  func.func @transform_2(%arg0: i32, %arg1: i32) -> (i32, i32) {
    %c0_i32 = arith.constant 0 : i32
    %c0_i32_0 = arith.constant 0 : i32
    %c0_i32_1 = arith.constant 0 : i32
    return %c0_i32, %c0_i32_0 : i32, i32
  }
  func.func @transform_3(%arg0: i32, %arg1: i32) -> (i32, i32) {
    %c0_i32 = arith.constant 0 : i32
    %c0_i32_0 = arith.constant 0 : i32
    return %arg0, %c0_i32 : i32, i32
  }
  func.func @transform_4(%arg0: i32, %arg1: i32) -> (i32, i32) {
    %c0_i32 = arith.constant 0 : i32
    %c0_i32_0 = arith.constant 0 : i32
    %c0_i32_1 = arith.constant 0 : i32
    return %c0_i32, %c0_i32_0 : i32, i32
  }
  func.func @transform_5(%arg0: i32, %arg1: i32) -> (i32, i32) {
    %c0_i32 = arith.constant 0 : i32
    %c0_i32_0 = arith.constant 0 : i32
    %c0_i32_1 = arith.constant 0 : i32
    return %c0_i32, %c0_i32_0 : i32, i32
  }
  func.func @transform_6(%arg0: i32, %arg1: i32) -> (i32, i32) {
    %c0_i32 = arith.constant 0 : i32
    %c0_i32_0 = arith.constant 0 : i32
    return %arg0, %c0_i32 : i32, i32
  }
}

module attributes {stable_mosaic.version = 11 : i64} {
  func.func @_attention_kernel(%arg0: i32, %arg1: memref<1x4x8x16xbf16, #tpu.memory_space<vmem>>, %arg2: memref<1x4x8x16xbf16, #tpu.memory_space<vmem>>, %arg3: memref<1x4x8x16xbf16, #tpu.memory_space<vmem>>, %arg4: memref<1x1x8xf32, #tpu.memory_space<vmem>>, %arg5: memref<1x4x8x16xbf16, #tpu.memory_space<vmem>>) attributes {dimension_semantics = [#tpu.dimension_semantics<parallel>], iteration_bounds = array<i64: 2>, scalar_prefetch = 0 : i64, scratch_operands = 0 : i64, tpu.core_type = #tpu.core_type<tc>, window_params = [{transform_indices = @transform_0, window_bounds = array<i64: 1, 4, 8, 16>}, {transform_indices = @transform_1, window_bounds = array<i64: 1, 4, 8, 16>}, {transform_indices = @transform_2, window_bounds = array<i64: 1, 4, 8, 16>}, {transform_indices = @transform_3, window_bounds = array<i64: 1, 1, 8>}, {transform_indices = @transform_4, window_bounds = array<i64: 1, 4, 8, 16>}]} {
    %c0 = arith.constant 0 : index
    %c0_0 = arith.constant 0 : index
    %c0_1 = arith.constant 0 : index
    %c0_2 = arith.constant 0 : index
    %0 = vector.load %arg1[%c0, %c0_0, %c0_1, %c0_2] : memref<1x4x8x16xbf16, #tpu.memory_space<vmem>>, vector<1x4x8x16xbf16>
    %1 = vector.shape_cast %0 : vector<1x4x8x16xbf16> to vector<4x8x16xbf16>
    %c0_3 = arith.constant 0 : index
    %c0_4 = arith.constant 0 : index
    %c0_5 = arith.constant 0 : index
    %c0_6 = arith.constant 0 : index
    %2 = vector.load %arg2[%c0_3, %c0_4, %c0_5, %c0_6] : memref<1x4x8x16xbf16, #tpu.memory_space<vmem>>, vector<1x4x8x16xbf16>
    %3 = vector.shape_cast %2 : vector<1x4x8x16xbf16> to vector<4x8x16xbf16>
    %c0_7 = arith.constant 0 : index
    %c0_8 = arith.constant 0 : index
    %c0_9 = arith.constant 0 : index
    %c0_10 = arith.constant 0 : index
    %4 = vector.load %arg3[%c0_7, %c0_8, %c0_9, %c0_10] : memref<1x4x8x16xbf16, #tpu.memory_space<vmem>>, vector<1x4x8x16xbf16>
    %5 = vector.shape_cast %4 : vector<1x4x8x16xbf16> to vector<4x8x16xbf16>
    "tpu.trace_start"() <{level = 10 : i32, message = "hqd,hkd->hqk"}> : () -> ()
    %cst = arith.constant dense<0.000000e+00> : vector<4x8x8xf32>
    %6 = tpu.matmul %1, %3, %cst {dimension_numbers = #tpu.dot_dimension_numbers<[2], [2], [1], [1], [0, 0, 0, 1, 1, 1], [0], [0]>} : vector<4x8x16xbf16>, vector<4x8x16xbf16>, vector<4x8x8xf32> -> vector<4x8x8xf32>
    "tpu.trace_stop"() : () -> ()
    %cst_11 = arith.constant 2.500000e-01 : f32
    %7 = vector.broadcast %cst_11 : f32 to vector<4x8x8xf32>
    %8 = arith.mulf %6, %7 : vector<4x8x8xf32>
    %c0_12 = arith.constant 0 : index
    %c0_13 = arith.constant 0 : index
    %c0_14 = arith.constant 0 : index
    %9 = vector.load %arg4[%c0_12, %c0_13, %c0_14] : memref<1x1x8xf32, #tpu.memory_space<vmem>>, vector<1x1x8xf32>
    %10 = vector.broadcast %9 : vector<1x1x8xf32> to vector<4x8x8xf32>
    %11 = arith.addf %8, %10 : vector<4x8x8xf32>
    %cst_15 = arith.constant dense<0xFF800000> : vector<4x8xf32>
    %12 = vector.multi_reduction <maximumf>, %11, %cst_15 [2] : vector<4x8x8xf32> to vector<4x8xf32>
    %13 = vector.shape_cast %12 : vector<4x8xf32> to vector<4x8x1xf32>
    %14 = vector.broadcast %13 : vector<4x8x1xf32> to vector<4x8x8xf32>
    %15 = arith.subf %11, %14 : vector<4x8x8xf32>
    %16 = math.exp %15 : vector<4x8x8xf32>
    %cst_16 = arith.constant dense<0.000000e+00> : vector<4x8xf32>
    %17 = vector.multi_reduction <add>, %16, %cst_16 [2] : vector<4x8x8xf32> to vector<4x8xf32>
    %18 = vector.shape_cast %17 : vector<4x8xf32> to vector<4x8x1xf32>
    %19 = tpu.reciprocal %18 {approx = true} : vector<4x8x1xf32> -> vector<4x8x1xf32>
    %20 = vector.broadcast %19 : vector<4x8x1xf32> to vector<4x8x8xf32>
    %21 = arith.mulf %16, %20 : vector<4x8x8xf32>
    %22 = arith.truncf %21 : vector<4x8x8xf32> to vector<4x8x8xbf16>
    "tpu.trace_start"() <{level = 10 : i32, message = "hqk,hkd->hqd"}> : () -> ()
    %cst_17 = arith.constant dense<0.000000e+00> : vector<4x8x16xf32>
    %23 = tpu.matmul %22, %5, %cst_17 {dimension_numbers = #tpu.dot_dimension_numbers<[2], [1], [1], [2], [0, 0, 0, 1, 1, 2], [0], [0]>} : vector<4x8x8xbf16>, vector<4x8x16xbf16>, vector<4x8x16xf32> -> vector<4x8x16xf32>
    "tpu.trace_stop"() : () -> ()
    %24 = arith.truncf %23 : vector<4x8x16xf32> to vector<4x8x16xbf16>
    %c0_18 = arith.constant 0 : index
    %c0_19 = arith.constant 0 : index
    %c0_20 = arith.constant 0 : index
    %c0_21 = arith.constant 0 : index
    %25 = vector.load %arg5[%c0_18, %c0_19, %c0_20, %c0_21] : memref<1x4x8x16xbf16, #tpu.memory_space<vmem>>, vector<1x4x8x16xbf16>
    %26 = vector.shape_cast %25 : vector<1x4x8x16xbf16> to vector<4x8x16xbf16>
    %27 = vector.shape_cast %24 : vector<4x8x16xbf16> to vector<1x4x8x16xbf16>
    tpu.vector_store %arg5[%c0_18, %c0_19, %c0_20, %c0_21], %27 {strides = array<i32>} : memref<1x4x8x16xbf16, #tpu.memory_space<vmem>>, vector<1x4x8x16xbf16>,
    return
  }
  func.func @transform_0(%arg0: i32) -> (i32, i32, i32, i32) {
    %c0_i32 = arith.constant 0 : i32
    %c0_i32_0 = arith.constant 0 : i32
    %c0_i32_1 = arith.constant 0 : i32
    %c0_i32_2 = arith.constant 0 : i32
    return %arg0, %c0_i32, %c0_i32_0, %c0_i32_1 : i32, i32, i32, i32
  }
  func.func @transform_1(%arg0: i32) -> (i32, i32, i32, i32) {
    %c0_i32 = arith.constant 0 : i32
    %c0_i32_0 = arith.constant 0 : i32
    %c0_i32_1 = arith.constant 0 : i32
    %c0_i32_2 = arith.constant 0 : i32
    return %arg0, %c0_i32, %c0_i32_0, %c0_i32_1 : i32, i32, i32, i32
  }
  func.func @transform_2(%arg0: i32) -> (i32, i32, i32, i32) {
    %c0_i32 = arith.constant 0 : i32
    %c0_i32_0 = arith.constant 0 : i32
    %c0_i32_1 = arith.constant 0 : i32
    %c0_i32_2 = arith.constant 0 : i32
    return %arg0, %c0_i32, %c0_i32_0, %c0_i32_1 : i32, i32, i32, i32
  }
  func.func @transform_3(%arg0: i32) -> (i32, i32, i32) {
    %c0_i32 = arith.constant 0 : i32
    %c0_i32_0 = arith.constant 0 : i32
    %c0_i32_1 = arith.constant 0 : i32
    return %arg0, %c0_i32, %c0_i32_0 : i32, i32, i32
  }
  func.func @transform_4(%arg0: i32) -> (i32, i32, i32, i32) {
    %c0_i32 = arith.constant 0 : i32
    %c0_i32_0 = arith.constant 0 : i32
    %c0_i32_1 = arith.constant 0 : i32
    %c0_i32_2 = arith.constant 0 : i32
    return %arg0, %c0_i32, %c0_i32_0, %c0_i32_1 : i32, i32, i32, i32
  }
}

module attributes {stable_mosaic.version = 11 : i64} {
  func.func @_linear_kernel(%arg0: i32, %arg1: i32, %arg2: memref<16x64xbf16, #tpu.memory_space<vmem>>, %arg3: memref<64x128xbf16, #tpu.memory_space<vmem>>, %arg4: memref<1x128xf32, #tpu.memory_space<vmem>>, %arg5: memref<16x128xbf16, #tpu.memory_space<vmem>>, %arg6: memref<16x128xf32, #tpu.memory_space<vmem>>) attributes {dimension_semantics = [#tpu.dimension_semantics<parallel>, #tpu.dimension_semantics<arbitrary>], iteration_bounds = array<i64: 1, 1>, scalar_prefetch = 0 : i64, scratch_operands = 1 : i64, tpu.core_type = #tpu.core_type<tc>, window_params = [{transform_indices = @transform_0, window_bounds = array<i64: 16, 64>}, {transform_indices = @transform_1, window_bounds = array<i64: 64, 128>}, {pipeline_mode = #tpu.pipeline_mode<synchronous>, transform_indices = @transform_2, window_bounds = array<i64: 1, 128>}, {transform_indices = @transform_3, window_bounds = array<i64: 16, 128>}]} {
    %c0_i32 = arith.constant 0 : i32
    %0 = arith.cmpi eq, %arg1, %c0_i32 : i32
    %1 = arith.extui %0 : i1 to i32
    %c0_i32_0 = arith.constant 0 : i32
    %2 = arith.cmpi ne, %1, %c0_i32_0 : i32
    scf.if %2 {
      %cst_10 = arith.constant 0.000000e+00 : f32
      %12 = vector.broadcast %cst_10 : f32 to vector<16x128xf32>
      %c0_11 = arith.constant 0 : index
      %c0_12 = arith.constant 0 : index
      %13 = vector.load %arg6[%c0_11, %c0_12] : memref<16x128xf32, #tpu.memory_space<vmem>>, vector<16x128xf32>
      tpu.vector_store %arg6[%c0_11, %c0_12], %12 {strides = array<i32>} : memref<16x128xf32, #tpu.memory_space<vmem>>, vector<16x128xf32>,
    } else {
    }
    %c0 = arith.constant 0 : index
    %c0_1 = arith.constant 0 : index
    %3 = vector.load %arg6[%c0, %c0_1] : memref<16x128xf32, #tpu.memory_space<vmem>>, vector<16x128xf32>
    %c0_2 = arith.constant 0 : index
    %c0_3 = arith.constant 0 : index
    %4 = vector.load %arg2[%c0_2, %c0_3] : memref<16x64xbf16, #tpu.memory_space<vmem>>, vector<16x64xbf16>
    %c0_4 = arith.constant 0 : index
    %c0_5 = arith.constant 0 : index
    %5 = vector.load %arg3[%c0_4, %c0_5] : memref<64x128xbf16, #tpu.memory_space<vmem>>, vector<64x128xbf16>
    %cst = arith.constant dense<0.000000e+00> : vector<16x128xf32>
    %6 = tpu.matmul %4, %5, %cst {dimension_numbers = #tpu.dot_dimension_numbers<[1], [0], [0], [1], [0, 0, 1, 1], [], []>} : vector<16x64xbf16>, vector<64x128xbf16>, vector<16x128xf32> -> vector<16x128xf32>
    %7 = arith.addf %3, %6 : vector<16x128xf32>
    %c0_6 = arith.constant 0 : index
    %c0_7 = arith.constant 0 : index
    %8 = vector.load %arg6[%c0_6, %c0_7] : memref<16x128xf32, #tpu.memory_space<vmem>>, vector<16x128xf32>
    tpu.vector_store %arg6[%c0_6, %c0_7], %7 {strides = array<i32>} : memref<16x128xf32, #tpu.memory_space<vmem>>, vector<16x128xf32>,
    %c0_i32_8 = arith.constant 0 : i32
    %9 = arith.cmpi eq, %arg1, %c0_i32_8 : i32
    %10 = arith.extui %9 : i1 to i32
    %c0_i32_9 = arith.constant 0 : i32
    %11 = arith.cmpi ne, %10, %c0_i32_9 : i32
    scf.if %11 {
      %c0_10 = arith.constant 0 : index
      %c0_11 = arith.constant 0 : index
      %12 = vector.load %arg6[%c0_10, %c0_11] : memref<16x128xf32, #tpu.memory_space<vmem>>, vector<16x128xf32>
      %c0_12 = arith.constant 0 : index
      %c0_13 = arith.constant 0 : index
      %13 = vector.load %arg4[%c0_12, %c0_13] : memref<1x128xf32, #tpu.memory_space<vmem>>, vector<1x128xf32>
      %14 = vector.broadcast %13 : vector<1x128xf32> to vector<16x128xf32>
      %15 = arith.addf %12, %14 : vector<16x128xf32>
      %cst_14 = arith.constant 0.000000e+00 : f32
      %16 = vector.broadcast %cst_14 : f32 to vector<16x128xf32>
      %17 = arith.maximumf %15, %16 : vector<16x128xf32>
      %18 = arith.truncf %17 : vector<16x128xf32> to vector<16x128xbf16>
      %c0_15 = arith.constant 0 : index
      %c0_16 = arith.constant 0 : index
      %19 = vector.load %arg5[%c0_15, %c0_16] : memref<16x128xbf16, #tpu.memory_space<vmem>>, vector<16x128xbf16>
      tpu.vector_store %arg5[%c0_15, %c0_16], %18 {strides = array<i32>} : memref<16x128xbf16, #tpu.memory_space<vmem>>, vector<16x128xbf16>,
    } else {
    }
    return
  }
  func.func @transform_0(%arg0: i32, %arg1: i32) -> (i32, i32) {
    %c0_i32 = arith.constant 0 : i32
    return %arg0, %arg1 : i32, i32
  }
  func.func @transform_1(%arg0: i32, %arg1: i32) -> (i32, i32) {
    %c0_i32 = arith.constant 0 : i32
    %c0_i32_0 = arith.constant 0 : i32
    return %arg1, %c0_i32 : i32, i32
  }
  func.func @transform_2(%arg0: i32, %arg1: i32) -> (i32, i32) {
    %c0_i32 = arith.constant 0 : i32
    %c0_i32_0 = arith.constant 0 : i32
    %c0_i32_1 = arith.constant 0 : i32
    return %c0_i32, %c0_i32_0 : i32, i32
  }
  func.func @transform_3(%arg0: i32, %arg1: i32) -> (i32, i32) {
    %c0_i32 = arith.constant 0 : i32
    %c0_i32_0 = arith.constant 0 : i32
    return %arg0, %c0_i32 : i32, i32
  }
}

module attributes {stable_mosaic.version = 11 : i64} {
  func.func @_linear_kernel(%arg0: i32, %arg1: i32, %arg2: memref<16x128xbf16, #tpu.memory_space<vmem>>, %arg3: memref<128x64xbf16, #tpu.memory_space<vmem>>, %arg4: memref<1x64xf32, #tpu.memory_space<vmem>>, %arg5: memref<16x64xbf16, #tpu.memory_space<vmem>>, %arg6: memref<1x64xf32, #tpu.memory_space<vmem>>, %arg7: memref<1x64xf32, #tpu.memory_space<vmem>>, %arg8: memref<16x64xbf16, #tpu.memory_space<vmem>>, %arg9: memref<16x64xf32, #tpu.memory_space<vmem>>) attributes {dimension_semantics = [#tpu.dimension_semantics<parallel>, #tpu.dimension_semantics<arbitrary>], iteration_bounds = array<i64: 1, 1>, scalar_prefetch = 0 : i64, scratch_operands = 1 : i64, tpu.core_type = #tpu.core_type<tc>, window_params = [{transform_indices = @transform_0, window_bounds = array<i64: 16, 128>}, {transform_indices = @transform_1, window_bounds = array<i64: 128, 64>}, {pipeline_mode = #tpu.pipeline_mode<synchronous>, transform_indices = @transform_2, window_bounds = array<i64: 1, 64>}, {transform_indices = @transform_3, window_bounds = array<i64: 16, 64>}, {pipeline_mode = #tpu.pipeline_mode<synchronous>, transform_indices = @transform_4, window_bounds = array<i64: 1, 64>}, {pipeline_mode = #tpu.pipeline_mode<synchronous>, transform_indices = @transform_5, window_bounds = array<i64: 1, 64>}, {transform_indices = @transform_6, window_bounds = array<i64: 16, 64>}]} {
    %c0_i32 = arith.constant 0 : i32
    %0 = arith.cmpi eq, %arg1, %c0_i32 : i32
    %1 = arith.extui %0 : i1 to i32
    %c0_i32_0 = arith.constant 0 : i32
    %2 = arith.cmpi ne, %1, %c0_i32_0 : i32
    scf.if %2 {
      %cst_10 = arith.constant 0.000000e+00 : f32
      %12 = vector.broadcast %cst_10 : f32 to vector<16x64xf32>
      %c0_11 = arith.constant 0 : index
      %c0_12 = arith.constant 0 : index
      %13 = vector.load %arg9[%c0_11, %c0_12] : memref<16x64xf32, #tpu.memory_space<vmem>>, vector<16x64xf32>
      tpu.vector_store %arg9[%c0_11, %c0_12], %12 {strides = array<i32>} : memref<16x64xf32, #tpu.memory_space<vmem>>, vector<16x64xf32>,
    } else {
    }
    %c0 = arith.constant 0 : index
    %c0_1 = arith.constant 0 : index
    %3 = vector.load %arg9[%c0, %c0_1] : memref<16x64xf32, #tpu.memory_space<vmem>>, vector<16x64xf32>
    %c0_2 = arith.constant 0 : index
    %c0_3 = arith.constant 0 : index
    %4 = vector.load %arg2[%c0_2, %c0_3] : memref<16x128xbf16, #tpu.memory_space<vmem>>, vector<16x128xbf16>
    %c0_4 = arith.constant 0 : index
    %c0_5 = arith.constant 0 : index
    %5 = vector.load %arg3[%c0_4, %c0_5] : memref<128x64xbf16, #tpu.memory_space<vmem>>, vector<128x64xbf16>
    %cst = arith.constant dense<0.000000e+00> : vector<16x64xf32>
    %6 = tpu.matmul %4, %5, %cst {dimension_numbers = #tpu.dot_dimension_numbers<[1], [0], [0], [1], [0, 0, 1, 1], [], []>} : vector<16x128xbf16>, vector<128x64xbf16>, vector<16x64xf32> -> vector<16x64xf32>
    %7 = arith.addf %3, %6 : vector<16x64xf32>
    %c0_6 = arith.constant 0 : index
    %c0_7 = arith.constant 0 : index
    %8 = vector.load %arg9[%c0_6, %c0_7] : memref<16x64xf32, #tpu.memory_space<vmem>>, vector<16x64xf32>
    tpu.vector_store %arg9[%c0_6, %c0_7], %7 {strides = array<i32>} : memref<16x64xf32, #tpu.memory_space<vmem>>, vector<16x64xf32>,
    %c0_i32_8 = arith.constant 0 : i32
    %9 = arith.cmpi eq, %arg1, %c0_i32_8 : i32
    %10 = arith.extui %9 : i1 to i32
    %c0_i32_9 = arith.constant 0 : i32
    %11 = arith.cmpi ne, %10, %c0_i32_9 : i32
    scf.if %11 {
      %c0_10 = arith.constant 0 : index
      %c0_11 = arith.constant 0 : index
      %12 = vector.load %arg9[%c0_10, %c0_11] : memref<16x64xf32, #tpu.memory_space<vmem>>, vector<16x64xf32>
      %c0_12 = arith.constant 0 : index
      %c0_13 = arith.constant 0 : index
      %13 = vector.load %arg4[%c0_12, %c0_13] : memref<1x64xf32, #tpu.memory_space<vmem>>, vector<1x64xf32>
      %14 = vector.broadcast %13 : vector<1x64xf32> to vector<16x64xf32>
      %15 = arith.addf %12, %14 : vector<16x64xf32>
      %c0_14 = arith.constant 0 : index
      %c0_15 = arith.constant 0 : index
      %16 = vector.load %arg5[%c0_14, %c0_15] : memref<16x64xbf16, #tpu.memory_space<vmem>>, vector<16x64xbf16>
      %17 = arith.extf %16 : vector<16x64xbf16> to vector<16x64xf32>
      %18 = arith.addf %15, %17 : vector<16x64xf32>
      %c0_16 = arith.constant 0 : index
      %c0_17 = arith.constant 0 : index
      %19 = vector.load %arg6[%c0_16, %c0_17] : memref<1x64xf32, #tpu.memory_space<vmem>>, vector<1x64xf32>
      %c0_18 = arith.constant 0 : index
      %c0_19 = arith.constant 0 : index
      %20 = vector.load %arg7[%c0_18, %c0_19] : memref<1x64xf32, #tpu.memory_space<vmem>>, vector<1x64xf32>
      %cst_20 = arith.constant dense<0.000000e+00> : vector<16xf32>
      %21 = vector.multi_reduction <add>, %18, %cst_20 [1] : vector<16x64xf32> to vector<16xf32>
      %22 = vector.shape_cast %21 : vector<16xf32> to vector<16x1xf32>
      %cst_21 = arith.constant 6.400000e+01 : f32
      %23 = vector.broadcast %cst_21 : f32 to vector<16x1xf32>
      %24 = arith.divf %22, %23 : vector<16x1xf32>
      %25 = vector.broadcast %24 : vector<16x1xf32> to vector<16x64xf32>
      %26 = arith.subf %18, %25 : vector<16x64xf32>
      %27 = arith.mulf %26, %26 : vector<16x64xf32>
      %cst_22 = arith.constant dense<0.000000e+00> : vector<16xf32>
      %28 = vector.multi_reduction <add>, %27, %cst_22 [1] : vector<16x64xf32> to vector<16xf32>
      %29 = vector.shape_cast %28 : vector<16xf32> to vector<16x1xf32>
      %cst_23 = arith.constant 6.400000e+01 : f32
      %30 = vector.broadcast %cst_23 : f32 to vector<16x1xf32>
      %31 = arith.divf %29, %30 : vector<16x1xf32>
      %32 = vector.broadcast %24 : vector<16x1xf32> to vector<16x64xf32>
      %33 = arith.subf %18, %32 : vector<16x64xf32>
      %cst_24 = arith.constant 9.99999997E-7 : f32
      %34 = vector.broadcast %cst_24 : f32 to vector<16x1xf32>
      %35 = arith.addf %31, %34 : vector<16x1xf32>
      %36 = math.rsqrt %35 : vector<16x1xf32>
      %37 = vector.broadcast %36 : vector<16x1xf32> to vector<16x64xf32>
      %38 = arith.mulf %33, %37 : vector<16x64xf32>
      %39 = vector.broadcast %19 : vector<1x64xf32> to vector<16x64xf32>
      %40 = arith.mulf %38, %39 : vector<16x64xf32>
      %41 = vector.broadcast %20 : vector<1x64xf32> to vector<16x64xf32>
      %42 = arith.addf %40, %41 : vector<16x64xf32>
      %43 = arith.truncf %42 : vector<16x64xf32> to vector<16x64xbf16>
      %c0_25 = arith.constant 0 : index
      %c0_26 = arith.constant 0 : index
      %44 = vector.load %arg8[%c0_25, %c0_26] : memref<16x64xbf16, #tpu.memory_space<vmem>>, vector<16x64xbf16>
      tpu.vector_store %arg8[%c0_25, %c0_26], %43 {strides = array<i32>} : memref<16x64xbf16, #tpu.memory_space<vmem>>, vector<16x64xbf16>,
    } else {
    }
    return
  }
  func.func @transform_0(%arg0: i32, %arg1: i32) -> (i32, i32) {
    %c0_i32 = arith.constant 0 : i32
    return %arg0, %arg1 : i32, i32
  }
  func.func @transform_1(%arg0: i32, %arg1: i32) -> (i32, i32) {
    %c0_i32 = arith.constant 0 : i32
    %c0_i32_0 = arith.constant 0 : i32
    return %arg1, %c0_i32 : i32, i32
  }
  func.func @transform_2(%arg0: i32, %arg1: i32) -> (i32, i32) {
    %c0_i32 = arith.constant 0 : i32
    %c0_i32_0 = arith.constant 0 : i32
    %c0_i32_1 = arith.constant 0 : i32
    return %c0_i32, %c0_i32_0 : i32, i32
  }
  func.func @transform_3(%arg0: i32, %arg1: i32) -> (i32, i32) {
    %c0_i32 = arith.constant 0 : i32
    %c0_i32_0 = arith.constant 0 : i32
    return %arg0, %c0_i32 : i32, i32
  }
  func.func @transform_4(%arg0: i32, %arg1: i32) -> (i32, i32) {
    %c0_i32 = arith.constant 0 : i32
    %c0_i32_0 = arith.constant 0 : i32
    %c0_i32_1 = arith.constant 0 : i32
    return %c0_i32, %c0_i32_0 : i32, i32
  }
  func.func @transform_5(%arg0: i32, %arg1: i32) -> (i32, i32) {
    %c0_i32 = arith.constant 0 : i32
    %c0_i32_0 = arith.constant 0 : i32
    %c0_i32_1 = arith.constant 0 : i32
    return %c0_i32, %c0_i32_0 : i32, i32
  }
  func.func @transform_6(%arg0: i32, %arg1: i32) -> (i32, i32) {
    %c0_i32 = arith.constant 0 : i32
    %c0_i32_0 = arith.constant 0 : i32
    return %arg0, %c0_i32 : i32, i32
  }
}

module attributes {stable_mosaic.version = 11 : i64} {
  func.func @_layernorm_kernel(%arg0: i32, %arg1: memref<16x64xbf16, #tpu.memory_space<vmem>>, %arg2: memref<1x64xf32, #tpu.memory_space<vmem>>, %arg3: memref<1x64xf32, #tpu.memory_space<vmem>>, %arg4: memref<16x64xf32, #tpu.memory_space<vmem>>) attributes {dimension_semantics = [#tpu.dimension_semantics<parallel>], iteration_bounds = array<i64: 1>, scalar_prefetch = 0 : i64, scratch_operands = 0 : i64, tpu.core_type = #tpu.core_type<tc>, window_params = [{transform_indices = @transform_0, window_bounds = array<i64: 16, 64>}, {pipeline_mode = #tpu.pipeline_mode<synchronous>, transform_indices = @transform_1, window_bounds = array<i64: 1, 64>}, {pipeline_mode = #tpu.pipeline_mode<synchronous>, transform_indices = @transform_2, window_bounds = array<i64: 1, 64>}, {transform_indices = @transform_3, window_bounds = array<i64: 16, 64>}]} {
    %c0 = arith.constant 0 : index
    %c0_0 = arith.constant 0 : index
    %0 = vector.load %arg1[%c0, %c0_0] : memref<16x64xbf16, #tpu.memory_space<vmem>>, vector<16x64xbf16>
    %1 = arith.extf %0 : vector<16x64xbf16> to vector<16x64xf32>
    %c0_1 = arith.constant 0 : index
    %c0_2 = arith.constant 0 : index
    %2 = vector.load %arg2[%c0_1, %c0_2] : memref<1x64xf32, #tpu.memory_space<vmem>>, vector<1x64xf32>
    %c0_3 = arith.constant 0 : index
    %c0_4 = arith.constant 0 : index
    %3 = vector.load %arg3[%c0_3, %c0_4] : memref<1x64xf32, #tpu.memory_space<vmem>>, vector<1x64xf32>
    %cst = arith.constant dense<0.000000e+00> : vector<16xf32>
    %4 = vector.multi_reduction <add>, %1, %cst [1] : vector<16x64xf32> to vector<16xf32>
    %5 = vector.shape_cast %4 : vector<16xf32> to vector<16x1xf32>
    %cst_5 = arith.constant 6.400000e+01 : f32
    %6 = vector.broadcast %cst_5 : f32 to vector<16x1xf32>
    %7 = arith.divf %5, %6 : vector<16x1xf32>
    %8 = vector.broadcast %7 : vector<16x1xf32> to vector<16x64xf32>
    %9 = arith.subf %1, %8 : vector<16x64xf32>
    %10 = arith.mulf %9, %9 : vector<16x64xf32>
    %cst_6 = arith.constant dense<0.000000e+00> : vector<16xf32>
    %11 = vector.multi_reduction <add>, %10, %cst_6 [1] : vector<16x64xf32> to vector<16xf32>
    %12 = vector.shape_cast %11 : vector<16xf32> to vector<16x1xf32>
    %cst_7 = arith.constant 6.400000e+01 : f32
    %13 = vector.broadcast %cst_7 : f32 to vector<16x1xf32>
    %14 = arith.divf %12, %13 : vector<16x1xf32>
    %15 = vector.broadcast %7 : vector<16x1xf32> to vector<16x64xf32>
    %16 = arith.subf %1, %15 : vector<16x64xf32>
    %cst_8 = arith.constant 9.99999997E-7 : f32
    %17 = vector.broadcast %cst_8 : f32 to vector<16x1xf32>
    %18 = arith.addf %14, %17 : vector<16x1xf32>
    %19 = math.rsqrt %18 : vector<16x1xf32>
    %20 = vector.broadcast %19 : vector<16x1xf32> to vector<16x64xf32>
    %21 = arith.mulf %16, %20 : vector<16x64xf32>
    %22 = vector.broadcast %2 : vector<1x64xf32> to vector<16x64xf32>
    %23 = arith.mulf %21, %22 : vector<16x64xf32>
    %24 = vector.broadcast %3 : vector<1x64xf32> to vector<16x64xf32>
    %25 = arith.addf %23, %24 : vector<16x64xf32>
    %c0_9 = arith.constant 0 : index
    %c0_10 = arith.constant 0 : index
    %26 = vector.load %arg4[%c0_9, %c0_10] : memref<16x64xf32, #tpu.memory_space<vmem>>, vector<16x64xf32>
    tpu.vector_store %arg4[%c0_9, %c0_10], %25 {strides = array<i32>} : memref<16x64xf32, #tpu.memory_space<vmem>>, vector<16x64xf32>,
    return
  }
  func.func @transform_0(%arg0: i32) -> (i32, i32) {
    %c0_i32 = arith.constant 0 : i32
    %c0_i32_0 = arith.constant 0 : i32
    return %arg0, %c0_i32 : i32, i32
  }
  func.func @transform_1(%arg0: i32) -> (i32, i32) {
    %c0_i32 = arith.constant 0 : i32
    %c0_i32_0 = arith.constant 0 : i32
    %c0_i32_1 = arith.constant 0 : i32
    return %c0_i32, %c0_i32_0 : i32, i32
  }
  func.func @transform_2(%arg0: i32) -> (i32, i32) {
    %c0_i32 = arith.constant 0 : i32
    %c0_i32_0 = arith.constant 0 : i32
    %c0_i32_1 = arith.constant 0 : i32
    return %c0_i32, %c0_i32_0 : i32, i32
  }
  func.func @transform_3(%arg0: i32) -> (i32, i32) {
    %c0_i32 = arith.constant 0 : i32
    %c0_i32_0 = arith.constant 0 : i32
    return %arg0, %c0_i32 : i32, i32
  }
}

module attributes {stable_mosaic.version = 11 : i64} {
  func.func @_linear_kernel(%arg0: i32, %arg1: i32, %arg2: memref<16x64xbf16, #tpu.memory_space<vmem>>, %arg3: memref<64x128xbf16, #tpu.memory_space<vmem>>, %arg4: memref<1x128xf32, #tpu.memory_space<vmem>>, %arg5: memref<16x128xbf16, #tpu.memory_space<vmem>>, %arg6: memref<16x128xf32, #tpu.memory_space<vmem>>) attributes {dimension_semantics = [#tpu.dimension_semantics<parallel>, #tpu.dimension_semantics<arbitrary>], iteration_bounds = array<i64: 1, 1>, scalar_prefetch = 0 : i64, scratch_operands = 1 : i64, tpu.core_type = #tpu.core_type<tc>, window_params = [{transform_indices = @transform_0, window_bounds = array<i64: 16, 64>}, {transform_indices = @transform_1, window_bounds = array<i64: 64, 128>}, {pipeline_mode = #tpu.pipeline_mode<synchronous>, transform_indices = @transform_2, window_bounds = array<i64: 1, 128>}, {transform_indices = @transform_3, window_bounds = array<i64: 16, 128>}]} {
    %c0_i32 = arith.constant 0 : i32
    %0 = arith.cmpi eq, %arg1, %c0_i32 : i32
    %1 = arith.extui %0 : i1 to i32
    %c0_i32_0 = arith.constant 0 : i32
    %2 = arith.cmpi ne, %1, %c0_i32_0 : i32
    scf.if %2 {
      %cst_10 = arith.constant 0.000000e+00 : f32
      %12 = vector.broadcast %cst_10 : f32 to vector<16x128xf32>
      %c0_11 = arith.constant 0 : index
      %c0_12 = arith.constant 0 : index
      %13 = vector.load %arg6[%c0_11, %c0_12] : memref<16x128xf32, #tpu.memory_space<vmem>>, vector<16x128xf32>
      tpu.vector_store %arg6[%c0_11, %c0_12], %12 {strides = array<i32>} : memref<16x128xf32, #tpu.memory_space<vmem>>, vector<16x128xf32>,
    } else {
    }
    %c0 = arith.constant 0 : index
    %c0_1 = arith.constant 0 : index
    %3 = vector.load %arg6[%c0, %c0_1] : memref<16x128xf32, #tpu.memory_space<vmem>>, vector<16x128xf32>
    %c0_2 = arith.constant 0 : index
    %c0_3 = arith.constant 0 : index
    %4 = vector.load %arg2[%c0_2, %c0_3] : memref<16x64xbf16, #tpu.memory_space<vmem>>, vector<16x64xbf16>
    %c0_4 = arith.constant 0 : index
    %c0_5 = arith.constant 0 : index
    %5 = vector.load %arg3[%c0_4, %c0_5] : memref<64x128xbf16, #tpu.memory_space<vmem>>, vector<64x128xbf16>
    %cst = arith.constant dense<0.000000e+00> : vector<16x128xf32>
    %6 = tpu.matmul %4, %5, %cst {dimension_numbers = #tpu.dot_dimension_numbers<[1], [0], [0], [1], [0, 0, 1, 1], [], []>} : vector<16x64xbf16>, vector<64x128xbf16>, vector<16x128xf32> -> vector<16x128xf32>
    %7 = arith.addf %3, %6 : vector<16x128xf32>
    %c0_6 = arith.constant 0 : index
    %c0_7 = arith.constant 0 : index
    %8 = vector.load %arg6[%c0_6, %c0_7] : memref<16x128xf32, #tpu.memory_space<vmem>>, vector<16x128xf32>
    tpu.vector_store %arg6[%c0_6, %c0_7], %7 {strides = array<i32>} : memref<16x128xf32, #tpu.memory_space<vmem>>, vector<16x128xf32>,
    %c0_i32_8 = arith.constant 0 : i32
    %9 = arith.cmpi eq, %arg1, %c0_i32_8 : i32
    %10 = arith.extui %9 : i1 to i32
    %c0_i32_9 = arith.constant 0 : i32
    %11 = arith.cmpi ne, %10, %c0_i32_9 : i32
    scf.if %11 {
      %c0_10 = arith.constant 0 : index
      %c0_11 = arith.constant 0 : index
      %12 = vector.load %arg6[%c0_10, %c0_11] : memref<16x128xf32, #tpu.memory_space<vmem>>, vector<16x128xf32>
      %c0_12 = arith.constant 0 : index
      %c0_13 = arith.constant 0 : index
      %13 = vector.load %arg4[%c0_12, %c0_13] : memref<1x128xf32, #tpu.memory_space<vmem>>, vector<1x128xf32>
      %14 = vector.broadcast %13 : vector<1x128xf32> to vector<16x128xf32>
      %15 = arith.addf %12, %14 : vector<16x128xf32>
      %16 = arith.truncf %15 : vector<16x128xf32> to vector<16x128xbf16>
      %c0_14 = arith.constant 0 : index
      %c0_15 = arith.constant 0 : index
      %17 = vector.load %arg5[%c0_14, %c0_15] : memref<16x128xbf16, #tpu.memory_space<vmem>>, vector<16x128xbf16>
      tpu.vector_store %arg5[%c0_14, %c0_15], %16 {strides = array<i32>} : memref<16x128xbf16, #tpu.memory_space<vmem>>, vector<16x128xbf16>,
    } else {
    }
    return
  }
  func.func @transform_0(%arg0: i32, %arg1: i32) -> (i32, i32) {
    %c0_i32 = arith.constant 0 : i32
    return %arg0, %arg1 : i32, i32
  }
  func.func @transform_1(%arg0: i32, %arg1: i32) -> (i32, i32) {
    %c0_i32 = arith.constant 0 : i32
    %c0_i32_0 = arith.constant 0 : i32
    return %arg1, %c0_i32 : i32, i32
  }
  func.func @transform_2(%arg0: i32, %arg1: i32) -> (i32, i32) {
    %c0_i32 = arith.constant 0 : i32
    %c0_i32_0 = arith.constant 0 : i32
    %c0_i32_1 = arith.constant 0 : i32
    return %c0_i32, %c0_i32_0 : i32, i32
  }
  func.func @transform_3(%arg0: i32, %arg1: i32) -> (i32, i32) {
    %c0_i32 = arith.constant 0 : i32
    %c0_i32_0 = arith.constant 0 : i32
    return %arg0, %c0_i32 : i32, i32
  }
}

module attributes {stable_mosaic.version = 11 : i64} {
  func.func @_linear_kernel(%arg0: i32, %arg1: i32, %arg2: memref<16x192xbf16, #tpu.memory_space<vmem>>, %arg3: memref<192x64xbf16, #tpu.memory_space<vmem>>, %arg4: memref<1x64xf32, #tpu.memory_space<vmem>>, %arg5: memref<1x64xf32, #tpu.memory_space<vmem>>, %arg6: memref<1x64xf32, #tpu.memory_space<vmem>>, %arg7: memref<16x64xbf16, #tpu.memory_space<vmem>>, %arg8: memref<16x64xf32, #tpu.memory_space<vmem>>) attributes {dimension_semantics = [#tpu.dimension_semantics<parallel>, #tpu.dimension_semantics<arbitrary>], iteration_bounds = array<i64: 1, 1>, scalar_prefetch = 0 : i64, scratch_operands = 1 : i64, tpu.core_type = #tpu.core_type<tc>, window_params = [{transform_indices = @transform_0, window_bounds = array<i64: 16, 192>}, {transform_indices = @transform_1, window_bounds = array<i64: 192, 64>}, {pipeline_mode = #tpu.pipeline_mode<synchronous>, transform_indices = @transform_2, window_bounds = array<i64: 1, 64>}, {pipeline_mode = #tpu.pipeline_mode<synchronous>, transform_indices = @transform_3, window_bounds = array<i64: 1, 64>}, {pipeline_mode = #tpu.pipeline_mode<synchronous>, transform_indices = @transform_4, window_bounds = array<i64: 1, 64>}, {transform_indices = @transform_5, window_bounds = array<i64: 16, 64>}]} {
    %c0_i32 = arith.constant 0 : i32
    %0 = arith.cmpi eq, %arg1, %c0_i32 : i32
    %1 = arith.extui %0 : i1 to i32
    %c0_i32_0 = arith.constant 0 : i32
    %2 = arith.cmpi ne, %1, %c0_i32_0 : i32
    scf.if %2 {
      %cst_10 = arith.constant 0.000000e+00 : f32
      %12 = vector.broadcast %cst_10 : f32 to vector<16x64xf32>
      %c0_11 = arith.constant 0 : index
      %c0_12 = arith.constant 0 : index
      %13 = vector.load %arg8[%c0_11, %c0_12] : memref<16x64xf32, #tpu.memory_space<vmem>>, vector<16x64xf32>
      tpu.vector_store %arg8[%c0_11, %c0_12], %12 {strides = array<i32>} : memref<16x64xf32, #tpu.memory_space<vmem>>, vector<16x64xf32>,
    } else {
    }
    %c0 = arith.constant 0 : index
    %c0_1 = arith.constant 0 : index
    %3 = vector.load %arg8[%c0, %c0_1] : memref<16x64xf32, #tpu.memory_space<vmem>>, vector<16x64xf32>
    %c0_2 = arith.constant 0 : index
    %c0_3 = arith.constant 0 : index
    %4 = vector.load %arg2[%c0_2, %c0_3] : memref<16x192xbf16, #tpu.memory_space<vmem>>, vector<16x192xbf16>
    %c0_4 = arith.constant 0 : index
    %c0_5 = arith.constant 0 : index
    %5 = vector.load %arg3[%c0_4, %c0_5] : memref<192x64xbf16, #tpu.memory_space<vmem>>, vector<192x64xbf16>
    %cst = arith.constant dense<0.000000e+00> : vector<16x64xf32>
    %6 = tpu.matmul %4, %5, %cst {dimension_numbers = #tpu.dot_dimension_numbers<[1], [0], [0], [1], [0, 0, 1, 1], [], []>} : vector<16x192xbf16>, vector<192x64xbf16>, vector<16x64xf32> -> vector<16x64xf32>
    %7 = arith.addf %3, %6 : vector<16x64xf32>
    %c0_6 = arith.constant 0 : index
    %c0_7 = arith.constant 0 : index
    %8 = vector.load %arg8[%c0_6, %c0_7] : memref<16x64xf32, #tpu.memory_space<vmem>>, vector<16x64xf32>
    tpu.vector_store %arg8[%c0_6, %c0_7], %7 {strides = array<i32>} : memref<16x64xf32, #tpu.memory_space<vmem>>, vector<16x64xf32>,
    %c0_i32_8 = arith.constant 0 : i32
    %9 = arith.cmpi eq, %arg1, %c0_i32_8 : i32
    %10 = arith.extui %9 : i1 to i32
    %c0_i32_9 = arith.constant 0 : i32
    %11 = arith.cmpi ne, %10, %c0_i32_9 : i32
    scf.if %11 {
      %c0_10 = arith.constant 0 : index
      %c0_11 = arith.constant 0 : index
      %12 = vector.load %arg8[%c0_10, %c0_11] : memref<16x64xf32, #tpu.memory_space<vmem>>, vector<16x64xf32>
      %c0_12 = arith.constant 0 : index
      %c0_13 = arith.constant 0 : index
      %13 = vector.load %arg4[%c0_12, %c0_13] : memref<1x64xf32, #tpu.memory_space<vmem>>, vector<1x64xf32>
      %14 = vector.broadcast %13 : vector<1x64xf32> to vector<16x64xf32>
      %15 = arith.addf %12, %14 : vector<16x64xf32>
      %c0_14 = arith.constant 0 : index
      %c0_15 = arith.constant 0 : index
      %16 = vector.load %arg5[%c0_14, %c0_15] : memref<1x64xf32, #tpu.memory_space<vmem>>, vector<1x64xf32>
      %c0_16 = arith.constant 0 : index
      %c0_17 = arith.constant 0 : index
      %17 = vector.load %arg6[%c0_16, %c0_17] : memref<1x64xf32, #tpu.memory_space<vmem>>, vector<1x64xf32>
      %cst_18 = arith.constant dense<0.000000e+00> : vector<16xf32>
      %18 = vector.multi_reduction <add>, %15, %cst_18 [1] : vector<16x64xf32> to vector<16xf32>
      %19 = vector.shape_cast %18 : vector<16xf32> to vector<16x1xf32>
      %cst_19 = arith.constant 6.400000e+01 : f32
      %20 = vector.broadcast %cst_19 : f32 to vector<16x1xf32>
      %21 = arith.divf %19, %20 : vector<16x1xf32>
      %22 = vector.broadcast %21 : vector<16x1xf32> to vector<16x64xf32>
      %23 = arith.subf %15, %22 : vector<16x64xf32>
      %24 = arith.mulf %23, %23 : vector<16x64xf32>
      %cst_20 = arith.constant dense<0.000000e+00> : vector<16xf32>
      %25 = vector.multi_reduction <add>, %24, %cst_20 [1] : vector<16x64xf32> to vector<16xf32>
      %26 = vector.shape_cast %25 : vector<16xf32> to vector<16x1xf32>
      %cst_21 = arith.constant 6.400000e+01 : f32
      %27 = vector.broadcast %cst_21 : f32 to vector<16x1xf32>
      %28 = arith.divf %26, %27 : vector<16x1xf32>
      %29 = vector.broadcast %21 : vector<16x1xf32> to vector<16x64xf32>
      %30 = arith.subf %15, %29 : vector<16x64xf32>
      %cst_22 = arith.constant 9.99999974E-6 : f32
      %31 = vector.broadcast %cst_22 : f32 to vector<16x1xf32>
      %32 = arith.addf %28, %31 : vector<16x1xf32>
      %33 = math.rsqrt %32 : vector<16x1xf32>
      %34 = vector.broadcast %33 : vector<16x1xf32> to vector<16x64xf32>
      %35 = arith.mulf %30, %34 : vector<16x64xf32>
      %36 = vector.broadcast %16 : vector<1x64xf32> to vector<16x64xf32>
      %37 = arith.mulf %35, %36 : vector<16x64xf32>
      %38 = vector.broadcast %17 : vector<1x64xf32> to vector<16x64xf32>
      %39 = arith.addf %37, %38 : vector<16x64xf32>
      %cst_23 = arith.constant 0.000000e+00 : f32
      %40 = vector.broadcast %cst_23 : f32 to vector<16x64xf32>
      %41 = arith.maximumf %39, %40 : vector<16x64xf32>
      %42 = arith.truncf %41 : vector<16x64xf32> to vector<16x64xbf16>
      %c0_24 = arith.constant 0 : index
      %c0_25 = arith.constant 0 : index
      %43 = vector.load %arg7[%c0_24, %c0_25] : memref<16x64xbf16, #tpu.memory_space<vmem>>, vector<16x64xbf16>
      tpu.vector_store %arg7[%c0_24, %c0_25], %42 {strides = array<i32>} : memref<16x64xbf16, #tpu.memory_space<vmem>>, vector<16x64xbf16>,
    } else {
    }
    return
  }
  func.func @transform_0(%arg0: i32, %arg1: i32) -> (i32, i32) {
    %c0_i32 = arith.constant 0 : i32
    return %arg0, %arg1 : i32, i32
  }
  func.func @transform_1(%arg0: i32, %arg1: i32) -> (i32, i32) {
    %c0_i32 = arith.constant 0 : i32
    %c0_i32_0 = arith.constant 0 : i32
    return %arg1, %c0_i32 : i32, i32
  }
  func.func @transform_2(%arg0: i32, %arg1: i32) -> (i32, i32) {
    %c0_i32 = arith.constant 0 : i32
    %c0_i32_0 = arith.constant 0 : i32
    %c0_i32_1 = arith.constant 0 : i32
    return %c0_i32, %c0_i32_0 : i32, i32
  }
  func.func @transform_3(%arg0: i32, %arg1: i32) -> (i32, i32) {
    %c0_i32 = arith.constant 0 : i32
    %c0_i32_0 = arith.constant 0 : i32
    %c0_i32_1 = arith.constant 0 : i32
    return %c0_i32, %c0_i32_0 : i32, i32
  }
  func.func @transform_4(%arg0: i32, %arg1: i32) -> (i32, i32) {
    %c0_i32 = arith.constant 0 : i32
    %c0_i32_0 = arith.constant 0 : i32
    %c0_i32_1 = arith.constant 0 : i32
    return %c0_i32, %c0_i32_0 : i32, i32
  }
  func.func @transform_5(%arg0: i32, %arg1: i32) -> (i32, i32) {
    %c0_i32 = arith.constant 0 : i32
    %c0_i32_0 = arith.constant 0 : i32
    return %arg0, %c0_i32 : i32, i32
  }
}

module attributes {stable_mosaic.version = 11 : i64} {
  func.func @_attention_kernel(%arg0: i32, %arg1: memref<1x4x8x16xbf16, #tpu.memory_space<vmem>>, %arg2: memref<1x4x8x16xbf16, #tpu.memory_space<vmem>>, %arg3: memref<1x4x8x16xbf16, #tpu.memory_space<vmem>>, %arg4: memref<1x1x8xf32, #tpu.memory_space<vmem>>, %arg5: memref<1x4x8x16xbf16, #tpu.memory_space<vmem>>) attributes {dimension_semantics = [#tpu.dimension_semantics<parallel>], iteration_bounds = array<i64: 2>, scalar_prefetch = 0 : i64, scratch_operands = 0 : i64, tpu.core_type = #tpu.core_type<tc>, window_params = [{transform_indices = @transform_0, window_bounds = array<i64: 1, 4, 8, 16>}, {transform_indices = @transform_1, window_bounds = array<i64: 1, 4, 8, 16>}, {transform_indices = @transform_2, window_bounds = array<i64: 1, 4, 8, 16>}, {transform_indices = @transform_3, window_bounds = array<i64: 1, 1, 8>}, {transform_indices = @transform_4, window_bounds = array<i64: 1, 4, 8, 16>}]} {
    %c0 = arith.constant 0 : index
    %c0_0 = arith.constant 0 : index
    %c0_1 = arith.constant 0 : index
    %c0_2 = arith.constant 0 : index
    %0 = vector.load %arg1[%c0, %c0_0, %c0_1, %c0_2] : memref<1x4x8x16xbf16, #tpu.memory_space<vmem>>, vector<1x4x8x16xbf16>
    %1 = vector.shape_cast %0 : vector<1x4x8x16xbf16> to vector<4x8x16xbf16>
    %c0_3 = arith.constant 0 : index
    %c0_4 = arith.constant 0 : index
    %c0_5 = arith.constant 0 : index
    %c0_6 = arith.constant 0 : index
    %2 = vector.load %arg2[%c0_3, %c0_4, %c0_5, %c0_6] : memref<1x4x8x16xbf16, #tpu.memory_space<vmem>>, vector<1x4x8x16xbf16>
    %3 = vector.shape_cast %2 : vector<1x4x8x16xbf16> to vector<4x8x16xbf16>
    %c0_7 = arith.constant 0 : index
    %c0_8 = arith.constant 0 : index
    %c0_9 = arith.constant 0 : index
    %c0_10 = arith.constant 0 : index
    %4 = vector.load %arg3[%c0_7, %c0_8, %c0_9, %c0_10] : memref<1x4x8x16xbf16, #tpu.memory_space<vmem>>, vector<1x4x8x16xbf16>
    %5 = vector.shape_cast %4 : vector<1x4x8x16xbf16> to vector<4x8x16xbf16>
    "tpu.trace_start"() <{level = 10 : i32, message = "hqd,hkd->hqk"}> : () -> ()
    %cst = arith.constant dense<0.000000e+00> : vector<4x8x8xf32>
    %6 = tpu.matmul %1, %3, %cst {dimension_numbers = #tpu.dot_dimension_numbers<[2], [2], [1], [1], [0, 0, 0, 1, 1, 1], [0], [0]>} : vector<4x8x16xbf16>, vector<4x8x16xbf16>, vector<4x8x8xf32> -> vector<4x8x8xf32>
    "tpu.trace_stop"() : () -> ()
    %cst_11 = arith.constant 2.500000e-01 : f32
    %7 = vector.broadcast %cst_11 : f32 to vector<4x8x8xf32>
    %8 = arith.mulf %6, %7 : vector<4x8x8xf32>
    %c0_12 = arith.constant 0 : index
    %c0_13 = arith.constant 0 : index
    %c0_14 = arith.constant 0 : index
    %9 = vector.load %arg4[%c0_12, %c0_13, %c0_14] : memref<1x1x8xf32, #tpu.memory_space<vmem>>, vector<1x1x8xf32>
    %10 = vector.broadcast %9 : vector<1x1x8xf32> to vector<4x8x8xf32>
    %11 = arith.addf %8, %10 : vector<4x8x8xf32>
    %12 = tpu.iota {dimensions = array<i32: 0>} : vector<8x8xi32>
    %13 = tpu.iota {dimensions = array<i32: 1>} : vector<8x8xi32>
    %14 = arith.cmpi sgt, %13, %12 : vector<8x8xi32>
    %cst_15 = arith.constant -1.000000e+09 : f32
    %cst_16 = arith.constant 0.000000e+00 : f32
    %15 = vector.broadcast %cst_15 : f32 to vector<8x8xf32>
    %16 = vector.broadcast %cst_16 : f32 to vector<8x8xf32>
    %17 = arith.select %14, %15, %16 : vector<8x8xi1>, vector<8x8xf32>
    %18 = vector.shape_cast %17 : vector<8x8xf32> to vector<1x8x8xf32>
    %19 = vector.broadcast %18 : vector<1x8x8xf32> to vector<4x8x8xf32>
    %20 = arith.addf %11, %19 : vector<4x8x8xf32>
    %cst_17 = arith.constant dense<0xFF800000> : vector<4x8xf32>
    %21 = vector.multi_reduction <maximumf>, %20, %cst_17 [2] : vector<4x8x8xf32> to vector<4x8xf32>
    %22 = vector.shape_cast %21 : vector<4x8xf32> to vector<4x8x1xf32>
    %23 = vector.broadcast %22 : vector<4x8x1xf32> to vector<4x8x8xf32>
    %24 = arith.subf %20, %23 : vector<4x8x8xf32>
    %25 = math.exp %24 : vector<4x8x8xf32>
    %cst_18 = arith.constant dense<0.000000e+00> : vector<4x8xf32>
    %26 = vector.multi_reduction <add>, %25, %cst_18 [2] : vector<4x8x8xf32> to vector<4x8xf32>
    %27 = vector.shape_cast %26 : vector<4x8xf32> to vector<4x8x1xf32>
    %28 = tpu.reciprocal %27 {approx = true} : vector<4x8x1xf32> -> vector<4x8x1xf32>
    %29 = vector.broadcast %28 : vector<4x8x1xf32> to vector<4x8x8xf32>
    %30 = arith.mulf %25, %29 : vector<4x8x8xf32>
    %31 = arith.truncf %30 : vector<4x8x8xf32> to vector<4x8x8xbf16>
    "tpu.trace_start"() <{level = 10 : i32, message = "hqk,hkd->hqd"}> : () -> ()
    %cst_19 = arith.constant dense<0.000000e+00> : vector<4x8x16xf32>
    %32 = tpu.matmul %31, %5, %cst_19 {dimension_numbers = #tpu.dot_dimension_numbers<[2], [1], [1], [2], [0, 0, 0, 1, 1, 2], [0], [0]>} : vector<4x8x8xbf16>, vector<4x8x16xbf16>, vector<4x8x16xf32> -> vector<4x8x16xf32>
    "tpu.trace_stop"() : () -> ()
    %33 = arith.truncf %32 : vector<4x8x16xf32> to vector<4x8x16xbf16>
    %c0_20 = arith.constant 0 : index
    %c0_21 = arith.constant 0 : index
    %c0_22 = arith.constant 0 : index
    %c0_23 = arith.constant 0 : index
    %34 = vector.load %arg5[%c0_20, %c0_21, %c0_22, %c0_23] : memref<1x4x8x16xbf16, #tpu.memory_space<vmem>>, vector<1x4x8x16xbf16>
    %35 = vector.shape_cast %34 : vector<1x4x8x16xbf16> to vector<4x8x16xbf16>
    %36 = vector.shape_cast %33 : vector<4x8x16xbf16> to vector<1x4x8x16xbf16>
    tpu.vector_store %arg5[%c0_20, %c0_21, %c0_22, %c0_23], %36 {strides = array<i32>} : memref<1x4x8x16xbf16, #tpu.memory_space<vmem>>, vector<1x4x8x16xbf16>,
    return
  }
  func.func @transform_0(%arg0: i32) -> (i32, i32, i32, i32) {
    %c0_i32 = arith.constant 0 : i32
    %c0_i32_0 = arith.constant 0 : i32
    %c0_i32_1 = arith.constant 0 : i32
    %c0_i32_2 = arith.constant 0 : i32
    return %arg0, %c0_i32, %c0_i32_0, %c0_i32_1 : i32, i32, i32, i32
  }
  func.func @transform_1(%arg0: i32) -> (i32, i32, i32, i32) {
    %c0_i32 = arith.constant 0 : i32
    %c0_i32_0 = arith.constant 0 : i32
    %c0_i32_1 = arith.constant 0 : i32
    %c0_i32_2 = arith.constant 0 : i32
    return %arg0, %c0_i32, %c0_i32_0, %c0_i32_1 : i32, i32, i32, i32
  }
  func.func @transform_2(%arg0: i32) -> (i32, i32, i32, i32) {
    %c0_i32 = arith.constant 0 : i32
    %c0_i32_0 = arith.constant 0 : i32
    %c0_i32_1 = arith.constant 0 : i32
    %c0_i32_2 = arith.constant 0 : i32
    return %arg0, %c0_i32, %c0_i32_0, %c0_i32_1 : i32, i32, i32, i32
  }
  func.func @transform_3(%arg0: i32) -> (i32, i32, i32) {
    %c0_i32 = arith.constant 0 : i32
    %c0_i32_0 = arith.constant 0 : i32
    %c0_i32_1 = arith.constant 0 : i32
    return %arg0, %c0_i32, %c0_i32_0 : i32, i32, i32
  }
  func.func @transform_4(%arg0: i32) -> (i32, i32, i32, i32) {
    %c0_i32 = arith.constant 0 : i32
    %c0_i32_0 = arith.constant 0 : i32
    %c0_i32_1 = arith.constant 0 : i32
    %c0_i32_2 = arith.constant 0 : i32
    return %arg0, %c0_i32, %c0_i32_0, %c0_i32_1 : i32, i32, i32, i32
  }
}

module attributes {stable_mosaic.version = 11 : i64} {
  func.func @_layernorm_kernel(%arg0: i32, %arg1: memref<16x64xbf16, #tpu.memory_space<vmem>>, %arg2: memref<1x64xf32, #tpu.memory_space<vmem>>, %arg3: memref<1x64xf32, #tpu.memory_space<vmem>>, %arg4: memref<16x64xf32, #tpu.memory_space<vmem>>) attributes {dimension_semantics = [#tpu.dimension_semantics<parallel>], iteration_bounds = array<i64: 1>, scalar_prefetch = 0 : i64, scratch_operands = 0 : i64, tpu.core_type = #tpu.core_type<tc>, window_params = [{transform_indices = @transform_0, window_bounds = array<i64: 16, 64>}, {pipeline_mode = #tpu.pipeline_mode<synchronous>, transform_indices = @transform_1, window_bounds = array<i64: 1, 64>}, {pipeline_mode = #tpu.pipeline_mode<synchronous>, transform_indices = @transform_2, window_bounds = array<i64: 1, 64>}, {transform_indices = @transform_3, window_bounds = array<i64: 16, 64>}]} {
    %c0 = arith.constant 0 : index
    %c0_0 = arith.constant 0 : index
    %0 = vector.load %arg1[%c0, %c0_0] : memref<16x64xbf16, #tpu.memory_space<vmem>>, vector<16x64xbf16>
    %1 = arith.extf %0 : vector<16x64xbf16> to vector<16x64xf32>
    %c0_1 = arith.constant 0 : index
    %c0_2 = arith.constant 0 : index
    %2 = vector.load %arg2[%c0_1, %c0_2] : memref<1x64xf32, #tpu.memory_space<vmem>>, vector<1x64xf32>
    %c0_3 = arith.constant 0 : index
    %c0_4 = arith.constant 0 : index
    %3 = vector.load %arg3[%c0_3, %c0_4] : memref<1x64xf32, #tpu.memory_space<vmem>>, vector<1x64xf32>
    %cst = arith.constant dense<0.000000e+00> : vector<16xf32>
    %4 = vector.multi_reduction <add>, %1, %cst [1] : vector<16x64xf32> to vector<16xf32>
    %5 = vector.shape_cast %4 : vector<16xf32> to vector<16x1xf32>
    %cst_5 = arith.constant 6.400000e+01 : f32
    %6 = vector.broadcast %cst_5 : f32 to vector<16x1xf32>
    %7 = arith.divf %5, %6 : vector<16x1xf32>
    %8 = vector.broadcast %7 : vector<16x1xf32> to vector<16x64xf32>
    %9 = arith.subf %1, %8 : vector<16x64xf32>
    %10 = arith.mulf %9, %9 : vector<16x64xf32>
    %cst_6 = arith.constant dense<0.000000e+00> : vector<16xf32>
    %11 = vector.multi_reduction <add>, %10, %cst_6 [1] : vector<16x64xf32> to vector<16xf32>
    %12 = vector.shape_cast %11 : vector<16xf32> to vector<16x1xf32>
    %cst_7 = arith.constant 6.400000e+01 : f32
    %13 = vector.broadcast %cst_7 : f32 to vector<16x1xf32>
    %14 = arith.divf %12, %13 : vector<16x1xf32>
    %15 = vector.broadcast %7 : vector<16x1xf32> to vector<16x64xf32>
    %16 = arith.subf %1, %15 : vector<16x64xf32>
    %cst_8 = arith.constant 9.99999997E-7 : f32
    %17 = vector.broadcast %cst_8 : f32 to vector<16x1xf32>
    %18 = arith.addf %14, %17 : vector<16x1xf32>
    %19 = math.rsqrt %18 : vector<16x1xf32>
    %20 = vector.broadcast %19 : vector<16x1xf32> to vector<16x64xf32>
    %21 = arith.mulf %16, %20 : vector<16x64xf32>
    %22 = vector.broadcast %2 : vector<1x64xf32> to vector<16x64xf32>
    %23 = arith.mulf %21, %22 : vector<16x64xf32>
    %24 = vector.broadcast %3 : vector<1x64xf32> to vector<16x64xf32>
    %25 = arith.addf %23, %24 : vector<16x64xf32>
    %c0_9 = arith.constant 0 : index
    %c0_10 = arith.constant 0 : index
    %26 = vector.load %arg4[%c0_9, %c0_10] : memref<16x64xf32, #tpu.memory_space<vmem>>, vector<16x64xf32>
    tpu.vector_store %arg4[%c0_9, %c0_10], %25 {strides = array<i32>} : memref<16x64xf32, #tpu.memory_space<vmem>>, vector<16x64xf32>,
    return
  }
  func.func @transform_0(%arg0: i32) -> (i32, i32) {
    %c0_i32 = arith.constant 0 : i32
    %c0_i32_0 = arith.constant 0 : i32
    return %arg0, %c0_i32 : i32, i32
  }
  func.func @transform_1(%arg0: i32) -> (i32, i32) {
    %c0_i32 = arith.constant 0 : i32
    %c0_i32_0 = arith.constant 0 : i32
    %c0_i32_1 = arith.constant 0 : i32
    return %c0_i32, %c0_i32_0 : i32, i32
  }
  func.func @transform_2(%arg0: i32) -> (i32, i32) {
    %c0_i32 = arith.constant 0 : i32
    %c0_i32_0 = arith.constant 0 : i32
    %c0_i32_1 = arith.constant 0 : i32
    return %c0_i32, %c0_i32_0 : i32, i32
  }
  func.func @transform_3(%arg0: i32) -> (i32, i32) {
    %c0_i32 = arith.constant 0 : i32
    %c0_i32_0 = arith.constant 0 : i32
    return %arg0, %c0_i32 : i32, i32
  }
}

</mosaic_0001>

<llo_original>
// kernel: _lambda_.41
$region0: #{_lambda_.41}
  #allocation0 [shape = 'u32[]', space=smem, size = 0x4, offset = 0x4, fixed_abs, tag = 'smem constant byte address 0x4 - core index']
  #allocation1 [shape = 'u32[72,128]{1,0:T(1,128)}', space=vmem, size = 0x9000, scoped, tag = 'internal scratch']
  #allocation2 [shape = 'f32[256,8]{1,0:T(8,128)}', space=vmem, size = 0x20000, scoped, tag = 'scratch operand']
  %s0 = inlined_call_operand.vmem [shape: bf16[1024,9], index: 0, kind: input, shape index: {}]
  %s1 = inlined_call_operand.vmem [shape: bf16[9,8], index: 1, kind: input, shape index: {}]
  %s2 = inlined_call_operand.vmem [shape: f32[1,8], index: 2, kind: input, shape index: {}]
  %s3 = inlined_call_operand.vmem [shape: bf16[1024,8], index: 3, kind: output, shape index: {}]
  %s4 = sld [smem:[#allocation0]]
  $region53: #{_lambda_.41} parent=0
    _
  %s6 = ssub.s32 1, %s4
  %s7 = scalar_select 0, %s6, %s4
  loop: start=0, step=1, limit=6
  $region2: #{_lambda_.41} parent=0 // loop_pre_header
    _
  $region3: #{_lambda_.41} parent=0 // loop_header
    %s9 = sphi 0, %s13
    %p10 = scmp.ge.s32.totalorder %s9, 6
    %s16 = sphi 0, %s28
    %s17 = sphi 0, %s24
    %s18 = sphi 0, %s16
    %s19 = sphi 0, %s17
    %s20 = sphi 0, %s18
    %s21 = sphi 0, %s19
    %s33 = sphi 0, %s35
    %s36 = sphi 0, %s33
    %s37 = sphi 0, %s36
    %s53 = sphi 0, %s37
    %s59 = sphi 0, %s61
    %s62 = sphi 0, %s59
    %s63 = sphi 0, %s62
    %s79 = sphi 0, %s63
    %s83 = sphi 0, %s83
    %s85 = sphi 0, %s83
    %s86 = sphi 0, %s85
    %s100 = sphi 0, %s86
    %s106 = sphi 0, %s108
    %s109 = sphi 0, %s106
    %s110 = sphi 0, %s109
    %s126 = sphi 0, %s110
  $region4: #{_lambda_.41} parent=0 // loop_header_branch
    %12 = sbr.rel (%p10) target = $region8
  $region5: #{_lambda_.41} parent=0 // loop_body
    %s14 = ssub.s32 %s9, 1
    %s15 = ssub.s32 %s9, 2
    %s22 = sadd.s32 1, %s17
    %p23 = scmp.ge.s32.totalorder %s22, 1
    %s24 = scalar_select %p23, 0, %s22
    %s25 = sadd.s32 1, %s16
    %s26 = scalar_select %p23, %s25, %s16
    %p27 = scmp.ge.s32.totalorder %s26, 4
    %s28 = scalar_select %p27, 0, %s26
    %s29 = ssub.s32 %s16, %s28
    %s30 = ssub.s32 %s17, %s24
    %s31 = sor.u32 %s29, %s30
    %p32 = scmp.eq.s32.totalorder %s31, 0
    %s34 = sadd.s32 %s33, 1
    %s35 = scalar_select %p32, %s33, %s34
    %p38 = pneg %p32
    %p39 = scmp.eq.s32.totalorder %s9, 3
    %p40 = por %p38, %p39
    %p41 = scmp.ne.s32.totalorder %s33, %s36
    %p42 = scmp.eq.s32.totalorder %s9, 0
    %p43 = por %p41, %p42
    %p44 = scmp.ne.s32.totalorder %s33, %s36
    %p45 = scmp.eq.s32.totalorder %s14, 3
    %p46 = por %p44, %p45
    %p47 = scmp.ne.s32.totalorder %s36, %s37
    %p48 = scmp.eq.s32.totalorder %s14, 0
    %p49 = por %p47, %p48
    %p50 = scmp.ne.s32.totalorder %s36, %s37
    %p51 = scmp.eq.s32.totalorder %s15, 3
    %p52 = por %p50, %p51
    %p54 = scmp.ne.s32.totalorder %s37, %s53
    %p55 = scmp.eq.s32.totalorder %s15, 0
    %p56 = por %p54, %p55
    %s57 = ssub.s32 %s17, %s24
    %p58 = scmp.eq.s32.totalorder %s57, 0
    %s60 = sadd.s32 %s59, 1
    %s61 = scalar_select %p58, %s59, %s60
    %p64 = pneg %p58
    %p65 = scmp.eq.s32.totalorder %s9, 3
    %p66 = por %p64, %p65
    %p67 = scmp.ne.s32.totalorder %s59, %s62
    %p68 = scmp.eq.s32.totalorder %s9, 0
    %p69 = por %p67, %p68
    %p70 = scmp.ne.s32.totalorder %s59, %s62
    %p71 = scmp.eq.s32.totalorder %s14, 3
    %p72 = por %p70, %p71
    %p73 = scmp.ne.s32.totalorder %s62, %s63
    %p74 = scmp.eq.s32.totalorder %s14, 0
    %p75 = por %p73, %p74
    %p76 = scmp.ne.s32.totalorder %s62, %s63
    %p77 = scmp.eq.s32.totalorder %s15, 3
    %p78 = por %p76, %p77
    %p80 = scmp.ne.s32.totalorder %s63, %s79
    %p81 = scmp.eq.s32.totalorder %s15, 0
    %p82 = por %p80, %p81
    %s84 = sadd.s32 %s83, 1
    %p87 = scmp.eq.s32.totalorder %s9, 3
    %p88 = scmp.ne.s32.totalorder %s83, %s85
    %p89 = scmp.eq.s32.totalorder %s9, 0
    %p90 = por %p88, %p89
    %p91 = scmp.ne.s32.totalorder %s83, %s85
    %p92 = scmp.eq.s32.totalorder %s14, 3
    %p93 = por %p91, %p92
    %p94 = scmp.ne.s32.totalorder %s85, %s86
    %p95 = scmp.eq.s32.totalorder %s14, 0
    %p96 = por %p94, %p95
    %p97 = scmp.ne.s32.totalorder %s85, %s86
    %p98 = scmp.eq.s32.totalorder %s15, 3
    %p99 = por %p97, %p98
    %p101 = scmp.ne.s32.totalorder %s86, %s100
    %p102 = scmp.eq.s32.totalorder %s15, 0
    %p103 = por %p101, %p102
    %s104 = ssub.s32 %s16, %s28
    %p105 = scmp.eq.s32.totalorder %s104, 0
    %s107 = sadd.s32 %s106, 1
    %s108 = scalar_select %p105, %s106, %s107
    %p111 = pneg %p105
    %p112 = scmp.eq.s32.totalorder %s9, 3
    %p113 = por %p111, %p112
    %p114 = scmp.ne.s32.totalorder %s106, %s109
    %p115 = scmp.eq.s32.totalorder %s9, 0
    %p116 = por %p114, %p115
    %p117 = scmp.ne.s32.totalorder %s106, %s109
    %p118 = scmp.eq.s32.totalorder %s14, 3
    %p119 = por %p117, %p118
    %p120 = scmp.ne.s32.totalorder %s109, %s110
    %p121 = scmp.eq.s32.totalorder %s14, 0
    %p122 = por %p120, %p121
    %p123 = scmp.ne.s32.totalorder %s109, %s110
    %p124 = scmp.eq.s32.totalorder %s15, 3
    %p125 = por %p123, %p124
    %p127 = scmp.ne.s32.totalorder %s110, %s126
    %p128 = scmp.eq.s32.totalorder %s15, 0
    %p129 = por %p127, %p128
    %p130 = scmp.le.s32.totalorder 1, %s9
    %p131 = scmp.lt.s32.totalorder %s9, 5
    %p132 = pnand %p130, %p131
    %p133 = pneg %p132
    // Predicated region
    $region9: #{_lambda_.41} parent=5 // pred_check
      _
    $region10: #{_lambda_.41} parent=5 // pred_check_branch
      %135 = sbr.rel (%p132) target = $region12
    $region11: #{_lambda_.41} parent=5 // pred_region
      %s136 = ssub.s32 %s9, 1
      // Predicated region
      $region13: #{_lambda_.41} parent=11 // pred_check
        %p137 = pneg %p75
      $region14: #{_lambda_.41} parent=11 // pred_check_branch
        %139 = sbr.rel (%p137) target = $region16
      $region15: #{_lambda_.41} parent=11 // pred_region
        %s140 = smul.u32 2, %s19
        %p141 = scmp.lt.s32.totalorder %s140, 1
        %s142 = scalar_select %p141, %s140, 1
        %s143 = smul.addr %s142, 4
        %s144 = scalar_lea.vmem %s1, %s143
        %s145 = smul.u32 2, %s19
      $region16: #{_lambda_.41} parent=11 // pred_fallthru
        _
      // Predicated region
      $region17: #{_lambda_.41} parent=11 // pred_check
        %p146 = pneg %p96
      $region18: #{_lambda_.41} parent=11 // pred_check_branch
        %148 = sbr.rel (%p146) target = $region20
      $region19: #{_lambda_.41} parent=11 // pred_region
        _
      $region20: #{_lambda_.41} parent=11 // pred_fallthru
        _
    $region12: #{_lambda_.41} parent=5 // pred_fallthru
      _
    %p149 = scmp.lt.s32.totalorder %s9, 4
    // Predicated region
    $region21: #{_lambda_.41} parent=5 // pred_check
      %p150 = pneg %p149
    $region22: #{_lambda_.41} parent=5 // pred_check_branch
      %152 = sbr.rel (%p150) target = $region24
    $region23: #{_lambda_.41} parent=5 // pred_region
      // Predicated region
      $region25: #{_lambda_.41} parent=23 // pred_check
        %p153 = pneg %p43
      $region26: #{_lambda_.41} parent=23 // pred_check_branch
        %155 = sbr.rel (%p153) target = $region28
      $region27: #{_lambda_.41} parent=23 // pred_region
        %s156 = smul.u32 32, %s16
        %p157 = scmp.lt.s32.totalorder %s156, 127
        %s158 = scalar_select %p157, %s156, 127
        %p159 = scmp.lt.s32.totalorder %s17, 0
        %s160 = scalar_select %p159, %s17, 0
        %s161 = sadd.s32 %s160, %s158
        %s162 = smul.addr %s161, 4
        %s163 = scalar_lea.vmem %s0, %s162
        %s164 = smul.u32 32, %s16
      $region28: #{_lambda_.41} parent=23 // pred_fallthru
        _
    $region24: #{_lambda_.41} parent=5 // pred_fallthru
      _
    %p165 = scmp.le.s32.totalorder 1, %s9
    %p166 = scmp.lt.s32.totalorder %s9, 5
    %p167 = pnand %p165, %p166
    %p168 = pneg %p167
    // Predicated region
    $region29: #{_lambda_.41} parent=5 // pred_check
      _
    $region30: #{_lambda_.41} parent=5 // pred_check_branch
      %170 = sbr.rel (%p167) target = $region32
    $region31: #{_lambda_.41} parent=5 // pred_region
      %s171 = ssub.s32 %s9, 1
      %s172 = smul.u32 32, %s18
      %p173 = scmp.lt.s32.totalorder %s172, 127
      %s174 = scalar_select %p173, %s172, 127
      %p175 = scmp.lt.s32.totalorder %s19, 0
      %s176 = scalar_select %p175, %s19, 0
      %s177 = sadd.s32 %s176, %s174
      %s178 = smul.addr %s177, 4
      %s179 = scalar_lea.vmem %s0, %s178
      %p180 = pneg %p49
      %p181 = pneg %p46
      %s182 = smul.u32 2, %s19
      %p183 = scmp.lt.s32.totalorder %s182, 1
      %s184 = scalar_select %p183, %s182, 1
      %s185 = smul.addr %s184, 4
      %s186 = scalar_lea.vmem %s1, %s185
      %p187 = pneg %p75
      %p188 = pneg %p72
      %p189 = pneg %p96
      %p190 = pneg %p93
      %p191 = pneg %p122
      %p192 = pneg %p119
      %s193 = smul.u32 32, %s18
      %p194 = scmp.lt.s32.totalorder %s193, 127
      %s195 = scalar_select %p194, %s193, 127
      %s196 = smul.addr %s195, 4
      %s197 = scalar_lea.vmem %s3, %s196
      %s198 = smul.u32 32, %s18
      %p199 = scmp.lt.s32.totalorder %s198, 127
      %s200 = scalar_select %p199, %s198, 127
      %p201 = scmp.lt.s32.totalorder %s19, 0
      %s202 = scalar_select %p201, %s19, 0
      %s203 = sadd.s32 %s202, %s200
      %s204 = smul.addr %s203, 4
      %s205 = scalar_lea.vmem %s0, %s204
      %s206 = smul.u32 32, %s18
      %s207 = smul.u32 2, %s19
      %p208 = scmp.lt.s32.totalorder %s207, 1
      %s209 = scalar_select %p208, %s207, 1
      %s210 = smul.addr %s209, 4
      %s211 = scalar_lea.vmem %s1, %s210
      %s212 = smul.u32 2, %s19
      %s213 = smul.u32 32, %s18
      %p214 = scmp.lt.s32.totalorder %s213, 127
      %s215 = scalar_select %p214, %s213, 127
      %s216 = smul.addr %s215, 4
      %s217 = scalar_lea.vmem %s3, %s216
      %s218 = smul.u32 32, %s18
      %p220 = scmp.eq.s32.totalorder %s19, 0
      // Predicated region
      $region33: #{_lambda_.41} parent=31 // pred_check
        %p221 = pneg %p220
      $region34: #{_lambda_.41} parent=31 // pred_check_branch
        %223 = sbr.rel (%p221) target = $region36
      $region35: #{_lambda_.41} parent=31 // pred_region
        %vm224 = vcmask 64512
        %225 = vst.msk [vmem:[#allocation2] sm:$0xff] %vm224, 0.0
        %226 = vst.msk [vmem:[#allocation2 + $0x8] sm:$0xff] %vm224, 0.0
        %227 = vst.msk [vmem:[#allocation2 + $0x10] sm:$0xff] %vm224, 0.0
        %228 = vst.msk [vmem:[#allocation2 + $0x18] sm:$0xff] %vm224, 0.0
        %229 = vst.msk [vmem:[#allocation2 + $0x20] sm:$0xff] %vm224, 0.0
        %230 = vst.msk [vmem:[#allocation2 + $0x28] sm:$0xff] %vm224, 0.0
        %231 = vst.msk [vmem:[#allocation2 + $0x30] sm:$0xff] %vm224, 0.0
        %232 = vst.msk [vmem:[#allocation2 + $0x38] sm:$0xff] %vm224, 0.0
        %233 = vst.msk [vmem:[#allocation2 + $0x40] sm:$0xff] %vm224, 0.0
        %234 = vst.msk [vmem:[#allocation2 + $0x48] sm:$0xff] %vm224, 0.0
        %235 = vst.msk [vmem:[#allocation2 + $0x50] sm:$0xff] %vm224, 0.0
        %236 = vst.msk [vmem:[#allocation2 + $0x58] sm:$0xff] %vm224, 0.0
        %237 = vst.msk [vmem:[#allocation2 + $0x60] sm:$0xff] %vm224, 0.0
        %238 = vst.msk [vmem:[#allocation2 + $0x68] sm:$0xff] %vm224, 0.0
        %239 = vst.msk [vmem:[#allocation2 + $0x70] sm:$0xff] %vm224, 0.0
        %240 = vst.msk [vmem:[#allocation2 + $0x78] sm:$0xff] %vm224, 0.0
        %241 = vst.msk [vmem:[#allocation2 + $0x80] sm:$0xff] %vm224, 0.0
        %242 = vst.msk [vmem:[#allocation2 + $0x88] sm:$0xff] %vm224, 0.0
        %243 = vst.msk [vmem:[#allocation2 + $0x90] sm:$0xff] %vm224, 0.0
        %244 = vst.msk [vmem:[#allocation2 + $0x98] sm:$0xff] %vm224, 0.0
        %245 = vst.msk [vmem:[#allocation2 + $0xa0] sm:$0xff] %vm224, 0.0
        %246 = vst.msk [vmem:[#allocation2 + $0xa8] sm:$0xff] %vm224, 0.0
        %247 = vst.msk [vmem:[#allocation2 + $0xb0] sm:$0xff] %vm224, 0.0
        %248 = vst.msk [vmem:[#allocation2 + $0xb8] sm:$0xff] %vm224, 0.0
        %249 = vst.msk [vmem:[#allocation2 + $0xc0] sm:$0xff] %vm224, 0.0
        %250 = vst.msk [vmem:[#allocation2 + $0xc8] sm:$0xff] %vm224, 0.0
        %251 = vst.msk [vmem:[#allocation2 + $0xd0] sm:$0xff] %vm224, 0.0
        %252 = vst.msk [vmem:[#allocation2 + $0xd8] sm:$0xff] %vm224, 0.0
        %253 = vst.msk [vmem:[#allocation2 + $0xe0] sm:$0xff] %vm224, 0.0
        %254 = vst.msk [vmem:[#allocation2 + $0xe8] sm:$0xff] %vm224, 0.0
        %255 = vst.msk [vmem:[#allocation2 + $0xf0] sm:$0xff] %vm224, 0.0
        %256 = vst.msk [vmem:[#allocation2 + $0xf8] sm:$0xff] %vm224, 0.0
      $region36: #{_lambda_.41} parent=31 // pred_fallthru
        _
      %v257 = vld [vmem:[#allocation2] sm:$0xff]
      %v258 = vld [vmem:[#allocation2 + $0x8] sm:$0xff]
      %v259 = vld [vmem:[#allocation2 + $0x10] sm:$0xff]
      %v260 = vld [vmem:[#allocation2 + $0x18] sm:$0xff]
      %v261 = vld [vmem:[#allocation2 + $0x20] sm:$0xff]
      %v262 = vld [vmem:[#allocation2 + $0x28] sm:$0xff]
      %v263 = vld [vmem:[#allocation2 + $0x30] sm:$0xff]
      %v264 = vld [vmem:[#allocation2 + $0x38] sm:$0xff]
      %v265 = vld [vmem:[#allocation2 + $0x40] sm:$0xff]
      %v266 = vld [vmem:[#allocation2 + $0x48] sm:$0xff]
      %v267 = vld [vmem:[#allocation2 + $0x50] sm:$0xff]
      %v268 = vld [vmem:[#allocation2 + $0x58] sm:$0xff]
      %v269 = vld [vmem:[#allocation2 + $0x60] sm:$0xff]
      %v270 = vld [vmem:[#allocation2 + $0x68] sm:$0xff]
      %v271 = vld [vmem:[#allocation2 + $0x70] sm:$0xff]
      %v272 = vld [vmem:[#allocation2 + $0x78] sm:$0xff]
      %v273 = vld [vmem:[#allocation2 + $0x80] sm:$0xff]
      %v274 = vld [vmem:[#allocation2 + $0x88] sm:$0xff]
      %v275 = vld [vmem:[#allocation2 + $0x90] sm:$0xff]
      %v276 = vld [vmem:[#allocation2 + $0x98] sm:$0xff]
      %v277 = vld [vmem:[#allocation2 + $0xa0] sm:$0xff]
      %v278 = vld [vmem:[#allocation2 + $0xa8] sm:$0xff]
      %v279 = vld [vmem:[#allocation2 + $0xb0] sm:$0xff]
      %v280 = vld [vmem:[#allocation2 + $0xb8] sm:$0xff]
      %v281 = vld [vmem:[#allocation2 + $0xc0] sm:$0xff]
      %v282 = vld [vmem:[#allocation2 + $0xc8] sm:$0xff]
      %v283 = vld [vmem:[#allocation2 + $0xd0] sm:$0xff]
      %v284 = vld [vmem:[#allocation2 + $0xd8] sm:$0xff]
      %v285 = vld [vmem:[#allocation2 + $0xe0] sm:$0xff]
      %v286 = vld [vmem:[#allocation2 + $0xe8] sm:$0xff]
      %v287 = vld [vmem:[#allocation2 + $0xf0] sm:$0xff]
      %v288 = vld [vmem:[#allocation2 + $0xf8] sm:$0xff]
      %v289 = vld [vmem:[%s205] sm:$0xf]
      %v290 = vld [vmem:[%s205 + $0x4] sm:$0xf]
      %v291 = vld [vmem:[%s205 + $0x8] sm:$0xf]
      %v292 = vld [vmem:[%s205 + $0xc] sm:$0xf]
      %v293 = vld [vmem:[%s205 + $0x10] sm:$0xf]
      %v294 = vld [vmem:[%s205 + $0x14] sm:$0xf]
      %v295 = vld [vmem:[%s205 + $0x18] sm:$0xf]
      %v296 = vld [vmem:[%s205 + $0x1c] sm:$0xf]
      %v297 = vld [vmem:[%s205 + $0x20] sm:$0xf]
      %v298 = vld [vmem:[%s205 + $0x24] sm:$0xf]
      %v299 = vld [vmem:[%s205 + $0x28] sm:$0xf]
      %v300 = vld [vmem:[%s205 + $0x2c] sm:$0xf]
      %v301 = vld [vmem:[%s205 + $0x30] sm:$0xf]
      %v302 = vld [vmem:[%s205 + $0x34] sm:$0xf]
      %v303 = vld [vmem:[%s205 + $0x38] sm:$0xf]
      %v304 = vld [vmem:[%s205 + $0x3c] sm:$0xf]
      %v305 = vld [vmem:[%s205 + $0x40] sm:$0xf]
      %v306 = vld [vmem:[%s205 + $0x44] sm:$0xf]
      %v307 = vld [vmem:[%s205 + $0x48] sm:$0xf]
      %v308 = vld [vmem:[%s205 + $0x4c] sm:$0xf]
      %v309 = vld [vmem:[%s205 + $0x50] sm:$0xf]
      %v310 = vld [vmem:[%s205 + $0x54] sm:$0xf]
      %v311 = vld [vmem:[%s205 + $0x58] sm:$0xf]
      %v312 = vld [vmem:[%s205 + $0x5c] sm:$0xf]
      %v313 = vld [vmem:[%s205 + $0x60] sm:$0xf]
      %v314 = vld [vmem:[%s205 + $0x64] sm:$0xf]
      %v315 = vld [vmem:[%s205 + $0x68] sm:$0xf]
      %v316 = vld [vmem:[%s205 + $0x6c] sm:$0xf]
      %v317 = vld [vmem:[%s205 + $0x70] sm:$0xf]
      %v318 = vld [vmem:[%s205 + $0x74] sm:$0xf]
      %v319 = vld [vmem:[%s205 + $0x78] sm:$0xf]
      %v320 = vld [vmem:[%s205 + $0x7c] sm:$0xf]
      %v321 = vld [vmem:[%s211] sm:$0xf]
      %v322 = vld [vmem:[%s211 + $0x4] sm:$0x1]
      %v355 = vunpack.c.l.b16 %v289
      %v356 = vunpack.c.l.b16 %v290
      %v357 = vunpack.c.l.b16 %v291
      %v358 = vunpack.c.l.b16 %v292
      %v359 = vunpack.c.l.b16 %v293
      %v360 = vunpack.c.l.b16 %v294
      %v361 = vunpack.c.l.b16 %v295
      %v362 = vunpack.c.l.b16 %v296
      %v363 = vunpack.c.l.b16 %v297
      %v364 = vunpack.c.l.b16 %v298
      %v365 = vunpack.c.l.b16 %v299
      %v366 = vunpack.c.l.b16 %v300
      %v367 = vunpack.c.l.b16 %v301
      %v368 = vunpack.c.l.b16 %v302
      %v369 = vunpack.c.l.b16 %v303
      %v370 = vunpack.c.l.b16 %v304
      %v371 = vunpack.c.l.b16 %v305
      %v372 = vunpack.c.l.b16 %v306
      %v373 = vunpack.c.l.b16 %v307
      %v374 = vunpack.c.l.b16 %v308
      %v375 = vunpack.c.l.b16 %v309
      %v376 = vunpack.c.l.b16 %v310
      %v377 = vunpack.c.l.b16 %v311
      %v378 = vunpack.c.l.b16 %v312
      %v379 = vunpack.c.l.b16 %v313
      %v380 = vunpack.c.l.b16 %v314
      %v381 = vunpack.c.l.b16 %v315
      %v382 = vunpack.c.l.b16 %v316
      %v383 = vunpack.c.l.b16 %v317
      %v384 = vunpack.c.l.b16 %v318
      %v385 = vunpack.c.l.b16 %v319
      %v386 = vunpack.c.l.b16 %v320
      %v387 = vpack.c.b16 %v356, %v355
      %v388 = vpack.c.b16 %v358, %v357
      %v389 = vpack.c.b16 %v360, %v359
      %v390 = vpack.c.b16 %v362, %v361
      %v391 = vpack.c.b16 %v364, %v363
      %v392 = vpack.c.b16 %v366, %v365
      %v393 = vpack.c.b16 %v368, %v367
      %v394 = vpack.c.b16 %v370, %v369
      %v395 = vpack.c.b16 %v372, %v371
      %v396 = vpack.c.b16 %v374, %v373
      %v397 = vpack.c.b16 %v376, %v375
      %v398 = vpack.c.b16 %v378, %v377
      %v399 = vpack.c.b16 %v380, %v379
      %v400 = vpack.c.b16 %v382, %v381
      %v401 = vpack.c.b16 %v384, %v383
      %v402 = vpack.c.b16 %v386, %v385
      %v405 = vunpack.c.l.b16 %v321
      %v406 = vunpack.c.l.b16 %v322
      %v407 = vpack.c.b16 %v406, %v405
      %vm408 = vcmask 72704
      %v410 = vsel %vm408, %v387, 0
      %v413 = vsel %vm408, %v388, 0
      %v416 = vsel %vm408, %v389, 0
      %v419 = vsel %vm408, %v390, 0
      %v422 = vsel %vm408, %v391, 0
      %v425 = vsel %vm408, %v392, 0
      %v428 = vsel %vm408, %v393, 0
      %v431 = vsel %vm408, %v394, 0
      %v434 = vsel %vm408, %v395, 0
      %v437 = vsel %vm408, %v396, 0
      %v440 = vsel %vm408, %v397, 0
      %v443 = vsel %vm408, %v398, 0
      %v446 = vsel %vm408, %v399, 0
      %v449 = vsel %vm408, %v400, 0
      %v452 = vsel %vm408, %v401, 0
      %v455 = vsel %vm408, %v402, 0
      %vm457 = vcmask 1043456
      %vm458 = vcmask 1044480
      %v459 = vsel %vm457, 4294967295, 65535
      %v460 = vsel %vm458, %v459, 0
      %v462 = vand.u32 %v407, %v460
      %464 = vmatpush.bf16.msra.mxu0 0
      %465 = vmatpush.bf16.msra.mxu0 0
      %466 = vmatpush.bf16.msra.mxu0 0
      %467 = vmatpush.bf16.msra.mxu0 0
      %468 = vmatpush.bf16.msra.mxu0 0
      %469 = vmatpush.bf16.msra.mxu0 0
      %470 = vmatpush.bf16.msra.mxu0 0
      %471 = vmatpush.bf16.msra.mxu0 %v462
      %472 = vmatmul.bf16.gmra.mxu0 %v410
      %v473 = vpop.f32.mrf.mxu0
      %v474 = vadd.f32 0.0, %v473
      %v475 = vpop.f32.mrf.mxu0
      %v476 = vadd.f32 0.0, %v475
      %477 = vmatmul.bf16.gmra.mxu0 %v413
      %v478 = vpop.f32.mrf.mxu0
      %v479 = vadd.f32 0.0, %v478
      %v480 = vpop.f32.mrf.mxu0
      %v481 = vadd.f32 0.0, %v480
      %482 = vmatmul.bf16.gmra.mxu0 %v416
      %v483 = vpop.f32.mrf.mxu0
      %v484 = vadd.f32 0.0, %v483
      %v485 = vpop.f32.mrf.mxu0
      %v486 = vadd.f32 0.0, %v485
      %487 = vmatmul.bf16.gmra.mxu0 %v419
      %v488 = vpop.f32.mrf.mxu0
      %v489 = vadd.f32 0.0, %v488
      %v490 = vpop.f32.mrf.mxu0
      %v491 = vadd.f32 0.0, %v490
      %492 = vmatmul.bf16.gmra.mxu0 %v422
      %v493 = vpop.f32.mrf.mxu0
      %v494 = vadd.f32 0.0, %v493
      %v495 = vpop.f32.mrf.mxu0
      %v496 = vadd.f32 0.0, %v495
      %497 = vmatmul.bf16.gmra.mxu0 %v425
      %v498 = vpop.f32.mrf.mxu0
      %v499 = vadd.f32 0.0, %v498
      %v500 = vpop.f32.mrf.mxu0
      %v501 = vadd.f32 0.0, %v500
      %502 = vmatmul.bf16.gmra.mxu0 %v428
      %v503 = vpop.f32.mrf.mxu0
      %v504 = vadd.f32 0.0, %v503
      %v505 = vpop.f32.mrf.mxu0
      %v506 = vadd.f32 0.0, %v505
      %507 = vmatmul.bf16.gmra.mxu0 %v431
      %v508 = vpop.f32.mrf.mxu0
      %v509 = vadd.f32 0.0, %v508
      %v510 = vpop.f32.mrf.mxu0
      %v511 = vadd.f32 0.0, %v510
      %512 = vmatmul.bf16.gmra.mxu0 %v434
      %v513 = vpop.f32.mrf.mxu0
      %v514 = vadd.f32 0.0, %v513
      %v515 = vpop.f32.mrf.mxu0
      %v516 = vadd.f32 0.0, %v515
      %517 = vmatmul.bf16.gmra.mxu0 %v437
      %v518 = vpop.f32.mrf.mxu0
      %v519 = vadd.f32 0.0, %v518
      %v520 = vpop.f32.mrf.mxu0
      %v521 = vadd.f32 0.0, %v520
      %522 = vmatmul.bf16.gmra.mxu0 %v440
      %v523 = vpop.f32.mrf.mxu0
      %v524 = vadd.f32 0.0, %v523
      %v525 = vpop.f32.mrf.mxu0
      %v526 = vadd.f32 0.0, %v525
      %527 = vmatmul.bf16.gmra.mxu0 %v443
      %v528 = vpop.f32.mrf.mxu0
      %v529 = vadd.f32 0.0, %v528
      %v530 = vpop.f32.mrf.mxu0
      %v531 = vadd.f32 0.0, %v530
      %532 = vmatmul.bf16.gmra.mxu0 %v446
      %v533 = vpop.f32.mrf.mxu0
      %v534 = vadd.f32 0.0, %v533
      %v535 = vpop.f32.mrf.mxu0
      %v536 = vadd.f32 0.0, %v535
      %537 = vmatmul.bf16.gmra.mxu0 %v449
      %v538 = vpop.f32.mrf.mxu0
      %v539 = vadd.f32 0.0, %v538
      %v540 = vpop.f32.mrf.mxu0
      %v541 = vadd.f32 0.0, %v540
      %542 = vmatmul.bf16.gmra.mxu0 %v452
      %v543 = vpop.f32.mrf.mxu0
      %v544 = vadd.f32 0.0, %v543
      %v545 = vpop.f32.mrf.mxu0
      %v546 = vadd.f32 0.0, %v545
      %547 = vmatmul.bf16.gmra.mxu0 %v455
      %v548 = vpop.f32.mrf.mxu0
      %v549 = vadd.f32 0.0, %v548
      %v550 = vpop.f32.mrf.mxu0
      %v551 = vadd.f32 0.0, %v550
      %552 = vdwg.mxu0
      %v553 = vadd.f32 %v257, %v474
      %v554 = vadd.f32 %v258, %v476
      %v555 = vadd.f32 %v259, %v479
      %v556 = vadd.f32 %v260, %v481
      %v557 = vadd.f32 %v261, %v484
      %v558 = vadd.f32 %v262, %v486
      %v559 = vadd.f32 %v263, %v489
      %v560 = vadd.f32 %v264, %v491
      %v561 = vadd.f32 %v265, %v494
      %v562 = vadd.f32 %v266, %v496
      %v563 = vadd.f32 %v267, %v499
      %v564 = vadd.f32 %v268, %v501
      %v565 = vadd.f32 %v269, %v504
      %v566 = vadd.f32 %v270, %v506
      %v567 = vadd.f32 %v271, %v509
      %v568 = vadd.f32 %v272, %v511
      %v569 = vadd.f32 %v273, %v514
      %v570 = vadd.f32 %v274, %v516
      %v571 = vadd.f32 %v275, %v519
      %v572 = vadd.f32 %v276, %v521
      %v573 = vadd.f32 %v277, %v524
      %v574 = vadd.f32 %v278, %v526
      %v575 = vadd.f32 %v279, %v529
      %v576 = vadd.f32 %v280, %v531
      %v577 = vadd.f32 %v281, %v534
      %v578 = vadd.f32 %v282, %v536
      %v579 = vadd.f32 %v283, %v539
      %v580 = vadd.f32 %v284, %v541
      %v581 = vadd.f32 %v285, %v544
      %v582 = vadd.f32 %v286, %v546
      %v583 = vadd.f32 %v287, %v549
      %v584 = vadd.f32 %v288, %v551
      %vm585 = vcmask 64512
      %586 = vst.msk [vmem:[#allocation2] sm:$0xff] %vm585, %v553
      %587 = vst.msk [vmem:[#allocation2 + $0x8] sm:$0xff] %vm585, %v554
      %588 = vst.msk [vmem:[#allocation2 + $0x10] sm:$0xff] %vm585, %v555
      %589 = vst.msk [vmem:[#allocation2 + $0x18] sm:$0xff] %vm585, %v556
      %590 = vst.msk [vmem:[#allocation2 + $0x20] sm:$0xff] %vm585, %v557
      %591 = vst.msk [vmem:[#allocation2 + $0x28] sm:$0xff] %vm585, %v558
      %592 = vst.msk [vmem:[#allocation2 + $0x30] sm:$0xff] %vm585, %v559
      %593 = vst.msk [vmem:[#allocation2 + $0x38] sm:$0xff] %vm585, %v560
      %594 = vst.msk [vmem:[#allocation2 + $0x40] sm:$0xff] %vm585, %v561
      %595 = vst.msk [vmem:[#allocation2 + $0x48] sm:$0xff] %vm585, %v562
      %596 = vst.msk [vmem:[#allocation2 + $0x50] sm:$0xff] %vm585, %v563
      %597 = vst.msk [vmem:[#allocation2 + $0x58] sm:$0xff] %vm585, %v564
      %598 = vst.msk [vmem:[#allocation2 + $0x60] sm:$0xff] %vm585, %v565
      %599 = vst.msk [vmem:[#allocation2 + $0x68] sm:$0xff] %vm585, %v566
      %600 = vst.msk [vmem:[#allocation2 + $0x70] sm:$0xff] %vm585, %v567
      %601 = vst.msk [vmem:[#allocation2 + $0x78] sm:$0xff] %vm585, %v568
      %602 = vst.msk [vmem:[#allocation2 + $0x80] sm:$0xff] %vm585, %v569
      %603 = vst.msk [vmem:[#allocation2 + $0x88] sm:$0xff] %vm585, %v570
      %604 = vst.msk [vmem:[#allocation2 + $0x90] sm:$0xff] %vm585, %v571
      %605 = vst.msk [vmem:[#allocation2 + $0x98] sm:$0xff] %vm585, %v572
      %606 = vst.msk [vmem:[#allocation2 + $0xa0] sm:$0xff] %vm585, %v573
      %607 = vst.msk [vmem:[#allocation2 + $0xa8] sm:$0xff] %vm585, %v574
      %608 = vst.msk [vmem:[#allocation2 + $0xb0] sm:$0xff] %vm585, %v575
      %609 = vst.msk [vmem:[#allocation2 + $0xb8] sm:$0xff] %vm585, %v576
      %610 = vst.msk [vmem:[#allocation2 + $0xc0] sm:$0xff] %vm585, %v577
      %611 = vst.msk [vmem:[#allocation2 + $0xc8] sm:$0xff] %vm585, %v578
      %612 = vst.msk [vmem:[#allocation2 + $0xd0] sm:$0xff] %vm585, %v579
      %613 = vst.msk [vmem:[#allocation2 + $0xd8] sm:$0xff] %vm585, %v580
      %614 = vst.msk [vmem:[#allocation2 + $0xe0] sm:$0xff] %vm585, %v581
      %615 = vst.msk [vmem:[#allocation2 + $0xe8] sm:$0xff] %vm585, %v582
      %616 = vst.msk [vmem:[#allocation2 + $0xf0] sm:$0xff] %vm585, %v583
      %617 = vst.msk [vmem:[#allocation2 + $0xf8] sm:$0xff] %vm585, %v584
      // Predicated region
      $region37: #{_lambda_.41} parent=31 // pred_check
        %p618 = pneg %p220
      $region38: #{_lambda_.41} parent=31 // pred_check_branch
        %620 = sbr.rel (%p618) target = $region40
      $region39: #{_lambda_.41} parent=31 // pred_region
        %v621 = vld [vmem:[#allocation2] sm:$0xff]
        %v622 = vld [vmem:[#allocation2 + $0x8] sm:$0xff]
        %v623 = vld [vmem:[#allocation2 + $0x10] sm:$0xff]
        %v624 = vld [vmem:[#allocation2 + $0x18] sm:$0xff]
        %v625 = vld [vmem:[#allocation2 + $0x20] sm:$0xff]
        %v626 = vld [vmem:[#allocation2 + $0x28] sm:$0xff]
        %v627 = vld [vmem:[#allocation2 + $0x30] sm:$0xff]
        %v628 = vld [vmem:[#allocation2 + $0x38] sm:$0xff]
        %v629 = vld [vmem:[#allocation2 + $0x40] sm:$0xff]
        %v630 = vld [vmem:[#allocation2 + $0x48] sm:$0xff]
        %v631 = vld [vmem:[#allocation2 + $0x50] sm:$0xff]
        %v632 = vld [vmem:[#allocation2 + $0x58] sm:$0xff]
        %v633 = vld [vmem:[#allocation2 + $0x60] sm:$0xff]
        %v634 = vld [vmem:[#allocation2 + $0x68] sm:$0xff]
        %v635 = vld [vmem:[#allocation2 + $0x70] sm:$0xff]
        %v636 = vld [vmem:[#allocation2 + $0x78] sm:$0xff]
        %v637 = vld [vmem:[#allocation2 + $0x80] sm:$0xff]
        %v638 = vld [vmem:[#allocation2 + $0x88] sm:$0xff]
        %v639 = vld [vmem:[#allocation2 + $0x90] sm:$0xff]
        %v640 = vld [vmem:[#allocation2 + $0x98] sm:$0xff]
        %v641 = vld [vmem:[#allocation2 + $0xa0] sm:$0xff]
        %v642 = vld [vmem:[#allocation2 + $0xa8] sm:$0xff]
        %v643 = vld [vmem:[#allocation2 + $0xb0] sm:$0xff]
        %v644 = vld [vmem:[#allocation2 + $0xb8] sm:$0xff]
        %v645 = vld [vmem:[#allocation2 + $0xc0] sm:$0xff]
        %v646 = vld [vmem:[#allocation2 + $0xc8] sm:$0xff]
        %v647 = vld [vmem:[#allocation2 + $0xd0] sm:$0xff]
        %v648 = vld [vmem:[#allocation2 + $0xd8] sm:$0xff]
        %v649 = vld [vmem:[#allocation2 + $0xe0] sm:$0xff]
        %v650 = vld [vmem:[#allocation2 + $0xe8] sm:$0xff]
        %v651 = vld [vmem:[#allocation2 + $0xf0] sm:$0xff]
        %v652 = vld [vmem:[#allocation2 + $0xf8] sm:$0xff]
        %v653 = vld [vmem:[%s2] sm:$0x1]
        %v655 = vperm.slane %v653, 0
        %v657 = vadd.f32 %v621, %v655
        %v658 = vadd.f32 %v622, %v655
        %v659 = vadd.f32 %v623, %v655
        %v660 = vadd.f32 %v624, %v655
        %v661 = vadd.f32 %v625, %v655
        %v662 = vadd.f32 %v626, %v655
        %v663 = vadd.f32 %v627, %v655
        %v664 = vadd.f32 %v628, %v655
        %v665 = vadd.f32 %v629, %v655
        %v666 = vadd.f32 %v630, %v655
        %v667 = vadd.f32 %v631, %v655
        %v668 = vadd.f32 %v632, %v655
        %v669 = vadd.f32 %v633, %v655
        %v670 = vadd.f32 %v634, %v655
        %v671 = vadd.f32 %v635, %v655
        %v672 = vadd.f32 %v636, %v655
        %v673 = vadd.f32 %v637, %v655
        %v674 = vadd.f32 %v638, %v655
        %v675 = vadd.f32 %v639, %v655
        %v676 = vadd.f32 %v640, %v655
        %v677 = vadd.f32 %v641, %v655
        %v678 = vadd.f32 %v642, %v655
        %v679 = vadd.f32 %v643, %v655
        %v680 = vadd.f32 %v644, %v655
        %v681 = vadd.f32 %v645, %v655
        %v682 = vadd.f32 %v646, %v655
        %v683 = vadd.f32 %v647, %v655
        %v684 = vadd.f32 %v648, %v655
        %v685 = vadd.f32 %v649, %v655
        %v686 = vadd.f32 %v650, %v655
        %v687 = vadd.f32 %v651, %v655
        %v688 = vadd.f32 %v652, %v655
        %v689 = vpack.c.bf16 %v657, %v657
        %v690 = vpack.c.bf16 %v658, %v658
        %v691 = vpack.c.bf16 %v659, %v659
        %v692 = vpack.c.bf16 %v660, %v660
        %v693 = vpack.c.bf16 %v661, %v661
        %v694 = vpack.c.bf16 %v662, %v662
        %v695 = vpack.c.bf16 %v663, %v663
        %v696 = vpack.c.bf16 %v664, %v664
        %v697 = vpack.c.bf16 %v665, %v665
        %v698 = vpack.c.bf16 %v666, %v666
        %v699 = vpack.c.bf16 %v667, %v667
        %v700 = vpack.c.bf16 %v668, %v668
        %v701 = vpack.c.bf16 %v669, %v669
        %v702 = vpack.c.bf16 %v670, %v670
        %v703 = vpack.c.bf16 %v671, %v671
        %v704 = vpack.c.bf16 %v672, %v672
        %v705 = vpack.c.bf16 %v673, %v673
        %v706 = vpack.c.bf16 %v674, %v674
        %v707 = vpack.c.bf16 %v675, %v675
        %v708 = vpack.c.bf16 %v676, %v676
        %v709 = vpack.c.bf16 %v677, %v677
        %v710 = vpack.c.bf16 %v678, %v678
        %v711 = vpack.c.bf16 %v679, %v679
        %v712 = vpack.c.bf16 %v680, %v680
        %v713 = vpack.c.bf16 %v681, %v681
        %v714 = vpack.c.bf16 %v682, %v682
        %v715 = vpack.c.bf16 %v683, %v683
        %v716 = vpack.c.bf16 %v684, %v684
        %v717 = vpack.c.bf16 %v685, %v685
        %v718 = vpack.c.bf16 %v686, %v686
        %v719 = vpack.c.bf16 %v687, %v687
        %v720 = vpack.c.bf16 %v688, %v688
        %vm721 = vcmask 60416
        %722 = vst.msk [vmem:[%s217] sm:$0xf] %vm721, %v689
        %723 = vst.msk [vmem:[%s217 + $0x4] sm:$0xf] %vm721, %v690
        %724 = vst.msk [vmem:[%s217 + $0x8] sm:$0xf] %vm721, %v691
        %725 = vst.msk [vmem:[%s217 + $0xc] sm:$0xf] %vm721, %v692
        %726 = vst.msk [vmem:[%s217 + $0x10] sm:$0xf] %vm721, %v693
        %727 = vst.msk [vmem:[%s217 + $0x14] sm:$0xf] %vm721, %v694
        %728 = vst.msk [vmem:[%s217 + $0x18] sm:$0xf] %vm721, %v695
        %729 = vst.msk [vmem:[%s217 + $0x1c] sm:$0xf] %vm721, %v696
        %730 = vst.msk [vmem:[%s217 + $0x20] sm:$0xf] %vm721, %v697
        %731 = vst.msk [vmem:[%s217 + $0x24] sm:$0xf] %vm721, %v698
        %732 = vst.msk [vmem:[%s217 + $0x28] sm:$0xf] %vm721, %v699
        %733 = vst.msk [vmem:[%s217 + $0x2c] sm:$0xf] %vm721, %v700
        %734 = vst.msk [vmem:[%s217 + $0x30] sm:$0xf] %vm721, %v701
        %735 = vst.msk [vmem:[%s217 + $0x34] sm:$0xf] %vm721, %v702
        %736 = vst.msk [vmem:[%s217 + $0x38] sm:$0xf] %vm721, %v703
        %737 = vst.msk [vmem:[%s217 + $0x3c] sm:$0xf] %vm721, %v704
        %738 = vst.msk [vmem:[%s217 + $0x40] sm:$0xf] %vm721, %v705
        %739 = vst.msk [vmem:[%s217 + $0x44] sm:$0xf] %vm721, %v706
        %740 = vst.msk [vmem:[%s217 + $0x48] sm:$0xf] %vm721, %v707
        %741 = vst.msk [vmem:[%s217 + $0x4c] sm:$0xf] %vm721, %v708
        %742 = vst.msk [vmem:[%s217 + $0x50] sm:$0xf] %vm721, %v709
        %743 = vst.msk [vmem:[%s217 + $0x54] sm:$0xf] %vm721, %v710
        %744 = vst.msk [vmem:[%s217 + $0x58] sm:$0xf] %vm721, %v711
        %745 = vst.msk [vmem:[%s217 + $0x5c] sm:$0xf] %vm721, %v712
        %746 = vst.msk [vmem:[%s217 + $0x60] sm:$0xf] %vm721, %v713
        %747 = vst.msk [vmem:[%s217 + $0x64] sm:$0xf] %vm721, %v714
        %748 = vst.msk [vmem:[%s217 + $0x68] sm:$0xf] %vm721, %v715
        %749 = vst.msk [vmem:[%s217 + $0x6c] sm:$0xf] %vm721, %v716
        %750 = vst.msk [vmem:[%s217 + $0x70] sm:$0xf] %vm721, %v717
        %751 = vst.msk [vmem:[%s217 + $0x74] sm:$0xf] %vm721, %v718
        %752 = vst.msk [vmem:[%s217 + $0x78] sm:$0xf] %vm721, %v719
        %753 = vst.msk [vmem:[%s217 + $0x7c] sm:$0xf] %vm721, %v720
      $region40: #{_lambda_.41} parent=31 // pred_fallthru
        _
      %s754 = smul.u32 32, %s18
      %p755 = scmp.lt.s32.totalorder %s754, 127
      %s756 = scalar_select %p755, %s754, 127
      %s757 = smul.addr %s756, 4
      %s758 = scalar_lea.vmem %s3, %s757
      // Predicated region
      $region41: #{_lambda_.41} parent=31 // pred_check
        %p759 = pneg %p119
      $region42: #{_lambda_.41} parent=31 // pred_check_branch
        %761 = sbr.rel (%p759) target = $region44
      $region43: #{_lambda_.41} parent=31 // pred_region
        %s762 = smul.u32 32, %s18
      $region44: #{_lambda_.41} parent=31 // pred_fallthru
        _
    $region32: #{_lambda_.41} parent=5 // pred_fallthru
      _
    %p763 = scmp.le.s32.totalorder 2, %s9
    // Predicated region
    $region45: #{_lambda_.41} parent=5 // pred_check
      %p764 = pneg %p763
    $region46: #{_lambda_.41} parent=5 // pred_check_branch
      %766 = sbr.rel (%p764) target = $region48
    $region47: #{_lambda_.41} parent=5 // pred_region
      %s767 = ssub.s32 %s9, 2
      // Predicated region
      $region49: #{_lambda_.41} parent=47 // pred_check
        %p768 = pneg %p125
      $region50: #{_lambda_.41} parent=47 // pred_check_branch
        %770 = sbr.rel (%p768) target = $region52
      $region51: #{_lambda_.41} parent=47 // pred_region
        %s771 = smul.u32 32, %s20
        %p772 = scmp.lt.s32.totalorder %s771, 127
        %s773 = scalar_select %p772, %s771, 127
        %s774 = smul.addr %s773, 4
        %s775 = scalar_lea.vmem %s3, %s774
      $region52: #{_lambda_.41} parent=47 // pred_fallthru
        _
    $region48: #{_lambda_.41} parent=5 // pred_fallthru
      _
  $region6: #{_lambda_.41} parent=0 // loop_footer
    %s13 = sadd.s32 1, %s9
  $region7: #{_lambda_.41} parent=0 // loop_footer_branch
    %8 = sbr.rel target = $region3
  $region8: #{_lambda_.41} parent=0 // loop_exit
    _

// kernel: _lambda_.42
$region0: #{_lambda_.42}
  #allocation0 [shape = 'u32[]', space=smem, size = 0x4, offset = 0x4, fixed_abs, tag = 'smem constant byte address 0x4 - core index']
  #allocation1 [shape = 'u32[72,128]{1,0:T(1,128)}', space=vmem, size = 0x9000, scoped, tag = 'internal scratch']
  %s0 = inlined_call_operand.vmem [shape: bf16[512,16], index: 0, kind: input, shape index: {}]
  %s1 = inlined_call_operand.vmem [shape: f32[1,16], index: 1, kind: input, shape index: {}]
  %s2 = inlined_call_operand.vmem [shape: f32[1,16], index: 2, kind: input, shape index: {}]
  %s3 = inlined_call_operand.vmem [shape: bf16[512,16], index: 3, kind: output, shape index: {}]
  %s4 = sld [smem:[#allocation0]]
  $region45: #{_lambda_.42} parent=0
    _
  %s6 = ssub.s32 1, %s4
  %s7 = scalar_select 0, %s6, %s4
  loop: start=0, step=1, limit=4
  $region2: #{_lambda_.42} parent=0 // loop_pre_header
    _
  $region3: #{_lambda_.42} parent=0 // loop_header
    %s9 = sphi 0, %s13
    %p10 = scmp.ge.s32.totalorder %s9, 4
    %s19 = sphi 0, %s21
    %s22 = sphi 0, %s19
    %s23 = sphi 0, %s22
    %s39 = sphi 0, %s23
    %s43 = sphi 0, %s43
    %s45 = sphi 0, %s43
    %s46 = sphi 0, %s45
    %s60 = sphi 0, %s46
    %s64 = sphi 0, %s64
    %s66 = sphi 0, %s64
    %s67 = sphi 0, %s66
    %s81 = sphi 0, %s67
    %s87 = sphi 0, %s89
    %s90 = sphi 0, %s87
    %s91 = sphi 0, %s90
    %s107 = sphi 0, %s91
  $region4: #{_lambda_.42} parent=0 // loop_header_branch
    %12 = sbr.rel (%p10) target = $region8
  $region5: #{_lambda_.42} parent=0 // loop_body
    %s14 = ssub.s32 %s9, 1
    %s15 = ssub.s32 %s9, 2
    %s16 = sadd.s32 %s9, 1
    %s17 = ssub.s32 %s9, %s16
    %p18 = scmp.eq.s32.totalorder %s17, 0
    %s20 = sadd.s32 %s19, 1
    %s21 = scalar_select %p18, %s19, %s20
    %p24 = pneg %p18
    %p25 = scmp.eq.s32.totalorder %s9, 1
    %p26 = por %p24, %p25
    %p27 = scmp.ne.s32.totalorder %s19, %s22
    %p28 = scmp.eq.s32.totalorder %s9, 0
    %p29 = por %p27, %p28
    %p30 = scmp.ne.s32.totalorder %s19, %s22
    %p31 = scmp.eq.s32.totalorder %s14, 1
    %p32 = por %p30, %p31
    %p33 = scmp.ne.s32.totalorder %s22, %s23
    %p34 = scmp.eq.s32.totalorder %s14, 0
    %p35 = por %p33, %p34
    %p36 = scmp.ne.s32.totalorder %s22, %s23
    %p37 = scmp.eq.s32.totalorder %s15, 1
    %p38 = por %p36, %p37
    %p40 = scmp.ne.s32.totalorder %s23, %s39
    %p41 = scmp.eq.s32.totalorder %s15, 0
    %p42 = por %p40, %p41
    %s44 = sadd.s32 %s43, 1
    %p47 = scmp.eq.s32.totalorder %s9, 1
    %p48 = scmp.ne.s32.totalorder %s43, %s45
    %p49 = scmp.eq.s32.totalorder %s9, 0
    %p50 = por %p48, %p49
    %p51 = scmp.ne.s32.totalorder %s43, %s45
    %p52 = scmp.eq.s32.totalorder %s14, 1
    %p53 = por %p51, %p52
    %p54 = scmp.ne.s32.totalorder %s45, %s46
    %p55 = scmp.eq.s32.totalorder %s14, 0
    %p56 = por %p54, %p55
    %p57 = scmp.ne.s32.totalorder %s45, %s46
    %p58 = scmp.eq.s32.totalorder %s15, 1
    %p59 = por %p57, %p58
    %p61 = scmp.ne.s32.totalorder %s46, %s60
    %p62 = scmp.eq.s32.totalorder %s15, 0
    %p63 = por %p61, %p62
    %s65 = sadd.s32 %s64, 1
    %p68 = scmp.eq.s32.totalorder %s9, 1
    %p69 = scmp.ne.s32.totalorder %s64, %s66
    %p70 = scmp.eq.s32.totalorder %s9, 0
    %p71 = por %p69, %p70
    %p72 = scmp.ne.s32.totalorder %s64, %s66
    %p73 = scmp.eq.s32.totalorder %s14, 1
    %p74 = por %p72, %p73
    %p75 = scmp.ne.s32.totalorder %s66, %s67
    %p76 = scmp.eq.s32.totalorder %s14, 0
    %p77 = por %p75, %p76
    %p78 = scmp.ne.s32.totalorder %s66, %s67
    %p79 = scmp.eq.s32.totalorder %s15, 1
    %p80 = por %p78, %p79
    %p82 = scmp.ne.s32.totalorder %s67, %s81
    %p83 = scmp.eq.s32.totalorder %s15, 0
    %p84 = por %p82, %p83
    %s85 = ssub.s32 %s9, %s16
    %p86 = scmp.eq.s32.totalorder %s85, 0
    %s88 = sadd.s32 %s87, 1
    %s89 = scalar_select %p86, %s87, %s88
    %p92 = pneg %p86
    %p93 = scmp.eq.s32.totalorder %s9, 1
    %p94 = por %p92, %p93
    %p95 = scmp.ne.s32.totalorder %s87, %s90
    %p96 = scmp.eq.s32.totalorder %s9, 0
    %p97 = por %p95, %p96
    %p98 = scmp.ne.s32.totalorder %s87, %s90
    %p99 = scmp.eq.s32.totalorder %s14, 1
    %p100 = por %p98, %p99
    %p101 = scmp.ne.s32.totalorder %s90, %s91
    %p102 = scmp.eq.s32.totalorder %s14, 0
    %p103 = por %p101, %p102
    %p104 = scmp.ne.s32.totalorder %s90, %s91
    %p105 = scmp.eq.s32.totalorder %s15, 1
    %p106 = por %p104, %p105
    %p108 = scmp.ne.s32.totalorder %s91, %s107
    %p109 = scmp.eq.s32.totalorder %s15, 0
    %p110 = por %p108, %p109
    %p111 = scmp.le.s32.totalorder 1, %s9
    %p112 = scmp.lt.s32.totalorder %s9, 3
    %p113 = pnand %p111, %p112
    %p114 = pneg %p113
    // Predicated region
    $region9: #{_lambda_.42} parent=5 // pred_check
      _
    $region10: #{_lambda_.42} parent=5 // pred_check_branch
      %116 = sbr.rel (%p113) target = $region12
    $region11: #{_lambda_.42} parent=5 // pred_region
      %s117 = ssub.s32 %s9, 1
      // Predicated region
      $region13: #{_lambda_.42} parent=11 // pred_check
        %p118 = pneg %p56
      $region14: #{_lambda_.42} parent=11 // pred_check_branch
        %120 = sbr.rel (%p118) target = $region16
      $region15: #{_lambda_.42} parent=11 // pred_region
        _
      $region16: #{_lambda_.42} parent=11 // pred_fallthru
        _
      // Predicated region
      $region17: #{_lambda_.42} parent=11 // pred_check
        %p121 = pneg %p77
      $region18: #{_lambda_.42} parent=11 // pred_check_branch
        %123 = sbr.rel (%p121) target = $region20
      $region19: #{_lambda_.42} parent=11 // pred_region
        _
      $region20: #{_lambda_.42} parent=11 // pred_fallthru
        _
    $region12: #{_lambda_.42} parent=5 // pred_fallthru
      _
    %p124 = scmp.lt.s32.totalorder %s9, 2
    // Predicated region
    $region21: #{_lambda_.42} parent=5 // pred_check
      %p125 = pneg %p124
    $region22: #{_lambda_.42} parent=5 // pred_check_branch
      %127 = sbr.rel (%p125) target = $region24
    $region23: #{_lambda_.42} parent=5 // pred_region
      // Predicated region
      $region25: #{_lambda_.42} parent=23 // pred_check
        %p128 = pneg %p29
      $region26: #{_lambda_.42} parent=23 // pred_check_branch
        %130 = sbr.rel (%p128) target = $region28
      $region27: #{_lambda_.42} parent=23 // pred_region
        %s131 = smul.u32 32, %s9
        %p132 = scmp.lt.s32.totalorder %s131, 63
        %s133 = scalar_select %p132, %s131, 63
        %s134 = smul.addr %s133, 4
        %s135 = scalar_lea.vmem %s0, %s134
        %s136 = smul.u32 32, %s9
      $region28: #{_lambda_.42} parent=23 // pred_fallthru
        _
    $region24: #{_lambda_.42} parent=5 // pred_fallthru
      _
    %p137 = scmp.le.s32.totalorder 1, %s9
    %p138 = scmp.lt.s32.totalorder %s9, 3
    %p139 = pnand %p137, %p138
    %p140 = pneg %p139
    // Predicated region
    $region29: #{_lambda_.42} parent=5 // pred_check
      _
    $region30: #{_lambda_.42} parent=5 // pred_check_branch
      %142 = sbr.rel (%p139) target = $region32
    $region31: #{_lambda_.42} parent=5 // pred_region
      %s143 = ssub.s32 %s9, 1
      %s144 = smul.u32 32, %s14
      %p145 = scmp.lt.s32.totalorder %s144, 63
      %s146 = scalar_select %p145, %s144, 63
      %s147 = smul.addr %s146, 4
      %s148 = scalar_lea.vmem %s0, %s147
      %p149 = pneg %p35
      %p150 = pneg %p32
      %p151 = pneg %p56
      %p152 = pneg %p53
      %p153 = pneg %p77
      %p154 = pneg %p74
      %p155 = pneg %p103
      %p156 = pneg %p100
      %s157 = smul.u32 32, %s14
      %p158 = scmp.lt.s32.totalorder %s157, 63
      %s159 = scalar_select %p158, %s157, 63
      %s160 = smul.addr %s159, 4
      %s161 = scalar_lea.vmem %s3, %s160
      %s162 = smul.u32 32, %s14
      %p163 = scmp.lt.s32.totalorder %s162, 63
      %s164 = scalar_select %p163, %s162, 63
      %s165 = smul.addr %s164, 4
      %s166 = scalar_lea.vmem %s0, %s165
      %s167 = smul.u32 32, %s14
      %s168 = smul.u32 32, %s14
      %p169 = scmp.lt.s32.totalorder %s168, 63
      %s170 = scalar_select %p169, %s168, 63
      %s171 = smul.addr %s170, 4
      %s172 = scalar_lea.vmem %s3, %s171
      %s173 = smul.u32 32, %s14
      %v174 = vld [vmem:[%s166] sm:$0xf]
      %v175 = vld [vmem:[%s166 + $0x4] sm:$0xf]
      %v176 = vld [vmem:[%s166 + $0x8] sm:$0xf]
      %v177 = vld [vmem:[%s166 + $0xc] sm:$0xf]
      %v178 = vld [vmem:[%s166 + $0x10] sm:$0xf]
      %v179 = vld [vmem:[%s166 + $0x14] sm:$0xf]
      %v180 = vld [vmem:[%s166 + $0x18] sm:$0xf]
      %v181 = vld [vmem:[%s166 + $0x1c] sm:$0xf]
      %v182 = vld [vmem:[%s166 + $0x20] sm:$0xf]
      %v183 = vld [vmem:[%s166 + $0x24] sm:$0xf]
      %v184 = vld [vmem:[%s166 + $0x28] sm:$0xf]
      %v185 = vld [vmem:[%s166 + $0x2c] sm:$0xf]
      %v186 = vld [vmem:[%s166 + $0x30] sm:$0xf]
      %v187 = vld [vmem:[%s166 + $0x34] sm:$0xf]
      %v188 = vld [vmem:[%s166 + $0x38] sm:$0xf]
      %v189 = vld [vmem:[%s166 + $0x3c] sm:$0xf]
      %v190 = vld [vmem:[%s166 + $0x40] sm:$0xf]
      %v191 = vld [vmem:[%s166 + $0x44] sm:$0xf]
      %v192 = vld [vmem:[%s166 + $0x48] sm:$0xf]
      %v193 = vld [vmem:[%s166 + $0x4c] sm:$0xf]
      %v194 = vld [vmem:[%s166 + $0x50] sm:$0xf]
      %v195 = vld [vmem:[%s166 + $0x54] sm:$0xf]
      %v196 = vld [vmem:[%s166 + $0x58] sm:$0xf]
      %v197 = vld [vmem:[%s166 + $0x5c] sm:$0xf]
      %v198 = vld [vmem:[%s166 + $0x60] sm:$0xf]
      %v199 = vld [vmem:[%s166 + $0x64] sm:$0xf]
      %v200 = vld [vmem:[%s166 + $0x68] sm:$0xf]
      %v201 = vld [vmem:[%s166 + $0x6c] sm:$0xf]
      %v202 = vld [vmem:[%s166 + $0x70] sm:$0xf]
      %v203 = vld [vmem:[%s166 + $0x74] sm:$0xf]
      %v204 = vld [vmem:[%s166 + $0x78] sm:$0xf]
      %v205 = vld [vmem:[%s166 + $0x7c] sm:$0xf]
      %v206 = vunpack.c.l.bf16 %v174
      %v207 = vunpack.c.l.bf16 %v175
      %v208 = vunpack.c.l.bf16 %v176
      %v209 = vunpack.c.l.bf16 %v177
      %v210 = vunpack.c.l.bf16 %v178
      %v211 = vunpack.c.l.bf16 %v179
      %v212 = vunpack.c.l.bf16 %v180
      %v213 = vunpack.c.l.bf16 %v181
      %v214 = vunpack.c.l.bf16 %v182
      %v215 = vunpack.c.l.bf16 %v183
      %v216 = vunpack.c.l.bf16 %v184
      %v217 = vunpack.c.l.bf16 %v185
      %v218 = vunpack.c.l.bf16 %v186
      %v219 = vunpack.c.l.bf16 %v187
      %v220 = vunpack.c.l.bf16 %v188
      %v221 = vunpack.c.l.bf16 %v189
      %v222 = vunpack.c.l.bf16 %v190
      %v223 = vunpack.c.l.bf16 %v191
      %v224 = vunpack.c.l.bf16 %v192
      %v225 = vunpack.c.l.bf16 %v193
      %v226 = vunpack.c.l.bf16 %v194
      %v227 = vunpack.c.l.bf16 %v195
      %v228 = vunpack.c.l.bf16 %v196
      %v229 = vunpack.c.l.bf16 %v197
      %v230 = vunpack.c.l.bf16 %v198
      %v231 = vunpack.c.l.bf16 %v199
      %v232 = vunpack.c.l.bf16 %v200
      %v233 = vunpack.c.l.bf16 %v201
      %v234 = vunpack.c.l.bf16 %v202
      %v235 = vunpack.c.l.bf16 %v203
      %v236 = vunpack.c.l.bf16 %v204
      %v237 = vunpack.c.l.bf16 %v205
      %v238 = vld [vmem:[%s1] sm:$0x1]
      %v239 = vld [vmem:[%s2] sm:$0x1]
      %vm240 = vcmask 130048
      %v241 = vsel %vm240, %v206, 0.0
      %242 = vadd.xlane.f32.xlu0 %v241
      %v243 = vpop.xlane.xlu0 %242
      %v244 = vsel %vm240, %v207, 0.0
      %245 = vadd.xlane.f32.xlu0 %v244
      %v246 = vpop.xlane.xlu0 %245
      %v247 = vsel %vm240, %v208, 0.0
      %248 = vadd.xlane.f32.xlu0 %v247
      %v249 = vpop.xlane.xlu0 %248
      %v250 = vsel %vm240, %v209, 0.0
      %251 = vadd.xlane.f32.xlu0 %v250
      %v252 = vpop.xlane.xlu0 %251
      %v253 = vsel %vm240, %v210, 0.0
      %254 = vadd.xlane.f32.xlu0 %v253
      %v255 = vpop.xlane.xlu0 %254
      %v256 = vsel %vm240, %v211, 0.0
      %257 = vadd.xlane.f32.xlu0 %v256
      %v258 = vpop.xlane.xlu0 %257
      %v259 = vsel %vm240, %v212, 0.0
      %260 = vadd.xlane.f32.xlu0 %v259
      %v261 = vpop.xlane.xlu0 %260
      %v262 = vsel %vm240, %v213, 0.0
      %263 = vadd.xlane.f32.xlu0 %v262
      %v264 = vpop.xlane.xlu0 %263
      %v265 = vsel %vm240, %v214, 0.0
      %266 = vadd.xlane.f32.xlu0 %v265
      %v267 = vpop.xlane.xlu0 %266
      %v268 = vsel %vm240, %v215, 0.0
      %269 = vadd.xlane.f32.xlu0 %v268
      %v270 = vpop.xlane.xlu0 %269
      %v271 = vsel %vm240, %v216, 0.0
      %272 = vadd.xlane.f32.xlu0 %v271
      %v273 = vpop.xlane.xlu0 %272
      %v274 = vsel %vm240, %v217, 0.0
      %275 = vadd.xlane.f32.xlu0 %v274
      %v276 = vpop.xlane.xlu0 %275
      %v277 = vsel %vm240, %v218, 0.0
      %278 = vadd.xlane.f32.xlu0 %v277
      %v279 = vpop.xlane.xlu0 %278
      %v280 = vsel %vm240, %v219, 0.0
      %281 = vadd.xlane.f32.xlu0 %v280
      %v282 = vpop.xlane.xlu0 %281
      %v283 = vsel %vm240, %v220, 0.0
      %284 = vadd.xlane.f32.xlu0 %v283
      %v285 = vpop.xlane.xlu0 %284
      %v286 = vsel %vm240, %v221, 0.0
      %287 = vadd.xlane.f32.xlu0 %v286
      %v288 = vpop.xlane.xlu0 %287
      %v289 = vsel %vm240, %v222, 0.0
      %290 = vadd.xlane.f32.xlu0 %v289
      %v291 = vpop.xlane.xlu0 %290
      %v292 = vsel %vm240, %v223, 0.0
      %293 = vadd.xlane.f32.xlu0 %v292
      %v294 = vpop.xlane.xlu0 %293
      %v295 = vsel %vm240, %v224, 0.0
      %296 = vadd.xlane.f32.xlu0 %v295
      %v297 = vpop.xlane.xlu0 %296
      %v298 = vsel %vm240, %v225, 0.0
      %299 = vadd.xlane.f32.xlu0 %v298
      %v300 = vpop.xlane.xlu0 %299
      %v301 = vsel %vm240, %v226, 0.0
      %302 = vadd.xlane.f32.xlu0 %v301
      %v303 = vpop.xlane.xlu0 %302
      %v304 = vsel %vm240, %v227, 0.0
      %305 = vadd.xlane.f32.xlu0 %v304
      %v306 = vpop.xlane.xlu0 %305
      %v307 = vsel %vm240, %v228, 0.0
      %308 = vadd.xlane.f32.xlu0 %v307
      %v309 = vpop.xlane.xlu0 %308
      %v310 = vsel %vm240, %v229, 0.0
      %311 = vadd.xlane.f32.xlu0 %v310
      %v312 = vpop.xlane.xlu0 %311
      %v313 = vsel %vm240, %v230, 0.0
      %314 = vadd.xlane.f32.xlu0 %v313
      %v315 = vpop.xlane.xlu0 %314
      %v316 = vsel %vm240, %v231, 0.0
      %317 = vadd.xlane.f32.xlu0 %v316
      %v318 = vpop.xlane.xlu0 %317
      %v319 = vsel %vm240, %v232, 0.0
      %320 = vadd.xlane.f32.xlu0 %v319
      %v321 = vpop.xlane.xlu0 %320
      %v322 = vsel %vm240, %v233, 0.0
      %323 = vadd.xlane.f32.xlu0 %v322
      %v324 = vpop.xlane.xlu0 %323
      %v325 = vsel %vm240, %v234, 0.0
      %326 = vadd.xlane.f32.xlu0 %v325
      %v327 = vpop.xlane.xlu0 %326
      %v328 = vsel %vm240, %v235, 0.0
      %329 = vadd.xlane.f32.xlu0 %v328
      %v330 = vpop.xlane.xlu0 %329
      %v331 = vsel %vm240, %v236, 0.0
      %332 = vadd.xlane.f32.xlu0 %v331
      %v333 = vpop.xlane.xlu0 %332
      %v334 = vsel %vm240, %v237, 0.0
      %335 = vadd.xlane.f32.xlu0 %v334
      %v336 = vpop.xlane.xlu0 %335
      %v337 = vrcp.pop 16.0
      %v338 = vmul.f32 16.0, %v337
      %v339 = vsub.f32 1.0, %v338
      %v340 = vmul.f32 %v337, %v339
      %v341 = vadd.f32 %v337, %v340
      %vm342 = vweird.f32 %v337
      %v343 = vsel %vm342, %v337, %v341
      %v344 = vmul.f32 %v243, %v343
      %v345 = vmul.f32 %v246, %v343
      %v346 = vmul.f32 %v249, %v343
      %v347 = vmul.f32 %v252, %v343
      %v348 = vmul.f32 %v255, %v343
      %v349 = vmul.f32 %v258, %v343
      %v350 = vmul.f32 %v261, %v343
      %v351 = vmul.f32 %v264, %v343
      %v352 = vmul.f32 %v267, %v343
      %v353 = vmul.f32 %v270, %v343
      %v354 = vmul.f32 %v273, %v343
      %v355 = vmul.f32 %v276, %v343
      %v356 = vmul.f32 %v279, %v343
      %v357 = vmul.f32 %v282, %v343
      %v358 = vmul.f32 %v285, %v343
      %v359 = vmul.f32 %v288, %v343
      %v360 = vmul.f32 %v291, %v343
      %v361 = vmul.f32 %v294, %v343
      %v362 = vmul.f32 %v297, %v343
      %v363 = vmul.f32 %v300, %v343
      %v364 = vmul.f32 %v303, %v343
      %v365 = vmul.f32 %v306, %v343
      %v366 = vmul.f32 %v309, %v343
      %v367 = vmul.f32 %v312, %v343
      %v368 = vmul.f32 %v315, %v343
      %v369 = vmul.f32 %v318, %v343
      %v370 = vmul.f32 %v321, %v343
      %v371 = vmul.f32 %v324, %v343
      %v372 = vmul.f32 %v327, %v343
      %v373 = vmul.f32 %v330, %v343
      %v374 = vmul.f32 %v333, %v343
      %v375 = vmul.f32 %v336, %v343
      %v376 = vsub.f32 %v206, %v344
      %v377 = vsub.f32 %v207, %v345
      %v378 = vsub.f32 %v208, %v346
      %v379 = vsub.f32 %v209, %v347
      %v380 = vsub.f32 %v210, %v348
      %v381 = vsub.f32 %v211, %v349
      %v382 = vsub.f32 %v212, %v350
      %v383 = vsub.f32 %v213, %v351
      %v384 = vsub.f32 %v214, %v352
      %v385 = vsub.f32 %v215, %v353
      %v386 = vsub.f32 %v216, %v354
      %v387 = vsub.f32 %v217, %v355
      %v388 = vsub.f32 %v218, %v356
      %v389 = vsub.f32 %v219, %v357
      %v390 = vsub.f32 %v220, %v358
      %v391 = vsub.f32 %v221, %v359
      %v392 = vsub.f32 %v222, %v360
      %v393 = vsub.f32 %v223, %v361
      %v394 = vsub.f32 %v224, %v362
      %v395 = vsub.f32 %v225, %v363
      %v396 = vsub.f32 %v226, %v364
      %v397 = vsub.f32 %v227, %v365
      %v398 = vsub.f32 %v228, %v366
      %v399 = vsub.f32 %v229, %v367
      %v400 = vsub.f32 %v230, %v368
      %v401 = vsub.f32 %v231, %v369
      %v402 = vsub.f32 %v232, %v370
      %v403 = vsub.f32 %v233, %v371
      %v404 = vsub.f32 %v234, %v372
      %v405 = vsub.f32 %v235, %v373
      %v406 = vsub.f32 %v236, %v374
      %v407 = vsub.f32 %v237, %v375
      %v408 = vmul.f32 %v376, %v376
      %v409 = vmul.f32 %v377, %v377
      %v410 = vmul.f32 %v378, %v378
      %v411 = vmul.f32 %v379, %v379
      %v412 = vmul.f32 %v380, %v380
      %v413 = vmul.f32 %v381, %v381
      %v414 = vmul.f32 %v382, %v382
      %v415 = vmul.f32 %v383, %v383
      %v416 = vmul.f32 %v384, %v384
      %v417 = vmul.f32 %v385, %v385
      %v418 = vmul.f32 %v386, %v386
      %v419 = vmul.f32 %v387, %v387
      %v420 = vmul.f32 %v388, %v388
      %v421 = vmul.f32 %v389, %v389
      %v422 = vmul.f32 %v390, %v390
      %v423 = vmul.f32 %v391, %v391
      %v424 = vmul.f32 %v392, %v392
      %v425 = vmul.f32 %v393, %v393
      %v426 = vmul.f32 %v394, %v394
      %v427 = vmul.f32 %v395, %v395
      %v428 = vmul.f32 %v396, %v396
      %v429 = vmul.f32 %v397, %v397
      %v430 = vmul.f32 %v398, %v398
      %v431 = vmul.f32 %v399, %v399
      %v432 = vmul.f32 %v400, %v400
      %v433 = vmul.f32 %v401, %v401
      %v434 = vmul.f32 %v402, %v402
      %v435 = vmul.f32 %v403, %v403
      %v436 = vmul.f32 %v404, %v404
      %v437 = vmul.f32 %v405, %v405
      %v438 = vmul.f32 %v406, %v406
      %v439 = vmul.f32 %v407, %v407
      %v440 = vsel %vm240, %v408, 0.0
      %441 = vadd.xlane.f32.xlu0 %v440
      %v442 = vpop.xlane.xlu0 %441
      %v443 = vsel %vm240, %v409, 0.0
      %444 = vadd.xlane.f32.xlu0 %v443
      %v445 = vpop.xlane.xlu0 %444
      %v446 = vsel %vm240, %v410, 0.0
      %447 = vadd.xlane.f32.xlu0 %v446
      %v448 = vpop.xlane.xlu0 %447
      %v449 = vsel %vm240, %v411, 0.0
      %450 = vadd.xlane.f32.xlu0 %v449
      %v451 = vpop.xlane.xlu0 %450
      %v452 = vsel %vm240, %v412, 0.0
      %453 = vadd.xlane.f32.xlu0 %v452
      %v454 = vpop.xlane.xlu0 %453
      %v455 = vsel %vm240, %v413, 0.0
      %456 = vadd.xlane.f32.xlu0 %v455
      %v457 = vpop.xlane.xlu0 %456
      %v458 = vsel %vm240, %v414, 0.0
      %459 = vadd.xlane.f32.xlu0 %v458
      %v460 = vpop.xlane.xlu0 %459
      %v461 = vsel %vm240, %v415, 0.0
      %462 = vadd.xlane.f32.xlu0 %v461
      %v463 = vpop.xlane.xlu0 %462
      %v464 = vsel %vm240, %v416, 0.0
      %465 = vadd.xlane.f32.xlu0 %v464
      %v466 = vpop.xlane.xlu0 %465
      %v467 = vsel %vm240, %v417, 0.0
      %468 = vadd.xlane.f32.xlu0 %v467
      %v469 = vpop.xlane.xlu0 %468
      %v470 = vsel %vm240, %v418, 0.0
      %471 = vadd.xlane.f32.xlu0 %v470
      %v472 = vpop.xlane.xlu0 %471
      %v473 = vsel %vm240, %v419, 0.0
      %474 = vadd.xlane.f32.xlu0 %v473
      %v475 = vpop.xlane.xlu0 %474
      %v476 = vsel %vm240, %v420, 0.0
      %477 = vadd.xlane.f32.xlu0 %v476
      %v478 = vpop.xlane.xlu0 %477
      %v479 = vsel %vm240, %v421, 0.0
      %480 = vadd.xlane.f32.xlu0 %v479
      %v481 = vpop.xlane.xlu0 %480
      %v482 = vsel %vm240, %v422, 0.0
      %483 = vadd.xlane.f32.xlu0 %v482
      %v484 = vpop.xlane.xlu0 %483
      %v485 = vsel %vm240, %v423, 0.0
      %486 = vadd.xlane.f32.xlu0 %v485
      %v487 = vpop.xlane.xlu0 %486
      %v488 = vsel %vm240, %v424, 0.0
      %489 = vadd.xlane.f32.xlu0 %v488
      %v490 = vpop.xlane.xlu0 %489
      %v491 = vsel %vm240, %v425, 0.0
      %492 = vadd.xlane.f32.xlu0 %v491
      %v493 = vpop.xlane.xlu0 %492
      %v494 = vsel %vm240, %v426, 0.0
      %495 = vadd.xlane.f32.xlu0 %v494
      %v496 = vpop.xlane.xlu0 %495
      %v497 = vsel %vm240, %v427, 0.0
      %498 = vadd.xlane.f32.xlu0 %v497
      %v499 = vpop.xlane.xlu0 %498
      %v500 = vsel %vm240, %v428, 0.0
      %501 = vadd.xlane.f32.xlu0 %v500
      %v502 = vpop.xlane.xlu0 %501
      %v503 = vsel %vm240, %v429, 0.0
      %504 = vadd.xlane.f32.xlu0 %v503
      %v505 = vpop.xlane.xlu0 %504
      %v506 = vsel %vm240, %v430, 0.0
      %507 = vadd.xlane.f32.xlu0 %v506
      %v508 = vpop.xlane.xlu0 %507
      %v509 = vsel %vm240, %v431, 0.0
      %510 = vadd.xlane.f32.xlu0 %v509
      %v511 = vpop.xlane.xlu0 %510
      %v512 = vsel %vm240, %v432, 0.0
      %513 = vadd.xlane.f32.xlu0 %v512
      %v514 = vpop.xlane.xlu0 %513
      %v515 = vsel %vm240, %v433, 0.0
      %516 = vadd.xlane.f32.xlu0 %v515
      %v517 = vpop.xlane.xlu0 %516
      %v518 = vsel %vm240, %v434, 0.0
      %519 = vadd.xlane.f32.xlu0 %v518
      %v520 = vpop.xlane.xlu0 %519
      %v521 = vsel %vm240, %v435, 0.0
      %522 = vadd.xlane.f32.xlu0 %v521
      %v523 = vpop.xlane.xlu0 %522
      %v524 = vsel %vm240, %v436, 0.0
      %525 = vadd.xlane.f32.xlu0 %v524
      %v526 = vpop.xlane.xlu0 %525
      %v527 = vsel %vm240, %v437, 0.0
      %528 = vadd.xlane.f32.xlu0 %v527
      %v529 = vpop.xlane.xlu0 %528
      %v530 = vsel %vm240, %v438, 0.0
      %531 = vadd.xlane.f32.xlu0 %v530
      %v532 = vpop.xlane.xlu0 %531
      %v533 = vsel %vm240, %v439, 0.0
      %534 = vadd.xlane.f32.xlu0 %v533
      %v535 = vpop.xlane.xlu0 %534
      %v536 = vmul.f32 %v442, %v343
      %v537 = vmul.f32 %v445, %v343
      %v538 = vmul.f32 %v448, %v343
      %v539 = vmul.f32 %v451, %v343
      %v540 = vmul.f32 %v454, %v343
      %v541 = vmul.f32 %v457, %v343
      %v542 = vmul.f32 %v460, %v343
      %v543 = vmul.f32 %v463, %v343
      %v544 = vmul.f32 %v466, %v343
      %v545 = vmul.f32 %v469, %v343
      %v546 = vmul.f32 %v472, %v343
      %v547 = vmul.f32 %v475, %v343
      %v548 = vmul.f32 %v478, %v343
      %v549 = vmul.f32 %v481, %v343
      %v550 = vmul.f32 %v484, %v343
      %v551 = vmul.f32 %v487, %v343
      %v552 = vmul.f32 %v490, %v343
      %v553 = vmul.f32 %v493, %v343
      %v554 = vmul.f32 %v496, %v343
      %v555 = vmul.f32 %v499, %v343
      %v556 = vmul.f32 %v502, %v343
      %v557 = vmul.f32 %v505, %v343
      %v558 = vmul.f32 %v508, %v343
      %v559 = vmul.f32 %v511, %v343
      %v560 = vmul.f32 %v514, %v343
      %v561 = vmul.f32 %v517, %v343
      %v562 = vmul.f32 %v520, %v343
      %v563 = vmul.f32 %v523, %v343
      %v564 = vmul.f32 %v526, %v343
      %v565 = vmul.f32 %v529, %v343
      %v566 = vmul.f32 %v532, %v343
      %v567 = vmul.f32 %v535, %v343
      %v568 = vadd.f32 %v536, 1e-05
      %v569 = vadd.f32 %v537, 1e-05
      %v570 = vadd.f32 %v538, 1e-05
      %v571 = vadd.f32 %v539, 1e-05
      %v572 = vadd.f32 %v540, 1e-05
      %v573 = vadd.f32 %v541, 1e-05
      %v574 = vadd.f32 %v542, 1e-05
      %v575 = vadd.f32 %v543, 1e-05
      %v576 = vadd.f32 %v544, 1e-05
      %v577 = vadd.f32 %v545, 1e-05
      %v578 = vadd.f32 %v546, 1e-05
      %v579 = vadd.f32 %v547, 1e-05
      %v580 = vadd.f32 %v548, 1e-05
      %v581 = vadd.f32 %v549, 1e-05
      %v582 = vadd.f32 %v550, 1e-05
      %v583 = vadd.f32 %v551, 1e-05
      %v584 = vadd.f32 %v552, 1e-05
      %v585 = vadd.f32 %v553, 1e-05
      %v586 = vadd.f32 %v554, 1e-05
      %v587 = vadd.f32 %v555, 1e-05
      %v588 = vadd.f32 %v556, 1e-05
      %v589 = vadd.f32 %v557, 1e-05
      %v590 = vadd.f32 %v558, 1e-05
      %v591 = vadd.f32 %v559, 1e-05
      %v592 = vadd.f32 %v560, 1e-05
      %v593 = vadd.f32 %v561, 1e-05
      %v594 = vadd.f32 %v562, 1e-05
      %v595 = vadd.f32 %v563, 1e-05
      %v596 = vadd.f32 %v564, 1e-05
      %v597 = vadd.f32 %v565, 1e-05
      %v598 = vadd.f32 %v566, 1e-05
      %v599 = vadd.f32 %v567, 1e-05
      %v600 = vrsqrt.pop %v568
      %v601 = vmul.f32 %v600, %v568
      %v602 = vmul.f32 %v601, %v600
      %v603 = vmul.f32 0.5, %v602
      %v604 = vsub.f32 1.5, %v603
      %v605 = vmul.f32 %v600, %v604
      %vm606 = vweird.f32 %v568
      %vm607 = vweird.f32 %v600
      %vm608 = vmor %vm606, %vm607
      %v609 = vsel %vm608, %v600, %v605
      %v610 = vrsqrt.pop %v569
      %v611 = vmul.f32 %v610, %v569
      %v612 = vmul.f32 %v611, %v610
      %v613 = vmul.f32 0.5, %v612
      %v614 = vsub.f32 1.5, %v613
      %v615 = vmul.f32 %v610, %v614
      %vm616 = vweird.f32 %v569
      %vm617 = vweird.f32 %v610
      %vm618 = vmor %vm616, %vm617
      %v619 = vsel %vm618, %v610, %v615
      %v620 = vrsqrt.pop %v570
      %v621 = vmul.f32 %v620, %v570
      %v622 = vmul.f32 %v621, %v620
      %v623 = vmul.f32 0.5, %v622
      %v624 = vsub.f32 1.5, %v623
      %v625 = vmul.f32 %v620, %v624
      %vm626 = vweird.f32 %v570
      %vm627 = vweird.f32 %v620
      %vm628 = vmor %vm626, %vm627
      %v629 = vsel %vm628, %v620, %v625
      %v630 = vrsqrt.pop %v571
      %v631 = vmul.f32 %v630, %v571
      %v632 = vmul.f32 %v631, %v630
      %v633 = vmul.f32 0.5, %v632
      %v634 = vsub.f32 1.5, %v633
      %v635 = vmul.f32 %v630, %v634
      %vm636 = vweird.f32 %v571
      %vm637 = vweird.f32 %v630
      %vm638 = vmor %vm636, %vm637
      %v639 = vsel %vm638, %v630, %v635
      %v640 = vrsqrt.pop %v572
      %v641 = vmul.f32 %v640, %v572
      %v642 = vmul.f32 %v641, %v640
      %v643 = vmul.f32 0.5, %v642
      %v644 = vsub.f32 1.5, %v643
      %v645 = vmul.f32 %v640, %v644
      %vm646 = vweird.f32 %v572
      %vm647 = vweird.f32 %v640
      %vm648 = vmor %vm646, %vm647
      %v649 = vsel %vm648, %v640, %v645
      %v650 = vrsqrt.pop %v573
      %v651 = vmul.f32 %v650, %v573
      %v652 = vmul.f32 %v651, %v650
      %v653 = vmul.f32 0.5, %v652
      %v654 = vsub.f32 1.5, %v653
      %v655 = vmul.f32 %v650, %v654
      %vm656 = vweird.f32 %v573
      %vm657 = vweird.f32 %v650
      %vm658 = vmor %vm656, %vm657
      %v659 = vsel %vm658, %v650, %v655
      %v660 = vrsqrt.pop %v574
      %v661 = vmul.f32 %v660, %v574
      %v662 = vmul.f32 %v661, %v660
      %v663 = vmul.f32 0.5, %v662
      %v664 = vsub.f32 1.5, %v663
      %v665 = vmul.f32 %v660, %v664
      %vm666 = vweird.f32 %v574
      %vm667 = vweird.f32 %v660
      %vm668 = vmor %vm666, %vm667
      %v669 = vsel %vm668, %v660, %v665
      %v670 = vrsqrt.pop %v575
      %v671 = vmul.f32 %v670, %v575
      %v672 = vmul.f32 %v671, %v670
      %v673 = vmul.f32 0.5, %v672
      %v674 = vsub.f32 1.5, %v673
      %v675 = vmul.f32 %v670, %v674
      %vm676 = vweird.f32 %v575
      %vm677 = vweird.f32 %v670
      %vm678 = vmor %vm676, %vm677
      %v679 = vsel %vm678, %v670, %v675
      %v680 = vrsqrt.pop %v576
      %v681 = vmul.f32 %v680, %v576
      %v682 = vmul.f32 %v681, %v680
      %v683 = vmul.f32 0.5, %v682
      %v684 = vsub.f32 1.5, %v683
      %v685 = vmul.f32 %v680, %v684
      %vm686 = vweird.f32 %v576
      %vm687 = vweird.f32 %v680
      %vm688 = vmor %vm686, %vm687
      %v689 = vsel %vm688, %v680, %v685
      %v690 = vrsqrt.pop %v577
      %v691 = vmul.f32 %v690, %v577
      %v692 = vmul.f32 %v691, %v690
      %v693 = vmul.f32 0.5, %v692
      %v694 = vsub.f32 1.5, %v693
      %v695 = vmul.f32 %v690, %v694
      %vm696 = vweird.f32 %v577
      %vm697 = vweird.f32 %v690
      %vm698 = vmor %vm696, %vm697
      %v699 = vsel %vm698, %v690, %v695
      %v700 = vrsqrt.pop %v578
      %v701 = vmul.f32 %v700, %v578
      %v702 = vmul.f32 %v701, %v700
      %v703 = vmul.f32 0.5, %v702
      %v704 = vsub.f32 1.5, %v703
      %v705 = vmul.f32 %v700, %v704
      %vm706 = vweird.f32 %v578
      %vm707 = vweird.f32 %v700
      %vm708 = vmor %vm706, %vm707
      %v709 = vsel %vm708, %v700, %v705
      %v710 = vrsqrt.pop %v579
      %v711 = vmul.f32 %v710, %v579
      %v712 = vmul.f32 %v711, %v710
      %v713 = vmul.f32 0.5, %v712
      %v714 = vsub.f32 1.5, %v713
      %v715 = vmul.f32 %v710, %v714
      %vm716 = vweird.f32 %v579
      %vm717 = vweird.f32 %v710
      %vm718 = vmor %vm716, %vm717
      %v719 = vsel %vm718, %v710, %v715
      %v720 = vrsqrt.pop %v580
      %v721 = vmul.f32 %v720, %v580
      %v722 = vmul.f32 %v721, %v720
      %v723 = vmul.f32 0.5, %v722
      %v724 = vsub.f32 1.5, %v723
      %v725 = vmul.f32 %v720, %v724
      %vm726 = vweird.f32 %v580
      %vm727 = vweird.f32 %v720
      %vm728 = vmor %vm726, %vm727
      %v729 = vsel %vm728, %v720, %v725
      %v730 = vrsqrt.pop %v581
      %v731 = vmul.f32 %v730, %v581
      %v732 = vmul.f32 %v731, %v730
      %v733 = vmul.f32 0.5, %v732
      %v734 = vsub.f32 1.5, %v733
      %v735 = vmul.f32 %v730, %v734
      %vm736 = vweird.f32 %v581
      %vm737 = vweird.f32 %v730
      %vm738 = vmor %vm736, %vm737
      %v739 = vsel %vm738, %v730, %v735
      %v740 = vrsqrt.pop %v582
      %v741 = vmul.f32 %v740, %v582
      %v742 = vmul.f32 %v741, %v740
      %v743 = vmul.f32 0.5, %v742
      %v744 = vsub.f32 1.5, %v743
      %v745 = vmul.f32 %v740, %v744
      %vm746 = vweird.f32 %v582
      %vm747 = vweird.f32 %v740
      %vm748 = vmor %vm746, %vm747
      %v749 = vsel %vm748, %v740, %v745
      %v750 = vrsqrt.pop %v583
      %v751 = vmul.f32 %v750, %v583
      %v752 = vmul.f32 %v751, %v750
      %v753 = vmul.f32 0.5, %v752
      %v754 = vsub.f32 1.5, %v753
      %v755 = vmul.f32 %v750, %v754
      %vm756 = vweird.f32 %v583
      %vm757 = vweird.f32 %v750
      %vm758 = vmor %vm756, %vm757
      %v759 = vsel %vm758, %v750, %v755
      %v760 = vrsqrt.pop %v584
      %v761 = vmul.f32 %v760, %v584
      %v762 = vmul.f32 %v761, %v760
      %v763 = vmul.f32 0.5, %v762
      %v764 = vsub.f32 1.5, %v763
      %v765 = vmul.f32 %v760, %v764
      %vm766 = vweird.f32 %v584
      %vm767 = vweird.f32 %v760
      %vm768 = vmor %vm766, %vm767
      %v769 = vsel %vm768, %v760, %v765
      %v770 = vrsqrt.pop %v585
      %v771 = vmul.f32 %v770, %v585
      %v772 = vmul.f32 %v771, %v770
      %v773 = vmul.f32 0.5, %v772
      %v774 = vsub.f32 1.5, %v773
      %v775 = vmul.f32 %v770, %v774
      %vm776 = vweird.f32 %v585
      %vm777 = vweird.f32 %v770
      %vm778 = vmor %vm776, %vm777
      %v779 = vsel %vm778, %v770, %v775
      %v780 = vrsqrt.pop %v586
      %v781 = vmul.f32 %v780, %v586
      %v782 = vmul.f32 %v781, %v780
      %v783 = vmul.f32 0.5, %v782
      %v784 = vsub.f32 1.5, %v783
      %v785 = vmul.f32 %v780, %v784
      %vm786 = vweird.f32 %v586
      %vm787 = vweird.f32 %v780
      %vm788 = vmor %vm786, %vm787
      %v789 = vsel %vm788, %v780, %v785
      %v790 = vrsqrt.pop %v587
      %v791 = vmul.f32 %v790, %v587
      %v792 = vmul.f32 %v791, %v790
      %v793 = vmul.f32 0.5, %v792
      %v794 = vsub.f32 1.5, %v793
      %v795 = vmul.f32 %v790, %v794
      %vm796 = vweird.f32 %v587
      %vm797 = vweird.f32 %v790
      %vm798 = vmor %vm796, %vm797
      %v799 = vsel %vm798, %v790, %v795
      %v800 = vrsqrt.pop %v588
      %v801 = vmul.f32 %v800, %v588
      %v802 = vmul.f32 %v801, %v800
      %v803 = vmul.f32 0.5, %v802
      %v804 = vsub.f32 1.5, %v803
      %v805 = vmul.f32 %v800, %v804
      %vm806 = vweird.f32 %v588
      %vm807 = vweird.f32 %v800
      %vm808 = vmor %vm806, %vm807
      %v809 = vsel %vm808, %v800, %v805
      %v810 = vrsqrt.pop %v589
      %v811 = vmul.f32 %v810, %v589
      %v812 = vmul.f32 %v811, %v810
      %v813 = vmul.f32 0.5, %v812
      %v814 = vsub.f32 1.5, %v813
      %v815 = vmul.f32 %v810, %v814
      %vm816 = vweird.f32 %v589
      %vm817 = vweird.f32 %v810
      %vm818 = vmor %vm816, %vm817
      %v819 = vsel %vm818, %v810, %v815
      %v820 = vrsqrt.pop %v590
      %v821 = vmul.f32 %v820, %v590
      %v822 = vmul.f32 %v821, %v820
      %v823 = vmul.f32 0.5, %v822
      %v824 = vsub.f32 1.5, %v823
      %v825 = vmul.f32 %v820, %v824
      %vm826 = vweird.f32 %v590
      %vm827 = vweird.f32 %v820
      %vm828 = vmor %vm826, %vm827
      %v829 = vsel %vm828, %v820, %v825
      %v830 = vrsqrt.pop %v591
      %v831 = vmul.f32 %v830, %v591
      %v832 = vmul.f32 %v831, %v830
      %v833 = vmul.f32 0.5, %v832
      %v834 = vsub.f32 1.5, %v833
      %v835 = vmul.f32 %v830, %v834
      %vm836 = vweird.f32 %v591
      %vm837 = vweird.f32 %v830
      %vm838 = vmor %vm836, %vm837
      %v839 = vsel %vm838, %v830, %v835
      %v840 = vrsqrt.pop %v592
      %v841 = vmul.f32 %v840, %v592
      %v842 = vmul.f32 %v841, %v840
      %v843 = vmul.f32 0.5, %v842
      %v844 = vsub.f32 1.5, %v843
      %v845 = vmul.f32 %v840, %v844
      %vm846 = vweird.f32 %v592
      %vm847 = vweird.f32 %v840
      %vm848 = vmor %vm846, %vm847
      %v849 = vsel %vm848, %v840, %v845
      %v850 = vrsqrt.pop %v593
      %v851 = vmul.f32 %v850, %v593
      %v852 = vmul.f32 %v851, %v850
      %v853 = vmul.f32 0.5, %v852
      %v854 = vsub.f32 1.5, %v853
      %v855 = vmul.f32 %v850, %v854
      %vm856 = vweird.f32 %v593
      %vm857 = vweird.f32 %v850
      %vm858 = vmor %vm856, %vm857
      %v859 = vsel %vm858, %v850, %v855
      %v860 = vrsqrt.pop %v594
      %v861 = vmul.f32 %v860, %v594
      %v862 = vmul.f32 %v861, %v860
      %v863 = vmul.f32 0.5, %v862
      %v864 = vsub.f32 1.5, %v863
      %v865 = vmul.f32 %v860, %v864
      %vm866 = vweird.f32 %v594
      %vm867 = vweird.f32 %v860
      %vm868 = vmor %vm866, %vm867
      %v869 = vsel %vm868, %v860, %v865
      %v870 = vrsqrt.pop %v595
      %v871 = vmul.f32 %v870, %v595
      %v872 = vmul.f32 %v871, %v870
      %v873 = vmul.f32 0.5, %v872
      %v874 = vsub.f32 1.5, %v873
      %v875 = vmul.f32 %v870, %v874
      %vm876 = vweird.f32 %v595
      %vm877 = vweird.f32 %v870
      %vm878 = vmor %vm876, %vm877
      %v879 = vsel %vm878, %v870, %v875
      %v880 = vrsqrt.pop %v596
      %v881 = vmul.f32 %v880, %v596
      %v882 = vmul.f32 %v881, %v880
      %v883 = vmul.f32 0.5, %v882
      %v884 = vsub.f32 1.5, %v883
      %v885 = vmul.f32 %v880, %v884
      %vm886 = vweird.f32 %v596
      %vm887 = vweird.f32 %v880
      %vm888 = vmor %vm886, %vm887
      %v889 = vsel %vm888, %v880, %v885
      %v890 = vrsqrt.pop %v597
      %v891 = vmul.f32 %v890, %v597
      %v892 = vmul.f32 %v891, %v890
      %v893 = vmul.f32 0.5, %v892
      %v894 = vsub.f32 1.5, %v893
      %v895 = vmul.f32 %v890, %v894
      %vm896 = vweird.f32 %v597
      %vm897 = vweird.f32 %v890
      %vm898 = vmor %vm896, %vm897
      %v899 = vsel %vm898, %v890, %v895
      %v900 = vrsqrt.pop %v598
      %v901 = vmul.f32 %v900, %v598
      %v902 = vmul.f32 %v901, %v900
      %v903 = vmul.f32 0.5, %v902
      %v904 = vsub.f32 1.5, %v903
      %v905 = vmul.f32 %v900, %v904
      %vm906 = vweird.f32 %v598
      %vm907 = vweird.f32 %v900
      %vm908 = vmor %vm906, %vm907
      %v909 = vsel %vm908, %v900, %v905
      %v910 = vrsqrt.pop %v599
      %v911 = vmul.f32 %v910, %v599
      %v912 = vmul.f32 %v911, %v910
      %v913 = vmul.f32 0.5, %v912
      %v914 = vsub.f32 1.5, %v913
      %v915 = vmul.f32 %v910, %v914
      %vm916 = vweird.f32 %v599
      %vm917 = vweird.f32 %v910
      %vm918 = vmor %vm916, %vm917
      %v919 = vsel %vm918, %v910, %v915
      %v920 = vmul.f32 %v376, %v609
      %v921 = vmul.f32 %v377, %v619
      %v922 = vmul.f32 %v378, %v629
      %v923 = vmul.f32 %v379, %v639
      %v924 = vmul.f32 %v380, %v649
      %v925 = vmul.f32 %v381, %v659
      %v926 = vmul.f32 %v382, %v669
      %v927 = vmul.f32 %v383, %v679
      %v928 = vmul.f32 %v384, %v689
      %v929 = vmul.f32 %v385, %v699
      %v930 = vmul.f32 %v386, %v709
      %v931 = vmul.f32 %v387, %v719
      %v932 = vmul.f32 %v388, %v729
      %v933 = vmul.f32 %v389, %v739
      %v934 = vmul.f32 %v390, %v749
      %v935 = vmul.f32 %v391, %v759
      %v936 = vmul.f32 %v392, %v769
      %v937 = vmul.f32 %v393, %v779
      %v938 = vmul.f32 %v394, %v789
      %v939 = vmul.f32 %v395, %v799
      %v940 = vmul.f32 %v396, %v809
      %v941 = vmul.f32 %v397, %v819
      %v942 = vmul.f32 %v398, %v829
      %v943 = vmul.f32 %v399, %v839
      %v944 = vmul.f32 %v400, %v849
      %v945 = vmul.f32 %v401, %v859
      %v946 = vmul.f32 %v402, %v869
      %v947 = vmul.f32 %v403, %v879
      %v948 = vmul.f32 %v404, %v889
      %v949 = vmul.f32 %v405, %v899
      %v950 = vmul.f32 %v406, %v909
      %v951 = vmul.f32 %v407, %v919
      %v953 = vperm.slane %v238, 0
      %v955 = vmul.f32 %v920, %v953
      %v956 = vmul.f32 %v921, %v953
      %v957 = vmul.f32 %v922, %v953
      %v958 = vmul.f32 %v923, %v953
      %v959 = vmul.f32 %v924, %v953
      %v960 = vmul.f32 %v925, %v953
      %v961 = vmul.f32 %v926, %v953
      %v962 = vmul.f32 %v927, %v953
      %v963 = vmul.f32 %v928, %v953
      %v964 = vmul.f32 %v929, %v953
      %v965 = vmul.f32 %v930, %v953
      %v966 = vmul.f32 %v931, %v953
      %v967 = vmul.f32 %v932, %v953
      %v968 = vmul.f32 %v933, %v953
      %v969 = vmul.f32 %v934, %v953
      %v970 = vmul.f32 %v935, %v953
      %v971 = vmul.f32 %v936, %v953
      %v972 = vmul.f32 %v937, %v953
      %v973 = vmul.f32 %v938, %v953
      %v974 = vmul.f32 %v939, %v953
      %v975 = vmul.f32 %v940, %v953
      %v976 = vmul.f32 %v941, %v953
      %v977 = vmul.f32 %v942, %v953
      %v978 = vmul.f32 %v943, %v953
      %v979 = vmul.f32 %v944, %v953
      %v980 = vmul.f32 %v945, %v953
      %v981 = vmul.f32 %v946, %v953
      %v982 = vmul.f32 %v947, %v953
      %v983 = vmul.f32 %v948, %v953
      %v984 = vmul.f32 %v949, %v953
      %v985 = vmul.f32 %v950, %v953
      %v986 = vmul.f32 %v951, %v953
      %v988 = vperm.slane %v239, 0
      %v990 = vadd.f32 %v955, %v988
      %v991 = vadd.f32 %v956, %v988
      %v992 = vadd.f32 %v957, %v988
      %v993 = vadd.f32 %v958, %v988
      %v994 = vadd.f32 %v959, %v988
      %v995 = vadd.f32 %v960, %v988
      %v996 = vadd.f32 %v961, %v988
      %v997 = vadd.f32 %v962, %v988
      %v998 = vadd.f32 %v963, %v988
      %v999 = vadd.f32 %v964, %v988
      %v1000 = vadd.f32 %v965, %v988
      %v1001 = vadd.f32 %v966, %v988
      %v1002 = vadd.f32 %v967, %v988
      %v1003 = vadd.f32 %v968, %v988
      %v1004 = vadd.f32 %v969, %v988
      %v1005 = vadd.f32 %v970, %v988
      %v1006 = vadd.f32 %v971, %v988
      %v1007 = vadd.f32 %v972, %v988
      %v1008 = vadd.f32 %v973, %v988
      %v1009 = vadd.f32 %v974, %v988
      %v1010 = vadd.f32 %v975, %v988
      %v1011 = vadd.f32 %v976, %v988
      %v1012 = vadd.f32 %v977, %v988
      %v1013 = vadd.f32 %v978, %v988
      %v1014 = vadd.f32 %v979, %v988
      %v1015 = vadd.f32 %v980, %v988
      %v1016 = vadd.f32 %v981, %v988
      %v1017 = vadd.f32 %v982, %v988
      %v1018 = vadd.f32 %v983, %v988
      %v1019 = vadd.f32 %v984, %v988
      %v1020 = vadd.f32 %v985, %v988
      %v1021 = vadd.f32 %v986, %v988
      %v1022 = vmax.f32 %v990, 0.0
      %v1023 = vmax.f32 %v991, 0.0
      %v1024 = vmax.f32 %v992, 0.0
      %v1025 = vmax.f32 %v993, 0.0
      %v1026 = vmax.f32 %v994, 0.0
      %v1027 = vmax.f32 %v995, 0.0
      %v1028 = vmax.f32 %v996, 0.0
      %v1029 = vmax.f32 %v997, 0.0
      %v1030 = vmax.f32 %v998, 0.0
      %v1031 = vmax.f32 %v999, 0.0
      %v1032 = vmax.f32 %v1000, 0.0
      %v1033 = vmax.f32 %v1001, 0.0
      %v1034 = vmax.f32 %v1002, 0.0
      %v1035 = vmax.f32 %v1003, 0.0
      %v1036 = vmax.f32 %v1004, 0.0
      %v1037 = vmax.f32 %v1005, 0.0
      %v1038 = vmax.f32 %v1006, 0.0
      %v1039 = vmax.f32 %v1007, 0.0
      %v1040 = vmax.f32 %v1008, 0.0
      %v1041 = vmax.f32 %v1009, 0.0
      %v1042 = vmax.f32 %v1010, 0.0
      %v1043 = vmax.f32 %v1011, 0.0
      %v1044 = vmax.f32 %v1012, 0.0
      %v1045 = vmax.f32 %v1013, 0.0
      %v1046 = vmax.f32 %v1014, 0.0
      %v1047 = vmax.f32 %v1015, 0.0
      %v1048 = vmax.f32 %v1016, 0.0
      %v1049 = vmax.f32 %v1017, 0.0
      %v1050 = vmax.f32 %v1018, 0.0
      %v1051 = vmax.f32 %v1019, 0.0
      %v1052 = vmax.f32 %v1020, 0.0
      %v1053 = vmax.f32 %v1021, 0.0
      %v1054 = vpack.c.bf16 %v1022, %v1022
      %v1055 = vpack.c.bf16 %v1023, %v1023
      %v1056 = vpack.c.bf16 %v1024, %v1024
      %v1057 = vpack.c.bf16 %v1025, %v1025
      %v1058 = vpack.c.bf16 %v1026, %v1026
      %v1059 = vpack.c.bf16 %v1027, %v1027
      %v1060 = vpack.c.bf16 %v1028, %v1028
      %v1061 = vpack.c.bf16 %v1029, %v1029
      %v1062 = vpack.c.bf16 %v1030, %v1030
      %v1063 = vpack.c.bf16 %v1031, %v1031
      %v1064 = vpack.c.bf16 %v1032, %v1032
      %v1065 = vpack.c.bf16 %v1033, %v1033
      %v1066 = vpack.c.bf16 %v1034, %v1034
      %v1067 = vpack.c.bf16 %v1035, %v1035
      %v1068 = vpack.c.bf16 %v1036, %v1036
      %v1069 = vpack.c.bf16 %v1037, %v1037
      %v1070 = vpack.c.bf16 %v1038, %v1038
      %v1071 = vpack.c.bf16 %v1039, %v1039
      %v1072 = vpack.c.bf16 %v1040, %v1040
      %v1073 = vpack.c.bf16 %v1041, %v1041
      %v1074 = vpack.c.bf16 %v1042, %v1042
      %v1075 = vpack.c.bf16 %v1043, %v1043
      %v1076 = vpack.c.bf16 %v1044, %v1044
      %v1077 = vpack.c.bf16 %v1045, %v1045
      %v1078 = vpack.c.bf16 %v1046, %v1046
      %v1079 = vpack.c.bf16 %v1047, %v1047
      %v1080 = vpack.c.bf16 %v1048, %v1048
      %v1081 = vpack.c.bf16 %v1049, %v1049
      %v1082 = vpack.c.bf16 %v1050, %v1050
      %v1083 = vpack.c.bf16 %v1051, %v1051
      %v1084 = vpack.c.bf16 %v1052, %v1052
      %v1085 = vpack.c.bf16 %v1053, %v1053
      %vm1086 = vcmask 125952
      %1087 = vst.msk [vmem:[%s172] sm:$0xf] %vm1086, %v1054
      %1088 = vst.msk [vmem:[%s172 + $0x4] sm:$0xf] %vm1086, %v1055
      %1089 = vst.msk [vmem:[%s172 + $0x8] sm:$0xf] %vm1086, %v1056
      %1090 = vst.msk [vmem:[%s172 + $0xc] sm:$0xf] %vm1086, %v1057
      %1091 = vst.msk [vmem:[%s172 + $0x10] sm:$0xf] %vm1086, %v1058
      %1092 = vst.msk [vmem:[%s172 + $0x14] sm:$0xf] %vm1086, %v1059
      %1093 = vst.msk [vmem:[%s172 + $0x18] sm:$0xf] %vm1086, %v1060
      %1094 = vst.msk [vmem:[%s172 + $0x1c] sm:$0xf] %vm1086, %v1061
      %1095 = vst.msk [vmem:[%s172 + $0x20] sm:$0xf] %vm1086, %v1062
      %1096 = vst.msk [vmem:[%s172 + $0x24] sm:$0xf] %vm1086, %v1063
      %1097 = vst.msk [vmem:[%s172 + $0x28] sm:$0xf] %vm1086, %v1064
      %1098 = vst.msk [vmem:[%s172 + $0x2c] sm:$0xf] %vm1086, %v1065
      %1099 = vst.msk [vmem:[%s172 + $0x30] sm:$0xf] %vm1086, %v1066
      %1100 = vst.msk [vmem:[%s172 + $0x34] sm:$0xf] %vm1086, %v1067
      %1101 = vst.msk [vmem:[%s172 + $0x38] sm:$0xf] %vm1086, %v1068
      %1102 = vst.msk [vmem:[%s172 + $0x3c] sm:$0xf] %vm1086, %v1069
      %1103 = vst.msk [vmem:[%s172 + $0x40] sm:$0xf] %vm1086, %v1070
      %1104 = vst.msk [vmem:[%s172 + $0x44] sm:$0xf] %vm1086, %v1071
      %1105 = vst.msk [vmem:[%s172 + $0x48] sm:$0xf] %vm1086, %v1072
      %1106 = vst.msk [vmem:[%s172 + $0x4c] sm:$0xf] %vm1086, %v1073
      %1107 = vst.msk [vmem:[%s172 + $0x50] sm:$0xf] %vm1086, %v1074
      %1108 = vst.msk [vmem:[%s172 + $0x54] sm:$0xf] %vm1086, %v1075
      %1109 = vst.msk [vmem:[%s172 + $0x58] sm:$0xf] %vm1086, %v1076
      %1110 = vst.msk [vmem:[%s172 + $0x5c] sm:$0xf] %vm1086, %v1077
      %1111 = vst.msk [vmem:[%s172 + $0x60] sm:$0xf] %vm1086, %v1078
      %1112 = vst.msk [vmem:[%s172 + $0x64] sm:$0xf] %vm1086, %v1079
      %1113 = vst.msk [vmem:[%s172 + $0x68] sm:$0xf] %vm1086, %v1080
      %1114 = vst.msk [vmem:[%s172 + $0x6c] sm:$0xf] %vm1086, %v1081
      %1115 = vst.msk [vmem:[%s172 + $0x70] sm:$0xf] %vm1086, %v1082
      %1116 = vst.msk [vmem:[%s172 + $0x74] sm:$0xf] %vm1086, %v1083
      %1117 = vst.msk [vmem:[%s172 + $0x78] sm:$0xf] %vm1086, %v1084
      %1118 = vst.msk [vmem:[%s172 + $0x7c] sm:$0xf] %vm1086, %v1085
      %s1119 = smul.u32 32, %s14
      %p1120 = scmp.lt.s32.totalorder %s1119, 63
      %s1121 = scalar_select %p1120, %s1119, 63
      %s1122 = smul.addr %s1121, 4
      %s1123 = scalar_lea.vmem %s3, %s1122
      // Predicated region
      $region33: #{_lambda_.42} parent=31 // pred_check
        %p1124 = pneg %p100
      $region34: #{_lambda_.42} parent=31 // pred_check_branch
        %1126 = sbr.rel (%p1124) target = $region36
      $region35: #{_lambda_.42} parent=31 // pred_region
        %s1127 = smul.u32 32, %s14
      $region36: #{_lambda_.42} parent=31 // pred_fallthru
        _
    $region32: #{_lambda_.42} parent=5 // pred_fallthru
      _
    %p1128 = scmp.le.s32.totalorder 2, %s9
    // Predicated region
    $region37: #{_lambda_.42} parent=5 // pred_check
      %p1129 = pneg %p1128
    $region38: #{_lambda_.42} parent=5 // pred_check_branch
      %1131 = sbr.rel (%p1129) target = $region40
    $region39: #{_lambda_.42} parent=5 // pred_region
      %s1132 = ssub.s32 %s9, 2
      // Predicated region
      $region41: #{_lambda_.42} parent=39 // pred_check
        %p1133 = pneg %p106
      $region42: #{_lambda_.42} parent=39 // pred_check_branch
        %1135 = sbr.rel (%p1133) target = $region44
      $region43: #{_lambda_.42} parent=39 // pred_region
        %s1136 = smul.u32 32, %s15
        %p1137 = scmp.lt.s32.totalorder %s1136, 63
        %s1138 = scalar_select %p1137, %s1136, 63
        %s1139 = smul.addr %s1138, 4
        %s1140 = scalar_lea.vmem %s3, %s1139
      $region44: #{_lambda_.42} parent=39 // pred_fallthru
        _
    $region40: #{_lambda_.42} parent=5 // pred_fallthru
      _
  $region6: #{_lambda_.42} parent=0 // loop_footer
    %s13 = sadd.s32 1, %s9
  $region7: #{_lambda_.42} parent=0 // loop_footer_branch
    %8 = sbr.rel target = $region3
  $region8: #{_lambda_.42} parent=0 // loop_exit
    _

// kernel: _lambda_.43
$region0: #{_lambda_.43}
  #allocation0 [shape = 'u32[]', space=smem, size = 0x4, offset = 0x4, fixed_abs, tag = 'smem constant byte address 0x4 - core index']
  #allocation1 [shape = 'u32[72,128]{1,0:T(1,128)}', space=vmem, size = 0x9000, scoped, tag = 'internal scratch']
  #allocation2 [shape = 'f32[256,8]{1,0:T(8,128)}', space=vmem, size = 0x20000, scoped, tag = 'scratch operand']
  %s0 = inlined_call_operand.vmem [shape: bf16[1024,72], index: 0, kind: input, shape index: {}]
  %s1 = inlined_call_operand.vmem [shape: bf16[72,8], index: 1, kind: input, shape index: {}]
  %s2 = inlined_call_operand.vmem [shape: f32[1,8], index: 2, kind: input, shape index: {}]
  %s3 = inlined_call_operand.vmem [shape: bf16[1024,8], index: 3, kind: output, shape index: {}]
  %s4 = sld [smem:[#allocation0]]
  $region53: #{_lambda_.43} parent=0
    _
  %s6 = ssub.s32 1, %s4
  %s7 = scalar_select 0, %s6, %s4
  loop: start=0, step=1, limit=6
  $region2: #{_lambda_.43} parent=0 // loop_pre_header
    _
  $region3: #{_lambda_.43} parent=0 // loop_header
    %s9 = sphi 0, %s13
    %p10 = scmp.ge.s32.totalorder %s9, 6
    %s16 = sphi 0, %s28
    %s17 = sphi 0, %s24
    %s18 = sphi 0, %s16
    %s19 = sphi 0, %s17
    %s20 = sphi 0, %s18
    %s21 = sphi 0, %s19
    %s33 = sphi 0, %s35
    %s36 = sphi 0, %s33
    %s37 = sphi 0, %s36
    %s53 = sphi 0, %s37
    %s59 = sphi 0, %s61
    %s62 = sphi 0, %s59
    %s63 = sphi 0, %s62
    %s79 = sphi 0, %s63
    %s83 = sphi 0, %s83
    %s85 = sphi 0, %s83
    %s86 = sphi 0, %s85
    %s100 = sphi 0, %s86
    %s106 = sphi 0, %s108
    %s109 = sphi 0, %s106
    %s110 = sphi 0, %s109
    %s126 = sphi 0, %s110
  $region4: #{_lambda_.43} parent=0 // loop_header_branch
    %12 = sbr.rel (%p10) target = $region8
  $region5: #{_lambda_.43} parent=0 // loop_body
    %s14 = ssub.s32 %s9, 1
    %s15 = ssub.s32 %s9, 2
    %s22 = sadd.s32 1, %s17
    %p23 = scmp.ge.s32.totalorder %s22, 1
    %s24 = scalar_select %p23, 0, %s22
    %s25 = sadd.s32 1, %s16
    %s26 = scalar_select %p23, %s25, %s16
    %p27 = scmp.ge.s32.totalorder %s26, 4
    %s28 = scalar_select %p27, 0, %s26
    %s29 = ssub.s32 %s16, %s28
    %s30 = ssub.s32 %s17, %s24
    %s31 = sor.u32 %s29, %s30
    %p32 = scmp.eq.s32.totalorder %s31, 0
    %s34 = sadd.s32 %s33, 1
    %s35 = scalar_select %p32, %s33, %s34
    %p38 = pneg %p32
    %p39 = scmp.eq.s32.totalorder %s9, 3
    %p40 = por %p38, %p39
    %p41 = scmp.ne.s32.totalorder %s33, %s36
    %p42 = scmp.eq.s32.totalorder %s9, 0
    %p43 = por %p41, %p42
    %p44 = scmp.ne.s32.totalorder %s33, %s36
    %p45 = scmp.eq.s32.totalorder %s14, 3
    %p46 = por %p44, %p45
    %p47 = scmp.ne.s32.totalorder %s36, %s37
    %p48 = scmp.eq.s32.totalorder %s14, 0
    %p49 = por %p47, %p48
    %p50 = scmp.ne.s32.totalorder %s36, %s37
    %p51 = scmp.eq.s32.totalorder %s15, 3
    %p52 = por %p50, %p51
    %p54 = scmp.ne.s32.totalorder %s37, %s53
    %p55 = scmp.eq.s32.totalorder %s15, 0
    %p56 = por %p54, %p55
    %s57 = ssub.s32 %s17, %s24
    %p58 = scmp.eq.s32.totalorder %s57, 0
    %s60 = sadd.s32 %s59, 1
    %s61 = scalar_select %p58, %s59, %s60
    %p64 = pneg %p58
    %p65 = scmp.eq.s32.totalorder %s9, 3
    %p66 = por %p64, %p65
    %p67 = scmp.ne.s32.totalorder %s59, %s62
    %p68 = scmp.eq.s32.totalorder %s9, 0
    %p69 = por %p67, %p68
    %p70 = scmp.ne.s32.totalorder %s59, %s62
    %p71 = scmp.eq.s32.totalorder %s14, 3
    %p72 = por %p70, %p71
    %p73 = scmp.ne.s32.totalorder %s62, %s63
    %p74 = scmp.eq.s32.totalorder %s14, 0
    %p75 = por %p73, %p74
    %p76 = scmp.ne.s32.totalorder %s62, %s63
    %p77 = scmp.eq.s32.totalorder %s15, 3
    %p78 = por %p76, %p77
    %p80 = scmp.ne.s32.totalorder %s63, %s79
    %p81 = scmp.eq.s32.totalorder %s15, 0
    %p82 = por %p80, %p81
    %s84 = sadd.s32 %s83, 1
    %p87 = scmp.eq.s32.totalorder %s9, 3
    %p88 = scmp.ne.s32.totalorder %s83, %s85
    %p89 = scmp.eq.s32.totalorder %s9, 0
    %p90 = por %p88, %p89
    %p91 = scmp.ne.s32.totalorder %s83, %s85
    %p92 = scmp.eq.s32.totalorder %s14, 3
    %p93 = por %p91, %p92
    %p94 = scmp.ne.s32.totalorder %s85, %s86
    %p95 = scmp.eq.s32.totalorder %s14, 0
    %p96 = por %p94, %p95
    %p97 = scmp.ne.s32.totalorder %s85, %s86
    %p98 = scmp.eq.s32.totalorder %s15, 3
    %p99 = por %p97, %p98
    %p101 = scmp.ne.s32.totalorder %s86, %s100
    %p102 = scmp.eq.s32.totalorder %s15, 0
    %p103 = por %p101, %p102
    %s104 = ssub.s32 %s16, %s28
    %p105 = scmp.eq.s32.totalorder %s104, 0
    %s107 = sadd.s32 %s106, 1
    %s108 = scalar_select %p105, %s106, %s107
    %p111 = pneg %p105
    %p112 = scmp.eq.s32.totalorder %s9, 3
    %p113 = por %p111, %p112
    %p114 = scmp.ne.s32.totalorder %s106, %s109
    %p115 = scmp.eq.s32.totalorder %s9, 0
    %p116 = por %p114, %p115
    %p117 = scmp.ne.s32.totalorder %s106, %s109
    %p118 = scmp.eq.s32.totalorder %s14, 3
    %p119 = por %p117, %p118
    %p120 = scmp.ne.s32.totalorder %s109, %s110
    %p121 = scmp.eq.s32.totalorder %s14, 0
    %p122 = por %p120, %p121
    %p123 = scmp.ne.s32.totalorder %s109, %s110
    %p124 = scmp.eq.s32.totalorder %s15, 3
    %p125 = por %p123, %p124
    %p127 = scmp.ne.s32.totalorder %s110, %s126
    %p128 = scmp.eq.s32.totalorder %s15, 0
    %p129 = por %p127, %p128
    %p130 = scmp.le.s32.totalorder 1, %s9
    %p131 = scmp.lt.s32.totalorder %s9, 5
    %p132 = pnand %p130, %p131
    %p133 = pneg %p132
    // Predicated region
    $region9: #{_lambda_.43} parent=5 // pred_check
      _
    $region10: #{_lambda_.43} parent=5 // pred_check_branch
      %135 = sbr.rel (%p132) target = $region12
    $region11: #{_lambda_.43} parent=5 // pred_region
      %s136 = ssub.s32 %s9, 1
      // Predicated region
      $region13: #{_lambda_.43} parent=11 // pred_check
        %p137 = pneg %p75
      $region14: #{_lambda_.43} parent=11 // pred_check_branch
        %139 = sbr.rel (%p137) target = $region16
      $region15: #{_lambda_.43} parent=11 // pred_region
        %s140 = smul.u32 9, %s19
        %p141 = scmp.lt.s32.totalorder %s140, 8
        %s142 = scalar_select %p141, %s140, 8
        %s143 = smul.addr %s142, 4
        %s144 = scalar_lea.vmem %s1, %s143
        %s145 = smul.u32 9, %s19
      $region16: #{_lambda_.43} parent=11 // pred_fallthru
        _
      // Predicated region
      $region17: #{_lambda_.43} parent=11 // pred_check
        %p146 = pneg %p96
      $region18: #{_lambda_.43} parent=11 // pred_check_branch
        %148 = sbr.rel (%p146) target = $region20
      $region19: #{_lambda_.43} parent=11 // pred_region
        _
      $region20: #{_lambda_.43} parent=11 // pred_fallthru
        _
    $region12: #{_lambda_.43} parent=5 // pred_fallthru
      _
    %p149 = scmp.lt.s32.totalorder %s9, 4
    // Predicated region
    $region21: #{_lambda_.43} parent=5 // pred_check
      %p150 = pneg %p149
    $region22: #{_lambda_.43} parent=5 // pred_check_branch
      %152 = sbr.rel (%p150) target = $region24
    $region23: #{_lambda_.43} parent=5 // pred_region
      // Predicated region
      $region25: #{_lambda_.43} parent=23 // pred_check
        %p153 = pneg %p43
      $region26: #{_lambda_.43} parent=23 // pred_check_branch
        %155 = sbr.rel (%p153) target = $region28
      $region27: #{_lambda_.43} parent=23 // pred_region
        %s156 = smul.u32 32, %s16
        %p157 = scmp.lt.s32.totalorder %s156, 127
        %s158 = scalar_select %p157, %s156, 127
        %p159 = scmp.lt.s32.totalorder %s17, 0
        %s160 = scalar_select %p159, %s17, 0
        %s161 = sadd.s32 %s160, %s158
        %s162 = smul.addr %s161, 4
        %s163 = scalar_lea.vmem %s0, %s162
        %s164 = smul.u32 32, %s16
      $region28: #{_lambda_.43} parent=23 // pred_fallthru
        _
    $region24: #{_lambda_.43} parent=5 // pred_fallthru
      _
    %p165 = scmp.le.s32.totalorder 1, %s9
    %p166 = scmp.lt.s32.totalorder %s9, 5
    %p167 = pnand %p165, %p166
    %p168 = pneg %p167
    // Predicated region
    $region29: #{_lambda_.43} parent=5 // pred_check
      _
    $region30: #{_lambda_.43} parent=5 // pred_check_branch
      %170 = sbr.rel (%p167) target = $region32
    $region31: #{_lambda_.43} parent=5 // pred_region
      %s171 = ssub.s32 %s9, 1
      %s172 = smul.u32 32, %s18
      %p173 = scmp.lt.s32.totalorder %s172, 127
      %s174 = scalar_select %p173, %s172, 127
      %p175 = scmp.lt.s32.totalorder %s19, 0
      %s176 = scalar_select %p175, %s19, 0
      %s177 = sadd.s32 %s176, %s174
      %s178 = smul.addr %s177, 4
      %s179 = scalar_lea.vmem %s0, %s178
      %p180 = pneg %p49
      %p181 = pneg %p46
      %s182 = smul.u32 9, %s19
      %p183 = scmp.lt.s32.totalorder %s182, 8
      %s184 = scalar_select %p183, %s182, 8
      %s185 = smul.addr %s184, 4
      %s186 = scalar_lea.vmem %s1, %s185
      %p187 = pneg %p75
      %p188 = pneg %p72
      %p189 = pneg %p96
      %p190 = pneg %p93
      %p191 = pneg %p122
      %p192 = pneg %p119
      %s193 = smul.u32 32, %s18
      %p194 = scmp.lt.s32.totalorder %s193, 127
      %s195 = scalar_select %p194, %s193, 127
      %s196 = smul.addr %s195, 4
      %s197 = scalar_lea.vmem %s3, %s196
      %s198 = smul.u32 32, %s18
      %p199 = scmp.lt.s32.totalorder %s198, 127
      %s200 = scalar_select %p199, %s198, 127
      %p201 = scmp.lt.s32.totalorder %s19, 0
      %s202 = scalar_select %p201, %s19, 0
      %s203 = sadd.s32 %s202, %s200
      %s204 = smul.addr %s203, 4
      %s205 = scalar_lea.vmem %s0, %s204
      %s206 = smul.u32 32, %s18
      %s207 = smul.u32 9, %s19
      %p208 = scmp.lt.s32.totalorder %s207, 8
      %s209 = scalar_select %p208, %s207, 8
      %s210 = smul.addr %s209, 4
      %s211 = scalar_lea.vmem %s1, %s210
      %s212 = smul.u32 9, %s19
      %s213 = smul.u32 32, %s18
      %p214 = scmp.lt.s32.totalorder %s213, 127
      %s215 = scalar_select %p214, %s213, 127
      %s216 = smul.addr %s215, 4
      %s217 = scalar_lea.vmem %s3, %s216
      %s218 = smul.u32 32, %s18
      %p220 = scmp.eq.s32.totalorder %s19, 0
      // Predicated region
      $region33: #{_lambda_.43} parent=31 // pred_check
        %p221 = pneg %p220
      $region34: #{_lambda_.43} parent=31 // pred_check_branch
        %223 = sbr.rel (%p221) target = $region36
      $region35: #{_lambda_.43} parent=31 // pred_region
        %vm224 = vcmask 64512
        %225 = vst.msk [vmem:[#allocation2] sm:$0xff] %vm224, 0.0
        %226 = vst.msk [vmem:[#allocation2 + $0x8] sm:$0xff] %vm224, 0.0
        %227 = vst.msk [vmem:[#allocation2 + $0x10] sm:$0xff] %vm224, 0.0
        %228 = vst.msk [vmem:[#allocation2 + $0x18] sm:$0xff] %vm224, 0.0
        %229 = vst.msk [vmem:[#allocation2 + $0x20] sm:$0xff] %vm224, 0.0
        %230 = vst.msk [vmem:[#allocation2 + $0x28] sm:$0xff] %vm224, 0.0
        %231 = vst.msk [vmem:[#allocation2 + $0x30] sm:$0xff] %vm224, 0.0
        %232 = vst.msk [vmem:[#allocation2 + $0x38] sm:$0xff] %vm224, 0.0
        %233 = vst.msk [vmem:[#allocation2 + $0x40] sm:$0xff] %vm224, 0.0
        %234 = vst.msk [vmem:[#allocation2 + $0x48] sm:$0xff] %vm224, 0.0
        %235 = vst.msk [vmem:[#allocation2 + $0x50] sm:$0xff] %vm224, 0.0
        %236 = vst.msk [vmem:[#allocation2 + $0x58] sm:$0xff] %vm224, 0.0
        %237 = vst.msk [vmem:[#allocation2 + $0x60] sm:$0xff] %vm224, 0.0
        %238 = vst.msk [vmem:[#allocation2 + $0x68] sm:$0xff] %vm224, 0.0
        %239 = vst.msk [vmem:[#allocation2 + $0x70] sm:$0xff] %vm224, 0.0
        %240 = vst.msk [vmem:[#allocation2 + $0x78] sm:$0xff] %vm224, 0.0
        %241 = vst.msk [vmem:[#allocation2 + $0x80] sm:$0xff] %vm224, 0.0
        %242 = vst.msk [vmem:[#allocation2 + $0x88] sm:$0xff] %vm224, 0.0
        %243 = vst.msk [vmem:[#allocation2 + $0x90] sm:$0xff] %vm224, 0.0
        %244 = vst.msk [vmem:[#allocation2 + $0x98] sm:$0xff] %vm224, 0.0
        %245 = vst.msk [vmem:[#allocation2 + $0xa0] sm:$0xff] %vm224, 0.0
        %246 = vst.msk [vmem:[#allocation2 + $0xa8] sm:$0xff] %vm224, 0.0
        %247 = vst.msk [vmem:[#allocation2 + $0xb0] sm:$0xff] %vm224, 0.0
        %248 = vst.msk [vmem:[#allocation2 + $0xb8] sm:$0xff] %vm224, 0.0
        %249 = vst.msk [vmem:[#allocation2 + $0xc0] sm:$0xff] %vm224, 0.0
        %250 = vst.msk [vmem:[#allocation2 + $0xc8] sm:$0xff] %vm224, 0.0
        %251 = vst.msk [vmem:[#allocation2 + $0xd0] sm:$0xff] %vm224, 0.0
        %252 = vst.msk [vmem:[#allocation2 + $0xd8] sm:$0xff] %vm224, 0.0
        %253 = vst.msk [vmem:[#allocation2 + $0xe0] sm:$0xff] %vm224, 0.0
        %254 = vst.msk [vmem:[#allocation2 + $0xe8] sm:$0xff] %vm224, 0.0
        %255 = vst.msk [vmem:[#allocation2 + $0xf0] sm:$0xff] %vm224, 0.0
        %256 = vst.msk [vmem:[#allocation2 + $0xf8] sm:$0xff] %vm224, 0.0
      $region36: #{_lambda_.43} parent=31 // pred_fallthru
        _
      %v257 = vld [vmem:[#allocation2] sm:$0xff]
      %v258 = vld [vmem:[#allocation2 + $0x8] sm:$0xff]
      %v259 = vld [vmem:[#allocation2 + $0x10] sm:$0xff]
      %v260 = vld [vmem:[#allocation2 + $0x18] sm:$0xff]
      %v261 = vld [vmem:[#allocation2 + $0x20] sm:$0xff]
      %v262 = vld [vmem:[#allocation2 + $0x28] sm:$0xff]
      %v263 = vld [vmem:[#allocation2 + $0x30] sm:$0xff]
      %v264 = vld [vmem:[#allocation2 + $0x38] sm:$0xff]
      %v265 = vld [vmem:[#allocation2 + $0x40] sm:$0xff]
      %v266 = vld [vmem:[#allocation2 + $0x48] sm:$0xff]
      %v267 = vld [vmem:[#allocation2 + $0x50] sm:$0xff]
      %v268 = vld [vmem:[#allocation2 + $0x58] sm:$0xff]
      %v269 = vld [vmem:[#allocation2 + $0x60] sm:$0xff]
      %v270 = vld [vmem:[#allocation2 + $0x68] sm:$0xff]
      %v271 = vld [vmem:[#allocation2 + $0x70] sm:$0xff]
      %v272 = vld [vmem:[#allocation2 + $0x78] sm:$0xff]
      %v273 = vld [vmem:[#allocation2 + $0x80] sm:$0xff]
      %v274 = vld [vmem:[#allocation2 + $0x88] sm:$0xff]
      %v275 = vld [vmem:[#allocation2 + $0x90] sm:$0xff]
      %v276 = vld [vmem:[#allocation2 + $0x98] sm:$0xff]
      %v277 = vld [vmem:[#allocation2 + $0xa0] sm:$0xff]
      %v278 = vld [vmem:[#allocation2 + $0xa8] sm:$0xff]
      %v279 = vld [vmem:[#allocation2 + $0xb0] sm:$0xff]
      %v280 = vld [vmem:[#allocation2 + $0xb8] sm:$0xff]
      %v281 = vld [vmem:[#allocation2 + $0xc0] sm:$0xff]
      %v282 = vld [vmem:[#allocation2 + $0xc8] sm:$0xff]
      %v283 = vld [vmem:[#allocation2 + $0xd0] sm:$0xff]
      %v284 = vld [vmem:[#allocation2 + $0xd8] sm:$0xff]
      %v285 = vld [vmem:[#allocation2 + $0xe0] sm:$0xff]
      %v286 = vld [vmem:[#allocation2 + $0xe8] sm:$0xff]
      %v287 = vld [vmem:[#allocation2 + $0xf0] sm:$0xff]
      %v288 = vld [vmem:[#allocation2 + $0xf8] sm:$0xff]
      %v289 = vld [vmem:[%s205] sm:$0xf]
      %v290 = vld [vmem:[%s205 + $0x4] sm:$0xf]
      %v291 = vld [vmem:[%s205 + $0x8] sm:$0xf]
      %v292 = vld [vmem:[%s205 + $0xc] sm:$0xf]
      %v293 = vld [vmem:[%s205 + $0x10] sm:$0xf]
      %v294 = vld [vmem:[%s205 + $0x14] sm:$0xf]
      %v295 = vld [vmem:[%s205 + $0x18] sm:$0xf]
      %v296 = vld [vmem:[%s205 + $0x1c] sm:$0xf]
      %v297 = vld [vmem:[%s205 + $0x20] sm:$0xf]
      %v298 = vld [vmem:[%s205 + $0x24] sm:$0xf]
      %v299 = vld [vmem:[%s205 + $0x28] sm:$0xf]
      %v300 = vld [vmem:[%s205 + $0x2c] sm:$0xf]
      %v301 = vld [vmem:[%s205 + $0x30] sm:$0xf]
      %v302 = vld [vmem:[%s205 + $0x34] sm:$0xf]
      %v303 = vld [vmem:[%s205 + $0x38] sm:$0xf]
      %v304 = vld [vmem:[%s205 + $0x3c] sm:$0xf]
      %v305 = vld [vmem:[%s205 + $0x40] sm:$0xf]
      %v306 = vld [vmem:[%s205 + $0x44] sm:$0xf]
      %v307 = vld [vmem:[%s205 + $0x48] sm:$0xf]
      %v308 = vld [vmem:[%s205 + $0x4c] sm:$0xf]
      %v309 = vld [vmem:[%s205 + $0x50] sm:$0xf]
      %v310 = vld [vmem:[%s205 + $0x54] sm:$0xf]
      %v311 = vld [vmem:[%s205 + $0x58] sm:$0xf]
      %v312 = vld [vmem:[%s205 + $0x5c] sm:$0xf]
      %v313 = vld [vmem:[%s205 + $0x60] sm:$0xf]
      %v314 = vld [vmem:[%s205 + $0x64] sm:$0xf]
      %v315 = vld [vmem:[%s205 + $0x68] sm:$0xf]
      %v316 = vld [vmem:[%s205 + $0x6c] sm:$0xf]
      %v317 = vld [vmem:[%s205 + $0x70] sm:$0xf]
      %v318 = vld [vmem:[%s205 + $0x74] sm:$0xf]
      %v319 = vld [vmem:[%s205 + $0x78] sm:$0xf]
      %v320 = vld [vmem:[%s205 + $0x7c] sm:$0xf]
      %v321 = vld [vmem:[%s211] sm:$0xf]
      %v322 = vld [vmem:[%s211 + $0x4] sm:$0xf]
      %v323 = vld [vmem:[%s211 + $0x8] sm:$0xf]
      %v324 = vld [vmem:[%s211 + $0xc] sm:$0xf]
      %v325 = vld [vmem:[%s211 + $0x10] sm:$0xf]
      %v326 = vld [vmem:[%s211 + $0x14] sm:$0xf]
      %v327 = vld [vmem:[%s211 + $0x18] sm:$0xf]
      %v328 = vld [vmem:[%s211 + $0x1c] sm:$0xf]
      %v329 = vld [vmem:[%s211 + $0x20] sm:$0xf]
      %v362 = vunpack.c.l.b16 %v289
      %v363 = vunpack.c.l.b16 %v290
      %v364 = vunpack.c.l.b16 %v291
      %v365 = vunpack.c.l.b16 %v292
      %v366 = vunpack.c.l.b16 %v293
      %v367 = vunpack.c.l.b16 %v294
      %v368 = vunpack.c.l.b16 %v295
      %v369 = vunpack.c.l.b16 %v296
      %v370 = vunpack.c.l.b16 %v297
      %v371 = vunpack.c.l.b16 %v298
      %v372 = vunpack.c.l.b16 %v299
      %v373 = vunpack.c.l.b16 %v300
      %v374 = vunpack.c.l.b16 %v301
      %v375 = vunpack.c.l.b16 %v302
      %v376 = vunpack.c.l.b16 %v303
      %v377 = vunpack.c.l.b16 %v304
      %v378 = vunpack.c.l.b16 %v305
      %v379 = vunpack.c.l.b16 %v306
      %v380 = vunpack.c.l.b16 %v307
      %v381 = vunpack.c.l.b16 %v308
      %v382 = vunpack.c.l.b16 %v309
      %v383 = vunpack.c.l.b16 %v310
      %v384 = vunpack.c.l.b16 %v311
      %v385 = vunpack.c.l.b16 %v312
      %v386 = vunpack.c.l.b16 %v313
      %v387 = vunpack.c.l.b16 %v314
      %v388 = vunpack.c.l.b16 %v315
      %v389 = vunpack.c.l.b16 %v316
      %v390 = vunpack.c.l.b16 %v317
      %v391 = vunpack.c.l.b16 %v318
      %v392 = vunpack.c.l.b16 %v319
      %v393 = vunpack.c.l.b16 %v320
      %v394 = vpack.c.b16 %v363, %v362
      %v395 = vpack.c.b16 %v365, %v364
      %v396 = vpack.c.b16 %v367, %v366
      %v397 = vpack.c.b16 %v369, %v368
      %v398 = vpack.c.b16 %v371, %v370
      %v399 = vpack.c.b16 %v373, %v372
      %v400 = vpack.c.b16 %v375, %v374
      %v401 = vpack.c.b16 %v377, %v376
      %v402 = vpack.c.b16 %v379, %v378
      %v403 = vpack.c.b16 %v381, %v380
      %v404 = vpack.c.b16 %v383, %v382
      %v405 = vpack.c.b16 %v385, %v384
      %v406 = vpack.c.b16 %v387, %v386
      %v407 = vpack.c.b16 %v389, %v388
      %v408 = vpack.c.b16 %v391, %v390
      %v409 = vpack.c.b16 %v393, %v392
      %v419 = vunpack.c.l.b16 %v321
      %v420 = vunpack.c.l.b16 %v322
      %v421 = vunpack.c.l.b16 %v323
      %v422 = vunpack.c.l.b16 %v324
      %v423 = vunpack.c.l.b16 %v325
      %v424 = vunpack.c.l.b16 %v326
      %v425 = vunpack.c.l.b16 %v327
      %v426 = vunpack.c.l.b16 %v328
      %v427 = vunpack.c.l.b16 %v329
      %v428 = vpack.c.b16 %v420, %v419
      %v429 = vpack.c.b16 %v422, %v421
      %v430 = vpack.c.b16 %v424, %v423
      %v431 = vpack.c.b16 %v426, %v425
      %v432 = vpack.c.b16 %v427, %v427
      %vm437 = vcmask 588800
      %v439 = vsel %vm437, %v394, 0
      %v442 = vsel %vm437, %v395, 0
      %v445 = vsel %vm437, %v396, 0
      %v448 = vsel %vm437, %v397, 0
      %v451 = vsel %vm437, %v398, 0
      %v454 = vsel %vm437, %v399, 0
      %v457 = vsel %vm437, %v400, 0
      %v460 = vsel %vm437, %v401, 0
      %v463 = vsel %vm437, %v402, 0
      %v466 = vsel %vm437, %v403, 0
      %v469 = vsel %vm437, %v404, 0
      %v472 = vsel %vm437, %v405, 0
      %v475 = vsel %vm437, %v406, 0
      %v478 = vsel %vm437, %v407, 0
      %v481 = vsel %vm437, %v408, 0
      %v484 = vsel %vm437, %v409, 0
      %vm486 = vcmask 1043456
      %v488 = vsel %vm486, %v432, 0
      %490 = vmatpush.bf16.msra.mxu0 0
      %491 = vmatpush.bf16.msra.mxu0 0
      %492 = vmatpush.bf16.msra.mxu0 0
      %493 = vmatpush.bf16.msra.mxu0 %v488
      %494 = vmatpush.bf16.msra.mxu0 %v431
      %495 = vmatpush.bf16.msra.mxu0 %v430
      %496 = vmatpush.bf16.msra.mxu0 %v429
      %497 = vmatpush.bf16.msra.mxu0 %v428
      %498 = vmatmul.bf16.gmra.mxu0 %v439
      %v499 = vpop.f32.mrf.mxu0
      %v500 = vadd.f32 0.0, %v499
      %v501 = vpop.f32.mrf.mxu0
      %v502 = vadd.f32 0.0, %v501
      %503 = vmatmul.bf16.gmra.mxu0 %v442
      %v504 = vpop.f32.mrf.mxu0
      %v505 = vadd.f32 0.0, %v504
      %v506 = vpop.f32.mrf.mxu0
      %v507 = vadd.f32 0.0, %v506
      %508 = vmatmul.bf16.gmra.mxu0 %v445
      %v509 = vpop.f32.mrf.mxu0
      %v510 = vadd.f32 0.0, %v509
      %v511 = vpop.f32.mrf.mxu0
      %v512 = vadd.f32 0.0, %v511
      %513 = vmatmul.bf16.gmra.mxu0 %v448
      %v514 = vpop.f32.mrf.mxu0
      %v515 = vadd.f32 0.0, %v514
      %v516 = vpop.f32.mrf.mxu0
      %v517 = vadd.f32 0.0, %v516
      %518 = vmatmul.bf16.gmra.mxu0 %v451
      %v519 = vpop.f32.mrf.mxu0
      %v520 = vadd.f32 0.0, %v519
      %v521 = vpop.f32.mrf.mxu0
      %v522 = vadd.f32 0.0, %v521
      %523 = vmatmul.bf16.gmra.mxu0 %v454
      %v524 = vpop.f32.mrf.mxu0
      %v525 = vadd.f32 0.0, %v524
      %v526 = vpop.f32.mrf.mxu0
      %v527 = vadd.f32 0.0, %v526
      %528 = vmatmul.bf16.gmra.mxu0 %v457
      %v529 = vpop.f32.mrf.mxu0
      %v530 = vadd.f32 0.0, %v529
      %v531 = vpop.f32.mrf.mxu0
      %v532 = vadd.f32 0.0, %v531
      %533 = vmatmul.bf16.gmra.mxu0 %v460
      %v534 = vpop.f32.mrf.mxu0
      %v535 = vadd.f32 0.0, %v534
      %v536 = vpop.f32.mrf.mxu0
      %v537 = vadd.f32 0.0, %v536
      %538 = vmatmul.bf16.gmra.mxu0 %v463
      %v539 = vpop.f32.mrf.mxu0
      %v540 = vadd.f32 0.0, %v539
      %v541 = vpop.f32.mrf.mxu0
      %v542 = vadd.f32 0.0, %v541
      %543 = vmatmul.bf16.gmra.mxu0 %v466
      %v544 = vpop.f32.mrf.mxu0
      %v545 = vadd.f32 0.0, %v544
      %v546 = vpop.f32.mrf.mxu0
      %v547 = vadd.f32 0.0, %v546
      %548 = vmatmul.bf16.gmra.mxu0 %v469
      %v549 = vpop.f32.mrf.mxu0
      %v550 = vadd.f32 0.0, %v549
      %v551 = vpop.f32.mrf.mxu0
      %v552 = vadd.f32 0.0, %v551
      %553 = vmatmul.bf16.gmra.mxu0 %v472
      %v554 = vpop.f32.mrf.mxu0
      %v555 = vadd.f32 0.0, %v554
      %v556 = vpop.f32.mrf.mxu0
      %v557 = vadd.f32 0.0, %v556
      %558 = vmatmul.bf16.gmra.mxu0 %v475
      %v559 = vpop.f32.mrf.mxu0
      %v560 = vadd.f32 0.0, %v559
      %v561 = vpop.f32.mrf.mxu0
      %v562 = vadd.f32 0.0, %v561
      %563 = vmatmul.bf16.gmra.mxu0 %v478
      %v564 = vpop.f32.mrf.mxu0
      %v565 = vadd.f32 0.0, %v564
      %v566 = vpop.f32.mrf.mxu0
      %v567 = vadd.f32 0.0, %v566
      %568 = vmatmul.bf16.gmra.mxu0 %v481
      %v569 = vpop.f32.mrf.mxu0
      %v570 = vadd.f32 0.0, %v569
      %v571 = vpop.f32.mrf.mxu0
      %v572 = vadd.f32 0.0, %v571
      %573 = vmatmul.bf16.gmra.mxu0 %v484
      %v574 = vpop.f32.mrf.mxu0
      %v575 = vadd.f32 0.0, %v574
      %v576 = vpop.f32.mrf.mxu0
      %v577 = vadd.f32 0.0, %v576
      %578 = vdwg.mxu0
      %v579 = vadd.f32 %v257, %v500
      %v580 = vadd.f32 %v258, %v502
      %v581 = vadd.f32 %v259, %v505
      %v582 = vadd.f32 %v260, %v507
      %v583 = vadd.f32 %v261, %v510
      %v584 = vadd.f32 %v262, %v512
      %v585 = vadd.f32 %v263, %v515
      %v586 = vadd.f32 %v264, %v517
      %v587 = vadd.f32 %v265, %v520
      %v588 = vadd.f32 %v266, %v522
      %v589 = vadd.f32 %v267, %v525
      %v590 = vadd.f32 %v268, %v527
      %v591 = vadd.f32 %v269, %v530
      %v592 = vadd.f32 %v270, %v532
      %v593 = vadd.f32 %v271, %v535
      %v594 = vadd.f32 %v272, %v537
      %v595 = vadd.f32 %v273, %v540
      %v596 = vadd.f32 %v274, %v542
      %v597 = vadd.f32 %v275, %v545
      %v598 = vadd.f32 %v276, %v547
      %v599 = vadd.f32 %v277, %v550
      %v600 = vadd.f32 %v278, %v552
      %v601 = vadd.f32 %v279, %v555
      %v602 = vadd.f32 %v280, %v557
      %v603 = vadd.f32 %v281, %v560
      %v604 = vadd.f32 %v282, %v562
      %v605 = vadd.f32 %v283, %v565
      %v606 = vadd.f32 %v284, %v567
      %v607 = vadd.f32 %v285, %v570
      %v608 = vadd.f32 %v286, %v572
      %v609 = vadd.f32 %v287, %v575
      %v610 = vadd.f32 %v288, %v577
      %vm611 = vcmask 64512
      %612 = vst.msk [vmem:[#allocation2] sm:$0xff] %vm611, %v579
      %613 = vst.msk [vmem:[#allocation2 + $0x8] sm:$0xff] %vm611, %v580
      %614 = vst.msk [vmem:[#allocation2 + $0x10] sm:$0xff] %vm611, %v581
      %615 = vst.msk [vmem:[#allocation2 + $0x18] sm:$0xff] %vm611, %v582
      %616 = vst.msk [vmem:[#allocation2 + $0x20] sm:$0xff] %vm611, %v583
      %617 = vst.msk [vmem:[#allocation2 + $0x28] sm:$0xff] %vm611, %v584
      %618 = vst.msk [vmem:[#allocation2 + $0x30] sm:$0xff] %vm611, %v585
      %619 = vst.msk [vmem:[#allocation2 + $0x38] sm:$0xff] %vm611, %v586
      %620 = vst.msk [vmem:[#allocation2 + $0x40] sm:$0xff] %vm611, %v587
      %621 = vst.msk [vmem:[#allocation2 + $0x48] sm:$0xff] %vm611, %v588
      %622 = vst.msk [vmem:[#allocation2 + $0x50] sm:$0xff] %vm611, %v589
      %623 = vst.msk [vmem:[#allocation2 + $0x58] sm:$0xff] %vm611, %v590
      %624 = vst.msk [vmem:[#allocation2 + $0x60] sm:$0xff] %vm611, %v591
      %625 = vst.msk [vmem:[#allocation2 + $0x68] sm:$0xff] %vm611, %v592
      %626 = vst.msk [vmem:[#allocation2 + $0x70] sm:$0xff] %vm611, %v593
      %627 = vst.msk [vmem:[#allocation2 + $0x78] sm:$0xff] %vm611, %v594
      %628 = vst.msk [vmem:[#allocation2 + $0x80] sm:$0xff] %vm611, %v595
      %629 = vst.msk [vmem:[#allocation2 + $0x88] sm:$0xff] %vm611, %v596
      %630 = vst.msk [vmem:[#allocation2 + $0x90] sm:$0xff] %vm611, %v597
      %631 = vst.msk [vmem:[#allocation2 + $0x98] sm:$0xff] %vm611, %v598
      %632 = vst.msk [vmem:[#allocation2 + $0xa0] sm:$0xff] %vm611, %v599
      %633 = vst.msk [vmem:[#allocation2 + $0xa8] sm:$0xff] %vm611, %v600
      %634 = vst.msk [vmem:[#allocation2 + $0xb0] sm:$0xff] %vm611, %v601
      %635 = vst.msk [vmem:[#allocation2 + $0xb8] sm:$0xff] %vm611, %v602
      %636 = vst.msk [vmem:[#allocation2 + $0xc0] sm:$0xff] %vm611, %v603
      %637 = vst.msk [vmem:[#allocation2 + $0xc8] sm:$0xff] %vm611, %v604
      %638 = vst.msk [vmem:[#allocation2 + $0xd0] sm:$0xff] %vm611, %v605
      %639 = vst.msk [vmem:[#allocation2 + $0xd8] sm:$0xff] %vm611, %v606
      %640 = vst.msk [vmem:[#allocation2 + $0xe0] sm:$0xff] %vm611, %v607
      %641 = vst.msk [vmem:[#allocation2 + $0xe8] sm:$0xff] %vm611, %v608
      %642 = vst.msk [vmem:[#allocation2 + $0xf0] sm:$0xff] %vm611, %v609
      %643 = vst.msk [vmem:[#allocation2 + $0xf8] sm:$0xff] %vm611, %v610
      // Predicated region
      $region37: #{_lambda_.43} parent=31 // pred_check
        %p644 = pneg %p220
      $region38: #{_lambda_.43} parent=31 // pred_check_branch
        %646 = sbr.rel (%p644) target = $region40
      $region39: #{_lambda_.43} parent=31 // pred_region
        %v647 = vld [vmem:[#allocation2] sm:$0xff]
        %v648 = vld [vmem:[#allocation2 + $0x8] sm:$0xff]
        %v649 = vld [vmem:[#allocation2 + $0x10] sm:$0xff]
        %v650 = vld [vmem:[#allocation2 + $0x18] sm:$0xff]
        %v651 = vld [vmem:[#allocation2 + $0x20] sm:$0xff]
        %v652 = vld [vmem:[#allocation2 + $0x28] sm:$0xff]
        %v653 = vld [vmem:[#allocation2 + $0x30] sm:$0xff]
        %v654 = vld [vmem:[#allocation2 + $0x38] sm:$0xff]
        %v655 = vld [vmem:[#allocation2 + $0x40] sm:$0xff]
        %v656 = vld [vmem:[#allocation2 + $0x48] sm:$0xff]
        %v657 = vld [vmem:[#allocation2 + $0x50] sm:$0xff]
        %v658 = vld [vmem:[#allocation2 + $0x58] sm:$0xff]
        %v659 = vld [vmem:[#allocation2 + $0x60] sm:$0xff]
        %v660 = vld [vmem:[#allocation2 + $0x68] sm:$0xff]
        %v661 = vld [vmem:[#allocation2 + $0x70] sm:$0xff]
        %v662 = vld [vmem:[#allocation2 + $0x78] sm:$0xff]
        %v663 = vld [vmem:[#allocation2 + $0x80] sm:$0xff]
        %v664 = vld [vmem:[#allocation2 + $0x88] sm:$0xff]
        %v665 = vld [vmem:[#allocation2 + $0x90] sm:$0xff]
        %v666 = vld [vmem:[#allocation2 + $0x98] sm:$0xff]
        %v667 = vld [vmem:[#allocation2 + $0xa0] sm:$0xff]
        %v668 = vld [vmem:[#allocation2 + $0xa8] sm:$0xff]
        %v669 = vld [vmem:[#allocation2 + $0xb0] sm:$0xff]
        %v670 = vld [vmem:[#allocation2 + $0xb8] sm:$0xff]
        %v671 = vld [vmem:[#allocation2 + $0xc0] sm:$0xff]
        %v672 = vld [vmem:[#allocation2 + $0xc8] sm:$0xff]
        %v673 = vld [vmem:[#allocation2 + $0xd0] sm:$0xff]
        %v674 = vld [vmem:[#allocation2 + $0xd8] sm:$0xff]
        %v675 = vld [vmem:[#allocation2 + $0xe0] sm:$0xff]
        %v676 = vld [vmem:[#allocation2 + $0xe8] sm:$0xff]
        %v677 = vld [vmem:[#allocation2 + $0xf0] sm:$0xff]
        %v678 = vld [vmem:[#allocation2 + $0xf8] sm:$0xff]
        %v679 = vld [vmem:[%s2] sm:$0x1]
        %v681 = vperm.slane %v679, 0
        %v683 = vadd.f32 %v647, %v681
        %v684 = vadd.f32 %v648, %v681
        %v685 = vadd.f32 %v649, %v681
        %v686 = vadd.f32 %v650, %v681
        %v687 = vadd.f32 %v651, %v681
        %v688 = vadd.f32 %v652, %v681
        %v689 = vadd.f32 %v653, %v681
        %v690 = vadd.f32 %v654, %v681
        %v691 = vadd.f32 %v655, %v681
        %v692 = vadd.f32 %v656, %v681
        %v693 = vadd.f32 %v657, %v681
        %v694 = vadd.f32 %v658, %v681
        %v695 = vadd.f32 %v659, %v681
        %v696 = vadd.f32 %v660, %v681
        %v697 = vadd.f32 %v661, %v681
        %v698 = vadd.f32 %v662, %v681
        %v699 = vadd.f32 %v663, %v681
        %v700 = vadd.f32 %v664, %v681
        %v701 = vadd.f32 %v665, %v681
        %v702 = vadd.f32 %v666, %v681
        %v703 = vadd.f32 %v667, %v681
        %v704 = vadd.f32 %v668, %v681
        %v705 = vadd.f32 %v669, %v681
        %v706 = vadd.f32 %v670, %v681
        %v707 = vadd.f32 %v671, %v681
        %v708 = vadd.f32 %v672, %v681
        %v709 = vadd.f32 %v673, %v681
        %v710 = vadd.f32 %v674, %v681
        %v711 = vadd.f32 %v675, %v681
        %v712 = vadd.f32 %v676, %v681
        %v713 = vadd.f32 %v677, %v681
        %v714 = vadd.f32 %v678, %v681
        %v715 = vpack.c.bf16 %v683, %v683
        %v716 = vpack.c.bf16 %v684, %v684
        %v717 = vpack.c.bf16 %v685, %v685
        %v718 = vpack.c.bf16 %v686, %v686
        %v719 = vpack.c.bf16 %v687, %v687
        %v720 = vpack.c.bf16 %v688, %v688
        %v721 = vpack.c.bf16 %v689, %v689
        %v722 = vpack.c.bf16 %v690, %v690
        %v723 = vpack.c.bf16 %v691, %v691
        %v724 = vpack.c.bf16 %v692, %v692
        %v725 = vpack.c.bf16 %v693, %v693
        %v726 = vpack.c.bf16 %v694, %v694
        %v727 = vpack.c.bf16 %v695, %v695
        %v728 = vpack.c.bf16 %v696, %v696
        %v729 = vpack.c.bf16 %v697, %v697
        %v730 = vpack.c.bf16 %v698, %v698
        %v731 = vpack.c.bf16 %v699, %v699
        %v732 = vpack.c.bf16 %v700, %v700
        %v733 = vpack.c.bf16 %v701, %v701
        %v734 = vpack.c.bf16 %v702, %v702
        %v735 = vpack.c.bf16 %v703, %v703
        %v736 = vpack.c.bf16 %v704, %v704
        %v737 = vpack.c.bf16 %v705, %v705
        %v738 = vpack.c.bf16 %v706, %v706
        %v739 = vpack.c.bf16 %v707, %v707
        %v740 = vpack.c.bf16 %v708, %v708
        %v741 = vpack.c.bf16 %v709, %v709
        %v742 = vpack.c.bf16 %v710, %v710
        %v743 = vpack.c.bf16 %v711, %v711
        %v744 = vpack.c.bf16 %v712, %v712
        %v745 = vpack.c.bf16 %v713, %v713
        %v746 = vpack.c.bf16 %v714, %v714
        %vm747 = vcmask 60416
        %748 = vst.msk [vmem:[%s217] sm:$0xf] %vm747, %v715
        %749 = vst.msk [vmem:[%s217 + $0x4] sm:$0xf] %vm747, %v716
        %750 = vst.msk [vmem:[%s217 + $0x8] sm:$0xf] %vm747, %v717
        %751 = vst.msk [vmem:[%s217 + $0xc] sm:$0xf] %vm747, %v718
        %752 = vst.msk [vmem:[%s217 + $0x10] sm:$0xf] %vm747, %v719
        %753 = vst.msk [vmem:[%s217 + $0x14] sm:$0xf] %vm747, %v720
        %754 = vst.msk [vmem:[%s217 + $0x18] sm:$0xf] %vm747, %v721
        %755 = vst.msk [vmem:[%s217 + $0x1c] sm:$0xf] %vm747, %v722
        %756 = vst.msk [vmem:[%s217 + $0x20] sm:$0xf] %vm747, %v723
        %757 = vst.msk [vmem:[%s217 + $0x24] sm:$0xf] %vm747, %v724
        %758 = vst.msk [vmem:[%s217 + $0x28] sm:$0xf] %vm747, %v725
        %759 = vst.msk [vmem:[%s217 + $0x2c] sm:$0xf] %vm747, %v726
        %760 = vst.msk [vmem:[%s217 + $0x30] sm:$0xf] %vm747, %v727
        %761 = vst.msk [vmem:[%s217 + $0x34] sm:$0xf] %vm747, %v728
        %762 = vst.msk [vmem:[%s217 + $0x38] sm:$0xf] %vm747, %v729
        %763 = vst.msk [vmem:[%s217 + $0x3c] sm:$0xf] %vm747, %v730
        %764 = vst.msk [vmem:[%s217 + $0x40] sm:$0xf] %vm747, %v731
        %765 = vst.msk [vmem:[%s217 + $0x44] sm:$0xf] %vm747, %v732
        %766 = vst.msk [vmem:[%s217 + $0x48] sm:$0xf] %vm747, %v733
        %767 = vst.msk [vmem:[%s217 + $0x4c] sm:$0xf] %vm747, %v734
        %768 = vst.msk [vmem:[%s217 + $0x50] sm:$0xf] %vm747, %v735
        %769 = vst.msk [vmem:[%s217 + $0x54] sm:$0xf] %vm747, %v736
        %770 = vst.msk [vmem:[%s217 + $0x58] sm:$0xf] %vm747, %v737
        %771 = vst.msk [vmem:[%s217 + $0x5c] sm:$0xf] %vm747, %v738
        %772 = vst.msk [vmem:[%s217 + $0x60] sm:$0xf] %vm747, %v739
        %773 = vst.msk [vmem:[%s217 + $0x64] sm:$0xf] %vm747, %v740
        %774 = vst.msk [vmem:[%s217 + $0x68] sm:$0xf] %vm747, %v741
        %775 = vst.msk [vmem:[%s217 + $0x6c] sm:$0xf] %vm747, %v742
        %776 = vst.msk [vmem:[%s217 + $0x70] sm:$0xf] %vm747, %v743
        %777 = vst.msk [vmem:[%s217 + $0x74] sm:$0xf] %vm747, %v744
        %778 = vst.msk [vmem:[%s217 + $0x78] sm:$0xf] %vm747, %v745
        %779 = vst.msk [vmem:[%s217 + $0x7c] sm:$0xf] %vm747, %v746
      $region40: #{_lambda_.43} parent=31 // pred_fallthru
        _
      %s780 = smul.u32 32, %s18
      %p781 = scmp.lt.s32.totalorder %s780, 127
      %s782 = scalar_select %p781, %s780, 127
      %s783 = smul.addr %s782, 4
      %s784 = scalar_lea.vmem %s3, %s783
      // Predicated region
      $region41: #{_lambda_.43} parent=31 // pred_check
        %p785 = pneg %p119
      $region42: #{_lambda_.43} parent=31 // pred_check_branch
        %787 = sbr.rel (%p785) target = $region44
      $region43: #{_lambda_.43} parent=31 // pred_region
        %s788 = smul.u32 32, %s18
      $region44: #{_lambda_.43} parent=31 // pred_fallthru
        _
    $region32: #{_lambda_.43} parent=5 // pred_fallthru
      _
    %p789 = scmp.le.s32.totalorder 2, %s9
    // Predicated region
    $region45: #{_lambda_.43} parent=5 // pred_check
      %p790 = pneg %p789
    $region46: #{_lambda_.43} parent=5 // pred_check_branch
      %792 = sbr.rel (%p790) target = $region48
    $region47: #{_lambda_.43} parent=5 // pred_region
      %s793 = ssub.s32 %s9, 2
      // Predicated region
      $region49: #{_lambda_.43} parent=47 // pred_check
        %p794 = pneg %p125
      $region50: #{_lambda_.43} parent=47 // pred_check_branch
        %796 = sbr.rel (%p794) target = $region52
      $region51: #{_lambda_.43} parent=47 // pred_region
        %s797 = smul.u32 32, %s20
        %p798 = scmp.lt.s32.totalorder %s797, 127
        %s799 = scalar_select %p798, %s797, 127
        %s800 = smul.addr %s799, 4
        %s801 = scalar_lea.vmem %s3, %s800
      $region52: #{_lambda_.43} parent=47 // pred_fallthru
        _
    $region48: #{_lambda_.43} parent=5 // pred_fallthru
      _
  $region6: #{_lambda_.43} parent=0 // loop_footer
    %s13 = sadd.s32 1, %s9
  $region7: #{_lambda_.43} parent=0 // loop_footer_branch
    %8 = sbr.rel target = $region3
  $region8: #{_lambda_.43} parent=0 // loop_exit
    _

// kernel: _lambda_.45
$region0: #{_lambda_.45}
  #allocation0 [shape = 'u32[]', space=smem, size = 0x4, offset = 0x4, fixed_abs, tag = 'smem constant byte address 0x4 - core index']
  #allocation1 [shape = 'u32[72,128]{1,0:T(1,128)}', space=vmem, size = 0x9000, scoped, tag = 'internal scratch']
  #allocation2 [shape = 'f32[256,16]{1,0:T(8,128)}', space=vmem, size = 0x20000, scoped, tag = 'scratch operand']
  %s0 = inlined_call_operand.vmem [shape: bf16[256,72], index: 0, kind: input, shape index: {}]
  %s1 = inlined_call_operand.vmem [shape: bf16[72,16], index: 1, kind: input, shape index: {}]
  %s2 = inlined_call_operand.vmem [shape: f32[1,16], index: 2, kind: input, shape index: {}]
  %s3 = inlined_call_operand.vmem [shape: bf16[256,16], index: 3, kind: output, shape index: {}]
  %s4 = sld [smem:[#allocation0]]
  $region30: #{_lambda_.45} parent=0
    _
  %s6 = ssub.s32 1, %s4
  %s7 = scalar_select 0, %s6, %s4
  // Predicated region
  $region2: #{_lambda_.45} parent=0 // pred_check
    _
  $region3: #{_lambda_.45} parent=0 // pred_check_branch
    %9 = sbr.rel (0) target = $region5
  $region4: #{_lambda_.45} parent=0 // pred_region
    _
  $region5: #{_lambda_.45} parent=0 // pred_fallthru
    _
  // Predicated region
  $region6: #{_lambda_.45} parent=0 // pred_check
    _
  $region7: #{_lambda_.45} parent=0 // pred_check_branch
    %11 = sbr.rel (0) target = $region9
  $region8: #{_lambda_.45} parent=0 // pred_region
    _
  $region9: #{_lambda_.45} parent=0 // pred_fallthru
    _
  // Predicated region
  $region10: #{_lambda_.45} parent=0 // pred_check
    _
  $region11: #{_lambda_.45} parent=0 // pred_check_branch
    %13 = sbr.rel (0) target = $region13
  $region12: #{_lambda_.45} parent=0 // pred_region
    _
  $region13: #{_lambda_.45} parent=0 // pred_fallthru
    _
  %p15 = scmp.eq.s32.totalorder 0, 0
  // Predicated region
  $region14: #{_lambda_.45} parent=0 // pred_check
    %p16 = pneg %p15
  $region15: #{_lambda_.45} parent=0 // pred_check_branch
    %18 = sbr.rel (%p16) target = $region17
  $region16: #{_lambda_.45} parent=0 // pred_region
    %vm19 = vcmask 130048
    %20 = vst.msk [vmem:[#allocation2] sm:$0xff] %vm19, 0.0
    %21 = vst.msk [vmem:[#allocation2 + $0x8] sm:$0xff] %vm19, 0.0
    %22 = vst.msk [vmem:[#allocation2 + $0x10] sm:$0xff] %vm19, 0.0
    %23 = vst.msk [vmem:[#allocation2 + $0x18] sm:$0xff] %vm19, 0.0
    %24 = vst.msk [vmem:[#allocation2 + $0x20] sm:$0xff] %vm19, 0.0
    %25 = vst.msk [vmem:[#allocation2 + $0x28] sm:$0xff] %vm19, 0.0
    %26 = vst.msk [vmem:[#allocation2 + $0x30] sm:$0xff] %vm19, 0.0
    %27 = vst.msk [vmem:[#allocation2 + $0x38] sm:$0xff] %vm19, 0.0
    %28 = vst.msk [vmem:[#allocation2 + $0x40] sm:$0xff] %vm19, 0.0
    %29 = vst.msk [vmem:[#allocation2 + $0x48] sm:$0xff] %vm19, 0.0
    %30 = vst.msk [vmem:[#allocation2 + $0x50] sm:$0xff] %vm19, 0.0
    %31 = vst.msk [vmem:[#allocation2 + $0x58] sm:$0xff] %vm19, 0.0
    %32 = vst.msk [vmem:[#allocation2 + $0x60] sm:$0xff] %vm19, 0.0
    %33 = vst.msk [vmem:[#allocation2 + $0x68] sm:$0xff] %vm19, 0.0
    %34 = vst.msk [vmem:[#allocation2 + $0x70] sm:$0xff] %vm19, 0.0
    %35 = vst.msk [vmem:[#allocation2 + $0x78] sm:$0xff] %vm19, 0.0
    %36 = vst.msk [vmem:[#allocation2 + $0x80] sm:$0xff] %vm19, 0.0
    %37 = vst.msk [vmem:[#allocation2 + $0x88] sm:$0xff] %vm19, 0.0
    %38 = vst.msk [vmem:[#allocation2 + $0x90] sm:$0xff] %vm19, 0.0
    %39 = vst.msk [vmem:[#allocation2 + $0x98] sm:$0xff] %vm19, 0.0
    %40 = vst.msk [vmem:[#allocation2 + $0xa0] sm:$0xff] %vm19, 0.0
    %41 = vst.msk [vmem:[#allocation2 + $0xa8] sm:$0xff] %vm19, 0.0
    %42 = vst.msk [vmem:[#allocation2 + $0xb0] sm:$0xff] %vm19, 0.0
    %43 = vst.msk [vmem:[#allocation2 + $0xb8] sm:$0xff] %vm19, 0.0
    %44 = vst.msk [vmem:[#allocation2 + $0xc0] sm:$0xff] %vm19, 0.0
    %45 = vst.msk [vmem:[#allocation2 + $0xc8] sm:$0xff] %vm19, 0.0
    %46 = vst.msk [vmem:[#allocation2 + $0xd0] sm:$0xff] %vm19, 0.0
    %47 = vst.msk [vmem:[#allocation2 + $0xd8] sm:$0xff] %vm19, 0.0
    %48 = vst.msk [vmem:[#allocation2 + $0xe0] sm:$0xff] %vm19, 0.0
    %49 = vst.msk [vmem:[#allocation2 + $0xe8] sm:$0xff] %vm19, 0.0
    %50 = vst.msk [vmem:[#allocation2 + $0xf0] sm:$0xff] %vm19, 0.0
    %51 = vst.msk [vmem:[#allocation2 + $0xf8] sm:$0xff] %vm19, 0.0
  $region17: #{_lambda_.45} parent=0 // pred_fallthru
    _
  %v52 = vld [vmem:[#allocation2] sm:$0xff]
  %v53 = vld [vmem:[#allocation2 + $0x8] sm:$0xff]
  %v54 = vld [vmem:[#allocation2 + $0x10] sm:$0xff]
  %v55 = vld [vmem:[#allocation2 + $0x18] sm:$0xff]
  %v56 = vld [vmem:[#allocation2 + $0x20] sm:$0xff]
  %v57 = vld [vmem:[#allocation2 + $0x28] sm:$0xff]
  %v58 = vld [vmem:[#allocation2 + $0x30] sm:$0xff]
  %v59 = vld [vmem:[#allocation2 + $0x38] sm:$0xff]
  %v60 = vld [vmem:[#allocation2 + $0x40] sm:$0xff]
  %v61 = vld [vmem:[#allocation2 + $0x48] sm:$0xff]
  %v62 = vld [vmem:[#allocation2 + $0x50] sm:$0xff]
  %v63 = vld [vmem:[#allocation2 + $0x58] sm:$0xff]
  %v64 = vld [vmem:[#allocation2 + $0x60] sm:$0xff]
  %v65 = vld [vmem:[#allocation2 + $0x68] sm:$0xff]
  %v66 = vld [vmem:[#allocation2 + $0x70] sm:$0xff]
  %v67 = vld [vmem:[#allocation2 + $0x78] sm:$0xff]
  %v68 = vld [vmem:[#allocation2 + $0x80] sm:$0xff]
  %v69 = vld [vmem:[#allocation2 + $0x88] sm:$0xff]
  %v70 = vld [vmem:[#allocation2 + $0x90] sm:$0xff]
  %v71 = vld [vmem:[#allocation2 + $0x98] sm:$0xff]
  %v72 = vld [vmem:[#allocation2 + $0xa0] sm:$0xff]
  %v73 = vld [vmem:[#allocation2 + $0xa8] sm:$0xff]
  %v74 = vld [vmem:[#allocation2 + $0xb0] sm:$0xff]
  %v75 = vld [vmem:[#allocation2 + $0xb8] sm:$0xff]
  %v76 = vld [vmem:[#allocation2 + $0xc0] sm:$0xff]
  %v77 = vld [vmem:[#allocation2 + $0xc8] sm:$0xff]
  %v78 = vld [vmem:[#allocation2 + $0xd0] sm:$0xff]
  %v79 = vld [vmem:[#allocation2 + $0xd8] sm:$0xff]
  %v80 = vld [vmem:[#allocation2 + $0xe0] sm:$0xff]
  %v81 = vld [vmem:[#allocation2 + $0xe8] sm:$0xff]
  %v82 = vld [vmem:[#allocation2 + $0xf0] sm:$0xff]
  %v83 = vld [vmem:[#allocation2 + $0xf8] sm:$0xff]
  %v84 = vld [vmem:[%s0] sm:$0xf]
  %v85 = vld [vmem:[%s0 + $0x4] sm:$0xf]
  %v86 = vld [vmem:[%s0 + $0x8] sm:$0xf]
  %v87 = vld [vmem:[%s0 + $0xc] sm:$0xf]
  %v88 = vld [vmem:[%s0 + $0x10] sm:$0xf]
  %v89 = vld [vmem:[%s0 + $0x14] sm:$0xf]
  %v90 = vld [vmem:[%s0 + $0x18] sm:$0xf]
  %v91 = vld [vmem:[%s0 + $0x1c] sm:$0xf]
  %v92 = vld [vmem:[%s0 + $0x20] sm:$0xf]
  %v93 = vld [vmem:[%s0 + $0x24] sm:$0xf]
  %v94 = vld [vmem:[%s0 + $0x28] sm:$0xf]
  %v95 = vld [vmem:[%s0 + $0x2c] sm:$0xf]
  %v96 = vld [vmem:[%s0 + $0x30] sm:$0xf]
  %v97 = vld [vmem:[%s0 + $0x34] sm:$0xf]
  %v98 = vld [vmem:[%s0 + $0x38] sm:$0xf]
  %v99 = vld [vmem:[%s0 + $0x3c] sm:$0xf]
  %v100 = vld [vmem:[%s0 + $0x40] sm:$0xf]
  %v101 = vld [vmem:[%s0 + $0x44] sm:$0xf]
  %v102 = vld [vmem:[%s0 + $0x48] sm:$0xf]
  %v103 = vld [vmem:[%s0 + $0x4c] sm:$0xf]
  %v104 = vld [vmem:[%s0 + $0x50] sm:$0xf]
  %v105 = vld [vmem:[%s0 + $0x54] sm:$0xf]
  %v106 = vld [vmem:[%s0 + $0x58] sm:$0xf]
  %v107 = vld [vmem:[%s0 + $0x5c] sm:$0xf]
  %v108 = vld [vmem:[%s0 + $0x60] sm:$0xf]
  %v109 = vld [vmem:[%s0 + $0x64] sm:$0xf]
  %v110 = vld [vmem:[%s0 + $0x68] sm:$0xf]
  %v111 = vld [vmem:[%s0 + $0x6c] sm:$0xf]
  %v112 = vld [vmem:[%s0 + $0x70] sm:$0xf]
  %v113 = vld [vmem:[%s0 + $0x74] sm:$0xf]
  %v114 = vld [vmem:[%s0 + $0x78] sm:$0xf]
  %v115 = vld [vmem:[%s0 + $0x7c] sm:$0xf]
  %v116 = vld [vmem:[%s1] sm:$0xf]
  %v117 = vld [vmem:[%s1 + $0x4] sm:$0xf]
  %v118 = vld [vmem:[%s1 + $0x8] sm:$0xf]
  %v119 = vld [vmem:[%s1 + $0xc] sm:$0xf]
  %v120 = vld [vmem:[%s1 + $0x10] sm:$0xf]
  %v121 = vld [vmem:[%s1 + $0x14] sm:$0xf]
  %v122 = vld [vmem:[%s1 + $0x18] sm:$0xf]
  %v123 = vld [vmem:[%s1 + $0x1c] sm:$0xf]
  %v124 = vld [vmem:[%s1 + $0x20] sm:$0xf]
  %v157 = vunpack.c.l.b16 %v84
  %v158 = vunpack.c.l.b16 %v85
  %v159 = vunpack.c.l.b16 %v86
  %v160 = vunpack.c.l.b16 %v87
  %v161 = vunpack.c.l.b16 %v88
  %v162 = vunpack.c.l.b16 %v89
  %v163 = vunpack.c.l.b16 %v90
  %v164 = vunpack.c.l.b16 %v91
  %v165 = vunpack.c.l.b16 %v92
  %v166 = vunpack.c.l.b16 %v93
  %v167 = vunpack.c.l.b16 %v94
  %v168 = vunpack.c.l.b16 %v95
  %v169 = vunpack.c.l.b16 %v96
  %v170 = vunpack.c.l.b16 %v97
  %v171 = vunpack.c.l.b16 %v98
  %v172 = vunpack.c.l.b16 %v99
  %v173 = vunpack.c.l.b16 %v100
  %v174 = vunpack.c.l.b16 %v101
  %v175 = vunpack.c.l.b16 %v102
  %v176 = vunpack.c.l.b16 %v103
  %v177 = vunpack.c.l.b16 %v104
  %v178 = vunpack.c.l.b16 %v105
  %v179 = vunpack.c.l.b16 %v106
  %v180 = vunpack.c.l.b16 %v107
  %v181 = vunpack.c.l.b16 %v108
  %v182 = vunpack.c.l.b16 %v109
  %v183 = vunpack.c.l.b16 %v110
  %v184 = vunpack.c.l.b16 %v111
  %v185 = vunpack.c.l.b16 %v112
  %v186 = vunpack.c.l.b16 %v113
  %v187 = vunpack.c.l.b16 %v114
  %v188 = vunpack.c.l.b16 %v115
  %v189 = vpack.c.b16 %v158, %v157
  %v190 = vpack.c.b16 %v160, %v159
  %v191 = vpack.c.b16 %v162, %v161
  %v192 = vpack.c.b16 %v164, %v163
  %v193 = vpack.c.b16 %v166, %v165
  %v194 = vpack.c.b16 %v168, %v167
  %v195 = vpack.c.b16 %v170, %v169
  %v196 = vpack.c.b16 %v172, %v171
  %v197 = vpack.c.b16 %v174, %v173
  %v198 = vpack.c.b16 %v176, %v175
  %v199 = vpack.c.b16 %v178, %v177
  %v200 = vpack.c.b16 %v180, %v179
  %v201 = vpack.c.b16 %v182, %v181
  %v202 = vpack.c.b16 %v184, %v183
  %v203 = vpack.c.b16 %v186, %v185
  %v204 = vpack.c.b16 %v188, %v187
  %v214 = vunpack.c.l.b16 %v116
  %v215 = vunpack.c.l.b16 %v117
  %v216 = vunpack.c.l.b16 %v118
  %v217 = vunpack.c.l.b16 %v119
  %v218 = vunpack.c.l.b16 %v120
  %v219 = vunpack.c.l.b16 %v121
  %v220 = vunpack.c.l.b16 %v122
  %v221 = vunpack.c.l.b16 %v123
  %v222 = vunpack.c.l.b16 %v124
  %v223 = vpack.c.b16 %v215, %v214
  %v224 = vpack.c.b16 %v217, %v216
  %v225 = vpack.c.b16 %v219, %v218
  %v226 = vpack.c.b16 %v221, %v220
  %v227 = vpack.c.b16 %v222, %v222
  %vm232 = vcmask 588800
  %v234 = vsel %vm232, %v189, 0
  %v237 = vsel %vm232, %v190, 0
  %v240 = vsel %vm232, %v191, 0
  %v243 = vsel %vm232, %v192, 0
  %v246 = vsel %vm232, %v193, 0
  %v249 = vsel %vm232, %v194, 0
  %v252 = vsel %vm232, %v195, 0
  %v255 = vsel %vm232, %v196, 0
  %v258 = vsel %vm232, %v197, 0
  %v261 = vsel %vm232, %v198, 0
  %v264 = vsel %vm232, %v199, 0
  %v267 = vsel %vm232, %v200, 0
  %v270 = vsel %vm232, %v201, 0
  %v273 = vsel %vm232, %v202, 0
  %v276 = vsel %vm232, %v203, 0
  %v279 = vsel %vm232, %v204, 0
  %vm281 = vcmask 1043456
  %v283 = vsel %vm281, %v227, 0
  %285 = vmatpush.bf16.msra.mxu0 0
  %286 = vmatpush.bf16.msra.mxu0 0
  %287 = vmatpush.bf16.msra.mxu0 0
  %288 = vmatpush.bf16.msra.mxu0 %v283
  %289 = vmatpush.bf16.msra.mxu0 %v226
  %290 = vmatpush.bf16.msra.mxu0 %v225
  %291 = vmatpush.bf16.msra.mxu0 %v224
  %292 = vmatpush.bf16.msra.mxu0 %v223
  %293 = vmatmul.bf16.gmra.mxu0 %v234
  %v294 = vpop.f32.mrf.mxu0
  %v295 = vadd.f32 0.0, %v294
  %v296 = vpop.f32.mrf.mxu0
  %v297 = vadd.f32 0.0, %v296
  %298 = vmatmul.bf16.gmra.mxu0 %v237
  %v299 = vpop.f32.mrf.mxu0
  %v300 = vadd.f32 0.0, %v299
  %v301 = vpop.f32.mrf.mxu0
  %v302 = vadd.f32 0.0, %v301
  %303 = vmatmul.bf16.gmra.mxu0 %v240
  %v304 = vpop.f32.mrf.mxu0
  %v305 = vadd.f32 0.0, %v304
  %v306 = vpop.f32.mrf.mxu0
  %v307 = vadd.f32 0.0, %v306
  %308 = vmatmul.bf16.gmra.mxu0 %v243
  %v309 = vpop.f32.mrf.mxu0
  %v310 = vadd.f32 0.0, %v309
  %v311 = vpop.f32.mrf.mxu0
  %v312 = vadd.f32 0.0, %v311
  %313 = vmatmul.bf16.gmra.mxu0 %v246
  %v314 = vpop.f32.mrf.mxu0
  %v315 = vadd.f32 0.0, %v314
  %v316 = vpop.f32.mrf.mxu0
  %v317 = vadd.f32 0.0, %v316
  %318 = vmatmul.bf16.gmra.mxu0 %v249
  %v319 = vpop.f32.mrf.mxu0
  %v320 = vadd.f32 0.0, %v319
  %v321 = vpop.f32.mrf.mxu0
  %v322 = vadd.f32 0.0, %v321
  %323 = vmatmul.bf16.gmra.mxu0 %v252
  %v324 = vpop.f32.mrf.mxu0
  %v325 = vadd.f32 0.0, %v324
  %v326 = vpop.f32.mrf.mxu0
  %v327 = vadd.f32 0.0, %v326
  %328 = vmatmul.bf16.gmra.mxu0 %v255
  %v329 = vpop.f32.mrf.mxu0
  %v330 = vadd.f32 0.0, %v329
  %v331 = vpop.f32.mrf.mxu0
  %v332 = vadd.f32 0.0, %v331
  %333 = vmatmul.bf16.gmra.mxu0 %v258
  %v334 = vpop.f32.mrf.mxu0
  %v335 = vadd.f32 0.0, %v334
  %v336 = vpop.f32.mrf.mxu0
  %v337 = vadd.f32 0.0, %v336
  %338 = vmatmul.bf16.gmra.mxu0 %v261
  %v339 = vpop.f32.mrf.mxu0
  %v340 = vadd.f32 0.0, %v339
  %v341 = vpop.f32.mrf.mxu0
  %v342 = vadd.f32 0.0, %v341
  %343 = vmatmul.bf16.gmra.mxu0 %v264
  %v344 = vpop.f32.mrf.mxu0
  %v345 = vadd.f32 0.0, %v344
  %v346 = vpop.f32.mrf.mxu0
  %v347 = vadd.f32 0.0, %v346
  %348 = vmatmul.bf16.gmra.mxu0 %v267
  %v349 = vpop.f32.mrf.mxu0
  %v350 = vadd.f32 0.0, %v349
  %v351 = vpop.f32.mrf.mxu0
  %v352 = vadd.f32 0.0, %v351
  %353 = vmatmul.bf16.gmra.mxu0 %v270
  %v354 = vpop.f32.mrf.mxu0
  %v355 = vadd.f32 0.0, %v354
  %v356 = vpop.f32.mrf.mxu0
  %v357 = vadd.f32 0.0, %v356
  %358 = vmatmul.bf16.gmra.mxu0 %v273
  %v359 = vpop.f32.mrf.mxu0
  %v360 = vadd.f32 0.0, %v359
  %v361 = vpop.f32.mrf.mxu0
  %v362 = vadd.f32 0.0, %v361
  %363 = vmatmul.bf16.gmra.mxu0 %v276
  %v364 = vpop.f32.mrf.mxu0
  %v365 = vadd.f32 0.0, %v364
  %v366 = vpop.f32.mrf.mxu0
  %v367 = vadd.f32 0.0, %v366
  %368 = vmatmul.bf16.gmra.mxu0 %v279
  %v369 = vpop.f32.mrf.mxu0
  %v370 = vadd.f32 0.0, %v369
  %v371 = vpop.f32.mrf.mxu0
  %v372 = vadd.f32 0.0, %v371
  %373 = vdwg.mxu0
  %v374 = vadd.f32 %v52, %v295
  %v375 = vadd.f32 %v53, %v297
  %v376 = vadd.f32 %v54, %v300
  %v377 = vadd.f32 %v55, %v302
  %v378 = vadd.f32 %v56, %v305
  %v379 = vadd.f32 %v57, %v307
  %v380 = vadd.f32 %v58, %v310
  %v381 = vadd.f32 %v59, %v312
  %v382 = vadd.f32 %v60, %v315
  %v383 = vadd.f32 %v61, %v317
  %v384 = vadd.f32 %v62, %v320
  %v385 = vadd.f32 %v63, %v322
  %v386 = vadd.f32 %v64, %v325
  %v387 = vadd.f32 %v65, %v327
  %v388 = vadd.f32 %v66, %v330
  %v389 = vadd.f32 %v67, %v332
  %v390 = vadd.f32 %v68, %v335
  %v391 = vadd.f32 %v69, %v337
  %v392 = vadd.f32 %v70, %v340
  %v393 = vadd.f32 %v71, %v342
  %v394 = vadd.f32 %v72, %v345
  %v395 = vadd.f32 %v73, %v347
  %v396 = vadd.f32 %v74, %v350
  %v397 = vadd.f32 %v75, %v352
  %v398 = vadd.f32 %v76, %v355
  %v399 = vadd.f32 %v77, %v357
  %v400 = vadd.f32 %v78, %v360
  %v401 = vadd.f32 %v79, %v362
  %v402 = vadd.f32 %v80, %v365
  %v403 = vadd.f32 %v81, %v367
  %v404 = vadd.f32 %v82, %v370
  %v405 = vadd.f32 %v83, %v372
  %vm406 = vcmask 130048
  %407 = vst.msk [vmem:[#allocation2] sm:$0xff] %vm406, %v374
  %408 = vst.msk [vmem:[#allocation2 + $0x8] sm:$0xff] %vm406, %v375
  %409 = vst.msk [vmem:[#allocation2 + $0x10] sm:$0xff] %vm406, %v376
  %410 = vst.msk [vmem:[#allocation2 + $0x18] sm:$0xff] %vm406, %v377
  %411 = vst.msk [vmem:[#allocation2 + $0x20] sm:$0xff] %vm406, %v378
  %412 = vst.msk [vmem:[#allocation2 + $0x28] sm:$0xff] %vm406, %v379
  %413 = vst.msk [vmem:[#allocation2 + $0x30] sm:$0xff] %vm406, %v380
  %414 = vst.msk [vmem:[#allocation2 + $0x38] sm:$0xff] %vm406, %v381
  %415 = vst.msk [vmem:[#allocation2 + $0x40] sm:$0xff] %vm406, %v382
  %416 = vst.msk [vmem:[#allocation2 + $0x48] sm:$0xff] %vm406, %v383
  %417 = vst.msk [vmem:[#allocation2 + $0x50] sm:$0xff] %vm406, %v384
  %418 = vst.msk [vmem:[#allocation2 + $0x58] sm:$0xff] %vm406, %v385
  %419 = vst.msk [vmem:[#allocation2 + $0x60] sm:$0xff] %vm406, %v386
  %420 = vst.msk [vmem:[#allocation2 + $0x68] sm:$0xff] %vm406, %v387
  %421 = vst.msk [vmem:[#allocation2 + $0x70] sm:$0xff] %vm406, %v388
  %422 = vst.msk [vmem:[#allocation2 + $0x78] sm:$0xff] %vm406, %v389
  %423 = vst.msk [vmem:[#allocation2 + $0x80] sm:$0xff] %vm406, %v390
  %424 = vst.msk [vmem:[#allocation2 + $0x88] sm:$0xff] %vm406, %v391
  %425 = vst.msk [vmem:[#allocation2 + $0x90] sm:$0xff] %vm406, %v392
  %426 = vst.msk [vmem:[#allocation2 + $0x98] sm:$0xff] %vm406, %v393
  %427 = vst.msk [vmem:[#allocation2 + $0xa0] sm:$0xff] %vm406, %v394
  %428 = vst.msk [vmem:[#allocation2 + $0xa8] sm:$0xff] %vm406, %v395
  %429 = vst.msk [vmem:[#allocation2 + $0xb0] sm:$0xff] %vm406, %v396
  %430 = vst.msk [vmem:[#allocation2 + $0xb8] sm:$0xff] %vm406, %v397
  %431 = vst.msk [vmem:[#allocation2 + $0xc0] sm:$0xff] %vm406, %v398
  %432 = vst.msk [vmem:[#allocation2 + $0xc8] sm:$0xff] %vm406, %v399
  %433 = vst.msk [vmem:[#allocation2 + $0xd0] sm:$0xff] %vm406, %v400
  %434 = vst.msk [vmem:[#allocation2 + $0xd8] sm:$0xff] %vm406, %v401
  %435 = vst.msk [vmem:[#allocation2 + $0xe0] sm:$0xff] %vm406, %v402
  %436 = vst.msk [vmem:[#allocation2 + $0xe8] sm:$0xff] %vm406, %v403
  %437 = vst.msk [vmem:[#allocation2 + $0xf0] sm:$0xff] %vm406, %v404
  %438 = vst.msk [vmem:[#allocation2 + $0xf8] sm:$0xff] %vm406, %v405
  // Predicated region
  $region18: #{_lambda_.45} parent=0 // pred_check
    %p439 = pneg %p15
  $region19: #{_lambda_.45} parent=0 // pred_check_branch
    %441 = sbr.rel (%p439) target = $region21
  $region20: #{_lambda_.45} parent=0 // pred_region
    %v442 = vld [vmem:[#allocation2] sm:$0xff]
    %v443 = vld [vmem:[#allocation2 + $0x8] sm:$0xff]
    %v444 = vld [vmem:[#allocation2 + $0x10] sm:$0xff]
    %v445 = vld [vmem:[#allocation2 + $0x18] sm:$0xff]
    %v446 = vld [vmem:[#allocation2 + $0x20] sm:$0xff]
    %v447 = vld [vmem:[#allocation2 + $0x28] sm:$0xff]
    %v448 = vld [vmem:[#allocation2 + $0x30] sm:$0xff]
    %v449 = vld [vmem:[#allocation2 + $0x38] sm:$0xff]
    %v450 = vld [vmem:[#allocation2 + $0x40] sm:$0xff]
    %v451 = vld [vmem:[#allocation2 + $0x48] sm:$0xff]
    %v452 = vld [vmem:[#allocation2 + $0x50] sm:$0xff]
    %v453 = vld [vmem:[#allocation2 + $0x58] sm:$0xff]
    %v454 = vld [vmem:[#allocation2 + $0x60] sm:$0xff]
    %v455 = vld [vmem:[#allocation2 + $0x68] sm:$0xff]
    %v456 = vld [vmem:[#allocation2 + $0x70] sm:$0xff]
    %v457 = vld [vmem:[#allocation2 + $0x78] sm:$0xff]
    %v458 = vld [vmem:[#allocation2 + $0x80] sm:$0xff]
    %v459 = vld [vmem:[#allocation2 + $0x88] sm:$0xff]
    %v460 = vld [vmem:[#allocation2 + $0x90] sm:$0xff]
    %v461 = vld [vmem:[#allocation2 + $0x98] sm:$0xff]
    %v462 = vld [vmem:[#allocation2 + $0xa0] sm:$0xff]
    %v463 = vld [vmem:[#allocation2 + $0xa8] sm:$0xff]
    %v464 = vld [vmem:[#allocation2 + $0xb0] sm:$0xff]
    %v465 = vld [vmem:[#allocation2 + $0xb8] sm:$0xff]
    %v466 = vld [vmem:[#allocation2 + $0xc0] sm:$0xff]
    %v467 = vld [vmem:[#allocation2 + $0xc8] sm:$0xff]
    %v468 = vld [vmem:[#allocation2 + $0xd0] sm:$0xff]
    %v469 = vld [vmem:[#allocation2 + $0xd8] sm:$0xff]
    %v470 = vld [vmem:[#allocation2 + $0xe0] sm:$0xff]
    %v471 = vld [vmem:[#allocation2 + $0xe8] sm:$0xff]
    %v472 = vld [vmem:[#allocation2 + $0xf0] sm:$0xff]
    %v473 = vld [vmem:[#allocation2 + $0xf8] sm:$0xff]
    %v474 = vld [vmem:[%s2] sm:$0x1]
    %v476 = vperm.slane %v474, 0
    %v478 = vadd.f32 %v442, %v476
    %v479 = vadd.f32 %v443, %v476
    %v480 = vadd.f32 %v444, %v476
    %v481 = vadd.f32 %v445, %v476
    %v482 = vadd.f32 %v446, %v476
    %v483 = vadd.f32 %v447, %v476
    %v484 = vadd.f32 %v448, %v476
    %v485 = vadd.f32 %v449, %v476
    %v486 = vadd.f32 %v450, %v476
    %v487 = vadd.f32 %v451, %v476
    %v488 = vadd.f32 %v452, %v476
    %v489 = vadd.f32 %v453, %v476
    %v490 = vadd.f32 %v454, %v476
    %v491 = vadd.f32 %v455, %v476
    %v492 = vadd.f32 %v456, %v476
    %v493 = vadd.f32 %v457, %v476
    %v494 = vadd.f32 %v458, %v476
    %v495 = vadd.f32 %v459, %v476
    %v496 = vadd.f32 %v460, %v476
    %v497 = vadd.f32 %v461, %v476
    %v498 = vadd.f32 %v462, %v476
    %v499 = vadd.f32 %v463, %v476
    %v500 = vadd.f32 %v464, %v476
    %v501 = vadd.f32 %v465, %v476
    %v502 = vadd.f32 %v466, %v476
    %v503 = vadd.f32 %v467, %v476
    %v504 = vadd.f32 %v468, %v476
    %v505 = vadd.f32 %v469, %v476
    %v506 = vadd.f32 %v470, %v476
    %v507 = vadd.f32 %v471, %v476
    %v508 = vadd.f32 %v472, %v476
    %v509 = vadd.f32 %v473, %v476
    %v510 = vpack.c.bf16 %v478, %v478
    %v511 = vpack.c.bf16 %v479, %v479
    %v512 = vpack.c.bf16 %v480, %v480
    %v513 = vpack.c.bf16 %v481, %v481
    %v514 = vpack.c.bf16 %v482, %v482
    %v515 = vpack.c.bf16 %v483, %v483
    %v516 = vpack.c.bf16 %v484, %v484
    %v517 = vpack.c.bf16 %v485, %v485
    %v518 = vpack.c.bf16 %v486, %v486
    %v519 = vpack.c.bf16 %v487, %v487
    %v520 = vpack.c.bf16 %v488, %v488
    %v521 = vpack.c.bf16 %v489, %v489
    %v522 = vpack.c.bf16 %v490, %v490
    %v523 = vpack.c.bf16 %v491, %v491
    %v524 = vpack.c.bf16 %v492, %v492
    %v525 = vpack.c.bf16 %v493, %v493
    %v526 = vpack.c.bf16 %v494, %v494
    %v527 = vpack.c.bf16 %v495, %v495
    %v528 = vpack.c.bf16 %v496, %v496
    %v529 = vpack.c.bf16 %v497, %v497
    %v530 = vpack.c.bf16 %v498, %v498
    %v531 = vpack.c.bf16 %v499, %v499
    %v532 = vpack.c.bf16 %v500, %v500
    %v533 = vpack.c.bf16 %v501, %v501
    %v534 = vpack.c.bf16 %v502, %v502
    %v535 = vpack.c.bf16 %v503, %v503
    %v536 = vpack.c.bf16 %v504, %v504
    %v537 = vpack.c.bf16 %v505, %v505
    %v538 = vpack.c.bf16 %v506, %v506
    %v539 = vpack.c.bf16 %v507, %v507
    %v540 = vpack.c.bf16 %v508, %v508
    %v541 = vpack.c.bf16 %v509, %v509
    %vm542 = vcmask 125952
    %543 = vst.msk [vmem:[%s3] sm:$0xf] %vm542, %v510
    %544 = vst.msk [vmem:[%s3 + $0x4] sm:$0xf] %vm542, %v511
    %545 = vst.msk [vmem:[%s3 + $0x8] sm:$0xf] %vm542, %v512
    %546 = vst.msk [vmem:[%s3 + $0xc] sm:$0xf] %vm542, %v513
    %547 = vst.msk [vmem:[%s3 + $0x10] sm:$0xf] %vm542, %v514
    %548 = vst.msk [vmem:[%s3 + $0x14] sm:$0xf] %vm542, %v515
    %549 = vst.msk [vmem:[%s3 + $0x18] sm:$0xf] %vm542, %v516
    %550 = vst.msk [vmem:[%s3 + $0x1c] sm:$0xf] %vm542, %v517
    %551 = vst.msk [vmem:[%s3 + $0x20] sm:$0xf] %vm542, %v518
    %552 = vst.msk [vmem:[%s3 + $0x24] sm:$0xf] %vm542, %v519
    %553 = vst.msk [vmem:[%s3 + $0x28] sm:$0xf] %vm542, %v520
    %554 = vst.msk [vmem:[%s3 + $0x2c] sm:$0xf] %vm542, %v521
    %555 = vst.msk [vmem:[%s3 + $0x30] sm:$0xf] %vm542, %v522
    %556 = vst.msk [vmem:[%s3 + $0x34] sm:$0xf] %vm542, %v523
    %557 = vst.msk [vmem:[%s3 + $0x38] sm:$0xf] %vm542, %v524
    %558 = vst.msk [vmem:[%s3 + $0x3c] sm:$0xf] %vm542, %v525
    %559 = vst.msk [vmem:[%s3 + $0x40] sm:$0xf] %vm542, %v526
    %560 = vst.msk [vmem:[%s3 + $0x44] sm:$0xf] %vm542, %v527
    %561 = vst.msk [vmem:[%s3 + $0x48] sm:$0xf] %vm542, %v528
    %562 = vst.msk [vmem:[%s3 + $0x4c] sm:$0xf] %vm542, %v529
    %563 = vst.msk [vmem:[%s3 + $0x50] sm:$0xf] %vm542, %v530
    %564 = vst.msk [vmem:[%s3 + $0x54] sm:$0xf] %vm542, %v531
    %565 = vst.msk [vmem:[%s3 + $0x58] sm:$0xf] %vm542, %v532
    %566 = vst.msk [vmem:[%s3 + $0x5c] sm:$0xf] %vm542, %v533
    %567 = vst.msk [vmem:[%s3 + $0x60] sm:$0xf] %vm542, %v534
    %568 = vst.msk [vmem:[%s3 + $0x64] sm:$0xf] %vm542, %v535
    %569 = vst.msk [vmem:[%s3 + $0x68] sm:$0xf] %vm542, %v536
    %570 = vst.msk [vmem:[%s3 + $0x6c] sm:$0xf] %vm542, %v537
    %571 = vst.msk [vmem:[%s3 + $0x70] sm:$0xf] %vm542, %v538
    %572 = vst.msk [vmem:[%s3 + $0x74] sm:$0xf] %vm542, %v539
    %573 = vst.msk [vmem:[%s3 + $0x78] sm:$0xf] %vm542, %v540
    %574 = vst.msk [vmem:[%s3 + $0x7c] sm:$0xf] %vm542, %v541
  $region21: #{_lambda_.45} parent=0 // pred_fallthru
    _
  // Predicated region
  $region22: #{_lambda_.45} parent=0 // pred_check
    _
  $region23: #{_lambda_.45} parent=0 // pred_check_branch
    %576 = sbr.rel (0) target = $region25
  $region24: #{_lambda_.45} parent=0 // pred_region
    _
  $region25: #{_lambda_.45} parent=0 // pred_fallthru
    _
  // Predicated region
  $region26: #{_lambda_.45} parent=0 // pred_check
    _
  $region27: #{_lambda_.45} parent=0 // pred_check_branch
    %578 = sbr.rel (0) target = $region29
  $region28: #{_lambda_.45} parent=0 // pred_region
    _
  $region29: #{_lambda_.45} parent=0 // pred_fallthru
    _

// kernel: _lambda_.46
$region0: #{_lambda_.46}
  #allocation0 [shape = 'u32[]', space=smem, size = 0x4, offset = 0x4, fixed_abs, tag = 'smem constant byte address 0x4 - core index']
  #allocation1 [shape = 'u32[72,128]{1,0:T(1,128)}', space=vmem, size = 0x9000, scoped, tag = 'internal scratch']
  %s0 = inlined_call_operand.vmem [shape: bf16[512,8], index: 0, kind: input, shape index: {}]
  %s1 = inlined_call_operand.vmem [shape: f32[1,8], index: 1, kind: input, shape index: {}]
  %s2 = inlined_call_operand.vmem [shape: f32[1,8], index: 2, kind: input, shape index: {}]
  %s3 = inlined_call_operand.vmem [shape: bf16[512,8], index: 3, kind: output, shape index: {}]
  %s4 = sld [smem:[#allocation0]]
  $region45: #{_lambda_.46} parent=0
    _
  %s6 = ssub.s32 1, %s4
  %s7 = scalar_select 0, %s6, %s4
  loop: start=0, step=1, limit=4
  $region2: #{_lambda_.46} parent=0 // loop_pre_header
    _
  $region3: #{_lambda_.46} parent=0 // loop_header
    %s9 = sphi 0, %s13
    %p10 = scmp.ge.s32.totalorder %s9, 4
    %s19 = sphi 0, %s21
    %s22 = sphi 0, %s19
    %s23 = sphi 0, %s22
    %s39 = sphi 0, %s23
    %s43 = sphi 0, %s43
    %s45 = sphi 0, %s43
    %s46 = sphi 0, %s45
    %s60 = sphi 0, %s46
    %s64 = sphi 0, %s64
    %s66 = sphi 0, %s64
    %s67 = sphi 0, %s66
    %s81 = sphi 0, %s67
    %s87 = sphi 0, %s89
    %s90 = sphi 0, %s87
    %s91 = sphi 0, %s90
    %s107 = sphi 0, %s91
  $region4: #{_lambda_.46} parent=0 // loop_header_branch
    %12 = sbr.rel (%p10) target = $region8
  $region5: #{_lambda_.46} parent=0 // loop_body
    %s14 = ssub.s32 %s9, 1
    %s15 = ssub.s32 %s9, 2
    %s16 = sadd.s32 %s9, 1
    %s17 = ssub.s32 %s9, %s16
    %p18 = scmp.eq.s32.totalorder %s17, 0
    %s20 = sadd.s32 %s19, 1
    %s21 = scalar_select %p18, %s19, %s20
    %p24 = pneg %p18
    %p25 = scmp.eq.s32.totalorder %s9, 1
    %p26 = por %p24, %p25
    %p27 = scmp.ne.s32.totalorder %s19, %s22
    %p28 = scmp.eq.s32.totalorder %s9, 0
    %p29 = por %p27, %p28
    %p30 = scmp.ne.s32.totalorder %s19, %s22
    %p31 = scmp.eq.s32.totalorder %s14, 1
    %p32 = por %p30, %p31
    %p33 = scmp.ne.s32.totalorder %s22, %s23
    %p34 = scmp.eq.s32.totalorder %s14, 0
    %p35 = por %p33, %p34
    %p36 = scmp.ne.s32.totalorder %s22, %s23
    %p37 = scmp.eq.s32.totalorder %s15, 1
    %p38 = por %p36, %p37
    %p40 = scmp.ne.s32.totalorder %s23, %s39
    %p41 = scmp.eq.s32.totalorder %s15, 0
    %p42 = por %p40, %p41
    %s44 = sadd.s32 %s43, 1
    %p47 = scmp.eq.s32.totalorder %s9, 1
    %p48 = scmp.ne.s32.totalorder %s43, %s45
    %p49 = scmp.eq.s32.totalorder %s9, 0
    %p50 = por %p48, %p49
    %p51 = scmp.ne.s32.totalorder %s43, %s45
    %p52 = scmp.eq.s32.totalorder %s14, 1
    %p53 = por %p51, %p52
    %p54 = scmp.ne.s32.totalorder %s45, %s46
    %p55 = scmp.eq.s32.totalorder %s14, 0
    %p56 = por %p54, %p55
    %p57 = scmp.ne.s32.totalorder %s45, %s46
    %p58 = scmp.eq.s32.totalorder %s15, 1
    %p59 = por %p57, %p58
    %p61 = scmp.ne.s32.totalorder %s46, %s60
    %p62 = scmp.eq.s32.totalorder %s15, 0
    %p63 = por %p61, %p62
    %s65 = sadd.s32 %s64, 1
    %p68 = scmp.eq.s32.totalorder %s9, 1
    %p69 = scmp.ne.s32.totalorder %s64, %s66
    %p70 = scmp.eq.s32.totalorder %s9, 0
    %p71 = por %p69, %p70
    %p72 = scmp.ne.s32.totalorder %s64, %s66
    %p73 = scmp.eq.s32.totalorder %s14, 1
    %p74 = por %p72, %p73
    %p75 = scmp.ne.s32.totalorder %s66, %s67
    %p76 = scmp.eq.s32.totalorder %s14, 0
    %p77 = por %p75, %p76
    %p78 = scmp.ne.s32.totalorder %s66, %s67
    %p79 = scmp.eq.s32.totalorder %s15, 1
    %p80 = por %p78, %p79
    %p82 = scmp.ne.s32.totalorder %s67, %s81
    %p83 = scmp.eq.s32.totalorder %s15, 0
    %p84 = por %p82, %p83
    %s85 = ssub.s32 %s9, %s16
    %p86 = scmp.eq.s32.totalorder %s85, 0
    %s88 = sadd.s32 %s87, 1
    %s89 = scalar_select %p86, %s87, %s88
    %p92 = pneg %p86
    %p93 = scmp.eq.s32.totalorder %s9, 1
    %p94 = por %p92, %p93
    %p95 = scmp.ne.s32.totalorder %s87, %s90
    %p96 = scmp.eq.s32.totalorder %s9, 0
    %p97 = por %p95, %p96
    %p98 = scmp.ne.s32.totalorder %s87, %s90
    %p99 = scmp.eq.s32.totalorder %s14, 1
    %p100 = por %p98, %p99
    %p101 = scmp.ne.s32.totalorder %s90, %s91
    %p102 = scmp.eq.s32.totalorder %s14, 0
    %p103 = por %p101, %p102
    %p104 = scmp.ne.s32.totalorder %s90, %s91
    %p105 = scmp.eq.s32.totalorder %s15, 1
    %p106 = por %p104, %p105
    %p108 = scmp.ne.s32.totalorder %s91, %s107
    %p109 = scmp.eq.s32.totalorder %s15, 0
    %p110 = por %p108, %p109
    %p111 = scmp.le.s32.totalorder 1, %s9
    %p112 = scmp.lt.s32.totalorder %s9, 3
    %p113 = pnand %p111, %p112
    %p114 = pneg %p113
    // Predicated region
    $region9: #{_lambda_.46} parent=5 // pred_check
      _
    $region10: #{_lambda_.46} parent=5 // pred_check_branch
      %116 = sbr.rel (%p113) target = $region12
    $region11: #{_lambda_.46} parent=5 // pred_region
      %s117 = ssub.s32 %s9, 1
      // Predicated region
      $region13: #{_lambda_.46} parent=11 // pred_check
        %p118 = pneg %p56
      $region14: #{_lambda_.46} parent=11 // pred_check_branch
        %120 = sbr.rel (%p118) target = $region16
      $region15: #{_lambda_.46} parent=11 // pred_region
        _
      $region16: #{_lambda_.46} parent=11 // pred_fallthru
        _
      // Predicated region
      $region17: #{_lambda_.46} parent=11 // pred_check
        %p121 = pneg %p77
      $region18: #{_lambda_.46} parent=11 // pred_check_branch
        %123 = sbr.rel (%p121) target = $region20
      $region19: #{_lambda_.46} parent=11 // pred_region
        _
      $region20: #{_lambda_.46} parent=11 // pred_fallthru
        _
    $region12: #{_lambda_.46} parent=5 // pred_fallthru
      _
    %p124 = scmp.lt.s32.totalorder %s9, 2
    // Predicated region
    $region21: #{_lambda_.46} parent=5 // pred_check
      %p125 = pneg %p124
    $region22: #{_lambda_.46} parent=5 // pred_check_branch
      %127 = sbr.rel (%p125) target = $region24
    $region23: #{_lambda_.46} parent=5 // pred_region
      // Predicated region
      $region25: #{_lambda_.46} parent=23 // pred_check
        %p128 = pneg %p29
      $region26: #{_lambda_.46} parent=23 // pred_check_branch
        %130 = sbr.rel (%p128) target = $region28
      $region27: #{_lambda_.46} parent=23 // pred_region
        %s131 = smul.u32 32, %s9
        %p132 = scmp.lt.s32.totalorder %s131, 63
        %s133 = scalar_select %p132, %s131, 63
        %s134 = smul.addr %s133, 4
        %s135 = scalar_lea.vmem %s0, %s134
        %s136 = smul.u32 32, %s9
      $region28: #{_lambda_.46} parent=23 // pred_fallthru
        _
    $region24: #{_lambda_.46} parent=5 // pred_fallthru
      _
    %p137 = scmp.le.s32.totalorder 1, %s9
    %p138 = scmp.lt.s32.totalorder %s9, 3
    %p139 = pnand %p137, %p138
    %p140 = pneg %p139
    // Predicated region
    $region29: #{_lambda_.46} parent=5 // pred_check
      _
    $region30: #{_lambda_.46} parent=5 // pred_check_branch
      %142 = sbr.rel (%p139) target = $region32
    $region31: #{_lambda_.46} parent=5 // pred_region
      %s143 = ssub.s32 %s9, 1
      %s144 = smul.u32 32, %s14
      %p145 = scmp.lt.s32.totalorder %s144, 63
      %s146 = scalar_select %p145, %s144, 63
      %s147 = smul.addr %s146, 4
      %s148 = scalar_lea.vmem %s0, %s147
      %p149 = pneg %p35
      %p150 = pneg %p32
      %p151 = pneg %p56
      %p152 = pneg %p53
      %p153 = pneg %p77
      %p154 = pneg %p74
      %p155 = pneg %p103
      %p156 = pneg %p100
      %s157 = smul.u32 32, %s14
      %p158 = scmp.lt.s32.totalorder %s157, 63
      %s159 = scalar_select %p158, %s157, 63
      %s160 = smul.addr %s159, 4
      %s161 = scalar_lea.vmem %s3, %s160
      %s162 = smul.u32 32, %s14
      %p163 = scmp.lt.s32.totalorder %s162, 63
      %s164 = scalar_select %p163, %s162, 63
      %s165 = smul.addr %s164, 4
      %s166 = scalar_lea.vmem %s0, %s165
      %s167 = smul.u32 32, %s14
      %s168 = smul.u32 32, %s14
      %p169 = scmp.lt.s32.totalorder %s168, 63
      %s170 = scalar_select %p169, %s168, 63
      %s171 = smul.addr %s170, 4
      %s172 = scalar_lea.vmem %s3, %s171
      %s173 = smul.u32 32, %s14
      %v174 = vld [vmem:[%s166] sm:$0xf]
      %v175 = vld [vmem:[%s166 + $0x4] sm:$0xf]
      %v176 = vld [vmem:[%s166 + $0x8] sm:$0xf]
      %v177 = vld [vmem:[%s166 + $0xc] sm:$0xf]
      %v178 = vld [vmem:[%s166 + $0x10] sm:$0xf]
      %v179 = vld [vmem:[%s166 + $0x14] sm:$0xf]
      %v180 = vld [vmem:[%s166 + $0x18] sm:$0xf]
      %v181 = vld [vmem:[%s166 + $0x1c] sm:$0xf]
      %v182 = vld [vmem:[%s166 + $0x20] sm:$0xf]
      %v183 = vld [vmem:[%s166 + $0x24] sm:$0xf]
      %v184 = vld [vmem:[%s166 + $0x28] sm:$0xf]
      %v185 = vld [vmem:[%s166 + $0x2c] sm:$0xf]
      %v186 = vld [vmem:[%s166 + $0x30] sm:$0xf]
      %v187 = vld [vmem:[%s166 + $0x34] sm:$0xf]
      %v188 = vld [vmem:[%s166 + $0x38] sm:$0xf]
      %v189 = vld [vmem:[%s166 + $0x3c] sm:$0xf]
      %v190 = vld [vmem:[%s166 + $0x40] sm:$0xf]
      %v191 = vld [vmem:[%s166 + $0x44] sm:$0xf]
      %v192 = vld [vmem:[%s166 + $0x48] sm:$0xf]
      %v193 = vld [vmem:[%s166 + $0x4c] sm:$0xf]
      %v194 = vld [vmem:[%s166 + $0x50] sm:$0xf]
      %v195 = vld [vmem:[%s166 + $0x54] sm:$0xf]
      %v196 = vld [vmem:[%s166 + $0x58] sm:$0xf]
      %v197 = vld [vmem:[%s166 + $0x5c] sm:$0xf]
      %v198 = vld [vmem:[%s166 + $0x60] sm:$0xf]
      %v199 = vld [vmem:[%s166 + $0x64] sm:$0xf]
      %v200 = vld [vmem:[%s166 + $0x68] sm:$0xf]
      %v201 = vld [vmem:[%s166 + $0x6c] sm:$0xf]
      %v202 = vld [vmem:[%s166 + $0x70] sm:$0xf]
      %v203 = vld [vmem:[%s166 + $0x74] sm:$0xf]
      %v204 = vld [vmem:[%s166 + $0x78] sm:$0xf]
      %v205 = vld [vmem:[%s166 + $0x7c] sm:$0xf]
      %v206 = vunpack.c.l.bf16 %v174
      %v207 = vunpack.c.l.bf16 %v175
      %v208 = vunpack.c.l.bf16 %v176
      %v209 = vunpack.c.l.bf16 %v177
      %v210 = vunpack.c.l.bf16 %v178
      %v211 = vunpack.c.l.bf16 %v179
      %v212 = vunpack.c.l.bf16 %v180
      %v213 = vunpack.c.l.bf16 %v181
      %v214 = vunpack.c.l.bf16 %v182
      %v215 = vunpack.c.l.bf16 %v183
      %v216 = vunpack.c.l.bf16 %v184
      %v217 = vunpack.c.l.bf16 %v185
      %v218 = vunpack.c.l.bf16 %v186
      %v219 = vunpack.c.l.bf16 %v187
      %v220 = vunpack.c.l.bf16 %v188
      %v221 = vunpack.c.l.bf16 %v189
      %v222 = vunpack.c.l.bf16 %v190
      %v223 = vunpack.c.l.bf16 %v191
      %v224 = vunpack.c.l.bf16 %v192
      %v225 = vunpack.c.l.bf16 %v193
      %v226 = vunpack.c.l.bf16 %v194
      %v227 = vunpack.c.l.bf16 %v195
      %v228 = vunpack.c.l.bf16 %v196
      %v229 = vunpack.c.l.bf16 %v197
      %v230 = vunpack.c.l.bf16 %v198
      %v231 = vunpack.c.l.bf16 %v199
      %v232 = vunpack.c.l.bf16 %v200
      %v233 = vunpack.c.l.bf16 %v201
      %v234 = vunpack.c.l.bf16 %v202
      %v235 = vunpack.c.l.bf16 %v203
      %v236 = vunpack.c.l.bf16 %v204
      %v237 = vunpack.c.l.bf16 %v205
      %v238 = vld [vmem:[%s1] sm:$0x1]
      %v239 = vld [vmem:[%s2] sm:$0x1]
      %vm240 = vcmask 64512
      %v241 = vsel %vm240, %v206, 0.0
      %242 = vadd.xlane.f32.xlu0 %v241
      %v243 = vpop.xlane.xlu0 %242
      %v244 = vsel %vm240, %v207, 0.0
      %245 = vadd.xlane.f32.xlu0 %v244
      %v246 = vpop.xlane.xlu0 %245
      %v247 = vsel %vm240, %v208, 0.0
      %248 = vadd.xlane.f32.xlu0 %v247
      %v249 = vpop.xlane.xlu0 %248
      %v250 = vsel %vm240, %v209, 0.0
      %251 = vadd.xlane.f32.xlu0 %v250
      %v252 = vpop.xlane.xlu0 %251
      %v253 = vsel %vm240, %v210, 0.0
      %254 = vadd.xlane.f32.xlu0 %v253
      %v255 = vpop.xlane.xlu0 %254
      %v256 = vsel %vm240, %v211, 0.0
      %257 = vadd.xlane.f32.xlu0 %v256
      %v258 = vpop.xlane.xlu0 %257
      %v259 = vsel %vm240, %v212, 0.0
      %260 = vadd.xlane.f32.xlu0 %v259
      %v261 = vpop.xlane.xlu0 %260
      %v262 = vsel %vm240, %v213, 0.0
      %263 = vadd.xlane.f32.xlu0 %v262
      %v264 = vpop.xlane.xlu0 %263
      %v265 = vsel %vm240, %v214, 0.0
      %266 = vadd.xlane.f32.xlu0 %v265
      %v267 = vpop.xlane.xlu0 %266
      %v268 = vsel %vm240, %v215, 0.0
      %269 = vadd.xlane.f32.xlu0 %v268
      %v270 = vpop.xlane.xlu0 %269
      %v271 = vsel %vm240, %v216, 0.0
      %272 = vadd.xlane.f32.xlu0 %v271
      %v273 = vpop.xlane.xlu0 %272
      %v274 = vsel %vm240, %v217, 0.0
      %275 = vadd.xlane.f32.xlu0 %v274
      %v276 = vpop.xlane.xlu0 %275
      %v277 = vsel %vm240, %v218, 0.0
      %278 = vadd.xlane.f32.xlu0 %v277
      %v279 = vpop.xlane.xlu0 %278
      %v280 = vsel %vm240, %v219, 0.0
      %281 = vadd.xlane.f32.xlu0 %v280
      %v282 = vpop.xlane.xlu0 %281
      %v283 = vsel %vm240, %v220, 0.0
      %284 = vadd.xlane.f32.xlu0 %v283
      %v285 = vpop.xlane.xlu0 %284
      %v286 = vsel %vm240, %v221, 0.0
      %287 = vadd.xlane.f32.xlu0 %v286
      %v288 = vpop.xlane.xlu0 %287
      %v289 = vsel %vm240, %v222, 0.0
      %290 = vadd.xlane.f32.xlu0 %v289
      %v291 = vpop.xlane.xlu0 %290
      %v292 = vsel %vm240, %v223, 0.0
      %293 = vadd.xlane.f32.xlu0 %v292
      %v294 = vpop.xlane.xlu0 %293
      %v295 = vsel %vm240, %v224, 0.0
      %296 = vadd.xlane.f32.xlu0 %v295
      %v297 = vpop.xlane.xlu0 %296
      %v298 = vsel %vm240, %v225, 0.0
      %299 = vadd.xlane.f32.xlu0 %v298
      %v300 = vpop.xlane.xlu0 %299
      %v301 = vsel %vm240, %v226, 0.0
      %302 = vadd.xlane.f32.xlu0 %v301
      %v303 = vpop.xlane.xlu0 %302
      %v304 = vsel %vm240, %v227, 0.0
      %305 = vadd.xlane.f32.xlu0 %v304
      %v306 = vpop.xlane.xlu0 %305
      %v307 = vsel %vm240, %v228, 0.0
      %308 = vadd.xlane.f32.xlu0 %v307
      %v309 = vpop.xlane.xlu0 %308
      %v310 = vsel %vm240, %v229, 0.0
      %311 = vadd.xlane.f32.xlu0 %v310
      %v312 = vpop.xlane.xlu0 %311
      %v313 = vsel %vm240, %v230, 0.0
      %314 = vadd.xlane.f32.xlu0 %v313
      %v315 = vpop.xlane.xlu0 %314
      %v316 = vsel %vm240, %v231, 0.0
      %317 = vadd.xlane.f32.xlu0 %v316
      %v318 = vpop.xlane.xlu0 %317
      %v319 = vsel %vm240, %v232, 0.0
      %320 = vadd.xlane.f32.xlu0 %v319
      %v321 = vpop.xlane.xlu0 %320
      %v322 = vsel %vm240, %v233, 0.0
      %323 = vadd.xlane.f32.xlu0 %v322
      %v324 = vpop.xlane.xlu0 %323
      %v325 = vsel %vm240, %v234, 0.0
      %326 = vadd.xlane.f32.xlu0 %v325
      %v327 = vpop.xlane.xlu0 %326
      %v328 = vsel %vm240, %v235, 0.0
      %329 = vadd.xlane.f32.xlu0 %v328
      %v330 = vpop.xlane.xlu0 %329
      %v331 = vsel %vm240, %v236, 0.0
      %332 = vadd.xlane.f32.xlu0 %v331
      %v333 = vpop.xlane.xlu0 %332
      %v334 = vsel %vm240, %v237, 0.0
      %335 = vadd.xlane.f32.xlu0 %v334
      %v336 = vpop.xlane.xlu0 %335
      %v337 = vrcp.pop 8.0
      %v338 = vmul.f32 8.0, %v337
      %v339 = vsub.f32 1.0, %v338
      %v340 = vmul.f32 %v337, %v339
      %v341 = vadd.f32 %v337, %v340
      %vm342 = vweird.f32 %v337
      %v343 = vsel %vm342, %v337, %v341
      %v344 = vmul.f32 %v243, %v343
      %v345 = vmul.f32 %v246, %v343
      %v346 = vmul.f32 %v249, %v343
      %v347 = vmul.f32 %v252, %v343
      %v348 = vmul.f32 %v255, %v343
      %v349 = vmul.f32 %v258, %v343
      %v350 = vmul.f32 %v261, %v343
      %v351 = vmul.f32 %v264, %v343
      %v352 = vmul.f32 %v267, %v343
      %v353 = vmul.f32 %v270, %v343
      %v354 = vmul.f32 %v273, %v343
      %v355 = vmul.f32 %v276, %v343
      %v356 = vmul.f32 %v279, %v343
      %v357 = vmul.f32 %v282, %v343
      %v358 = vmul.f32 %v285, %v343
      %v359 = vmul.f32 %v288, %v343
      %v360 = vmul.f32 %v291, %v343
      %v361 = vmul.f32 %v294, %v343
      %v362 = vmul.f32 %v297, %v343
      %v363 = vmul.f32 %v300, %v343
      %v364 = vmul.f32 %v303, %v343
      %v365 = vmul.f32 %v306, %v343
      %v366 = vmul.f32 %v309, %v343
      %v367 = vmul.f32 %v312, %v343
      %v368 = vmul.f32 %v315, %v343
      %v369 = vmul.f32 %v318, %v343
      %v370 = vmul.f32 %v321, %v343
      %v371 = vmul.f32 %v324, %v343
      %v372 = vmul.f32 %v327, %v343
      %v373 = vmul.f32 %v330, %v343
      %v374 = vmul.f32 %v333, %v343
      %v375 = vmul.f32 %v336, %v343
      %v376 = vsub.f32 %v206, %v344
      %v377 = vsub.f32 %v207, %v345
      %v378 = vsub.f32 %v208, %v346
      %v379 = vsub.f32 %v209, %v347
      %v380 = vsub.f32 %v210, %v348
      %v381 = vsub.f32 %v211, %v349
      %v382 = vsub.f32 %v212, %v350
      %v383 = vsub.f32 %v213, %v351
      %v384 = vsub.f32 %v214, %v352
      %v385 = vsub.f32 %v215, %v353
      %v386 = vsub.f32 %v216, %v354
      %v387 = vsub.f32 %v217, %v355
      %v388 = vsub.f32 %v218, %v356
      %v389 = vsub.f32 %v219, %v357
      %v390 = vsub.f32 %v220, %v358
      %v391 = vsub.f32 %v221, %v359
      %v392 = vsub.f32 %v222, %v360
      %v393 = vsub.f32 %v223, %v361
      %v394 = vsub.f32 %v224, %v362
      %v395 = vsub.f32 %v225, %v363
      %v396 = vsub.f32 %v226, %v364
      %v397 = vsub.f32 %v227, %v365
      %v398 = vsub.f32 %v228, %v366
      %v399 = vsub.f32 %v229, %v367
      %v400 = vsub.f32 %v230, %v368
      %v401 = vsub.f32 %v231, %v369
      %v402 = vsub.f32 %v232, %v370
      %v403 = vsub.f32 %v233, %v371
      %v404 = vsub.f32 %v234, %v372
      %v405 = vsub.f32 %v235, %v373
      %v406 = vsub.f32 %v236, %v374
      %v407 = vsub.f32 %v237, %v375
      %v408 = vmul.f32 %v376, %v376
      %v409 = vmul.f32 %v377, %v377
      %v410 = vmul.f32 %v378, %v378
      %v411 = vmul.f32 %v379, %v379
      %v412 = vmul.f32 %v380, %v380
      %v413 = vmul.f32 %v381, %v381
      %v414 = vmul.f32 %v382, %v382
      %v415 = vmul.f32 %v383, %v383
      %v416 = vmul.f32 %v384, %v384
      %v417 = vmul.f32 %v385, %v385
      %v418 = vmul.f32 %v386, %v386
      %v419 = vmul.f32 %v387, %v387
      %v420 = vmul.f32 %v388, %v388
      %v421 = vmul.f32 %v389, %v389
      %v422 = vmul.f32 %v390, %v390
      %v423 = vmul.f32 %v391, %v391
      %v424 = vmul.f32 %v392, %v392
      %v425 = vmul.f32 %v393, %v393
      %v426 = vmul.f32 %v394, %v394
      %v427 = vmul.f32 %v395, %v395
      %v428 = vmul.f32 %v396, %v396
      %v429 = vmul.f32 %v397, %v397
      %v430 = vmul.f32 %v398, %v398
      %v431 = vmul.f32 %v399, %v399
      %v432 = vmul.f32 %v400, %v400
      %v433 = vmul.f32 %v401, %v401
      %v434 = vmul.f32 %v402, %v402
      %v435 = vmul.f32 %v403, %v403
      %v436 = vmul.f32 %v404, %v404
      %v437 = vmul.f32 %v405, %v405
      %v438 = vmul.f32 %v406, %v406
      %v439 = vmul.f32 %v407, %v407
      %v440 = vsel %vm240, %v408, 0.0
      %441 = vadd.xlane.f32.xlu0 %v440
      %v442 = vpop.xlane.xlu0 %441
      %v443 = vsel %vm240, %v409, 0.0
      %444 = vadd.xlane.f32.xlu0 %v443
      %v445 = vpop.xlane.xlu0 %444
      %v446 = vsel %vm240, %v410, 0.0
      %447 = vadd.xlane.f32.xlu0 %v446
      %v448 = vpop.xlane.xlu0 %447
      %v449 = vsel %vm240, %v411, 0.0
      %450 = vadd.xlane.f32.xlu0 %v449
      %v451 = vpop.xlane.xlu0 %450
      %v452 = vsel %vm240, %v412, 0.0
      %453 = vadd.xlane.f32.xlu0 %v452
      %v454 = vpop.xlane.xlu0 %453
      %v455 = vsel %vm240, %v413, 0.0
      %456 = vadd.xlane.f32.xlu0 %v455
      %v457 = vpop.xlane.xlu0 %456
      %v458 = vsel %vm240, %v414, 0.0
      %459 = vadd.xlane.f32.xlu0 %v458
      %v460 = vpop.xlane.xlu0 %459
      %v461 = vsel %vm240, %v415, 0.0
      %462 = vadd.xlane.f32.xlu0 %v461
      %v463 = vpop.xlane.xlu0 %462
      %v464 = vsel %vm240, %v416, 0.0
      %465 = vadd.xlane.f32.xlu0 %v464
      %v466 = vpop.xlane.xlu0 %465
      %v467 = vsel %vm240, %v417, 0.0
      %468 = vadd.xlane.f32.xlu0 %v467
      %v469 = vpop.xlane.xlu0 %468
      %v470 = vsel %vm240, %v418, 0.0
      %471 = vadd.xlane.f32.xlu0 %v470
      %v472 = vpop.xlane.xlu0 %471
      %v473 = vsel %vm240, %v419, 0.0
      %474 = vadd.xlane.f32.xlu0 %v473
      %v475 = vpop.xlane.xlu0 %474
      %v476 = vsel %vm240, %v420, 0.0
      %477 = vadd.xlane.f32.xlu0 %v476
      %v478 = vpop.xlane.xlu0 %477
      %v479 = vsel %vm240, %v421, 0.0
      %480 = vadd.xlane.f32.xlu0 %v479
      %v481 = vpop.xlane.xlu0 %480
      %v482 = vsel %vm240, %v422, 0.0
      %483 = vadd.xlane.f32.xlu0 %v482
      %v484 = vpop.xlane.xlu0 %483
      %v485 = vsel %vm240, %v423, 0.0
      %486 = vadd.xlane.f32.xlu0 %v485
      %v487 = vpop.xlane.xlu0 %486
      %v488 = vsel %vm240, %v424, 0.0
      %489 = vadd.xlane.f32.xlu0 %v488
      %v490 = vpop.xlane.xlu0 %489
      %v491 = vsel %vm240, %v425, 0.0
      %492 = vadd.xlane.f32.xlu0 %v491
      %v493 = vpop.xlane.xlu0 %492
      %v494 = vsel %vm240, %v426, 0.0
      %495 = vadd.xlane.f32.xlu0 %v494
      %v496 = vpop.xlane.xlu0 %495
      %v497 = vsel %vm240, %v427, 0.0
      %498 = vadd.xlane.f32.xlu0 %v497
      %v499 = vpop.xlane.xlu0 %498
      %v500 = vsel %vm240, %v428, 0.0
      %501 = vadd.xlane.f32.xlu0 %v500
      %v502 = vpop.xlane.xlu0 %501
      %v503 = vsel %vm240, %v429, 0.0
      %504 = vadd.xlane.f32.xlu0 %v503
      %v505 = vpop.xlane.xlu0 %504
      %v506 = vsel %vm240, %v430, 0.0
      %507 = vadd.xlane.f32.xlu0 %v506
      %v508 = vpop.xlane.xlu0 %507
      %v509 = vsel %vm240, %v431, 0.0
      %510 = vadd.xlane.f32.xlu0 %v509
      %v511 = vpop.xlane.xlu0 %510
      %v512 = vsel %vm240, %v432, 0.0
      %513 = vadd.xlane.f32.xlu0 %v512
      %v514 = vpop.xlane.xlu0 %513
      %v515 = vsel %vm240, %v433, 0.0
      %516 = vadd.xlane.f32.xlu0 %v515
      %v517 = vpop.xlane.xlu0 %516
      %v518 = vsel %vm240, %v434, 0.0
      %519 = vadd.xlane.f32.xlu0 %v518
      %v520 = vpop.xlane.xlu0 %519
      %v521 = vsel %vm240, %v435, 0.0
      %522 = vadd.xlane.f32.xlu0 %v521
      %v523 = vpop.xlane.xlu0 %522
      %v524 = vsel %vm240, %v436, 0.0
      %525 = vadd.xlane.f32.xlu0 %v524
      %v526 = vpop.xlane.xlu0 %525
      %v527 = vsel %vm240, %v437, 0.0
      %528 = vadd.xlane.f32.xlu0 %v527
      %v529 = vpop.xlane.xlu0 %528
      %v530 = vsel %vm240, %v438, 0.0
      %531 = vadd.xlane.f32.xlu0 %v530
      %v532 = vpop.xlane.xlu0 %531
      %v533 = vsel %vm240, %v439, 0.0
      %534 = vadd.xlane.f32.xlu0 %v533
      %v535 = vpop.xlane.xlu0 %534
      %v536 = vmul.f32 %v442, %v343
      %v537 = vmul.f32 %v445, %v343
      %v538 = vmul.f32 %v448, %v343
      %v539 = vmul.f32 %v451, %v343
      %v540 = vmul.f32 %v454, %v343
      %v541 = vmul.f32 %v457, %v343
      %v542 = vmul.f32 %v460, %v343
      %v543 = vmul.f32 %v463, %v343
      %v544 = vmul.f32 %v466, %v343
      %v545 = vmul.f32 %v469, %v343
      %v546 = vmul.f32 %v472, %v343
      %v547 = vmul.f32 %v475, %v343
      %v548 = vmul.f32 %v478, %v343
      %v549 = vmul.f32 %v481, %v343
      %v550 = vmul.f32 %v484, %v343
      %v551 = vmul.f32 %v487, %v343
      %v552 = vmul.f32 %v490, %v343
      %v553 = vmul.f32 %v493, %v343
      %v554 = vmul.f32 %v496, %v343
      %v555 = vmul.f32 %v499, %v343
      %v556 = vmul.f32 %v502, %v343
      %v557 = vmul.f32 %v505, %v343
      %v558 = vmul.f32 %v508, %v343
      %v559 = vmul.f32 %v511, %v343
      %v560 = vmul.f32 %v514, %v343
      %v561 = vmul.f32 %v517, %v343
      %v562 = vmul.f32 %v520, %v343
      %v563 = vmul.f32 %v523, %v343
      %v564 = vmul.f32 %v526, %v343
      %v565 = vmul.f32 %v529, %v343
      %v566 = vmul.f32 %v532, %v343
      %v567 = vmul.f32 %v535, %v343
      %v568 = vadd.f32 %v536, 1e-05
      %v569 = vadd.f32 %v537, 1e-05
      %v570 = vadd.f32 %v538, 1e-05
      %v571 = vadd.f32 %v539, 1e-05
      %v572 = vadd.f32 %v540, 1e-05
      %v573 = vadd.f32 %v541, 1e-05
      %v574 = vadd.f32 %v542, 1e-05
      %v575 = vadd.f32 %v543, 1e-05
      %v576 = vadd.f32 %v544, 1e-05
      %v577 = vadd.f32 %v545, 1e-05
      %v578 = vadd.f32 %v546, 1e-05
      %v579 = vadd.f32 %v547, 1e-05
      %v580 = vadd.f32 %v548, 1e-05
      %v581 = vadd.f32 %v549, 1e-05
      %v582 = vadd.f32 %v550, 1e-05
      %v583 = vadd.f32 %v551, 1e-05
      %v584 = vadd.f32 %v552, 1e-05
      %v585 = vadd.f32 %v553, 1e-05
      %v586 = vadd.f32 %v554, 1e-05
      %v587 = vadd.f32 %v555, 1e-05
      %v588 = vadd.f32 %v556, 1e-05
      %v589 = vadd.f32 %v557, 1e-05
      %v590 = vadd.f32 %v558, 1e-05
      %v591 = vadd.f32 %v559, 1e-05
      %v592 = vadd.f32 %v560, 1e-05
      %v593 = vadd.f32 %v561, 1e-05
      %v594 = vadd.f32 %v562, 1e-05
      %v595 = vadd.f32 %v563, 1e-05
      %v596 = vadd.f32 %v564, 1e-05
      %v597 = vadd.f32 %v565, 1e-05
      %v598 = vadd.f32 %v566, 1e-05
      %v599 = vadd.f32 %v567, 1e-05
      %v600 = vrsqrt.pop %v568
      %v601 = vmul.f32 %v600, %v568
      %v602 = vmul.f32 %v601, %v600
      %v603 = vmul.f32 0.5, %v602
      %v604 = vsub.f32 1.5, %v603
      %v605 = vmul.f32 %v600, %v604
      %vm606 = vweird.f32 %v568
      %vm607 = vweird.f32 %v600
      %vm608 = vmor %vm606, %vm607
      %v609 = vsel %vm608, %v600, %v605
      %v610 = vrsqrt.pop %v569
      %v611 = vmul.f32 %v610, %v569
      %v612 = vmul.f32 %v611, %v610
      %v613 = vmul.f32 0.5, %v612
      %v614 = vsub.f32 1.5, %v613
      %v615 = vmul.f32 %v610, %v614
      %vm616 = vweird.f32 %v569
      %vm617 = vweird.f32 %v610
      %vm618 = vmor %vm616, %vm617
      %v619 = vsel %vm618, %v610, %v615
      %v620 = vrsqrt.pop %v570
      %v621 = vmul.f32 %v620, %v570
      %v622 = vmul.f32 %v621, %v620
      %v623 = vmul.f32 0.5, %v622
      %v624 = vsub.f32 1.5, %v623
      %v625 = vmul.f32 %v620, %v624
      %vm626 = vweird.f32 %v570
      %vm627 = vweird.f32 %v620
      %vm628 = vmor %vm626, %vm627
      %v629 = vsel %vm628, %v620, %v625
      %v630 = vrsqrt.pop %v571
      %v631 = vmul.f32 %v630, %v571
      %v632 = vmul.f32 %v631, %v630
      %v633 = vmul.f32 0.5, %v632
      %v634 = vsub.f32 1.5, %v633
      %v635 = vmul.f32 %v630, %v634
      %vm636 = vweird.f32 %v571
      %vm637 = vweird.f32 %v630
      %vm638 = vmor %vm636, %vm637
      %v639 = vsel %vm638, %v630, %v635
      %v640 = vrsqrt.pop %v572
      %v641 = vmul.f32 %v640, %v572
      %v642 = vmul.f32 %v641, %v640
      %v643 = vmul.f32 0.5, %v642
      %v644 = vsub.f32 1.5, %v643
      %v645 = vmul.f32 %v640, %v644
      %vm646 = vweird.f32 %v572
      %vm647 = vweird.f32 %v640
      %vm648 = vmor %vm646, %vm647
      %v649 = vsel %vm648, %v640, %v645
      %v650 = vrsqrt.pop %v573
      %v651 = vmul.f32 %v650, %v573
      %v652 = vmul.f32 %v651, %v650
      %v653 = vmul.f32 0.5, %v652
      %v654 = vsub.f32 1.5, %v653
      %v655 = vmul.f32 %v650, %v654
      %vm656 = vweird.f32 %v573
      %vm657 = vweird.f32 %v650
      %vm658 = vmor %vm656, %vm657
      %v659 = vsel %vm658, %v650, %v655
      %v660 = vrsqrt.pop %v574
      %v661 = vmul.f32 %v660, %v574
      %v662 = vmul.f32 %v661, %v660
      %v663 = vmul.f32 0.5, %v662
      %v664 = vsub.f32 1.5, %v663
      %v665 = vmul.f32 %v660, %v664
      %vm666 = vweird.f32 %v574
      %vm667 = vweird.f32 %v660
      %vm668 = vmor %vm666, %vm667
      %v669 = vsel %vm668, %v660, %v665
      %v670 = vrsqrt.pop %v575
      %v671 = vmul.f32 %v670, %v575
      %v672 = vmul.f32 %v671, %v670
      %v673 = vmul.f32 0.5, %v672
      %v674 = vsub.f32 1.5, %v673
      %v675 = vmul.f32 %v670, %v674
      %vm676 = vweird.f32 %v575
      %vm677 = vweird.f32 %v670
      %vm678 = vmor %vm676, %vm677
      %v679 = vsel %vm678, %v670, %v675
      %v680 = vrsqrt.pop %v576
      %v681 = vmul.f32 %v680, %v576
      %v682 = vmul.f32 %v681, %v680
      %v683 = vmul.f32 0.5, %v682
      %v684 = vsub.f32 1.5, %v683
      %v685 = vmul.f32 %v680, %v684
      %vm686 = vweird.f32 %v576
      %vm687 = vweird.f32 %v680
      %vm688 = vmor %vm686, %vm687
      %v689 = vsel %vm688, %v680, %v685
      %v690 = vrsqrt.pop %v577
      %v691 = vmul.f32 %v690, %v577
      %v692 = vmul.f32 %v691, %v690
      %v693 = vmul.f32 0.5, %v692
      %v694 = vsub.f32 1.5, %v693
      %v695 = vmul.f32 %v690, %v694
      %vm696 = vweird.f32 %v577
      %vm697 = vweird.f32 %v690
      %vm698 = vmor %vm696, %vm697
      %v699 = vsel %vm698, %v690, %v695
      %v700 = vrsqrt.pop %v578
      %v701 = vmul.f32 %v700, %v578
      %v702 = vmul.f32 %v701, %v700
      %v703 = vmul.f32 0.5, %v702
      %v704 = vsub.f32 1.5, %v703
      %v705 = vmul.f32 %v700, %v704
      %vm706 = vweird.f32 %v578
      %vm707 = vweird.f32 %v700
      %vm708 = vmor %vm706, %vm707
      %v709 = vsel %vm708, %v700, %v705
      %v710 = vrsqrt.pop %v579
      %v711 = vmul.f32 %v710, %v579
      %v712 = vmul.f32 %v711, %v710
      %v713 = vmul.f32 0.5, %v712
      %v714 = vsub.f32 1.5, %v713
      %v715 = vmul.f32 %v710, %v714
      %vm716 = vweird.f32 %v579
      %vm717 = vweird.f32 %v710
      %vm718 = vmor %vm716, %vm717
      %v719 = vsel %vm718, %v710, %v715
      %v720 = vrsqrt.pop %v580
      %v721 = vmul.f32 %v720, %v580
      %v722 = vmul.f32 %v721, %v720
      %v723 = vmul.f32 0.5, %v722
      %v724 = vsub.f32 1.5, %v723
      %v725 = vmul.f32 %v720, %v724
      %vm726 = vweird.f32 %v580
      %vm727 = vweird.f32 %v720
      %vm728 = vmor %vm726, %vm727
      %v729 = vsel %vm728, %v720, %v725
      %v730 = vrsqrt.pop %v581
      %v731 = vmul.f32 %v730, %v581
      %v732 = vmul.f32 %v731, %v730
      %v733 = vmul.f32 0.5, %v732
      %v734 = vsub.f32 1.5, %v733
      %v735 = vmul.f32 %v730, %v734
      %vm736 = vweird.f32 %v581
      %vm737 = vweird.f32 %v730
      %vm738 = vmor %vm736, %vm737
      %v739 = vsel %vm738, %v730, %v735
      %v740 = vrsqrt.pop %v582
      %v741 = vmul.f32 %v740, %v582
      %v742 = vmul.f32 %v741, %v740
      %v743 = vmul.f32 0.5, %v742
      %v744 = vsub.f32 1.5, %v743
      %v745 = vmul.f32 %v740, %v744
      %vm746 = vweird.f32 %v582
      %vm747 = vweird.f32 %v740
      %vm748 = vmor %vm746, %vm747
      %v749 = vsel %vm748, %v740, %v745
      %v750 = vrsqrt.pop %v583
      %v751 = vmul.f32 %v750, %v583
      %v752 = vmul.f32 %v751, %v750
      %v753 = vmul.f32 0.5, %v752
      %v754 = vsub.f32 1.5, %v753
      %v755 = vmul.f32 %v750, %v754
      %vm756 = vweird.f32 %v583
      %vm757 = vweird.f32 %v750
      %vm758 = vmor %vm756, %vm757
      %v759 = vsel %vm758, %v750, %v755
      %v760 = vrsqrt.pop %v584
      %v761 = vmul.f32 %v760, %v584
      %v762 = vmul.f32 %v761, %v760
      %v763 = vmul.f32 0.5, %v762
      %v764 = vsub.f32 1.5, %v763
      %v765 = vmul.f32 %v760, %v764
      %vm766 = vweird.f32 %v584
      %vm767 = vweird.f32 %v760
      %vm768 = vmor %vm766, %vm767
      %v769 = vsel %vm768, %v760, %v765
      %v770 = vrsqrt.pop %v585
      %v771 = vmul.f32 %v770, %v585
      %v772 = vmul.f32 %v771, %v770
      %v773 = vmul.f32 0.5, %v772
      %v774 = vsub.f32 1.5, %v773
      %v775 = vmul.f32 %v770, %v774
      %vm776 = vweird.f32 %v585
      %vm777 = vweird.f32 %v770
      %vm778 = vmor %vm776, %vm777
      %v779 = vsel %vm778, %v770, %v775
      %v780 = vrsqrt.pop %v586
      %v781 = vmul.f32 %v780, %v586
      %v782 = vmul.f32 %v781, %v780
      %v783 = vmul.f32 0.5, %v782
      %v784 = vsub.f32 1.5, %v783
      %v785 = vmul.f32 %v780, %v784
      %vm786 = vweird.f32 %v586
      %vm787 = vweird.f32 %v780
      %vm788 = vmor %vm786, %vm787
      %v789 = vsel %vm788, %v780, %v785
      %v790 = vrsqrt.pop %v587
      %v791 = vmul.f32 %v790, %v587
      %v792 = vmul.f32 %v791, %v790
      %v793 = vmul.f32 0.5, %v792
      %v794 = vsub.f32 1.5, %v793
      %v795 = vmul.f32 %v790, %v794
      %vm796 = vweird.f32 %v587
      %vm797 = vweird.f32 %v790
      %vm798 = vmor %vm796, %vm797
      %v799 = vsel %vm798, %v790, %v795
      %v800 = vrsqrt.pop %v588
      %v801 = vmul.f32 %v800, %v588
      %v802 = vmul.f32 %v801, %v800
      %v803 = vmul.f32 0.5, %v802
      %v804 = vsub.f32 1.5, %v803
      %v805 = vmul.f32 %v800, %v804
      %vm806 = vweird.f32 %v588
      %vm807 = vweird.f32 %v800
      %vm808 = vmor %vm806, %vm807
      %v809 = vsel %vm808, %v800, %v805
      %v810 = vrsqrt.pop %v589
      %v811 = vmul.f32 %v810, %v589
      %v812 = vmul.f32 %v811, %v810
      %v813 = vmul.f32 0.5, %v812
      %v814 = vsub.f32 1.5, %v813
      %v815 = vmul.f32 %v810, %v814
      %vm816 = vweird.f32 %v589
      %vm817 = vweird.f32 %v810
      %vm818 = vmor %vm816, %vm817
      %v819 = vsel %vm818, %v810, %v815
      %v820 = vrsqrt.pop %v590
      %v821 = vmul.f32 %v820, %v590
      %v822 = vmul.f32 %v821, %v820
      %v823 = vmul.f32 0.5, %v822
      %v824 = vsub.f32 1.5, %v823
      %v825 = vmul.f32 %v820, %v824
      %vm826 = vweird.f32 %v590
      %vm827 = vweird.f32 %v820
      %vm828 = vmor %vm826, %vm827
      %v829 = vsel %vm828, %v820, %v825
      %v830 = vrsqrt.pop %v591
      %v831 = vmul.f32 %v830, %v591
      %v832 = vmul.f32 %v831, %v830
      %v833 = vmul.f32 0.5, %v832
      %v834 = vsub.f32 1.5, %v833
      %v835 = vmul.f32 %v830, %v834
      %vm836 = vweird.f32 %v591
      %vm837 = vweird.f32 %v830
      %vm838 = vmor %vm836, %vm837
      %v839 = vsel %vm838, %v830, %v835
      %v840 = vrsqrt.pop %v592
      %v841 = vmul.f32 %v840, %v592
      %v842 = vmul.f32 %v841, %v840
      %v843 = vmul.f32 0.5, %v842
      %v844 = vsub.f32 1.5, %v843
      %v845 = vmul.f32 %v840, %v844
      %vm846 = vweird.f32 %v592
      %vm847 = vweird.f32 %v840
      %vm848 = vmor %vm846, %vm847
      %v849 = vsel %vm848, %v840, %v845
      %v850 = vrsqrt.pop %v593
      %v851 = vmul.f32 %v850, %v593
      %v852 = vmul.f32 %v851, %v850
      %v853 = vmul.f32 0.5, %v852
      %v854 = vsub.f32 1.5, %v853
      %v855 = vmul.f32 %v850, %v854
      %vm856 = vweird.f32 %v593
      %vm857 = vweird.f32 %v850
      %vm858 = vmor %vm856, %vm857
      %v859 = vsel %vm858, %v850, %v855
      %v860 = vrsqrt.pop %v594
      %v861 = vmul.f32 %v860, %v594
      %v862 = vmul.f32 %v861, %v860
      %v863 = vmul.f32 0.5, %v862
      %v864 = vsub.f32 1.5, %v863
      %v865 = vmul.f32 %v860, %v864
      %vm866 = vweird.f32 %v594
      %vm867 = vweird.f32 %v860
      %vm868 = vmor %vm866, %vm867
      %v869 = vsel %vm868, %v860, %v865
      %v870 = vrsqrt.pop %v595
      %v871 = vmul.f32 %v870, %v595
      %v872 = vmul.f32 %v871, %v870
      %v873 = vmul.f32 0.5, %v872
      %v874 = vsub.f32 1.5, %v873
      %v875 = vmul.f32 %v870, %v874
      %vm876 = vweird.f32 %v595
      %vm877 = vweird.f32 %v870
      %vm878 = vmor %vm876, %vm877
      %v879 = vsel %vm878, %v870, %v875
      %v880 = vrsqrt.pop %v596
      %v881 = vmul.f32 %v880, %v596
      %v882 = vmul.f32 %v881, %v880
      %v883 = vmul.f32 0.5, %v882
      %v884 = vsub.f32 1.5, %v883
      %v885 = vmul.f32 %v880, %v884
      %vm886 = vweird.f32 %v596
      %vm887 = vweird.f32 %v880
      %vm888 = vmor %vm886, %vm887
      %v889 = vsel %vm888, %v880, %v885
      %v890 = vrsqrt.pop %v597
      %v891 = vmul.f32 %v890, %v597
      %v892 = vmul.f32 %v891, %v890
      %v893 = vmul.f32 0.5, %v892
      %v894 = vsub.f32 1.5, %v893
      %v895 = vmul.f32 %v890, %v894
      %vm896 = vweird.f32 %v597
      %vm897 = vweird.f32 %v890
      %vm898 = vmor %vm896, %vm897
      %v899 = vsel %vm898, %v890, %v895
      %v900 = vrsqrt.pop %v598
      %v901 = vmul.f32 %v900, %v598
      %v902 = vmul.f32 %v901, %v900
      %v903 = vmul.f32 0.5, %v902
      %v904 = vsub.f32 1.5, %v903
      %v905 = vmul.f32 %v900, %v904
      %vm906 = vweird.f32 %v598
      %vm907 = vweird.f32 %v900
      %vm908 = vmor %vm906, %vm907
      %v909 = vsel %vm908, %v900, %v905
      %v910 = vrsqrt.pop %v599
      %v911 = vmul.f32 %v910, %v599
      %v912 = vmul.f32 %v911, %v910
      %v913 = vmul.f32 0.5, %v912
      %v914 = vsub.f32 1.5, %v913
      %v915 = vmul.f32 %v910, %v914
      %vm916 = vweird.f32 %v599
      %vm917 = vweird.f32 %v910
      %vm918 = vmor %vm916, %vm917
      %v919 = vsel %vm918, %v910, %v915
      %v920 = vmul.f32 %v376, %v609
      %v921 = vmul.f32 %v377, %v619
      %v922 = vmul.f32 %v378, %v629
      %v923 = vmul.f32 %v379, %v639
      %v924 = vmul.f32 %v380, %v649
      %v925 = vmul.f32 %v381, %v659
      %v926 = vmul.f32 %v382, %v669
      %v927 = vmul.f32 %v383, %v679
      %v928 = vmul.f32 %v384, %v689
      %v929 = vmul.f32 %v385, %v699
      %v930 = vmul.f32 %v386, %v709
      %v931 = vmul.f32 %v387, %v719
      %v932 = vmul.f32 %v388, %v729
      %v933 = vmul.f32 %v389, %v739
      %v934 = vmul.f32 %v390, %v749
      %v935 = vmul.f32 %v391, %v759
      %v936 = vmul.f32 %v392, %v769
      %v937 = vmul.f32 %v393, %v779
      %v938 = vmul.f32 %v394, %v789
      %v939 = vmul.f32 %v395, %v799
      %v940 = vmul.f32 %v396, %v809
      %v941 = vmul.f32 %v397, %v819
      %v942 = vmul.f32 %v398, %v829
      %v943 = vmul.f32 %v399, %v839
      %v944 = vmul.f32 %v400, %v849
      %v945 = vmul.f32 %v401, %v859
      %v946 = vmul.f32 %v402, %v869
      %v947 = vmul.f32 %v403, %v879
      %v948 = vmul.f32 %v404, %v889
      %v949 = vmul.f32 %v405, %v899
      %v950 = vmul.f32 %v406, %v909
      %v951 = vmul.f32 %v407, %v919
      %v953 = vperm.slane %v238, 0
      %v955 = vmul.f32 %v920, %v953
      %v956 = vmul.f32 %v921, %v953
      %v957 = vmul.f32 %v922, %v953
      %v958 = vmul.f32 %v923, %v953
      %v959 = vmul.f32 %v924, %v953
      %v960 = vmul.f32 %v925, %v953
      %v961 = vmul.f32 %v926, %v953
      %v962 = vmul.f32 %v927, %v953
      %v963 = vmul.f32 %v928, %v953
      %v964 = vmul.f32 %v929, %v953
      %v965 = vmul.f32 %v930, %v953
      %v966 = vmul.f32 %v931, %v953
      %v967 = vmul.f32 %v932, %v953
      %v968 = vmul.f32 %v933, %v953
      %v969 = vmul.f32 %v934, %v953
      %v970 = vmul.f32 %v935, %v953
      %v971 = vmul.f32 %v936, %v953
      %v972 = vmul.f32 %v937, %v953
      %v973 = vmul.f32 %v938, %v953
      %v974 = vmul.f32 %v939, %v953
      %v975 = vmul.f32 %v940, %v953
      %v976 = vmul.f32 %v941, %v953
      %v977 = vmul.f32 %v942, %v953
      %v978 = vmul.f32 %v943, %v953
      %v979 = vmul.f32 %v944, %v953
      %v980 = vmul.f32 %v945, %v953
      %v981 = vmul.f32 %v946, %v953
      %v982 = vmul.f32 %v947, %v953
      %v983 = vmul.f32 %v948, %v953
      %v984 = vmul.f32 %v949, %v953
      %v985 = vmul.f32 %v950, %v953
      %v986 = vmul.f32 %v951, %v953
      %v988 = vperm.slane %v239, 0
      %v990 = vadd.f32 %v955, %v988
      %v991 = vadd.f32 %v956, %v988
      %v992 = vadd.f32 %v957, %v988
      %v993 = vadd.f32 %v958, %v988
      %v994 = vadd.f32 %v959, %v988
      %v995 = vadd.f32 %v960, %v988
      %v996 = vadd.f32 %v961, %v988
      %v997 = vadd.f32 %v962, %v988
      %v998 = vadd.f32 %v963, %v988
      %v999 = vadd.f32 %v964, %v988
      %v1000 = vadd.f32 %v965, %v988
      %v1001 = vadd.f32 %v966, %v988
      %v1002 = vadd.f32 %v967, %v988
      %v1003 = vadd.f32 %v968, %v988
      %v1004 = vadd.f32 %v969, %v988
      %v1005 = vadd.f32 %v970, %v988
      %v1006 = vadd.f32 %v971, %v988
      %v1007 = vadd.f32 %v972, %v988
      %v1008 = vadd.f32 %v973, %v988
      %v1009 = vadd.f32 %v974, %v988
      %v1010 = vadd.f32 %v975, %v988
      %v1011 = vadd.f32 %v976, %v988
      %v1012 = vadd.f32 %v977, %v988
      %v1013 = vadd.f32 %v978, %v988
      %v1014 = vadd.f32 %v979, %v988
      %v1015 = vadd.f32 %v980, %v988
      %v1016 = vadd.f32 %v981, %v988
      %v1017 = vadd.f32 %v982, %v988
      %v1018 = vadd.f32 %v983, %v988
      %v1019 = vadd.f32 %v984, %v988
      %v1020 = vadd.f32 %v985, %v988
      %v1021 = vadd.f32 %v986, %v988
      %v1022 = vmax.f32 %v990, 0.0
      %v1023 = vmax.f32 %v991, 0.0
      %v1024 = vmax.f32 %v992, 0.0
      %v1025 = vmax.f32 %v993, 0.0
      %v1026 = vmax.f32 %v994, 0.0
      %v1027 = vmax.f32 %v995, 0.0
      %v1028 = vmax.f32 %v996, 0.0
      %v1029 = vmax.f32 %v997, 0.0
      %v1030 = vmax.f32 %v998, 0.0
      %v1031 = vmax.f32 %v999, 0.0
      %v1032 = vmax.f32 %v1000, 0.0
      %v1033 = vmax.f32 %v1001, 0.0
      %v1034 = vmax.f32 %v1002, 0.0
      %v1035 = vmax.f32 %v1003, 0.0
      %v1036 = vmax.f32 %v1004, 0.0
      %v1037 = vmax.f32 %v1005, 0.0
      %v1038 = vmax.f32 %v1006, 0.0
      %v1039 = vmax.f32 %v1007, 0.0
      %v1040 = vmax.f32 %v1008, 0.0
      %v1041 = vmax.f32 %v1009, 0.0
      %v1042 = vmax.f32 %v1010, 0.0
      %v1043 = vmax.f32 %v1011, 0.0
      %v1044 = vmax.f32 %v1012, 0.0
      %v1045 = vmax.f32 %v1013, 0.0
      %v1046 = vmax.f32 %v1014, 0.0
      %v1047 = vmax.f32 %v1015, 0.0
      %v1048 = vmax.f32 %v1016, 0.0
      %v1049 = vmax.f32 %v1017, 0.0
      %v1050 = vmax.f32 %v1018, 0.0
      %v1051 = vmax.f32 %v1019, 0.0
      %v1052 = vmax.f32 %v1020, 0.0
      %v1053 = vmax.f32 %v1021, 0.0
      %v1054 = vpack.c.bf16 %v1022, %v1022
      %v1055 = vpack.c.bf16 %v1023, %v1023
      %v1056 = vpack.c.bf16 %v1024, %v1024
      %v1057 = vpack.c.bf16 %v1025, %v1025
      %v1058 = vpack.c.bf16 %v1026, %v1026
      %v1059 = vpack.c.bf16 %v1027, %v1027
      %v1060 = vpack.c.bf16 %v1028, %v1028
      %v1061 = vpack.c.bf16 %v1029, %v1029
      %v1062 = vpack.c.bf16 %v1030, %v1030
      %v1063 = vpack.c.bf16 %v1031, %v1031
      %v1064 = vpack.c.bf16 %v1032, %v1032
      %v1065 = vpack.c.bf16 %v1033, %v1033
      %v1066 = vpack.c.bf16 %v1034, %v1034
      %v1067 = vpack.c.bf16 %v1035, %v1035
      %v1068 = vpack.c.bf16 %v1036, %v1036
      %v1069 = vpack.c.bf16 %v1037, %v1037
      %v1070 = vpack.c.bf16 %v1038, %v1038
      %v1071 = vpack.c.bf16 %v1039, %v1039
      %v1072 = vpack.c.bf16 %v1040, %v1040
      %v1073 = vpack.c.bf16 %v1041, %v1041
      %v1074 = vpack.c.bf16 %v1042, %v1042
      %v1075 = vpack.c.bf16 %v1043, %v1043
      %v1076 = vpack.c.bf16 %v1044, %v1044
      %v1077 = vpack.c.bf16 %v1045, %v1045
      %v1078 = vpack.c.bf16 %v1046, %v1046
      %v1079 = vpack.c.bf16 %v1047, %v1047
      %v1080 = vpack.c.bf16 %v1048, %v1048
      %v1081 = vpack.c.bf16 %v1049, %v1049
      %v1082 = vpack.c.bf16 %v1050, %v1050
      %v1083 = vpack.c.bf16 %v1051, %v1051
      %v1084 = vpack.c.bf16 %v1052, %v1052
      %v1085 = vpack.c.bf16 %v1053, %v1053
      %vm1086 = vcmask 60416
      %1087 = vst.msk [vmem:[%s172] sm:$0xf] %vm1086, %v1054
      %1088 = vst.msk [vmem:[%s172 + $0x4] sm:$0xf] %vm1086, %v1055
      %1089 = vst.msk [vmem:[%s172 + $0x8] sm:$0xf] %vm1086, %v1056
      %1090 = vst.msk [vmem:[%s172 + $0xc] sm:$0xf] %vm1086, %v1057
      %1091 = vst.msk [vmem:[%s172 + $0x10] sm:$0xf] %vm1086, %v1058
      %1092 = vst.msk [vmem:[%s172 + $0x14] sm:$0xf] %vm1086, %v1059
      %1093 = vst.msk [vmem:[%s172 + $0x18] sm:$0xf] %vm1086, %v1060
      %1094 = vst.msk [vmem:[%s172 + $0x1c] sm:$0xf] %vm1086, %v1061
      %1095 = vst.msk [vmem:[%s172 + $0x20] sm:$0xf] %vm1086, %v1062
      %1096 = vst.msk [vmem:[%s172 + $0x24] sm:$0xf] %vm1086, %v1063
      %1097 = vst.msk [vmem:[%s172 + $0x28] sm:$0xf] %vm1086, %v1064
      %1098 = vst.msk [vmem:[%s172 + $0x2c] sm:$0xf] %vm1086, %v1065
      %1099 = vst.msk [vmem:[%s172 + $0x30] sm:$0xf] %vm1086, %v1066
      %1100 = vst.msk [vmem:[%s172 + $0x34] sm:$0xf] %vm1086, %v1067
      %1101 = vst.msk [vmem:[%s172 + $0x38] sm:$0xf] %vm1086, %v1068
      %1102 = vst.msk [vmem:[%s172 + $0x3c] sm:$0xf] %vm1086, %v1069
      %1103 = vst.msk [vmem:[%s172 + $0x40] sm:$0xf] %vm1086, %v1070
      %1104 = vst.msk [vmem:[%s172 + $0x44] sm:$0xf] %vm1086, %v1071
      %1105 = vst.msk [vmem:[%s172 + $0x48] sm:$0xf] %vm1086, %v1072
      %1106 = vst.msk [vmem:[%s172 + $0x4c] sm:$0xf] %vm1086, %v1073
      %1107 = vst.msk [vmem:[%s172 + $0x50] sm:$0xf] %vm1086, %v1074
      %1108 = vst.msk [vmem:[%s172 + $0x54] sm:$0xf] %vm1086, %v1075
      %1109 = vst.msk [vmem:[%s172 + $0x58] sm:$0xf] %vm1086, %v1076
      %1110 = vst.msk [vmem:[%s172 + $0x5c] sm:$0xf] %vm1086, %v1077
      %1111 = vst.msk [vmem:[%s172 + $0x60] sm:$0xf] %vm1086, %v1078
      %1112 = vst.msk [vmem:[%s172 + $0x64] sm:$0xf] %vm1086, %v1079
      %1113 = vst.msk [vmem:[%s172 + $0x68] sm:$0xf] %vm1086, %v1080
      %1114 = vst.msk [vmem:[%s172 + $0x6c] sm:$0xf] %vm1086, %v1081
      %1115 = vst.msk [vmem:[%s172 + $0x70] sm:$0xf] %vm1086, %v1082
      %1116 = vst.msk [vmem:[%s172 + $0x74] sm:$0xf] %vm1086, %v1083
      %1117 = vst.msk [vmem:[%s172 + $0x78] sm:$0xf] %vm1086, %v1084
      %1118 = vst.msk [vmem:[%s172 + $0x7c] sm:$0xf] %vm1086, %v1085
      %s1119 = smul.u32 32, %s14
      %p1120 = scmp.lt.s32.totalorder %s1119, 63
      %s1121 = scalar_select %p1120, %s1119, 63
      %s1122 = smul.addr %s1121, 4
      %s1123 = scalar_lea.vmem %s3, %s1122
      // Predicated region
      $region33: #{_lambda_.46} parent=31 // pred_check
        %p1124 = pneg %p100
      $region34: #{_lambda_.46} parent=31 // pred_check_branch
        %1126 = sbr.rel (%p1124) target = $region36
      $region35: #{_lambda_.46} parent=31 // pred_region
        %s1127 = smul.u32 32, %s14
      $region36: #{_lambda_.46} parent=31 // pred_fallthru
        _
    $region32: #{_lambda_.46} parent=5 // pred_fallthru
      _
    %p1128 = scmp.le.s32.totalorder 2, %s9
    // Predicated region
    $region37: #{_lambda_.46} parent=5 // pred_check
      %p1129 = pneg %p1128
    $region38: #{_lambda_.46} parent=5 // pred_check_branch
      %1131 = sbr.rel (%p1129) target = $region40
    $region39: #{_lambda_.46} parent=5 // pred_region
      %s1132 = ssub.s32 %s9, 2
      // Predicated region
      $region41: #{_lambda_.46} parent=39 // pred_check
        %p1133 = pneg %p106
      $region42: #{_lambda_.46} parent=39 // pred_check_branch
        %1135 = sbr.rel (%p1133) target = $region44
      $region43: #{_lambda_.46} parent=39 // pred_region
        %s1136 = smul.u32 32, %s15
        %p1137 = scmp.lt.s32.totalorder %s1136, 63
        %s1138 = scalar_select %p1137, %s1136, 63
        %s1139 = smul.addr %s1138, 4
        %s1140 = scalar_lea.vmem %s3, %s1139
      $region44: #{_lambda_.46} parent=39 // pred_fallthru
        _
    $region40: #{_lambda_.46} parent=5 // pred_fallthru
      _
  $region6: #{_lambda_.46} parent=0 // loop_footer
    %s13 = sadd.s32 1, %s9
  $region7: #{_lambda_.46} parent=0 // loop_footer_branch
    %8 = sbr.rel target = $region3
  $region8: #{_lambda_.46} parent=0 // loop_exit
    _

// kernel: _lambda_.47
$region0: #{_lambda_.47}
  #allocation0 [shape = 'u32[]', space=smem, size = 0x4, offset = 0x4, fixed_abs, tag = 'smem constant byte address 0x4 - core index']
  #allocation1 [shape = 'u32[72,128]{1,0:T(1,128)}', space=vmem, size = 0x9000, scoped, tag = 'internal scratch']
  #allocation2 [shape = 'f32[256,16]{1,0:T(8,128)}', space=vmem, size = 0x20000, scoped, tag = 'scratch operand']
  %s0 = inlined_call_operand.vmem [shape: bf16[256,144], index: 0, kind: input, shape index: {}]
  %s1 = inlined_call_operand.vmem [shape: bf16[144,16], index: 1, kind: input, shape index: {}]
  %s2 = inlined_call_operand.vmem [shape: f32[1,16], index: 2, kind: input, shape index: {}]
  %s3 = inlined_call_operand.vmem [shape: bf16[256,16], index: 3, kind: output, shape index: {}]
  %s4 = sld [smem:[#allocation0]]
  $region30: #{_lambda_.47} parent=0
    _
  %s6 = ssub.s32 1, %s4
  %s7 = scalar_select 0, %s6, %s4
  // Predicated region
  $region2: #{_lambda_.47} parent=0 // pred_check
    _
  $region3: #{_lambda_.47} parent=0 // pred_check_branch
    %9 = sbr.rel (0) target = $region5
  $region4: #{_lambda_.47} parent=0 // pred_region
    _
  $region5: #{_lambda_.47} parent=0 // pred_fallthru
    _
  // Predicated region
  $region6: #{_lambda_.47} parent=0 // pred_check
    _
  $region7: #{_lambda_.47} parent=0 // pred_check_branch
    %11 = sbr.rel (0) target = $region9
  $region8: #{_lambda_.47} parent=0 // pred_region
    _
  $region9: #{_lambda_.47} parent=0 // pred_fallthru
    _
  // Predicated region
  $region10: #{_lambda_.47} parent=0 // pred_check
    _
  $region11: #{_lambda_.47} parent=0 // pred_check_branch
    %13 = sbr.rel (0) target = $region13
  $region12: #{_lambda_.47} parent=0 // pred_region
    _
  $region13: #{_lambda_.47} parent=0 // pred_fallthru
    _
  %p15 = scmp.eq.s32.totalorder 0, 0
  // Predicated region
  $region14: #{_lambda_.47} parent=0 // pred_check
    %p16 = pneg %p15
  $region15: #{_lambda_.47} parent=0 // pred_check_branch
    %18 = sbr.rel (%p16) target = $region17
  $region16: #{_lambda_.47} parent=0 // pred_region
    %vm19 = vcmask 130048
    %20 = vst.msk [vmem:[#allocation2] sm:$0xff] %vm19, 0.0
    %21 = vst.msk [vmem:[#allocation2 + $0x8] sm:$0xff] %vm19, 0.0
    %22 = vst.msk [vmem:[#allocation2 + $0x10] sm:$0xff] %vm19, 0.0
    %23 = vst.msk [vmem:[#allocation2 + $0x18] sm:$0xff] %vm19, 0.0
    %24 = vst.msk [vmem:[#allocation2 + $0x20] sm:$0xff] %vm19, 0.0
    %25 = vst.msk [vmem:[#allocation2 + $0x28] sm:$0xff] %vm19, 0.0
    %26 = vst.msk [vmem:[#allocation2 + $0x30] sm:$0xff] %vm19, 0.0
    %27 = vst.msk [vmem:[#allocation2 + $0x38] sm:$0xff] %vm19, 0.0
    %28 = vst.msk [vmem:[#allocation2 + $0x40] sm:$0xff] %vm19, 0.0
    %29 = vst.msk [vmem:[#allocation2 + $0x48] sm:$0xff] %vm19, 0.0
    %30 = vst.msk [vmem:[#allocation2 + $0x50] sm:$0xff] %vm19, 0.0
    %31 = vst.msk [vmem:[#allocation2 + $0x58] sm:$0xff] %vm19, 0.0
    %32 = vst.msk [vmem:[#allocation2 + $0x60] sm:$0xff] %vm19, 0.0
    %33 = vst.msk [vmem:[#allocation2 + $0x68] sm:$0xff] %vm19, 0.0
    %34 = vst.msk [vmem:[#allocation2 + $0x70] sm:$0xff] %vm19, 0.0
    %35 = vst.msk [vmem:[#allocation2 + $0x78] sm:$0xff] %vm19, 0.0
    %36 = vst.msk [vmem:[#allocation2 + $0x80] sm:$0xff] %vm19, 0.0
    %37 = vst.msk [vmem:[#allocation2 + $0x88] sm:$0xff] %vm19, 0.0
    %38 = vst.msk [vmem:[#allocation2 + $0x90] sm:$0xff] %vm19, 0.0
    %39 = vst.msk [vmem:[#allocation2 + $0x98] sm:$0xff] %vm19, 0.0
    %40 = vst.msk [vmem:[#allocation2 + $0xa0] sm:$0xff] %vm19, 0.0
    %41 = vst.msk [vmem:[#allocation2 + $0xa8] sm:$0xff] %vm19, 0.0
    %42 = vst.msk [vmem:[#allocation2 + $0xb0] sm:$0xff] %vm19, 0.0
    %43 = vst.msk [vmem:[#allocation2 + $0xb8] sm:$0xff] %vm19, 0.0
    %44 = vst.msk [vmem:[#allocation2 + $0xc0] sm:$0xff] %vm19, 0.0
    %45 = vst.msk [vmem:[#allocation2 + $0xc8] sm:$0xff] %vm19, 0.0
    %46 = vst.msk [vmem:[#allocation2 + $0xd0] sm:$0xff] %vm19, 0.0
    %47 = vst.msk [vmem:[#allocation2 + $0xd8] sm:$0xff] %vm19, 0.0
    %48 = vst.msk [vmem:[#allocation2 + $0xe0] sm:$0xff] %vm19, 0.0
    %49 = vst.msk [vmem:[#allocation2 + $0xe8] sm:$0xff] %vm19, 0.0
    %50 = vst.msk [vmem:[#allocation2 + $0xf0] sm:$0xff] %vm19, 0.0
    %51 = vst.msk [vmem:[#allocation2 + $0xf8] sm:$0xff] %vm19, 0.0
  $region17: #{_lambda_.47} parent=0 // pred_fallthru
    _
  %v52 = vld [vmem:[#allocation2] sm:$0xff]
  %v53 = vld [vmem:[#allocation2 + $0x8] sm:$0xff]
  %v54 = vld [vmem:[#allocation2 + $0x10] sm:$0xff]
  %v55 = vld [vmem:[#allocation2 + $0x18] sm:$0xff]
  %v56 = vld [vmem:[#allocation2 + $0x20] sm:$0xff]
  %v57 = vld [vmem:[#allocation2 + $0x28] sm:$0xff]
  %v58 = vld [vmem:[#allocation2 + $0x30] sm:$0xff]
  %v59 = vld [vmem:[#allocation2 + $0x38] sm:$0xff]
  %v60 = vld [vmem:[#allocation2 + $0x40] sm:$0xff]
  %v61 = vld [vmem:[#allocation2 + $0x48] sm:$0xff]
  %v62 = vld [vmem:[#allocation2 + $0x50] sm:$0xff]
  %v63 = vld [vmem:[#allocation2 + $0x58] sm:$0xff]
  %v64 = vld [vmem:[#allocation2 + $0x60] sm:$0xff]
  %v65 = vld [vmem:[#allocation2 + $0x68] sm:$0xff]
  %v66 = vld [vmem:[#allocation2 + $0x70] sm:$0xff]
  %v67 = vld [vmem:[#allocation2 + $0x78] sm:$0xff]
  %v68 = vld [vmem:[#allocation2 + $0x80] sm:$0xff]
  %v69 = vld [vmem:[#allocation2 + $0x88] sm:$0xff]
  %v70 = vld [vmem:[#allocation2 + $0x90] sm:$0xff]
  %v71 = vld [vmem:[#allocation2 + $0x98] sm:$0xff]
  %v72 = vld [vmem:[#allocation2 + $0xa0] sm:$0xff]
  %v73 = vld [vmem:[#allocation2 + $0xa8] sm:$0xff]
  %v74 = vld [vmem:[#allocation2 + $0xb0] sm:$0xff]
  %v75 = vld [vmem:[#allocation2 + $0xb8] sm:$0xff]
  %v76 = vld [vmem:[#allocation2 + $0xc0] sm:$0xff]
  %v77 = vld [vmem:[#allocation2 + $0xc8] sm:$0xff]
  %v78 = vld [vmem:[#allocation2 + $0xd0] sm:$0xff]
  %v79 = vld [vmem:[#allocation2 + $0xd8] sm:$0xff]
  %v80 = vld [vmem:[#allocation2 + $0xe0] sm:$0xff]
  %v81 = vld [vmem:[#allocation2 + $0xe8] sm:$0xff]
  %v82 = vld [vmem:[#allocation2 + $0xf0] sm:$0xff]
  %v83 = vld [vmem:[#allocation2 + $0xf8] sm:$0xff]
  %v84 = vld [vmem:[%s0] sm:$0xff]
  %v85 = vld [vmem:[%s0 + $0x8] sm:$0xff]
  %v86 = vld [vmem:[%s0 + $0x10] sm:$0xff]
  %v87 = vld [vmem:[%s0 + $0x18] sm:$0xff]
  %v88 = vld [vmem:[%s0 + $0x20] sm:$0xff]
  %v89 = vld [vmem:[%s0 + $0x28] sm:$0xff]
  %v90 = vld [vmem:[%s0 + $0x30] sm:$0xff]
  %v91 = vld [vmem:[%s0 + $0x38] sm:$0xff]
  %v92 = vld [vmem:[%s0 + $0x40] sm:$0xff]
  %v93 = vld [vmem:[%s0 + $0x48] sm:$0xff]
  %v94 = vld [vmem:[%s0 + $0x50] sm:$0xff]
  %v95 = vld [vmem:[%s0 + $0x58] sm:$0xff]
  %v96 = vld [vmem:[%s0 + $0x60] sm:$0xff]
  %v97 = vld [vmem:[%s0 + $0x68] sm:$0xff]
  %v98 = vld [vmem:[%s0 + $0x70] sm:$0xff]
  %v99 = vld [vmem:[%s0 + $0x78] sm:$0xff]
  %v100 = vld [vmem:[%s0 + $0x80] sm:$0xff]
  %v101 = vld [vmem:[%s0 + $0x88] sm:$0xff]
  %v102 = vld [vmem:[%s0 + $0x90] sm:$0xff]
  %v103 = vld [vmem:[%s0 + $0x98] sm:$0xff]
  %v104 = vld [vmem:[%s0 + $0xa0] sm:$0xff]
  %v105 = vld [vmem:[%s0 + $0xa8] sm:$0xff]
  %v106 = vld [vmem:[%s0 + $0xb0] sm:$0xff]
  %v107 = vld [vmem:[%s0 + $0xb8] sm:$0xff]
  %v108 = vld [vmem:[%s0 + $0xc0] sm:$0xff]
  %v109 = vld [vmem:[%s0 + $0xc8] sm:$0xff]
  %v110 = vld [vmem:[%s0 + $0xd0] sm:$0xff]
  %v111 = vld [vmem:[%s0 + $0xd8] sm:$0xff]
  %v112 = vld [vmem:[%s0 + $0xe0] sm:$0xff]
  %v113 = vld [vmem:[%s0 + $0xe8] sm:$0xff]
  %v114 = vld [vmem:[%s0 + $0xf0] sm:$0xff]
  %v115 = vld [vmem:[%s0 + $0xf8] sm:$0xff]
  %v116 = vld [vmem:[%s1] sm:$0xf]
  %v117 = vld [vmem:[%s1 + $0x4] sm:$0xf]
  %v118 = vld [vmem:[%s1 + $0x8] sm:$0xf]
  %v119 = vld [vmem:[%s1 + $0xc] sm:$0xf]
  %v120 = vld [vmem:[%s1 + $0x10] sm:$0xf]
  %v121 = vld [vmem:[%s1 + $0x14] sm:$0xf]
  %v122 = vld [vmem:[%s1 + $0x18] sm:$0xf]
  %v123 = vld [vmem:[%s1 + $0x1c] sm:$0xf]
  %v124 = vld [vmem:[%s1 + $0x20] sm:$0xf]
  %v125 = vld [vmem:[%s1 + $0x24] sm:$0xf]
  %v126 = vld [vmem:[%s1 + $0x28] sm:$0xf]
  %v127 = vld [vmem:[%s1 + $0x2c] sm:$0xf]
  %v128 = vld [vmem:[%s1 + $0x30] sm:$0xf]
  %v129 = vld [vmem:[%s1 + $0x34] sm:$0xf]
  %v130 = vld [vmem:[%s1 + $0x38] sm:$0xf]
  %v131 = vld [vmem:[%s1 + $0x3c] sm:$0xf]
  %v132 = vld [vmem:[%s1 + $0x40] sm:$0xf]
  %v133 = vld [vmem:[%s1 + $0x44] sm:$0xf]
  %v166 = vunpack.c.l.b16 %v84
  %v167 = vunpack.c.h.b16 %v84
  %v168 = vunpack.c.l.b16 %v85
  %v169 = vunpack.c.h.b16 %v85
  %v170 = vunpack.c.l.b16 %v86
  %v171 = vunpack.c.h.b16 %v86
  %v172 = vunpack.c.l.b16 %v87
  %v173 = vunpack.c.h.b16 %v87
  %v174 = vunpack.c.l.b16 %v88
  %v175 = vunpack.c.h.b16 %v88
  %v176 = vunpack.c.l.b16 %v89
  %v177 = vunpack.c.h.b16 %v89
  %v178 = vunpack.c.l.b16 %v90
  %v179 = vunpack.c.h.b16 %v90
  %v180 = vunpack.c.l.b16 %v91
  %v181 = vunpack.c.h.b16 %v91
  %v182 = vunpack.c.l.b16 %v92
  %v183 = vunpack.c.h.b16 %v92
  %v184 = vunpack.c.l.b16 %v93
  %v185 = vunpack.c.h.b16 %v93
  %v186 = vunpack.c.l.b16 %v94
  %v187 = vunpack.c.h.b16 %v94
  %v188 = vunpack.c.l.b16 %v95
  %v189 = vunpack.c.h.b16 %v95
  %v190 = vunpack.c.l.b16 %v96
  %v191 = vunpack.c.h.b16 %v96
  %v192 = vunpack.c.l.b16 %v97
  %v193 = vunpack.c.h.b16 %v97
  %v194 = vunpack.c.l.b16 %v98
  %v195 = vunpack.c.h.b16 %v98
  %v196 = vunpack.c.l.b16 %v99
  %v197 = vunpack.c.h.b16 %v99
  %v198 = vunpack.c.l.b16 %v100
  %v199 = vunpack.c.h.b16 %v100
  %v200 = vunpack.c.l.b16 %v101
  %v201 = vunpack.c.h.b16 %v101
  %v202 = vunpack.c.l.b16 %v102
  %v203 = vunpack.c.h.b16 %v102
  %v204 = vunpack.c.l.b16 %v103
  %v205 = vunpack.c.h.b16 %v103
  %v206 = vunpack.c.l.b16 %v104
  %v207 = vunpack.c.h.b16 %v104
  %v208 = vunpack.c.l.b16 %v105
  %v209 = vunpack.c.h.b16 %v105
  %v210 = vunpack.c.l.b16 %v106
  %v211 = vunpack.c.h.b16 %v106
  %v212 = vunpack.c.l.b16 %v107
  %v213 = vunpack.c.h.b16 %v107
  %v214 = vunpack.c.l.b16 %v108
  %v215 = vunpack.c.h.b16 %v108
  %v216 = vunpack.c.l.b16 %v109
  %v217 = vunpack.c.h.b16 %v109
  %v218 = vunpack.c.l.b16 %v110
  %v219 = vunpack.c.h.b16 %v110
  %v220 = vunpack.c.l.b16 %v111
  %v221 = vunpack.c.h.b16 %v111
  %v222 = vunpack.c.l.b16 %v112
  %v223 = vunpack.c.h.b16 %v112
  %v224 = vunpack.c.l.b16 %v113
  %v225 = vunpack.c.h.b16 %v113
  %v226 = vunpack.c.l.b16 %v114
  %v227 = vunpack.c.h.b16 %v114
  %v228 = vunpack.c.l.b16 %v115
  %v229 = vunpack.c.h.b16 %v115
  %v230 = vpack.c.b16 %v168, %v166
  %v231 = vpack.c.b16 %v169, %v167
  %v232 = vpack.c.b16 %v172, %v170
  %v233 = vpack.c.b16 %v173, %v171
  %v234 = vpack.c.b16 %v176, %v174
  %v235 = vpack.c.b16 %v177, %v175
  %v236 = vpack.c.b16 %v180, %v178
  %v237 = vpack.c.b16 %v181, %v179
  %v238 = vpack.c.b16 %v184, %v182
  %v239 = vpack.c.b16 %v185, %v183
  %v240 = vpack.c.b16 %v188, %v186
  %v241 = vpack.c.b16 %v189, %v187
  %v242 = vpack.c.b16 %v192, %v190
  %v243 = vpack.c.b16 %v193, %v191
  %v244 = vpack.c.b16 %v196, %v194
  %v245 = vpack.c.b16 %v197, %v195
  %v246 = vpack.c.b16 %v200, %v198
  %v247 = vpack.c.b16 %v201, %v199
  %v248 = vpack.c.b16 %v204, %v202
  %v249 = vpack.c.b16 %v205, %v203
  %v250 = vpack.c.b16 %v208, %v206
  %v251 = vpack.c.b16 %v209, %v207
  %v252 = vpack.c.b16 %v212, %v210
  %v253 = vpack.c.b16 %v213, %v211
  %v254 = vpack.c.b16 %v216, %v214
  %v255 = vpack.c.b16 %v217, %v215
  %v256 = vpack.c.b16 %v220, %v218
  %v257 = vpack.c.b16 %v221, %v219
  %v258 = vpack.c.b16 %v224, %v222
  %v259 = vpack.c.b16 %v225, %v223
  %v260 = vpack.c.b16 %v228, %v226
  %v261 = vpack.c.b16 %v229, %v227
  %v296 = vunpack.c.l.b16 %v116
  %v297 = vunpack.c.l.b16 %v117
  %v298 = vunpack.c.l.b16 %v118
  %v299 = vunpack.c.l.b16 %v119
  %v300 = vunpack.c.l.b16 %v120
  %v301 = vunpack.c.l.b16 %v121
  %v302 = vunpack.c.l.b16 %v122
  %v303 = vunpack.c.l.b16 %v123
  %v304 = vunpack.c.l.b16 %v124
  %v305 = vunpack.c.l.b16 %v125
  %v306 = vunpack.c.l.b16 %v126
  %v307 = vunpack.c.l.b16 %v127
  %v308 = vunpack.c.l.b16 %v128
  %v309 = vunpack.c.l.b16 %v129
  %v310 = vunpack.c.l.b16 %v130
  %v311 = vunpack.c.l.b16 %v131
  %v312 = vunpack.c.l.b16 %v132
  %v313 = vunpack.c.l.b16 %v133
  %v314 = vpack.c.b16 %v297, %v296
  %v315 = vpack.c.b16 %v299, %v298
  %v316 = vpack.c.b16 %v301, %v300
  %v317 = vpack.c.b16 %v303, %v302
  %v318 = vpack.c.b16 %v305, %v304
  %v319 = vpack.c.b16 %v307, %v306
  %v320 = vpack.c.b16 %v309, %v308
  %v321 = vpack.c.b16 %v311, %v310
  %v322 = vpack.c.b16 %v313, %v312
  %vm332 = vcmask 130048
  %v334 = vsel %vm332, %v231, 0
  %v337 = vsel %vm332, %v233, 0
  %v340 = vsel %vm332, %v235, 0
  %v343 = vsel %vm332, %v237, 0
  %v346 = vsel %vm332, %v239, 0
  %v349 = vsel %vm332, %v241, 0
  %v352 = vsel %vm332, %v243, 0
  %v355 = vsel %vm332, %v245, 0
  %v358 = vsel %vm332, %v247, 0
  %v361 = vsel %vm332, %v249, 0
  %v364 = vsel %vm332, %v251, 0
  %v367 = vsel %vm332, %v253, 0
  %v370 = vsel %vm332, %v255, 0
  %v373 = vsel %vm332, %v257, 0
  %v376 = vsel %vm332, %v259, 0
  %v379 = vsel %vm332, %v261, 0
  %381 = vmatpush.bf16.msra.mxu0 %v321
  %382 = vmatpush.bf16.msra.mxu0 %v320
  %383 = vmatpush.bf16.msra.mxu0 %v319
  %384 = vmatpush.bf16.msra.mxu0 %v318
  %385 = vmatpush.bf16.msra.mxu0 %v317
  %386 = vmatpush.bf16.msra.mxu0 %v316
  %387 = vmatpush.bf16.msra.mxu0 %v315
  %388 = vmatpush.bf16.msra.mxu0 %v314
  %389 = vmatmul.bf16.gmra.mxu0 %v230
  %v390 = vpop.f32.mrf.mxu0
  %v391 = vadd.f32 0.0, %v390
  %v392 = vpop.f32.mrf.mxu0
  %v393 = vadd.f32 0.0, %v392
  %394 = vmatmul.bf16.gmra.mxu0 %v232
  %v395 = vpop.f32.mrf.mxu0
  %v396 = vadd.f32 0.0, %v395
  %v397 = vpop.f32.mrf.mxu0
  %v398 = vadd.f32 0.0, %v397
  %399 = vmatmul.bf16.gmra.mxu0 %v234
  %v400 = vpop.f32.mrf.mxu0
  %v401 = vadd.f32 0.0, %v400
  %v402 = vpop.f32.mrf.mxu0
  %v403 = vadd.f32 0.0, %v402
  %404 = vmatmul.bf16.gmra.mxu0 %v236
  %v405 = vpop.f32.mrf.mxu0
  %v406 = vadd.f32 0.0, %v405
  %v407 = vpop.f32.mrf.mxu0
  %v408 = vadd.f32 0.0, %v407
  %409 = vmatmul.bf16.gmra.mxu0 %v238
  %v410 = vpop.f32.mrf.mxu0
  %v411 = vadd.f32 0.0, %v410
  %v412 = vpop.f32.mrf.mxu0
  %v413 = vadd.f32 0.0, %v412
  %414 = vmatmul.bf16.gmra.mxu0 %v240
  %v415 = vpop.f32.mrf.mxu0
  %v416 = vadd.f32 0.0, %v415
  %v417 = vpop.f32.mrf.mxu0
  %v418 = vadd.f32 0.0, %v417
  %419 = vmatmul.bf16.gmra.mxu0 %v242
  %v420 = vpop.f32.mrf.mxu0
  %v421 = vadd.f32 0.0, %v420
  %v422 = vpop.f32.mrf.mxu0
  %v423 = vadd.f32 0.0, %v422
  %424 = vmatmul.bf16.gmra.mxu0 %v244
  %v425 = vpop.f32.mrf.mxu0
  %v426 = vadd.f32 0.0, %v425
  %v427 = vpop.f32.mrf.mxu0
  %v428 = vadd.f32 0.0, %v427
  %429 = vmatmul.bf16.gmra.mxu0 %v246
  %v430 = vpop.f32.mrf.mxu0
  %v431 = vadd.f32 0.0, %v430
  %v432 = vpop.f32.mrf.mxu0
  %v433 = vadd.f32 0.0, %v432
  %434 = vmatmul.bf16.gmra.mxu0 %v248
  %v435 = vpop.f32.mrf.mxu0
  %v436 = vadd.f32 0.0, %v435
  %v437 = vpop.f32.mrf.mxu0
  %v438 = vadd.f32 0.0, %v437
  %439 = vmatmul.bf16.gmra.mxu0 %v250
  %v440 = vpop.f32.mrf.mxu0
  %v441 = vadd.f32 0.0, %v440
  %v442 = vpop.f32.mrf.mxu0
  %v443 = vadd.f32 0.0, %v442
  %444 = vmatmul.bf16.gmra.mxu0 %v252
  %v445 = vpop.f32.mrf.mxu0
  %v446 = vadd.f32 0.0, %v445
  %v447 = vpop.f32.mrf.mxu0
  %v448 = vadd.f32 0.0, %v447
  %449 = vmatmul.bf16.gmra.mxu0 %v254
  %v450 = vpop.f32.mrf.mxu0
  %v451 = vadd.f32 0.0, %v450
  %v452 = vpop.f32.mrf.mxu0
  %v453 = vadd.f32 0.0, %v452
  %454 = vmatmul.bf16.gmra.mxu0 %v256
  %v455 = vpop.f32.mrf.mxu0
  %v456 = vadd.f32 0.0, %v455
  %v457 = vpop.f32.mrf.mxu0
  %v458 = vadd.f32 0.0, %v457
  %459 = vmatmul.bf16.gmra.mxu0 %v258
  %v460 = vpop.f32.mrf.mxu0
  %v461 = vadd.f32 0.0, %v460
  %v462 = vpop.f32.mrf.mxu0
  %v463 = vadd.f32 0.0, %v462
  %464 = vmatmul.bf16.gmra.mxu0 %v260
  %v465 = vpop.f32.mrf.mxu0
  %v466 = vadd.f32 0.0, %v465
  %v467 = vpop.f32.mrf.mxu0
  %v468 = vadd.f32 0.0, %v467
  %469 = vdwg.mxu0
  %470 = vmatpush.bf16.msra.mxu0 0
  %471 = vmatpush.bf16.msra.mxu0 0
  %472 = vmatpush.bf16.msra.mxu0 0
  %473 = vmatpush.bf16.msra.mxu0 0
  %474 = vmatpush.bf16.msra.mxu0 0
  %475 = vmatpush.bf16.msra.mxu0 0
  %476 = vmatpush.bf16.msra.mxu0 0
  %477 = vmatpush.bf16.msra.mxu0 %v322
  %478 = vmatmul.bf16.gmra.mxu0 %v334
  %v479 = vpop.f32.mrf.mxu0
  %v480 = vadd.f32 %v391, %v479
  %v481 = vpop.f32.mrf.mxu0
  %v482 = vadd.f32 %v393, %v481
  %483 = vmatmul.bf16.gmra.mxu0 %v337
  %v484 = vpop.f32.mrf.mxu0
  %v485 = vadd.f32 %v396, %v484
  %v486 = vpop.f32.mrf.mxu0
  %v487 = vadd.f32 %v398, %v486
  %488 = vmatmul.bf16.gmra.mxu0 %v340
  %v489 = vpop.f32.mrf.mxu0
  %v490 = vadd.f32 %v401, %v489
  %v491 = vpop.f32.mrf.mxu0
  %v492 = vadd.f32 %v403, %v491
  %493 = vmatmul.bf16.gmra.mxu0 %v343
  %v494 = vpop.f32.mrf.mxu0
  %v495 = vadd.f32 %v406, %v494
  %v496 = vpop.f32.mrf.mxu0
  %v497 = vadd.f32 %v408, %v496
  %498 = vmatmul.bf16.gmra.mxu0 %v346
  %v499 = vpop.f32.mrf.mxu0
  %v500 = vadd.f32 %v411, %v499
  %v501 = vpop.f32.mrf.mxu0
  %v502 = vadd.f32 %v413, %v501
  %503 = vmatmul.bf16.gmra.mxu0 %v349
  %v504 = vpop.f32.mrf.mxu0
  %v505 = vadd.f32 %v416, %v504
  %v506 = vpop.f32.mrf.mxu0
  %v507 = vadd.f32 %v418, %v506
  %508 = vmatmul.bf16.gmra.mxu0 %v352
  %v509 = vpop.f32.mrf.mxu0
  %v510 = vadd.f32 %v421, %v509
  %v511 = vpop.f32.mrf.mxu0
  %v512 = vadd.f32 %v423, %v511
  %513 = vmatmul.bf16.gmra.mxu0 %v355
  %v514 = vpop.f32.mrf.mxu0
  %v515 = vadd.f32 %v426, %v514
  %v516 = vpop.f32.mrf.mxu0
  %v517 = vadd.f32 %v428, %v516
  %518 = vmatmul.bf16.gmra.mxu0 %v358
  %v519 = vpop.f32.mrf.mxu0
  %v520 = vadd.f32 %v431, %v519
  %v521 = vpop.f32.mrf.mxu0
  %v522 = vadd.f32 %v433, %v521
  %523 = vmatmul.bf16.gmra.mxu0 %v361
  %v524 = vpop.f32.mrf.mxu0
  %v525 = vadd.f32 %v436, %v524
  %v526 = vpop.f32.mrf.mxu0
  %v527 = vadd.f32 %v438, %v526
  %528 = vmatmul.bf16.gmra.mxu0 %v364
  %v529 = vpop.f32.mrf.mxu0
  %v530 = vadd.f32 %v441, %v529
  %v531 = vpop.f32.mrf.mxu0
  %v532 = vadd.f32 %v443, %v531
  %533 = vmatmul.bf16.gmra.mxu0 %v367
  %v534 = vpop.f32.mrf.mxu0
  %v535 = vadd.f32 %v446, %v534
  %v536 = vpop.f32.mrf.mxu0
  %v537 = vadd.f32 %v448, %v536
  %538 = vmatmul.bf16.gmra.mxu0 %v370
  %v539 = vpop.f32.mrf.mxu0
  %v540 = vadd.f32 %v451, %v539
  %v541 = vpop.f32.mrf.mxu0
  %v542 = vadd.f32 %v453, %v541
  %543 = vmatmul.bf16.gmra.mxu0 %v373
  %v544 = vpop.f32.mrf.mxu0
  %v545 = vadd.f32 %v456, %v544
  %v546 = vpop.f32.mrf.mxu0
  %v547 = vadd.f32 %v458, %v546
  %548 = vmatmul.bf16.gmra.mxu0 %v376
  %v549 = vpop.f32.mrf.mxu0
  %v550 = vadd.f32 %v461, %v549
  %v551 = vpop.f32.mrf.mxu0
  %v552 = vadd.f32 %v463, %v551
  %553 = vmatmul.bf16.gmra.mxu0 %v379
  %v554 = vpop.f32.mrf.mxu0
  %v555 = vadd.f32 %v466, %v554
  %v556 = vpop.f32.mrf.mxu0
  %v557 = vadd.f32 %v468, %v556
  %558 = vdwg.mxu0
  %v559 = vadd.f32 %v52, %v480
  %v560 = vadd.f32 %v53, %v482
  %v561 = vadd.f32 %v54, %v485
  %v562 = vadd.f32 %v55, %v487
  %v563 = vadd.f32 %v56, %v490
  %v564 = vadd.f32 %v57, %v492
  %v565 = vadd.f32 %v58, %v495
  %v566 = vadd.f32 %v59, %v497
  %v567 = vadd.f32 %v60, %v500
  %v568 = vadd.f32 %v61, %v502
  %v569 = vadd.f32 %v62, %v505
  %v570 = vadd.f32 %v63, %v507
  %v571 = vadd.f32 %v64, %v510
  %v572 = vadd.f32 %v65, %v512
  %v573 = vadd.f32 %v66, %v515
  %v574 = vadd.f32 %v67, %v517
  %v575 = vadd.f32 %v68, %v520
  %v576 = vadd.f32 %v69, %v522
  %v577 = vadd.f32 %v70, %v525
  %v578 = vadd.f32 %v71, %v527
  %v579 = vadd.f32 %v72, %v530
  %v580 = vadd.f32 %v73, %v532
  %v581 = vadd.f32 %v74, %v535
  %v582 = vadd.f32 %v75, %v537
  %v583 = vadd.f32 %v76, %v540
  %v584 = vadd.f32 %v77, %v542
  %v585 = vadd.f32 %v78, %v545
  %v586 = vadd.f32 %v79, %v547
  %v587 = vadd.f32 %v80, %v550
  %v588 = vadd.f32 %v81, %v552
  %v589 = vadd.f32 %v82, %v555
  %v590 = vadd.f32 %v83, %v557
  %591 = vst.msk [vmem:[#allocation2] sm:$0xff] %vm332, %v559
  %592 = vst.msk [vmem:[#allocation2 + $0x8] sm:$0xff] %vm332, %v560
  %593 = vst.msk [vmem:[#allocation2 + $0x10] sm:$0xff] %vm332, %v561
  %594 = vst.msk [vmem:[#allocation2 + $0x18] sm:$0xff] %vm332, %v562
  %595 = vst.msk [vmem:[#allocation2 + $0x20] sm:$0xff] %vm332, %v563
  %596 = vst.msk [vmem:[#allocation2 + $0x28] sm:$0xff] %vm332, %v564
  %597 = vst.msk [vmem:[#allocation2 + $0x30] sm:$0xff] %vm332, %v565
  %598 = vst.msk [vmem:[#allocation2 + $0x38] sm:$0xff] %vm332, %v566
  %599 = vst.msk [vmem:[#allocation2 + $0x40] sm:$0xff] %vm332, %v567
  %600 = vst.msk [vmem:[#allocation2 + $0x48] sm:$0xff] %vm332, %v568
  %601 = vst.msk [vmem:[#allocation2 + $0x50] sm:$0xff] %vm332, %v569
  %602 = vst.msk [vmem:[#allocation2 + $0x58] sm:$0xff] %vm332, %v570
  %603 = vst.msk [vmem:[#allocation2 + $0x60] sm:$0xff] %vm332, %v571
  %604 = vst.msk [vmem:[#allocation2 + $0x68] sm:$0xff] %vm332, %v572
  %605 = vst.msk [vmem:[#allocation2 + $0x70] sm:$0xff] %vm332, %v573
  %606 = vst.msk [vmem:[#allocation2 + $0x78] sm:$0xff] %vm332, %v574
  %607 = vst.msk [vmem:[#allocation2 + $0x80] sm:$0xff] %vm332, %v575
  %608 = vst.msk [vmem:[#allocation2 + $0x88] sm:$0xff] %vm332, %v576
  %609 = vst.msk [vmem:[#allocation2 + $0x90] sm:$0xff] %vm332, %v577
  %610 = vst.msk [vmem:[#allocation2 + $0x98] sm:$0xff] %vm332, %v578
  %611 = vst.msk [vmem:[#allocation2 + $0xa0] sm:$0xff] %vm332, %v579
  %612 = vst.msk [vmem:[#allocation2 + $0xa8] sm:$0xff] %vm332, %v580
  %613 = vst.msk [vmem:[#allocation2 + $0xb0] sm:$0xff] %vm332, %v581
  %614 = vst.msk [vmem:[#allocation2 + $0xb8] sm:$0xff] %vm332, %v582
  %615 = vst.msk [vmem:[#allocation2 + $0xc0] sm:$0xff] %vm332, %v583
  %616 = vst.msk [vmem:[#allocation2 + $0xc8] sm:$0xff] %vm332, %v584
  %617 = vst.msk [vmem:[#allocation2 + $0xd0] sm:$0xff] %vm332, %v585
  %618 = vst.msk [vmem:[#allocation2 + $0xd8] sm:$0xff] %vm332, %v586
  %619 = vst.msk [vmem:[#allocation2 + $0xe0] sm:$0xff] %vm332, %v587
  %620 = vst.msk [vmem:[#allocation2 + $0xe8] sm:$0xff] %vm332, %v588
  %621 = vst.msk [vmem:[#allocation2 + $0xf0] sm:$0xff] %vm332, %v589
  %622 = vst.msk [vmem:[#allocation2 + $0xf8] sm:$0xff] %vm332, %v590
  // Predicated region
  $region18: #{_lambda_.47} parent=0 // pred_check
    %p623 = pneg %p15
  $region19: #{_lambda_.47} parent=0 // pred_check_branch
    %625 = sbr.rel (%p623) target = $region21
  $region20: #{_lambda_.47} parent=0 // pred_region
    %v626 = vld [vmem:[#allocation2] sm:$0xff]
    %v627 = vld [vmem:[#allocation2 + $0x8] sm:$0xff]
    %v628 = vld [vmem:[#allocation2 + $0x10] sm:$0xff]
    %v629 = vld [vmem:[#allocation2 + $0x18] sm:$0xff]
    %v630 = vld [vmem:[#allocation2 + $0x20] sm:$0xff]
    %v631 = vld [vmem:[#allocation2 + $0x28] sm:$0xff]
    %v632 = vld [vmem:[#allocation2 + $0x30] sm:$0xff]
    %v633 = vld [vmem:[#allocation2 + $0x38] sm:$0xff]
    %v634 = vld [vmem:[#allocation2 + $0x40] sm:$0xff]
    %v635 = vld [vmem:[#allocation2 + $0x48] sm:$0xff]
    %v636 = vld [vmem:[#allocation2 + $0x50] sm:$0xff]
    %v637 = vld [vmem:[#allocation2 + $0x58] sm:$0xff]
    %v638 = vld [vmem:[#allocation2 + $0x60] sm:$0xff]
    %v639 = vld [vmem:[#allocation2 + $0x68] sm:$0xff]
    %v640 = vld [vmem:[#allocation2 + $0x70] sm:$0xff]
    %v641 = vld [vmem:[#allocation2 + $0x78] sm:$0xff]
    %v642 = vld [vmem:[#allocation2 + $0x80] sm:$0xff]
    %v643 = vld [vmem:[#allocation2 + $0x88] sm:$0xff]
    %v644 = vld [vmem:[#allocation2 + $0x90] sm:$0xff]
    %v645 = vld [vmem:[#allocation2 + $0x98] sm:$0xff]
    %v646 = vld [vmem:[#allocation2 + $0xa0] sm:$0xff]
    %v647 = vld [vmem:[#allocation2 + $0xa8] sm:$0xff]
    %v648 = vld [vmem:[#allocation2 + $0xb0] sm:$0xff]
    %v649 = vld [vmem:[#allocation2 + $0xb8] sm:$0xff]
    %v650 = vld [vmem:[#allocation2 + $0xc0] sm:$0xff]
    %v651 = vld [vmem:[#allocation2 + $0xc8] sm:$0xff]
    %v652 = vld [vmem:[#allocation2 + $0xd0] sm:$0xff]
    %v653 = vld [vmem:[#allocation2 + $0xd8] sm:$0xff]
    %v654 = vld [vmem:[#allocation2 + $0xe0] sm:$0xff]
    %v655 = vld [vmem:[#allocation2 + $0xe8] sm:$0xff]
    %v656 = vld [vmem:[#allocation2 + $0xf0] sm:$0xff]
    %v657 = vld [vmem:[#allocation2 + $0xf8] sm:$0xff]
    %v658 = vld [vmem:[%s2] sm:$0x1]
    %v660 = vperm.slane %v658, 0
    %v662 = vadd.f32 %v626, %v660
    %v663 = vadd.f32 %v627, %v660
    %v664 = vadd.f32 %v628, %v660
    %v665 = vadd.f32 %v629, %v660
    %v666 = vadd.f32 %v630, %v660
    %v667 = vadd.f32 %v631, %v660
    %v668 = vadd.f32 %v632, %v660
    %v669 = vadd.f32 %v633, %v660
    %v670 = vadd.f32 %v634, %v660
    %v671 = vadd.f32 %v635, %v660
    %v672 = vadd.f32 %v636, %v660
    %v673 = vadd.f32 %v637, %v660
    %v674 = vadd.f32 %v638, %v660
    %v675 = vadd.f32 %v639, %v660
    %v676 = vadd.f32 %v640, %v660
    %v677 = vadd.f32 %v641, %v660
    %v678 = vadd.f32 %v642, %v660
    %v679 = vadd.f32 %v643, %v660
    %v680 = vadd.f32 %v644, %v660
    %v681 = vadd.f32 %v645, %v660
    %v682 = vadd.f32 %v646, %v660
    %v683 = vadd.f32 %v647, %v660
    %v684 = vadd.f32 %v648, %v660
    %v685 = vadd.f32 %v649, %v660
    %v686 = vadd.f32 %v650, %v660
    %v687 = vadd.f32 %v651, %v660
    %v688 = vadd.f32 %v652, %v660
    %v689 = vadd.f32 %v653, %v660
    %v690 = vadd.f32 %v654, %v660
    %v691 = vadd.f32 %v655, %v660
    %v692 = vadd.f32 %v656, %v660
    %v693 = vadd.f32 %v657, %v660
    %v694 = vpack.c.bf16 %v662, %v662
    %v695 = vpack.c.bf16 %v663, %v663
    %v696 = vpack.c.bf16 %v664, %v664
    %v697 = vpack.c.bf16 %v665, %v665
    %v698 = vpack.c.bf16 %v666, %v666
    %v699 = vpack.c.bf16 %v667, %v667
    %v700 = vpack.c.bf16 %v668, %v668
    %v701 = vpack.c.bf16 %v669, %v669
    %v702 = vpack.c.bf16 %v670, %v670
    %v703 = vpack.c.bf16 %v671, %v671
    %v704 = vpack.c.bf16 %v672, %v672
    %v705 = vpack.c.bf16 %v673, %v673
    %v706 = vpack.c.bf16 %v674, %v674
    %v707 = vpack.c.bf16 %v675, %v675
    %v708 = vpack.c.bf16 %v676, %v676
    %v709 = vpack.c.bf16 %v677, %v677
    %v710 = vpack.c.bf16 %v678, %v678
    %v711 = vpack.c.bf16 %v679, %v679
    %v712 = vpack.c.bf16 %v680, %v680
    %v713 = vpack.c.bf16 %v681, %v681
    %v714 = vpack.c.bf16 %v682, %v682
    %v715 = vpack.c.bf16 %v683, %v683
    %v716 = vpack.c.bf16 %v684, %v684
    %v717 = vpack.c.bf16 %v685, %v685
    %v718 = vpack.c.bf16 %v686, %v686
    %v719 = vpack.c.bf16 %v687, %v687
    %v720 = vpack.c.bf16 %v688, %v688
    %v721 = vpack.c.bf16 %v689, %v689
    %v722 = vpack.c.bf16 %v690, %v690
    %v723 = vpack.c.bf16 %v691, %v691
    %v724 = vpack.c.bf16 %v692, %v692
    %v725 = vpack.c.bf16 %v693, %v693
    %vm726 = vcmask 125952
    %727 = vst.msk [vmem:[%s3] sm:$0xf] %vm726, %v694
    %728 = vst.msk [vmem:[%s3 + $0x4] sm:$0xf] %vm726, %v695
    %729 = vst.msk [vmem:[%s3 + $0x8] sm:$0xf] %vm726, %v696
    %730 = vst.msk [vmem:[%s3 + $0xc] sm:$0xf] %vm726, %v697
    %731 = vst.msk [vmem:[%s3 + $0x10] sm:$0xf] %vm726, %v698
    %732 = vst.msk [vmem:[%s3 + $0x14] sm:$0xf] %vm726, %v699
    %733 = vst.msk [vmem:[%s3 + $0x18] sm:$0xf] %vm726, %v700
    %734 = vst.msk [vmem:[%s3 + $0x1c] sm:$0xf] %vm726, %v701
    %735 = vst.msk [vmem:[%s3 + $0x20] sm:$0xf] %vm726, %v702
    %736 = vst.msk [vmem:[%s3 + $0x24] sm:$0xf] %vm726, %v703
    %737 = vst.msk [vmem:[%s3 + $0x28] sm:$0xf] %vm726, %v704
    %738 = vst.msk [vmem:[%s3 + $0x2c] sm:$0xf] %vm726, %v705
    %739 = vst.msk [vmem:[%s3 + $0x30] sm:$0xf] %vm726, %v706
    %740 = vst.msk [vmem:[%s3 + $0x34] sm:$0xf] %vm726, %v707
    %741 = vst.msk [vmem:[%s3 + $0x38] sm:$0xf] %vm726, %v708
    %742 = vst.msk [vmem:[%s3 + $0x3c] sm:$0xf] %vm726, %v709
    %743 = vst.msk [vmem:[%s3 + $0x40] sm:$0xf] %vm726, %v710
    %744 = vst.msk [vmem:[%s3 + $0x44] sm:$0xf] %vm726, %v711
    %745 = vst.msk [vmem:[%s3 + $0x48] sm:$0xf] %vm726, %v712
    %746 = vst.msk [vmem:[%s3 + $0x4c] sm:$0xf] %vm726, %v713
    %747 = vst.msk [vmem:[%s3 + $0x50] sm:$0xf] %vm726, %v714
    %748 = vst.msk [vmem:[%s3 + $0x54] sm:$0xf] %vm726, %v715
    %749 = vst.msk [vmem:[%s3 + $0x58] sm:$0xf] %vm726, %v716
    %750 = vst.msk [vmem:[%s3 + $0x5c] sm:$0xf] %vm726, %v717
    %751 = vst.msk [vmem:[%s3 + $0x60] sm:$0xf] %vm726, %v718
    %752 = vst.msk [vmem:[%s3 + $0x64] sm:$0xf] %vm726, %v719
    %753 = vst.msk [vmem:[%s3 + $0x68] sm:$0xf] %vm726, %v720
    %754 = vst.msk [vmem:[%s3 + $0x6c] sm:$0xf] %vm726, %v721
    %755 = vst.msk [vmem:[%s3 + $0x70] sm:$0xf] %vm726, %v722
    %756 = vst.msk [vmem:[%s3 + $0x74] sm:$0xf] %vm726, %v723
    %757 = vst.msk [vmem:[%s3 + $0x78] sm:$0xf] %vm726, %v724
    %758 = vst.msk [vmem:[%s3 + $0x7c] sm:$0xf] %vm726, %v725
  $region21: #{_lambda_.47} parent=0 // pred_fallthru
    _
  // Predicated region
  $region22: #{_lambda_.47} parent=0 // pred_check
    _
  $region23: #{_lambda_.47} parent=0 // pred_check_branch
    %760 = sbr.rel (0) target = $region25
  $region24: #{_lambda_.47} parent=0 // pred_region
    _
  $region25: #{_lambda_.47} parent=0 // pred_fallthru
    _
  // Predicated region
  $region26: #{_lambda_.47} parent=0 // pred_check
    _
  $region27: #{_lambda_.47} parent=0 // pred_check_branch
    %762 = sbr.rel (0) target = $region29
  $region28: #{_lambda_.47} parent=0 // pred_region
    _
  $region29: #{_lambda_.47} parent=0 // pred_fallthru
    _

// kernel: _lambda_.50
$region0: #{_lambda_.50}
  #allocation0 [shape = 'u32[]', space=smem, size = 0x4, offset = 0x4, fixed_abs, tag = 'smem constant byte address 0x4 - core index']
  #allocation1 [shape = 'u32[72,128]{1,0:T(1,128)}', space=vmem, size = 0x9000, scoped, tag = 'internal scratch']
  #allocation2 [shape = 'f32[16,192]{1,0:T(8,128)}', space=vmem, size = 0x4000, scoped, tag = 'scratch operand']
  %s0 = inlined_call_operand.vmem [shape: bf16[16,64], index: 0, kind: input, shape index: {}]
  %s1 = inlined_call_operand.vmem [shape: bf16[64,192], index: 1, kind: input, shape index: {}]
  %s2 = inlined_call_operand.vmem [shape: f32[1,192], index: 2, kind: input, shape index: {}]
  %s3 = inlined_call_operand.vmem [shape: bf16[16,192], index: 3, kind: output, shape index: {}]
  %s4 = sld [smem:[#allocation0]]
  $region30: #{_lambda_.50} parent=0
    _
  %s6 = ssub.s32 1, %s4
  %s7 = scalar_select 0, %s6, %s4
  // Predicated region
  $region2: #{_lambda_.50} parent=0 // pred_check
    _
  $region3: #{_lambda_.50} parent=0 // pred_check_branch
    %9 = sbr.rel (0) target = $region5
  $region4: #{_lambda_.50} parent=0 // pred_region
    _
  $region5: #{_lambda_.50} parent=0 // pred_fallthru
    _
  // Predicated region
  $region6: #{_lambda_.50} parent=0 // pred_check
    _
  $region7: #{_lambda_.50} parent=0 // pred_check_branch
    %11 = sbr.rel (0) target = $region9
  $region8: #{_lambda_.50} parent=0 // pred_region
    _
  $region9: #{_lambda_.50} parent=0 // pred_fallthru
    _
  // Predicated region
  $region10: #{_lambda_.50} parent=0 // pred_check
    _
  $region11: #{_lambda_.50} parent=0 // pred_check_branch
    %13 = sbr.rel (0) target = $region13
  $region12: #{_lambda_.50} parent=0 // pred_region
    _
  $region13: #{_lambda_.50} parent=0 // pred_fallthru
    _
  %p15 = scmp.eq.s32.totalorder 0, 0
  // Predicated region
  $region14: #{_lambda_.50} parent=0 // pred_check
    %p16 = pneg %p15
  $region15: #{_lambda_.50} parent=0 // pred_check_branch
    %18 = sbr.rel (%p16) target = $region17
  $region16: #{_lambda_.50} parent=0 // pred_region
    %19 = vst [vmem:[#allocation2] sm:$0xff] 0.0
    %vm20 = vcmask 523264
    %21 = vst.msk [vmem:[#allocation2 + $0x8] sm:$0xff] %vm20, 0.0
    %22 = vst [vmem:[#allocation2 + $0x10] sm:$0xff] 0.0
    %23 = vst.msk [vmem:[#allocation2 + $0x18] sm:$0xff] %vm20, 0.0
  $region17: #{_lambda_.50} parent=0 // pred_fallthru
    _
  %v24 = vld [vmem:[#allocation2] sm:$0xff]
  %v25 = vld [vmem:[#allocation2 + $0x8] sm:$0xff]
  %v26 = vld [vmem:[#allocation2 + $0x10] sm:$0xff]
  %v27 = vld [vmem:[#allocation2 + $0x18] sm:$0xff]
  %v28 = vld [vmem:[%s0] sm:$0xf]
  %v29 = vld [vmem:[%s0 + $0x4] sm:$0xf]
  %v30 = vld [vmem:[%s1] sm:$0xff]
  %v31 = vld [vmem:[%s1 + $0x8] sm:$0xff]
  %v32 = vld [vmem:[%s1 + $0x10] sm:$0xff]
  %v33 = vld [vmem:[%s1 + $0x18] sm:$0xff]
  %v34 = vld [vmem:[%s1 + $0x20] sm:$0xff]
  %v35 = vld [vmem:[%s1 + $0x28] sm:$0xff]
  %v36 = vld [vmem:[%s1 + $0x30] sm:$0xff]
  %v37 = vld [vmem:[%s1 + $0x38] sm:$0xff]
  %v40 = vunpack.c.l.b16 %v28
  %v41 = vunpack.c.l.b16 %v29
  %v42 = vpack.c.b16 %v41, %v40
  %v51 = vunpack.c.l.b16 %v30
  %v52 = vunpack.c.h.b16 %v30
  %v53 = vunpack.c.l.b16 %v31
  %v54 = vunpack.c.h.b16 %v31
  %v55 = vunpack.c.l.b16 %v32
  %v56 = vunpack.c.h.b16 %v32
  %v57 = vunpack.c.l.b16 %v33
  %v58 = vunpack.c.h.b16 %v33
  %v59 = vunpack.c.l.b16 %v34
  %v60 = vunpack.c.h.b16 %v34
  %v61 = vunpack.c.l.b16 %v35
  %v62 = vunpack.c.h.b16 %v35
  %v63 = vunpack.c.l.b16 %v36
  %v64 = vunpack.c.h.b16 %v36
  %v65 = vunpack.c.l.b16 %v37
  %v66 = vunpack.c.h.b16 %v37
  %v67 = vpack.c.b16 %v53, %v51
  %v68 = vpack.c.b16 %v54, %v52
  %v69 = vpack.c.b16 %v57, %v55
  %v70 = vpack.c.b16 %v58, %v56
  %v71 = vpack.c.b16 %v61, %v59
  %v72 = vpack.c.b16 %v62, %v60
  %v73 = vpack.c.b16 %v65, %v63
  %v74 = vpack.c.b16 %v66, %v64
  %vm83 = vcmask 523264
  %v85 = vsel %vm83, %v42, 0
  %87 = vmatpush.bf16.msra.mxu0 0
  %88 = vmatpush.bf16.msra.mxu0 0
  %89 = vmatpush.bf16.msra.mxu0 0
  %90 = vmatpush.bf16.msra.mxu0 0
  %91 = vmatpush.bf16.msra.mxu0 %v73
  %92 = vmatpush.bf16.msra.mxu0 %v71
  %93 = vmatpush.bf16.msra.mxu0 %v69
  %94 = vmatpush.bf16.msra.mxu0 %v67
  %95 = vmatmul.bf16.gmra.mxu0 %v85
  %v96 = vpop.f32.mrf.mxu0
  %v97 = vadd.f32 0.0, %v96
  %v98 = vpop.f32.mrf.mxu0
  %v99 = vadd.f32 0.0, %v98
  %100 = vdwg.mxu0
  %101 = vmatpush.bf16.msra.mxu0 0
  %102 = vmatpush.bf16.msra.mxu0 0
  %103 = vmatpush.bf16.msra.mxu0 0
  %104 = vmatpush.bf16.msra.mxu0 0
  %105 = vmatpush.bf16.msra.mxu0 %v74
  %106 = vmatpush.bf16.msra.mxu0 %v72
  %107 = vmatpush.bf16.msra.mxu0 %v70
  %108 = vmatpush.bf16.msra.mxu0 %v68
  %109 = vmatmul.bf16.gmra.mxu0 %v85
  %v110 = vpop.f32.mrf.mxu0
  %v111 = vadd.f32 0.0, %v110
  %v112 = vpop.f32.mrf.mxu0
  %v113 = vadd.f32 0.0, %v112
  %114 = vdwg.mxu0
  %v115 = vadd.f32 %v24, %v97
  %v116 = vadd.f32 %v25, %v111
  %v117 = vadd.f32 %v26, %v99
  %v118 = vadd.f32 %v27, %v113
  %119 = vst [vmem:[#allocation2] sm:$0xff] %v115
  %120 = vst.msk [vmem:[#allocation2 + $0x8] sm:$0xff] %vm83, %v116
  %121 = vst [vmem:[#allocation2 + $0x10] sm:$0xff] %v117
  %122 = vst.msk [vmem:[#allocation2 + $0x18] sm:$0xff] %vm83, %v118
  // Predicated region
  $region18: #{_lambda_.50} parent=0 // pred_check
    %p123 = pneg %p15
  $region19: #{_lambda_.50} parent=0 // pred_check_branch
    %125 = sbr.rel (%p123) target = $region21
  $region20: #{_lambda_.50} parent=0 // pred_region
    %v126 = vld [vmem:[#allocation2] sm:$0xff]
    %v127 = vld [vmem:[#allocation2 + $0x8] sm:$0xff]
    %v128 = vld [vmem:[#allocation2 + $0x10] sm:$0xff]
    %v129 = vld [vmem:[#allocation2 + $0x18] sm:$0xff]
    %v130 = vld [vmem:[%s2] sm:$0x3]
    %v132 = vperm.slane %v130, 0
    %v133 = vperm.slane %v130, 1
    %v136 = vadd.f32 %v126, %v132
    %v137 = vadd.f32 %v127, %v133
    %v138 = vadd.f32 %v128, %v132
    %v139 = vadd.f32 %v129, %v133
    %v140 = vpack.c.bf16 %v137, %v136
    %v141 = vpack.c.bf16 %v139, %v138
    %vm142 = vcmask 1043456
    %vm143 = vcmask 523268
    %vm144 = vmor %vm143, %vm142
    %145 = vst.msk [vmem:[%s3] sm:$0xff] %vm144, %v140
    %146 = vst.msk [vmem:[%s3 + $0x8] sm:$0xff] %vm144, %v141
  $region21: #{_lambda_.50} parent=0 // pred_fallthru
    _
  // Predicated region
  $region22: #{_lambda_.50} parent=0 // pred_check
    _
  $region23: #{_lambda_.50} parent=0 // pred_check_branch
    %148 = sbr.rel (0) target = $region25
  $region24: #{_lambda_.50} parent=0 // pred_region
    _
  $region25: #{_lambda_.50} parent=0 // pred_fallthru
    _
  // Predicated region
  $region26: #{_lambda_.50} parent=0 // pred_check
    _
  $region27: #{_lambda_.50} parent=0 // pred_check_branch
    %150 = sbr.rel (0) target = $region29
  $region28: #{_lambda_.50} parent=0 // pred_region
    _
  $region29: #{_lambda_.50} parent=0 // pred_fallthru
    _

// kernel: _lambda_.49
$region0: #{_lambda_.49}
  #allocation0 [shape = 'u32[]', space=smem, size = 0x4, offset = 0x4, fixed_abs, tag = 'smem constant byte address 0x4 - core index']
  #allocation1 [shape = 'u32[72,128]{1,0:T(1,128)}', space=vmem, size = 0x9000, scoped, tag = 'internal scratch']
  #allocation2 [shape = 'f32[16,64]{1,0:T(8,128)}', space=vmem, size = 0x2000, scoped, tag = 'scratch operand']
  %s0 = inlined_call_operand.vmem [shape: bf16[16,64], index: 0, kind: input, shape index: {}]
  %s1 = inlined_call_operand.vmem [shape: bf16[64,64], index: 1, kind: input, shape index: {}]
  %s2 = inlined_call_operand.vmem [shape: f32[1,64], index: 2, kind: input, shape index: {}]
  %s3 = inlined_call_operand.vmem [shape: bf16[16,64], index: 3, kind: output, shape index: {}]
  %s4 = sld [smem:[#allocation0]]
  $region30: #{_lambda_.49} parent=0
    _
  %s6 = ssub.s32 1, %s4
  %s7 = scalar_select 0, %s6, %s4
  // Predicated region
  $region2: #{_lambda_.49} parent=0 // pred_check
    _
  $region3: #{_lambda_.49} parent=0 // pred_check_branch
    %9 = sbr.rel (0) target = $region5
  $region4: #{_lambda_.49} parent=0 // pred_region
    _
  $region5: #{_lambda_.49} parent=0 // pred_fallthru
    _
  // Predicated region
  $region6: #{_lambda_.49} parent=0 // pred_check
    _
  $region7: #{_lambda_.49} parent=0 // pred_check_branch
    %11 = sbr.rel (0) target = $region9
  $region8: #{_lambda_.49} parent=0 // pred_region
    _
  $region9: #{_lambda_.49} parent=0 // pred_fallthru
    _
  // Predicated region
  $region10: #{_lambda_.49} parent=0 // pred_check
    _
  $region11: #{_lambda_.49} parent=0 // pred_check_branch
    %13 = sbr.rel (0) target = $region13
  $region12: #{_lambda_.49} parent=0 // pred_region
    _
  $region13: #{_lambda_.49} parent=0 // pred_fallthru
    _
  %p15 = scmp.eq.s32.totalorder 0, 0
  // Predicated region
  $region14: #{_lambda_.49} parent=0 // pred_check
    %p16 = pneg %p15
  $region15: #{_lambda_.49} parent=0 // pred_check_branch
    %18 = sbr.rel (%p16) target = $region17
  $region16: #{_lambda_.49} parent=0 // pred_region
    %vm19 = vcmask 523264
    %20 = vst.msk [vmem:[#allocation2] sm:$0xff] %vm19, 0.0
    %21 = vst.msk [vmem:[#allocation2 + $0x8] sm:$0xff] %vm19, 0.0
  $region17: #{_lambda_.49} parent=0 // pred_fallthru
    _
  %v22 = vld [vmem:[#allocation2] sm:$0xff]
  %v23 = vld [vmem:[#allocation2 + $0x8] sm:$0xff]
  %v24 = vld [vmem:[%s0] sm:$0xf]
  %v25 = vld [vmem:[%s0 + $0x4] sm:$0xf]
  %v26 = vld [vmem:[%s1] sm:$0xf]
  %v27 = vld [vmem:[%s1 + $0x4] sm:$0xf]
  %v28 = vld [vmem:[%s1 + $0x8] sm:$0xf]
  %v29 = vld [vmem:[%s1 + $0xc] sm:$0xf]
  %v30 = vld [vmem:[%s1 + $0x10] sm:$0xf]
  %v31 = vld [vmem:[%s1 + $0x14] sm:$0xf]
  %v32 = vld [vmem:[%s1 + $0x18] sm:$0xf]
  %v33 = vld [vmem:[%s1 + $0x1c] sm:$0xf]
  %v36 = vunpack.c.l.b16 %v24
  %v37 = vunpack.c.l.b16 %v25
  %v38 = vpack.c.b16 %v37, %v36
  %v47 = vunpack.c.l.b16 %v26
  %v48 = vunpack.c.l.b16 %v27
  %v49 = vunpack.c.l.b16 %v28
  %v50 = vunpack.c.l.b16 %v29
  %v51 = vunpack.c.l.b16 %v30
  %v52 = vunpack.c.l.b16 %v31
  %v53 = vunpack.c.l.b16 %v32
  %v54 = vunpack.c.l.b16 %v33
  %v55 = vpack.c.b16 %v48, %v47
  %v56 = vpack.c.b16 %v50, %v49
  %v57 = vpack.c.b16 %v52, %v51
  %v58 = vpack.c.b16 %v54, %v53
  %vm63 = vcmask 523264
  %v65 = vsel %vm63, %v38, 0
  %67 = vmatpush.bf16.msra.mxu0 0
  %68 = vmatpush.bf16.msra.mxu0 0
  %69 = vmatpush.bf16.msra.mxu0 0
  %70 = vmatpush.bf16.msra.mxu0 0
  %71 = vmatpush.bf16.msra.mxu0 %v58
  %72 = vmatpush.bf16.msra.mxu0 %v57
  %73 = vmatpush.bf16.msra.mxu0 %v56
  %74 = vmatpush.bf16.msra.mxu0 %v55
  %75 = vmatmul.bf16.gmra.mxu0 %v65
  %v76 = vpop.f32.mrf.mxu0
  %v77 = vadd.f32 0.0, %v76
  %v78 = vpop.f32.mrf.mxu0
  %v79 = vadd.f32 0.0, %v78
  %80 = vdwg.mxu0
  %v81 = vadd.f32 %v22, %v77
  %v82 = vadd.f32 %v23, %v79
  %83 = vst.msk [vmem:[#allocation2] sm:$0xff] %vm63, %v81
  %84 = vst.msk [vmem:[#allocation2 + $0x8] sm:$0xff] %vm63, %v82
  // Predicated region
  $region18: #{_lambda_.49} parent=0 // pred_check
    %p85 = pneg %p15
  $region19: #{_lambda_.49} parent=0 // pred_check_branch
    %87 = sbr.rel (%p85) target = $region21
  $region20: #{_lambda_.49} parent=0 // pred_region
    %v88 = vld [vmem:[#allocation2] sm:$0xff]
    %v89 = vld [vmem:[#allocation2 + $0x8] sm:$0xff]
    %v90 = vld [vmem:[%s2] sm:$0x1]
    %v92 = vperm.slane %v90, 0
    %v94 = vadd.f32 %v88, %v92
    %v95 = vadd.f32 %v89, %v92
    %v96 = vpack.c.bf16 %v94, %v94
    %v97 = vpack.c.bf16 %v95, %v95
    %vm98 = vcmask 519168
    %99 = vst.msk [vmem:[%s3] sm:$0xf] %vm98, %v96
    %100 = vst.msk [vmem:[%s3 + $0x4] sm:$0xf] %vm98, %v97
  $region21: #{_lambda_.49} parent=0 // pred_fallthru
    _
  // Predicated region
  $region22: #{_lambda_.49} parent=0 // pred_check
    _
  $region23: #{_lambda_.49} parent=0 // pred_check_branch
    %102 = sbr.rel (0) target = $region25
  $region24: #{_lambda_.49} parent=0 // pred_region
    _
  $region25: #{_lambda_.49} parent=0 // pred_fallthru
    _
  // Predicated region
  $region26: #{_lambda_.49} parent=0 // pred_check
    _
  $region27: #{_lambda_.49} parent=0 // pred_check_branch
    %104 = sbr.rel (0) target = $region29
  $region28: #{_lambda_.49} parent=0 // pred_region
    _
  $region29: #{_lambda_.49} parent=0 // pred_fallthru
    _

// kernel: _lambda_.52
$region0: #{_lambda_.52}
  #allocation0 [shape = 'u32[]', space=smem, size = 0x4, offset = 0x4, fixed_abs, tag = 'smem constant byte address 0x4 - core index']
  #allocation1 [shape = 'u32[72,128]{1,0:T(1,128)}', space=vmem, size = 0x9000, scoped, tag = 'internal scratch']
  #allocation2 [shape = 'f32[16,64]{1,0:T(8,128)}', space=vmem, size = 0x2000, scoped, tag = 'scratch operand']
  %s0 = inlined_call_operand.vmem [shape: bf16[16,64], index: 0, kind: input, shape index: {}]
  %s1 = inlined_call_operand.vmem [shape: bf16[64,64], index: 1, kind: input, shape index: {}]
  %s2 = inlined_call_operand.vmem [shape: f32[1,64], index: 2, kind: input, shape index: {}]
  %s3 = inlined_call_operand.vmem [shape: bf16[16,64], index: 3, kind: input, shape index: {}]
  %s4 = inlined_call_operand.vmem [shape: f32[1,64], index: 4, kind: input, shape index: {}]
  %s5 = inlined_call_operand.vmem [shape: f32[1,64], index: 5, kind: input, shape index: {}]
  %s6 = inlined_call_operand.vmem [shape: bf16[16,64], index: 6, kind: output, shape index: {}]
  %s7 = sld [smem:[#allocation0]]
  $region42: #{_lambda_.52} parent=0
    _
  %s9 = ssub.s32 1, %s7
  %s10 = scalar_select 0, %s9, %s7
  // Predicated region
  $region2: #{_lambda_.52} parent=0 // pred_check
    _
  $region3: #{_lambda_.52} parent=0 // pred_check_branch
    %12 = sbr.rel (0) target = $region5
  $region4: #{_lambda_.52} parent=0 // pred_region
    _
  $region5: #{_lambda_.52} parent=0 // pred_fallthru
    _
  // Predicated region
  $region6: #{_lambda_.52} parent=0 // pred_check
    _
  $region7: #{_lambda_.52} parent=0 // pred_check_branch
    %14 = sbr.rel (0) target = $region9
  $region8: #{_lambda_.52} parent=0 // pred_region
    _
  $region9: #{_lambda_.52} parent=0 // pred_fallthru
    _
  // Predicated region
  $region10: #{_lambda_.52} parent=0 // pred_check
    _
  $region11: #{_lambda_.52} parent=0 // pred_check_branch
    %16 = sbr.rel (0) target = $region13
  $region12: #{_lambda_.52} parent=0 // pred_region
    _
  $region13: #{_lambda_.52} parent=0 // pred_fallthru
    _
  // Predicated region
  $region14: #{_lambda_.52} parent=0 // pred_check
    _
  $region15: #{_lambda_.52} parent=0 // pred_check_branch
    %18 = sbr.rel (0) target = $region17
  $region16: #{_lambda_.52} parent=0 // pred_region
    _
  $region17: #{_lambda_.52} parent=0 // pred_fallthru
    _
  // Predicated region
  $region18: #{_lambda_.52} parent=0 // pred_check
    _
  $region19: #{_lambda_.52} parent=0 // pred_check_branch
    %20 = sbr.rel (0) target = $region21
  $region20: #{_lambda_.52} parent=0 // pred_region
    _
  $region21: #{_lambda_.52} parent=0 // pred_fallthru
    _
  // Predicated region
  $region22: #{_lambda_.52} parent=0 // pred_check
    _
  $region23: #{_lambda_.52} parent=0 // pred_check_branch
    %22 = sbr.rel (0) target = $region25
  $region24: #{_lambda_.52} parent=0 // pred_region
    _
  $region25: #{_lambda_.52} parent=0 // pred_fallthru
    _
  %p24 = scmp.eq.s32.totalorder 0, 0
  // Predicated region
  $region26: #{_lambda_.52} parent=0 // pred_check
    %p25 = pneg %p24
  $region27: #{_lambda_.52} parent=0 // pred_check_branch
    %27 = sbr.rel (%p25) target = $region29
  $region28: #{_lambda_.52} parent=0 // pred_region
    %vm28 = vcmask 523264
    %29 = vst.msk [vmem:[#allocation2] sm:$0xff] %vm28, 0.0
    %30 = vst.msk [vmem:[#allocation2 + $0x8] sm:$0xff] %vm28, 0.0
  $region29: #{_lambda_.52} parent=0 // pred_fallthru
    _
  %v31 = vld [vmem:[#allocation2] sm:$0xff]
  %v32 = vld [vmem:[#allocation2 + $0x8] sm:$0xff]
  %v33 = vld [vmem:[%s0] sm:$0xf]
  %v34 = vld [vmem:[%s0 + $0x4] sm:$0xf]
  %v35 = vld [vmem:[%s1] sm:$0xf]
  %v36 = vld [vmem:[%s1 + $0x4] sm:$0xf]
  %v37 = vld [vmem:[%s1 + $0x8] sm:$0xf]
  %v38 = vld [vmem:[%s1 + $0xc] sm:$0xf]
  %v39 = vld [vmem:[%s1 + $0x10] sm:$0xf]
  %v40 = vld [vmem:[%s1 + $0x14] sm:$0xf]
  %v41 = vld [vmem:[%s1 + $0x18] sm:$0xf]
  %v42 = vld [vmem:[%s1 + $0x1c] sm:$0xf]
  %v45 = vunpack.c.l.b16 %v33
  %v46 = vunpack.c.l.b16 %v34
  %v47 = vpack.c.b16 %v46, %v45
  %v56 = vunpack.c.l.b16 %v35
  %v57 = vunpack.c.l.b16 %v36
  %v58 = vunpack.c.l.b16 %v37
  %v59 = vunpack.c.l.b16 %v38
  %v60 = vunpack.c.l.b16 %v39
  %v61 = vunpack.c.l.b16 %v40
  %v62 = vunpack.c.l.b16 %v41
  %v63 = vunpack.c.l.b16 %v42
  %v64 = vpack.c.b16 %v57, %v56
  %v65 = vpack.c.b16 %v59, %v58
  %v66 = vpack.c.b16 %v61, %v60
  %v67 = vpack.c.b16 %v63, %v62
  %vm72 = vcmask 523264
  %v74 = vsel %vm72, %v47, 0
  %76 = vmatpush.bf16.msra.mxu0 0
  %77 = vmatpush.bf16.msra.mxu0 0
  %78 = vmatpush.bf16.msra.mxu0 0
  %79 = vmatpush.bf16.msra.mxu0 0
  %80 = vmatpush.bf16.msra.mxu0 %v67
  %81 = vmatpush.bf16.msra.mxu0 %v66
  %82 = vmatpush.bf16.msra.mxu0 %v65
  %83 = vmatpush.bf16.msra.mxu0 %v64
  %84 = vmatmul.bf16.gmra.mxu0 %v74
  %v85 = vpop.f32.mrf.mxu0
  %v86 = vadd.f32 0.0, %v85
  %v87 = vpop.f32.mrf.mxu0
  %v88 = vadd.f32 0.0, %v87
  %89 = vdwg.mxu0
  %v90 = vadd.f32 %v31, %v86
  %v91 = vadd.f32 %v32, %v88
  %92 = vst.msk [vmem:[#allocation2] sm:$0xff] %vm72, %v90
  %93 = vst.msk [vmem:[#allocation2 + $0x8] sm:$0xff] %vm72, %v91
  // Predicated region
  $region30: #{_lambda_.52} parent=0 // pred_check
    %p94 = pneg %p24
  $region31: #{_lambda_.52} parent=0 // pred_check_branch
    %96 = sbr.rel (%p94) target = $region33
  $region32: #{_lambda_.52} parent=0 // pred_region
    %v97 = vld [vmem:[#allocation2] sm:$0xff]
    %v98 = vld [vmem:[#allocation2 + $0x8] sm:$0xff]
    %v99 = vld [vmem:[%s2] sm:$0x1]
    %v101 = vperm.slane %v99, 0
    %v103 = vadd.f32 %v97, %v101
    %v104 = vadd.f32 %v98, %v101
    %v105 = vld [vmem:[%s3] sm:$0xf]
    %v106 = vld [vmem:[%s3 + $0x4] sm:$0xf]
    %v107 = vunpack.c.l.bf16 %v105
    %v108 = vunpack.c.l.bf16 %v106
    %v109 = vadd.f32 %v103, %v107
    %v110 = vadd.f32 %v104, %v108
    %v111 = vld [vmem:[%s4] sm:$0x1]
    %v112 = vld [vmem:[%s5] sm:$0x1]
    %v113 = vsel %vm72, %v109, 0.0
    %114 = vadd.xlane.f32.xlu0 %v113
    %v115 = vpop.xlane.xlu0 %114
    %v116 = vsel %vm72, %v110, 0.0
    %117 = vadd.xlane.f32.xlu0 %v116
    %v118 = vpop.xlane.xlu0 %117
    %v119 = vrcp.pop 64.0
    %v120 = vmul.f32 64.0, %v119
    %v121 = vsub.f32 1.0, %v120
    %v122 = vmul.f32 %v119, %v121
    %v123 = vadd.f32 %v119, %v122
    %vm124 = vweird.f32 %v119
    %v125 = vsel %vm124, %v119, %v123
    %v126 = vmul.f32 %v115, %v125
    %v127 = vmul.f32 %v118, %v125
    %v128 = vsub.f32 %v109, %v126
    %v129 = vsub.f32 %v110, %v127
    %v130 = vmul.f32 %v128, %v128
    %v131 = vmul.f32 %v129, %v129
    %v132 = vsel %vm72, %v130, 0.0
    %133 = vadd.xlane.f32.xlu0 %v132
    %v134 = vpop.xlane.xlu0 %133
    %v135 = vsel %vm72, %v131, 0.0
    %136 = vadd.xlane.f32.xlu0 %v135
    %v137 = vpop.xlane.xlu0 %136
    %v138 = vmul.f32 %v134, %v125
    %v139 = vmul.f32 %v137, %v125
    %v140 = vadd.f32 %v138, 1e-06
    %v141 = vadd.f32 %v139, 1e-06
    %v142 = vrsqrt.pop %v140
    %v143 = vmul.f32 %v142, %v140
    %v144 = vmul.f32 %v143, %v142
    %v145 = vmul.f32 0.5, %v144
    %v146 = vsub.f32 1.5, %v145
    %v147 = vmul.f32 %v142, %v146
    %vm148 = vweird.f32 %v140
    %vm149 = vweird.f32 %v142
    %vm150 = vmor %vm148, %vm149
    %v151 = vsel %vm150, %v142, %v147
    %v152 = vrsqrt.pop %v141
    %v153 = vmul.f32 %v152, %v141
    %v154 = vmul.f32 %v153, %v152
    %v155 = vmul.f32 0.5, %v154
    %v156 = vsub.f32 1.5, %v155
    %v157 = vmul.f32 %v152, %v156
    %vm158 = vweird.f32 %v141
    %vm159 = vweird.f32 %v152
    %vm160 = vmor %vm158, %vm159
    %v161 = vsel %vm160, %v152, %v157
    %v162 = vmul.f32 %v128, %v151
    %v163 = vmul.f32 %v129, %v161
    %v165 = vperm.slane %v111, 0
    %v167 = vmul.f32 %v162, %v165
    %v168 = vmul.f32 %v163, %v165
    %v170 = vperm.slane %v112, 0
    %v172 = vadd.f32 %v167, %v170
    %v173 = vadd.f32 %v168, %v170
    %v174 = vpack.c.bf16 %v172, %v172
    %v175 = vpack.c.bf16 %v173, %v173
    %vm176 = vcmask 519168
    %177 = vst.msk [vmem:[%s6] sm:$0xf] %vm176, %v174
    %178 = vst.msk [vmem:[%s6 + $0x4] sm:$0xf] %vm176, %v175
  $region33: #{_lambda_.52} parent=0 // pred_fallthru
    _
  // Predicated region
  $region34: #{_lambda_.52} parent=0 // pred_check
    _
  $region35: #{_lambda_.52} parent=0 // pred_check_branch
    %180 = sbr.rel (0) target = $region37
  $region36: #{_lambda_.52} parent=0 // pred_region
    _
  $region37: #{_lambda_.52} parent=0 // pred_fallthru
    _
  // Predicated region
  $region38: #{_lambda_.52} parent=0 // pred_check
    _
  $region39: #{_lambda_.52} parent=0 // pred_check_branch
    %182 = sbr.rel (0) target = $region41
  $region40: #{_lambda_.52} parent=0 // pred_region
    _
  $region41: #{_lambda_.52} parent=0 // pred_fallthru
    _

// kernel: _lambda_.51
$region0: #{_lambda_.51}
  #allocation0 [shape = 'u32[]', space=smem, size = 0x4, offset = 0x4, fixed_abs, tag = 'smem constant byte address 0x4 - core index']
  #allocation1 [shape = 'u32[72,128]{1,0:T(1,128)}', space=vmem, size = 0x9000, scoped, tag = 'internal scratch']
  %s0 = inlined_call_operand.vmem [shape: bf16[2,4,8,16], index: 0, kind: input, shape index: {}]
  %s1 = inlined_call_operand.vmem [shape: bf16[2,4,8,16], index: 1, kind: input, shape index: {}]
  %s2 = inlined_call_operand.vmem [shape: bf16[2,4,8,16], index: 2, kind: input, shape index: {}]
  %s3 = inlined_call_operand.vmem [shape: f32[2,1,8], index: 3, kind: input, shape index: {}]
  %s4 = inlined_call_operand.vmem [shape: bf16[2,4,8,16], index: 4, kind: output, shape index: {}]
  %s5 = sld [smem:[#allocation0]]
  $region49: #{_lambda_.51} parent=0
    _
  %s7 = ssub.s32 1, %s5
  %s8 = scalar_select 0, %s7, %s5
  loop: start=0, step=1, limit=4
  $region2: #{_lambda_.51} parent=0 // loop_pre_header
    _
  $region3: #{_lambda_.51} parent=0 // loop_header
    %s10 = sphi 0, %s14
    %p11 = scmp.ge.s32.totalorder %s10, 4
    %s20 = sphi 0, %s22
    %s23 = sphi 0, %s20
    %s24 = sphi 0, %s23
    %s40 = sphi 0, %s24
    %s46 = sphi 0, %s48
    %s49 = sphi 0, %s46
    %s50 = sphi 0, %s49
    %s66 = sphi 0, %s50
    %s72 = sphi 0, %s74
    %s75 = sphi 0, %s72
    %s76 = sphi 0, %s75
    %s92 = sphi 0, %s76
    %s98 = sphi 0, %s100
    %s101 = sphi 0, %s98
    %s102 = sphi 0, %s101
    %s118 = sphi 0, %s102
    %s124 = sphi 0, %s126
    %s127 = sphi 0, %s124
    %s128 = sphi 0, %s127
    %s144 = sphi 0, %s128
  $region4: #{_lambda_.51} parent=0 // loop_header_branch
    %13 = sbr.rel (%p11) target = $region8
  $region5: #{_lambda_.51} parent=0 // loop_body
    %s15 = ssub.s32 %s10, 1
    %s16 = ssub.s32 %s10, 2
    %s17 = sadd.s32 %s10, 1
    %s18 = ssub.s32 %s10, %s17
    %p19 = scmp.eq.s32.totalorder %s18, 0
    %s21 = sadd.s32 %s20, 1
    %s22 = scalar_select %p19, %s20, %s21
    %p25 = pneg %p19
    %p26 = scmp.eq.s32.totalorder %s10, 1
    %p27 = por %p25, %p26
    %p28 = scmp.ne.s32.totalorder %s20, %s23
    %p29 = scmp.eq.s32.totalorder %s10, 0
    %p30 = por %p28, %p29
    %p31 = scmp.ne.s32.totalorder %s20, %s23
    %p32 = scmp.eq.s32.totalorder %s15, 1
    %p33 = por %p31, %p32
    %p34 = scmp.ne.s32.totalorder %s23, %s24
    %p35 = scmp.eq.s32.totalorder %s15, 0
    %p36 = por %p34, %p35
    %p37 = scmp.ne.s32.totalorder %s23, %s24
    %p38 = scmp.eq.s32.totalorder %s16, 1
    %p39 = por %p37, %p38
    %p41 = scmp.ne.s32.totalorder %s24, %s40
    %p42 = scmp.eq.s32.totalorder %s16, 0
    %p43 = por %p41, %p42
    %s44 = ssub.s32 %s10, %s17
    %p45 = scmp.eq.s32.totalorder %s44, 0
    %s47 = sadd.s32 %s46, 1
    %s48 = scalar_select %p45, %s46, %s47
    %p51 = pneg %p45
    %p52 = scmp.eq.s32.totalorder %s10, 1
    %p53 = por %p51, %p52
    %p54 = scmp.ne.s32.totalorder %s46, %s49
    %p55 = scmp.eq.s32.totalorder %s10, 0
    %p56 = por %p54, %p55
    %p57 = scmp.ne.s32.totalorder %s46, %s49
    %p58 = scmp.eq.s32.totalorder %s15, 1
    %p59 = por %p57, %p58
    %p60 = scmp.ne.s32.totalorder %s49, %s50
    %p61 = scmp.eq.s32.totalorder %s15, 0
    %p62 = por %p60, %p61
    %p63 = scmp.ne.s32.totalorder %s49, %s50
    %p64 = scmp.eq.s32.totalorder %s16, 1
    %p65 = por %p63, %p64
    %p67 = scmp.ne.s32.totalorder %s50, %s66
    %p68 = scmp.eq.s32.totalorder %s16, 0
    %p69 = por %p67, %p68
    %s70 = ssub.s32 %s10, %s17
    %p71 = scmp.eq.s32.totalorder %s70, 0
    %s73 = sadd.s32 %s72, 1
    %s74 = scalar_select %p71, %s72, %s73
    %p77 = pneg %p71
    %p78 = scmp.eq.s32.totalorder %s10, 1
    %p79 = por %p77, %p78
    %p80 = scmp.ne.s32.totalorder %s72, %s75
    %p81 = scmp.eq.s32.totalorder %s10, 0
    %p82 = por %p80, %p81
    %p83 = scmp.ne.s32.totalorder %s72, %s75
    %p84 = scmp.eq.s32.totalorder %s15, 1
    %p85 = por %p83, %p84
    %p86 = scmp.ne.s32.totalorder %s75, %s76
    %p87 = scmp.eq.s32.totalorder %s15, 0
    %p88 = por %p86, %p87
    %p89 = scmp.ne.s32.totalorder %s75, %s76
    %p90 = scmp.eq.s32.totalorder %s16, 1
    %p91 = por %p89, %p90
    %p93 = scmp.ne.s32.totalorder %s76, %s92
    %p94 = scmp.eq.s32.totalorder %s16, 0
    %p95 = por %p93, %p94
    %s96 = ssub.s32 %s10, %s17
    %p97 = scmp.eq.s32.totalorder %s96, 0
    %s99 = sadd.s32 %s98, 1
    %s100 = scalar_select %p97, %s98, %s99
    %p103 = pneg %p97
    %p104 = scmp.eq.s32.totalorder %s10, 1
    %p105 = por %p103, %p104
    %p106 = scmp.ne.s32.totalorder %s98, %s101
    %p107 = scmp.eq.s32.totalorder %s10, 0
    %p108 = por %p106, %p107
    %p109 = scmp.ne.s32.totalorder %s98, %s101
    %p110 = scmp.eq.s32.totalorder %s15, 1
    %p111 = por %p109, %p110
    %p112 = scmp.ne.s32.totalorder %s101, %s102
    %p113 = scmp.eq.s32.totalorder %s15, 0
    %p114 = por %p112, %p113
    %p115 = scmp.ne.s32.totalorder %s101, %s102
    %p116 = scmp.eq.s32.totalorder %s16, 1
    %p117 = por %p115, %p116
    %p119 = scmp.ne.s32.totalorder %s102, %s118
    %p120 = scmp.eq.s32.totalorder %s16, 0
    %p121 = por %p119, %p120
    %s122 = ssub.s32 %s10, %s17
    %p123 = scmp.eq.s32.totalorder %s122, 0
    %s125 = sadd.s32 %s124, 1
    %s126 = scalar_select %p123, %s124, %s125
    %p129 = pneg %p123
    %p130 = scmp.eq.s32.totalorder %s10, 1
    %p131 = por %p129, %p130
    %p132 = scmp.ne.s32.totalorder %s124, %s127
    %p133 = scmp.eq.s32.totalorder %s10, 0
    %p134 = por %p132, %p133
    %p135 = scmp.ne.s32.totalorder %s124, %s127
    %p136 = scmp.eq.s32.totalorder %s15, 1
    %p137 = por %p135, %p136
    %p138 = scmp.ne.s32.totalorder %s127, %s128
    %p139 = scmp.eq.s32.totalorder %s15, 0
    %p140 = por %p138, %p139
    %p141 = scmp.ne.s32.totalorder %s127, %s128
    %p142 = scmp.eq.s32.totalorder %s16, 1
    %p143 = por %p141, %p142
    %p145 = scmp.ne.s32.totalorder %s128, %s144
    %p146 = scmp.eq.s32.totalorder %s16, 0
    %p147 = por %p145, %p146
    %p148 = scmp.le.s32.totalorder 1, %s10
    %p149 = scmp.lt.s32.totalorder %s10, 3
    %p150 = pnand %p148, %p149
    %p151 = pneg %p150
    // Predicated region
    $region9: #{_lambda_.51} parent=5 // pred_check
      _
    $region10: #{_lambda_.51} parent=5 // pred_check_branch
      %153 = sbr.rel (%p150) target = $region12
    $region11: #{_lambda_.51} parent=5 // pred_region
      %s154 = ssub.s32 %s10, 1
    $region12: #{_lambda_.51} parent=5 // pred_fallthru
      _
    %p155 = scmp.lt.s32.totalorder %s10, 2
    // Predicated region
    $region13: #{_lambda_.51} parent=5 // pred_check
      %p156 = pneg %p155
    $region14: #{_lambda_.51} parent=5 // pred_check_branch
      %158 = sbr.rel (%p156) target = $region16
    $region15: #{_lambda_.51} parent=5 // pred_region
      // Predicated region
      $region17: #{_lambda_.51} parent=15 // pred_check
        %p159 = pneg %p30
      $region18: #{_lambda_.51} parent=15 // pred_check_branch
        %161 = sbr.rel (%p159) target = $region20
      $region19: #{_lambda_.51} parent=15 // pred_region
        %p162 = scmp.lt.s32.totalorder %s10, 1
        %s163 = scalar_select %p162, %s10, 1
        %s164 = smul.addr %s163, 4
        %s165 = smul.addr %s164, 4
        %s166 = scalar_lea.vmem %s0, %s165
      $region20: #{_lambda_.51} parent=15 // pred_fallthru
        _
      // Predicated region
      $region21: #{_lambda_.51} parent=15 // pred_check
        %p167 = pneg %p56
      $region22: #{_lambda_.51} parent=15 // pred_check_branch
        %169 = sbr.rel (%p167) target = $region24
      $region23: #{_lambda_.51} parent=15 // pred_region
        %p170 = scmp.lt.s32.totalorder %s10, 1
        %s171 = scalar_select %p170, %s10, 1
        %s172 = smul.addr %s171, 4
        %s173 = smul.addr %s172, 4
        %s174 = scalar_lea.vmem %s1, %s173
      $region24: #{_lambda_.51} parent=15 // pred_fallthru
        _
      // Predicated region
      $region25: #{_lambda_.51} parent=15 // pred_check
        %p175 = pneg %p82
      $region26: #{_lambda_.51} parent=15 // pred_check_branch
        %177 = sbr.rel (%p175) target = $region28
      $region27: #{_lambda_.51} parent=15 // pred_region
        %p178 = scmp.lt.s32.totalorder %s10, 1
        %s179 = scalar_select %p178, %s10, 1
        %s180 = smul.addr %s179, 4
        %s181 = smul.addr %s180, 4
        %s182 = scalar_lea.vmem %s2, %s181
      $region28: #{_lambda_.51} parent=15 // pred_fallthru
        _
      // Predicated region
      $region29: #{_lambda_.51} parent=15 // pred_check
        %p183 = pneg %p108
      $region30: #{_lambda_.51} parent=15 // pred_check_branch
        %185 = sbr.rel (%p183) target = $region32
      $region31: #{_lambda_.51} parent=15 // pred_region
        %p186 = scmp.lt.s32.totalorder %s10, 1
        %s187 = scalar_select %p186, %s10, 1
        %s188 = scalar_lea.vmem %s3, %s187
      $region32: #{_lambda_.51} parent=15 // pred_fallthru
        _
    $region16: #{_lambda_.51} parent=5 // pred_fallthru
      _
    %p189 = scmp.le.s32.totalorder 1, %s10
    %p190 = scmp.lt.s32.totalorder %s10, 3
    %p191 = pnand %p189, %p190
    %p192 = pneg %p191
    // Predicated region
    $region33: #{_lambda_.51} parent=5 // pred_check
      _
    $region34: #{_lambda_.51} parent=5 // pred_check_branch
      %194 = sbr.rel (%p191) target = $region36
    $region35: #{_lambda_.51} parent=5 // pred_region
      %s195 = ssub.s32 %s10, 1
      %p196 = scmp.lt.s32.totalorder %s15, 1
      %s197 = scalar_select %p196, %s15, 1
      %s198 = smul.addr %s197, 4
      %s199 = smul.addr %s198, 4
      %s200 = scalar_lea.vmem %s0, %s199
      %p201 = pneg %p36
      %p202 = pneg %p33
      %p203 = scmp.lt.s32.totalorder %s15, 1
      %s204 = scalar_select %p203, %s15, 1
      %s205 = smul.addr %s204, 4
      %s206 = smul.addr %s205, 4
      %s207 = scalar_lea.vmem %s1, %s206
      %p208 = pneg %p62
      %p209 = pneg %p59
      %p210 = scmp.lt.s32.totalorder %s15, 1
      %s211 = scalar_select %p210, %s15, 1
      %s212 = smul.addr %s211, 4
      %s213 = smul.addr %s212, 4
      %s214 = scalar_lea.vmem %s2, %s213
      %p215 = pneg %p88
      %p216 = pneg %p85
      %p217 = scmp.lt.s32.totalorder %s15, 1
      %s218 = scalar_select %p217, %s15, 1
      %s219 = scalar_lea.vmem %s3, %s218
      %p220 = pneg %p114
      %p221 = pneg %p111
      %p222 = pneg %p140
      %p223 = pneg %p137
      %p224 = scmp.lt.s32.totalorder %s15, 1
      %s225 = scalar_select %p224, %s15, 1
      %s226 = smul.addr %s225, 4
      %s227 = smul.addr %s226, 4
      %s228 = scalar_lea.vmem %s4, %s227
      %p229 = scmp.lt.s32.totalorder %s15, 1
      %s230 = scalar_select %p229, %s15, 1
      %s231 = smul.addr %s230, 4
      %s232 = smul.addr %s231, 4
      %s233 = scalar_lea.vmem %s0, %s232
      %p234 = scmp.lt.s32.totalorder %s15, 1
      %s235 = scalar_select %p234, %s15, 1
      %s236 = smul.addr %s235, 4
      %s237 = smul.addr %s236, 4
      %s238 = scalar_lea.vmem %s1, %s237
      %p239 = scmp.lt.s32.totalorder %s15, 1
      %s240 = scalar_select %p239, %s15, 1
      %s241 = smul.addr %s240, 4
      %s242 = smul.addr %s241, 4
      %s243 = scalar_lea.vmem %s2, %s242
      %p244 = scmp.lt.s32.totalorder %s15, 1
      %s245 = scalar_select %p244, %s15, 1
      %s246 = scalar_lea.vmem %s3, %s245
      %p247 = scmp.lt.s32.totalorder %s15, 1
      %s248 = scalar_select %p247, %s15, 1
      %s249 = smul.addr %s248, 4
      %s250 = smul.addr %s249, 4
      %s251 = scalar_lea.vmem %s4, %s250
      %v253 = vld [vmem:[%s233] sm:$0xf]
      %v254 = vld [vmem:[%s233 + $0x4] sm:$0xf]
      %v255 = vld [vmem:[%s233 + $0x8] sm:$0xf]
      %v256 = vld [vmem:[%s233 + $0xc] sm:$0xf]
      %v257 = vld [vmem:[%s238] sm:$0xf]
      %v258 = vld [vmem:[%s238 + $0x4] sm:$0xf]
      %v259 = vld [vmem:[%s238 + $0x8] sm:$0xf]
      %v260 = vld [vmem:[%s238 + $0xc] sm:$0xf]
      %v261 = vld [vmem:[%s243] sm:$0xf]
      %v262 = vld [vmem:[%s243 + $0x4] sm:$0xf]
      %v263 = vld [vmem:[%s243 + $0x8] sm:$0xf]
      %v264 = vld [vmem:[%s243 + $0xc] sm:$0xf]
      %vm265 = vcmask 130048
      %v267 = vsel %vm265, %v253, 0
      %v270 = vsel %vm265, %v257, 0
      %272 = vmatpush.bf16.xpose.msra.mxu0 0
      %273 = vmatpush.bf16.xpose.msra.mxu0 0
      %274 = vmatpush.bf16.xpose.msra.mxu0 0
      %275 = vmatpush.bf16.xpose.msra.mxu0 0
      %276 = vmatpush.bf16.xpose.msra.mxu0 0
      %277 = vmatpush.bf16.xpose.msra.mxu0 0
      %278 = vmatpush.bf16.xpose.msra.mxu0 0
      %279 = vmatpush.bf16.xpose.msra.mxu0 %v270
      %280 = vmatmul.bf16.gmra.mxu0 %v267
      %v281 = vpop.f32.mrf.mxu0
      %v282 = vadd.f32 0.0, %v281
      %v283 = vpop.f32.mrf.mxu0
      %284 = vdwg.mxu0
      %v286 = vsel %vm265, %v254, 0
      %v289 = vsel %vm265, %v258, 0
      %291 = vmatpush.bf16.xpose.msra.mxu0 0
      %292 = vmatpush.bf16.xpose.msra.mxu0 0
      %293 = vmatpush.bf16.xpose.msra.mxu0 0
      %294 = vmatpush.bf16.xpose.msra.mxu0 0
      %295 = vmatpush.bf16.xpose.msra.mxu0 0
      %296 = vmatpush.bf16.xpose.msra.mxu0 0
      %297 = vmatpush.bf16.xpose.msra.mxu0 0
      %298 = vmatpush.bf16.xpose.msra.mxu0 %v289
      %299 = vmatmul.bf16.gmra.mxu0 %v286
      %v300 = vpop.f32.mrf.mxu0
      %v301 = vadd.f32 0.0, %v300
      %v302 = vpop.f32.mrf.mxu0
      %303 = vdwg.mxu0
      %v305 = vsel %vm265, %v255, 0
      %v308 = vsel %vm265, %v259, 0
      %310 = vmatpush.bf16.xpose.msra.mxu0 0
      %311 = vmatpush.bf16.xpose.msra.mxu0 0
      %312 = vmatpush.bf16.xpose.msra.mxu0 0
      %313 = vmatpush.bf16.xpose.msra.mxu0 0
      %314 = vmatpush.bf16.xpose.msra.mxu0 0
      %315 = vmatpush.bf16.xpose.msra.mxu0 0
      %316 = vmatpush.bf16.xpose.msra.mxu0 0
      %317 = vmatpush.bf16.xpose.msra.mxu0 %v308
      %318 = vmatmul.bf16.gmra.mxu0 %v305
      %v319 = vpop.f32.mrf.mxu0
      %v320 = vadd.f32 0.0, %v319
      %v321 = vpop.f32.mrf.mxu0
      %322 = vdwg.mxu0
      %v324 = vsel %vm265, %v256, 0
      %v327 = vsel %vm265, %v260, 0
      %329 = vmatpush.bf16.xpose.msra.mxu0 0
      %330 = vmatpush.bf16.xpose.msra.mxu0 0
      %331 = vmatpush.bf16.xpose.msra.mxu0 0
      %332 = vmatpush.bf16.xpose.msra.mxu0 0
      %333 = vmatpush.bf16.xpose.msra.mxu0 0
      %334 = vmatpush.bf16.xpose.msra.mxu0 0
      %335 = vmatpush.bf16.xpose.msra.mxu0 0
      %336 = vmatpush.bf16.xpose.msra.mxu0 %v327
      %337 = vmatmul.bf16.gmra.mxu0 %v324
      %v338 = vpop.f32.mrf.mxu0
      %v339 = vadd.f32 0.0, %v338
      %v340 = vpop.f32.mrf.mxu0
      %341 = vdwg.mxu0
      %v342 = vmul.f32 %v282, 0.25
      %v343 = vmul.f32 %v301, 0.25
      %v344 = vmul.f32 %v320, 0.25
      %v345 = vmul.f32 %v339, 0.25
      %v346 = vld [vmem:[%s246] sm:$0x1]
      %v348 = vperm.slane %v346, 0
      %v350 = vadd.f32 %v342, %v348
      %v351 = vadd.f32 %v343, %v348
      %v352 = vadd.f32 %v344, %v348
      %v353 = vadd.f32 %v345, %v348
      %vm354 = vcmask 64512
      %v355 = vsel %vm354, %v350, -inf
      %356 = vmax.xlane.f32.xlu0 %v355
      %v357 = vpop.xlane.xlu0 %356
      %v358 = vsel %vm354, %v351, -inf
      %359 = vmax.xlane.f32.xlu0 %v358
      %v360 = vpop.xlane.xlu0 %359
      %v361 = vsel %vm354, %v352, -inf
      %362 = vmax.xlane.f32.xlu0 %v361
      %v363 = vpop.xlane.xlu0 %362
      %v364 = vsel %vm354, %v353, -inf
      %365 = vmax.xlane.f32.xlu0 %v364
      %v366 = vpop.xlane.xlu0 %365
      %v367 = vsub.f32 %v350, %v357
      %v368 = vsub.f32 %v351, %v360
      %v369 = vsub.f32 %v352, %v363
      %v370 = vsub.f32 %v353, %v366
      %v371 = vmul.f32 %v367, 1.442695
      %v372 = vpow.pop %v371
      %v373 = vmul.f32 %v368, 1.442695
      %v374 = vpow.pop %v373
      %v375 = vmul.f32 %v369, 1.442695
      %v376 = vpow.pop %v375
      %v377 = vmul.f32 %v370, 1.442695
      %v378 = vpow.pop %v377
      %v379 = vsel %vm354, %v372, 0.0
      %380 = vadd.xlane.f32.xlu0 %v379
      %v381 = vpop.xlane.xlu0 %380
      %v382 = vsel %vm354, %v374, 0.0
      %383 = vadd.xlane.f32.xlu0 %v382
      %v384 = vpop.xlane.xlu0 %383
      %v385 = vsel %vm354, %v376, 0.0
      %386 = vadd.xlane.f32.xlu0 %v385
      %v387 = vpop.xlane.xlu0 %386
      %v388 = vsel %vm354, %v378, 0.0
      %389 = vadd.xlane.f32.xlu0 %v388
      %v390 = vpop.xlane.xlu0 %389
      %v391 = vrcp.pop %v381
      %v392 = vrcp.pop %v384
      %v393 = vrcp.pop %v387
      %v394 = vrcp.pop %v390
      %v395 = vmul.f32 %v372, %v391
      %v396 = vmul.f32 %v374, %v392
      %v397 = vmul.f32 %v376, %v393
      %v398 = vmul.f32 %v378, %v394
      %v399 = vpack.c.bf16 %v395, %v395
      %v400 = vpack.c.bf16 %v396, %v396
      %v401 = vpack.c.bf16 %v397, %v397
      %v402 = vpack.c.bf16 %v398, %v398
      %v404 = vsel %vm354, %v399, 0
      %vm406 = vcmask 1043456
      %v408 = vsel %vm406, %v261, 0
      %410 = vmatpush.bf16.msra.mxu0 0
      %411 = vmatpush.bf16.msra.mxu0 0
      %412 = vmatpush.bf16.msra.mxu0 0
      %413 = vmatpush.bf16.msra.mxu0 0
      %414 = vmatpush.bf16.msra.mxu0 0
      %415 = vmatpush.bf16.msra.mxu0 0
      %416 = vmatpush.bf16.msra.mxu0 0
      %417 = vmatpush.bf16.msra.mxu0 %v408
      %418 = vmatmul.bf16.gmra.mxu0 %v404
      %v419 = vpop.f32.mrf.mxu0
      %v420 = vadd.f32 0.0, %v419
      %v421 = vpop.f32.mrf.mxu0
      %422 = vdwg.mxu0
      %v424 = vsel %vm354, %v400, 0
      %v427 = vsel %vm406, %v262, 0
      %429 = vmatpush.bf16.msra.mxu0 0
      %430 = vmatpush.bf16.msra.mxu0 0
      %431 = vmatpush.bf16.msra.mxu0 0
      %432 = vmatpush.bf16.msra.mxu0 0
      %433 = vmatpush.bf16.msra.mxu0 0
      %434 = vmatpush.bf16.msra.mxu0 0
      %435 = vmatpush.bf16.msra.mxu0 0
      %436 = vmatpush.bf16.msra.mxu0 %v427
      %437 = vmatmul.bf16.gmra.mxu0 %v424
      %v438 = vpop.f32.mrf.mxu0
      %v439 = vadd.f32 0.0, %v438
      %v440 = vpop.f32.mrf.mxu0
      %441 = vdwg.mxu0
      %v443 = vsel %vm354, %v401, 0
      %v446 = vsel %vm406, %v263, 0
      %448 = vmatpush.bf16.msra.mxu0 0
      %449 = vmatpush.bf16.msra.mxu0 0
      %450 = vmatpush.bf16.msra.mxu0 0
      %451 = vmatpush.bf16.msra.mxu0 0
      %452 = vmatpush.bf16.msra.mxu0 0
      %453 = vmatpush.bf16.msra.mxu0 0
      %454 = vmatpush.bf16.msra.mxu0 0
      %455 = vmatpush.bf16.msra.mxu0 %v446
      %456 = vmatmul.bf16.gmra.mxu0 %v443
      %v457 = vpop.f32.mrf.mxu0
      %v458 = vadd.f32 0.0, %v457
      %v459 = vpop.f32.mrf.mxu0
      %460 = vdwg.mxu0
      %v462 = vsel %vm354, %v402, 0
      %v465 = vsel %vm406, %v264, 0
      %467 = vmatpush.bf16.msra.mxu0 0
      %468 = vmatpush.bf16.msra.mxu0 0
      %469 = vmatpush.bf16.msra.mxu0 0
      %470 = vmatpush.bf16.msra.mxu0 0
      %471 = vmatpush.bf16.msra.mxu0 0
      %472 = vmatpush.bf16.msra.mxu0 0
      %473 = vmatpush.bf16.msra.mxu0 0
      %474 = vmatpush.bf16.msra.mxu0 %v465
      %475 = vmatmul.bf16.gmra.mxu0 %v462
      %v476 = vpop.f32.mrf.mxu0
      %v477 = vadd.f32 0.0, %v476
      %v478 = vpop.f32.mrf.mxu0
      %479 = vdwg.mxu0
      %v480 = vpack.c.bf16 %v420, %v420
      %v481 = vpack.c.bf16 %v439, %v439
      %v482 = vpack.c.bf16 %v458, %v458
      %v483 = vpack.c.bf16 %v477, %v477
      %vm484 = vcmask 125952
      %485 = vst.msk [vmem:[%s251] sm:$0xf] %vm484, %v480
      %486 = vst.msk [vmem:[%s251 + $0x4] sm:$0xf] %vm484, %v481
      %487 = vst.msk [vmem:[%s251 + $0x8] sm:$0xf] %vm484, %v482
      %488 = vst.msk [vmem:[%s251 + $0xc] sm:$0xf] %vm484, %v483
      %p489 = scmp.lt.s32.totalorder %s15, 1
      %s490 = scalar_select %p489, %s15, 1
      %s491 = smul.addr %s490, 4
      %s492 = smul.addr %s491, 4
      %s493 = scalar_lea.vmem %s4, %s492
      // Predicated region
      $region37: #{_lambda_.51} parent=35 // pred_check
        %p494 = pneg %p137
      $region38: #{_lambda_.51} parent=35 // pred_check_branch
        %496 = sbr.rel (%p494) target = $region40
      $region39: #{_lambda_.51} parent=35 // pred_region
        _
      $region40: #{_lambda_.51} parent=35 // pred_fallthru
        _
    $region36: #{_lambda_.51} parent=5 // pred_fallthru
      _
    %p497 = scmp.le.s32.totalorder 2, %s10
    // Predicated region
    $region41: #{_lambda_.51} parent=5 // pred_check
      %p498 = pneg %p497
    $region42: #{_lambda_.51} parent=5 // pred_check_branch
      %500 = sbr.rel (%p498) target = $region44
    $region43: #{_lambda_.51} parent=5 // pred_region
      %s501 = ssub.s32 %s10, 2
      // Predicated region
      $region45: #{_lambda_.51} parent=43 // pred_check
        %p502 = pneg %p143
      $region46: #{_lambda_.51} parent=43 // pred_check_branch
        %504 = sbr.rel (%p502) target = $region48
      $region47: #{_lambda_.51} parent=43 // pred_region
        %p505 = scmp.lt.s32.totalorder %s16, 1
        %s506 = scalar_select %p505, %s16, 1
        %s507 = smul.addr %s506, 4
        %s508 = smul.addr %s507, 4
        %s509 = scalar_lea.vmem %s4, %s508
      $region48: #{_lambda_.51} parent=43 // pred_fallthru
        _
    $region44: #{_lambda_.51} parent=5 // pred_fallthru
      _
  $region6: #{_lambda_.51} parent=0 // loop_footer
    %s14 = sadd.s32 1, %s10
  $region7: #{_lambda_.51} parent=0 // loop_footer_branch
    %9 = sbr.rel target = $region3
  $region8: #{_lambda_.51} parent=0 // loop_exit
    _

// kernel: _lambda_.53
$region0: #{_lambda_.53}
  #allocation0 [shape = 'u32[]', space=smem, size = 0x4, offset = 0x4, fixed_abs, tag = 'smem constant byte address 0x4 - core index']
  #allocation1 [shape = 'u32[72,128]{1,0:T(1,128)}', space=vmem, size = 0x9000, scoped, tag = 'internal scratch']
  #allocation2 [shape = 'f32[16,128]{1,0:T(8,128)}', space=vmem, size = 0x2000, scoped, tag = 'scratch operand']
  %s0 = inlined_call_operand.vmem [shape: bf16[16,64], index: 0, kind: input, shape index: {}]
  %s1 = inlined_call_operand.vmem [shape: bf16[64,128], index: 1, kind: input, shape index: {}]
  %s2 = inlined_call_operand.vmem [shape: f32[1,128], index: 2, kind: input, shape index: {}]
  %s3 = inlined_call_operand.vmem [shape: bf16[16,128], index: 3, kind: output, shape index: {}]
  %s4 = sld [smem:[#allocation0]]
  $region30: #{_lambda_.53} parent=0
    _
  %s6 = ssub.s32 1, %s4
  %s7 = scalar_select 0, %s6, %s4
  // Predicated region
  $region2: #{_lambda_.53} parent=0 // pred_check
    _
  $region3: #{_lambda_.53} parent=0 // pred_check_branch
    %9 = sbr.rel (0) target = $region5
  $region4: #{_lambda_.53} parent=0 // pred_region
    _
  $region5: #{_lambda_.53} parent=0 // pred_fallthru
    _
  // Predicated region
  $region6: #{_lambda_.53} parent=0 // pred_check
    _
  $region7: #{_lambda_.53} parent=0 // pred_check_branch
    %11 = sbr.rel (0) target = $region9
  $region8: #{_lambda_.53} parent=0 // pred_region
    _
  $region9: #{_lambda_.53} parent=0 // pred_fallthru
    _
  // Predicated region
  $region10: #{_lambda_.53} parent=0 // pred_check
    _
  $region11: #{_lambda_.53} parent=0 // pred_check_branch
    %13 = sbr.rel (0) target = $region13
  $region12: #{_lambda_.53} parent=0 // pred_region
    _
  $region13: #{_lambda_.53} parent=0 // pred_fallthru
    _
  %p15 = scmp.eq.s32.totalorder 0, 0
  // Predicated region
  $region14: #{_lambda_.53} parent=0 // pred_check
    %p16 = pneg %p15
  $region15: #{_lambda_.53} parent=0 // pred_check_branch
    %18 = sbr.rel (%p16) target = $region17
  $region16: #{_lambda_.53} parent=0 // pred_region
    %19 = vst [vmem:[#allocation2] sm:$0xff] 0.0
    %20 = vst [vmem:[#allocation2 + $0x8] sm:$0xff] 0.0
  $region17: #{_lambda_.53} parent=0 // pred_fallthru
    _
  %v21 = vld [vmem:[#allocation2] sm:$0xff]
  %v22 = vld [vmem:[#allocation2 + $0x8] sm:$0xff]
  %v23 = vld [vmem:[%s0] sm:$0xf]
  %v24 = vld [vmem:[%s0 + $0x4] sm:$0xf]
  %v25 = vld [vmem:[%s1] sm:$0xf]
  %v26 = vld [vmem:[%s1 + $0x4] sm:$0xf]
  %v27 = vld [vmem:[%s1 + $0x8] sm:$0xf]
  %v28 = vld [vmem:[%s1 + $0xc] sm:$0xf]
  %v29 = vld [vmem:[%s1 + $0x10] sm:$0xf]
  %v30 = vld [vmem:[%s1 + $0x14] sm:$0xf]
  %v31 = vld [vmem:[%s1 + $0x18] sm:$0xf]
  %v32 = vld [vmem:[%s1 + $0x1c] sm:$0xf]
  %v35 = vunpack.c.l.b16 %v23
  %v36 = vunpack.c.l.b16 %v24
  %v37 = vpack.c.b16 %v36, %v35
  %v46 = vunpack.c.l.b16 %v25
  %v47 = vunpack.c.l.b16 %v26
  %v48 = vunpack.c.l.b16 %v27
  %v49 = vunpack.c.l.b16 %v28
  %v50 = vunpack.c.l.b16 %v29
  %v51 = vunpack.c.l.b16 %v30
  %v52 = vunpack.c.l.b16 %v31
  %v53 = vunpack.c.l.b16 %v32
  %v54 = vpack.c.b16 %v47, %v46
  %v55 = vpack.c.b16 %v49, %v48
  %v56 = vpack.c.b16 %v51, %v50
  %v57 = vpack.c.b16 %v53, %v52
  %vm62 = vcmask 523264
  %v64 = vsel %vm62, %v37, 0
  %66 = vmatpush.bf16.msra.mxu0 0
  %67 = vmatpush.bf16.msra.mxu0 0
  %68 = vmatpush.bf16.msra.mxu0 0
  %69 = vmatpush.bf16.msra.mxu0 0
  %70 = vmatpush.bf16.msra.mxu0 %v57
  %71 = vmatpush.bf16.msra.mxu0 %v56
  %72 = vmatpush.bf16.msra.mxu0 %v55
  %73 = vmatpush.bf16.msra.mxu0 %v54
  %74 = vmatmul.bf16.gmra.mxu0 %v64
  %v75 = vpop.f32.mrf.mxu0
  %v76 = vadd.f32 0.0, %v75
  %v77 = vpop.f32.mrf.mxu0
  %v78 = vadd.f32 0.0, %v77
  %79 = vdwg.mxu0
  %v80 = vadd.f32 %v21, %v76
  %v81 = vadd.f32 %v22, %v78
  %82 = vst [vmem:[#allocation2] sm:$0xff] %v80
  %83 = vst [vmem:[#allocation2 + $0x8] sm:$0xff] %v81
  // Predicated region
  $region18: #{_lambda_.53} parent=0 // pred_check
    %p84 = pneg %p15
  $region19: #{_lambda_.53} parent=0 // pred_check_branch
    %86 = sbr.rel (%p84) target = $region21
  $region20: #{_lambda_.53} parent=0 // pred_region
    %v87 = vld [vmem:[#allocation2] sm:$0xff]
    %v88 = vld [vmem:[#allocation2 + $0x8] sm:$0xff]
    %v89 = vld [vmem:[%s2] sm:$0x1]
    %v91 = vperm.slane %v89, 0
    %v93 = vadd.f32 %v87, %v91
    %v94 = vadd.f32 %v88, %v91
    %v95 = vmax.f32 %v93, 0.0
    %v96 = vmax.f32 %v94, 0.0
    %v97 = vpack.c.bf16 %v95, %v95
    %v98 = vpack.c.bf16 %v96, %v96
    %99 = vst [vmem:[%s3] sm:$0xf] %v97
    %100 = vst [vmem:[%s3 + $0x4] sm:$0xf] %v98
  $region21: #{_lambda_.53} parent=0 // pred_fallthru
    _
  // Predicated region
  $region22: #{_lambda_.53} parent=0 // pred_check
    _
  $region23: #{_lambda_.53} parent=0 // pred_check_branch
    %102 = sbr.rel (0) target = $region25
  $region24: #{_lambda_.53} parent=0 // pred_region
    _
  $region25: #{_lambda_.53} parent=0 // pred_fallthru
    _
  // Predicated region
  $region26: #{_lambda_.53} parent=0 // pred_check
    _
  $region27: #{_lambda_.53} parent=0 // pred_check_branch
    %104 = sbr.rel (0) target = $region29
  $region28: #{_lambda_.53} parent=0 // pred_region
    _
  $region29: #{_lambda_.53} parent=0 // pred_fallthru
    _

// kernel: _lambda_.54
$region0: #{_lambda_.54}
  #allocation0 [shape = 'u32[]', space=smem, size = 0x4, offset = 0x4, fixed_abs, tag = 'smem constant byte address 0x4 - core index']
  #allocation1 [shape = 'u32[72,128]{1,0:T(1,128)}', space=vmem, size = 0x9000, scoped, tag = 'internal scratch']
  #allocation2 [shape = 'f32[16,64]{1,0:T(8,128)}', space=vmem, size = 0x2000, scoped, tag = 'scratch operand']
  %s0 = inlined_call_operand.vmem [shape: bf16[16,128], index: 0, kind: input, shape index: {}]
  %s1 = inlined_call_operand.vmem [shape: bf16[128,64], index: 1, kind: input, shape index: {}]
  %s2 = inlined_call_operand.vmem [shape: f32[1,64], index: 2, kind: input, shape index: {}]
  %s3 = inlined_call_operand.vmem [shape: bf16[16,64], index: 3, kind: input, shape index: {}]
  %s4 = inlined_call_operand.vmem [shape: f32[1,64], index: 4, kind: input, shape index: {}]
  %s5 = inlined_call_operand.vmem [shape: f32[1,64], index: 5, kind: input, shape index: {}]
  %s6 = inlined_call_operand.vmem [shape: bf16[16,64], index: 6, kind: output, shape index: {}]
  %s7 = sld [smem:[#allocation0]]
  $region42: #{_lambda_.54} parent=0
    _
  %s9 = ssub.s32 1, %s7
  %s10 = scalar_select 0, %s9, %s7
  // Predicated region
  $region2: #{_lambda_.54} parent=0 // pred_check
    _
  $region3: #{_lambda_.54} parent=0 // pred_check_branch
    %12 = sbr.rel (0) target = $region5
  $region4: #{_lambda_.54} parent=0 // pred_region
    _
  $region5: #{_lambda_.54} parent=0 // pred_fallthru
    _
  // Predicated region
  $region6: #{_lambda_.54} parent=0 // pred_check
    _
  $region7: #{_lambda_.54} parent=0 // pred_check_branch
    %14 = sbr.rel (0) target = $region9
  $region8: #{_lambda_.54} parent=0 // pred_region
    _
  $region9: #{_lambda_.54} parent=0 // pred_fallthru
    _
  // Predicated region
  $region10: #{_lambda_.54} parent=0 // pred_check
    _
  $region11: #{_lambda_.54} parent=0 // pred_check_branch
    %16 = sbr.rel (0) target = $region13
  $region12: #{_lambda_.54} parent=0 // pred_region
    _
  $region13: #{_lambda_.54} parent=0 // pred_fallthru
    _
  // Predicated region
  $region14: #{_lambda_.54} parent=0 // pred_check
    _
  $region15: #{_lambda_.54} parent=0 // pred_check_branch
    %18 = sbr.rel (0) target = $region17
  $region16: #{_lambda_.54} parent=0 // pred_region
    _
  $region17: #{_lambda_.54} parent=0 // pred_fallthru
    _
  // Predicated region
  $region18: #{_lambda_.54} parent=0 // pred_check
    _
  $region19: #{_lambda_.54} parent=0 // pred_check_branch
    %20 = sbr.rel (0) target = $region21
  $region20: #{_lambda_.54} parent=0 // pred_region
    _
  $region21: #{_lambda_.54} parent=0 // pred_fallthru
    _
  // Predicated region
  $region22: #{_lambda_.54} parent=0 // pred_check
    _
  $region23: #{_lambda_.54} parent=0 // pred_check_branch
    %22 = sbr.rel (0) target = $region25
  $region24: #{_lambda_.54} parent=0 // pred_region
    _
  $region25: #{_lambda_.54} parent=0 // pred_fallthru
    _
  %p23 = scmp.eq.s32.totalorder 0, 0
  // Predicated region
  $region26: #{_lambda_.54} parent=0 // pred_check
    %p24 = pneg %p23
  $region27: #{_lambda_.54} parent=0 // pred_check_branch
    %26 = sbr.rel (%p24) target = $region29
  $region28: #{_lambda_.54} parent=0 // pred_region
    %vm27 = vcmask 523264
    %28 = vst.msk [vmem:[#allocation2] sm:$0xff] %vm27, 0.0
    %29 = vst.msk [vmem:[#allocation2 + $0x8] sm:$0xff] %vm27, 0.0
  $region29: #{_lambda_.54} parent=0 // pred_fallthru
    _
  %v30 = vld [vmem:[#allocation2] sm:$0xff]
  %v31 = vld [vmem:[#allocation2 + $0x8] sm:$0xff]
  %v32 = vld [vmem:[%s0] sm:$0xf]
  %v33 = vld [vmem:[%s0 + $0x4] sm:$0xf]
  %v34 = vld [vmem:[%s1] sm:$0xf]
  %v35 = vld [vmem:[%s1 + $0x4] sm:$0xf]
  %v36 = vld [vmem:[%s1 + $0x8] sm:$0xf]
  %v37 = vld [vmem:[%s1 + $0xc] sm:$0xf]
  %v38 = vld [vmem:[%s1 + $0x10] sm:$0xf]
  %v39 = vld [vmem:[%s1 + $0x14] sm:$0xf]
  %v40 = vld [vmem:[%s1 + $0x18] sm:$0xf]
  %v41 = vld [vmem:[%s1 + $0x1c] sm:$0xf]
  %v42 = vld [vmem:[%s1 + $0x20] sm:$0xf]
  %v43 = vld [vmem:[%s1 + $0x24] sm:$0xf]
  %v44 = vld [vmem:[%s1 + $0x28] sm:$0xf]
  %v45 = vld [vmem:[%s1 + $0x2c] sm:$0xf]
  %v46 = vld [vmem:[%s1 + $0x30] sm:$0xf]
  %v47 = vld [vmem:[%s1 + $0x34] sm:$0xf]
  %v48 = vld [vmem:[%s1 + $0x38] sm:$0xf]
  %v49 = vld [vmem:[%s1 + $0x3c] sm:$0xf]
  %v52 = vunpack.c.l.b16 %v32
  %v53 = vunpack.c.l.b16 %v33
  %v54 = vpack.c.b16 %v53, %v52
  %v72 = vunpack.c.l.b16 %v34
  %v73 = vunpack.c.l.b16 %v35
  %v74 = vunpack.c.l.b16 %v36
  %v75 = vunpack.c.l.b16 %v37
  %v76 = vunpack.c.l.b16 %v38
  %v77 = vunpack.c.l.b16 %v39
  %v78 = vunpack.c.l.b16 %v40
  %v79 = vunpack.c.l.b16 %v41
  %v80 = vunpack.c.l.b16 %v42
  %v81 = vunpack.c.l.b16 %v43
  %v82 = vunpack.c.l.b16 %v44
  %v83 = vunpack.c.l.b16 %v45
  %v84 = vunpack.c.l.b16 %v46
  %v85 = vunpack.c.l.b16 %v47
  %v86 = vunpack.c.l.b16 %v48
  %v87 = vunpack.c.l.b16 %v49
  %v88 = vpack.c.b16 %v73, %v72
  %v89 = vpack.c.b16 %v75, %v74
  %v90 = vpack.c.b16 %v77, %v76
  %v91 = vpack.c.b16 %v79, %v78
  %v92 = vpack.c.b16 %v81, %v80
  %v93 = vpack.c.b16 %v83, %v82
  %v94 = vpack.c.b16 %v85, %v84
  %v95 = vpack.c.b16 %v87, %v86
  %104 = vmatpush.bf16.msra.mxu0 %v95
  %105 = vmatpush.bf16.msra.mxu0 %v94
  %106 = vmatpush.bf16.msra.mxu0 %v93
  %107 = vmatpush.bf16.msra.mxu0 %v92
  %108 = vmatpush.bf16.msra.mxu0 %v91
  %109 = vmatpush.bf16.msra.mxu0 %v90
  %110 = vmatpush.bf16.msra.mxu0 %v89
  %111 = vmatpush.bf16.msra.mxu0 %v88
  %112 = vmatmul.bf16.gmra.mxu0 %v54
  %v113 = vpop.f32.mrf.mxu0
  %v114 = vadd.f32 0.0, %v113
  %v115 = vpop.f32.mrf.mxu0
  %v116 = vadd.f32 0.0, %v115
  %117 = vdwg.mxu0
  %v118 = vadd.f32 %v30, %v114
  %v119 = vadd.f32 %v31, %v116
  %vm120 = vcmask 523264
  %121 = vst.msk [vmem:[#allocation2] sm:$0xff] %vm120, %v118
  %122 = vst.msk [vmem:[#allocation2 + $0x8] sm:$0xff] %vm120, %v119
  // Predicated region
  $region30: #{_lambda_.54} parent=0 // pred_check
    %p123 = pneg %p23
  $region31: #{_lambda_.54} parent=0 // pred_check_branch
    %125 = sbr.rel (%p123) target = $region33
  $region32: #{_lambda_.54} parent=0 // pred_region
    %v126 = vld [vmem:[#allocation2] sm:$0xff]
    %v127 = vld [vmem:[#allocation2 + $0x8] sm:$0xff]
    %v128 = vld [vmem:[%s2] sm:$0x1]
    %v130 = vperm.slane %v128, 0
    %v132 = vadd.f32 %v126, %v130
    %v133 = vadd.f32 %v127, %v130
    %v134 = vld [vmem:[%s3] sm:$0xf]
    %v135 = vld [vmem:[%s3 + $0x4] sm:$0xf]
    %v136 = vunpack.c.l.bf16 %v134
    %v137 = vunpack.c.l.bf16 %v135
    %v138 = vadd.f32 %v132, %v136
    %v139 = vadd.f32 %v133, %v137
    %v140 = vld [vmem:[%s4] sm:$0x1]
    %v141 = vld [vmem:[%s5] sm:$0x1]
    %v142 = vsel %vm120, %v138, 0.0
    %143 = vadd.xlane.f32.xlu0 %v142
    %v144 = vpop.xlane.xlu0 %143
    %v145 = vsel %vm120, %v139, 0.0
    %146 = vadd.xlane.f32.xlu0 %v145
    %v147 = vpop.xlane.xlu0 %146
    %v148 = vrcp.pop 64.0
    %v149 = vmul.f32 64.0, %v148
    %v150 = vsub.f32 1.0, %v149
    %v151 = vmul.f32 %v148, %v150
    %v152 = vadd.f32 %v148, %v151
    %vm153 = vweird.f32 %v148
    %v154 = vsel %vm153, %v148, %v152
    %v155 = vmul.f32 %v144, %v154
    %v156 = vmul.f32 %v147, %v154
    %v157 = vsub.f32 %v138, %v155
    %v158 = vsub.f32 %v139, %v156
    %v159 = vmul.f32 %v157, %v157
    %v160 = vmul.f32 %v158, %v158
    %v161 = vsel %vm120, %v159, 0.0
    %162 = vadd.xlane.f32.xlu0 %v161
    %v163 = vpop.xlane.xlu0 %162
    %v164 = vsel %vm120, %v160, 0.0
    %165 = vadd.xlane.f32.xlu0 %v164
    %v166 = vpop.xlane.xlu0 %165
    %v167 = vmul.f32 %v163, %v154
    %v168 = vmul.f32 %v166, %v154
    %v169 = vadd.f32 %v167, 1e-06
    %v170 = vadd.f32 %v168, 1e-06
    %v171 = vrsqrt.pop %v169
    %v172 = vmul.f32 %v171, %v169
    %v173 = vmul.f32 %v172, %v171
    %v174 = vmul.f32 0.5, %v173
    %v175 = vsub.f32 1.5, %v174
    %v176 = vmul.f32 %v171, %v175
    %vm177 = vweird.f32 %v169
    %vm178 = vweird.f32 %v171
    %vm179 = vmor %vm177, %vm178
    %v180 = vsel %vm179, %v171, %v176
    %v181 = vrsqrt.pop %v170
    %v182 = vmul.f32 %v181, %v170
    %v183 = vmul.f32 %v182, %v181
    %v184 = vmul.f32 0.5, %v183
    %v185 = vsub.f32 1.5, %v184
    %v186 = vmul.f32 %v181, %v185
    %vm187 = vweird.f32 %v170
    %vm188 = vweird.f32 %v181
    %vm189 = vmor %vm187, %vm188
    %v190 = vsel %vm189, %v181, %v186
    %v191 = vmul.f32 %v157, %v180
    %v192 = vmul.f32 %v158, %v190
    %v194 = vperm.slane %v140, 0
    %v196 = vmul.f32 %v191, %v194
    %v197 = vmul.f32 %v192, %v194
    %v199 = vperm.slane %v141, 0
    %v201 = vadd.f32 %v196, %v199
    %v202 = vadd.f32 %v197, %v199
    %v203 = vpack.c.bf16 %v201, %v201
    %v204 = vpack.c.bf16 %v202, %v202
    %vm205 = vcmask 519168
    %206 = vst.msk [vmem:[%s6] sm:$0xf] %vm205, %v203
    %207 = vst.msk [vmem:[%s6 + $0x4] sm:$0xf] %vm205, %v204
  $region33: #{_lambda_.54} parent=0 // pred_fallthru
    _
  // Predicated region
  $region34: #{_lambda_.54} parent=0 // pred_check
    _
  $region35: #{_lambda_.54} parent=0 // pred_check_branch
    %209 = sbr.rel (0) target = $region37
  $region36: #{_lambda_.54} parent=0 // pred_region
    _
  $region37: #{_lambda_.54} parent=0 // pred_fallthru
    _
  // Predicated region
  $region38: #{_lambda_.54} parent=0 // pred_check
    _
  $region39: #{_lambda_.54} parent=0 // pred_check_branch
    %211 = sbr.rel (0) target = $region41
  $region40: #{_lambda_.54} parent=0 // pred_region
    _
  $region41: #{_lambda_.54} parent=0 // pred_fallthru
    _

// kernel: _lambda_.60
$region0: #{_lambda_.60}
  #allocation0 [shape = 'u32[]', space=smem, size = 0x4, offset = 0x4, fixed_abs, tag = 'smem constant byte address 0x4 - core index']
  #allocation1 [shape = 'u32[72,128]{1,0:T(1,128)}', space=vmem, size = 0x9000, scoped, tag = 'internal scratch']
  %s0 = inlined_call_operand.vmem [shape: bf16[16,64], index: 0, kind: input, shape index: {}]
  %s1 = inlined_call_operand.vmem [shape: f32[1,64], index: 1, kind: input, shape index: {}]
  %s2 = inlined_call_operand.vmem [shape: f32[1,64], index: 2, kind: input, shape index: {}]
  %s3 = inlined_call_operand.vmem [shape: f32[16,64], index: 3, kind: output, shape index: {}]
  %s4 = sld [smem:[#allocation0]]
  $region22: #{_lambda_.60} parent=0
    _
  %s6 = ssub.s32 1, %s4
  %s7 = scalar_select 0, %s6, %s4
  // Predicated region
  $region2: #{_lambda_.60} parent=0 // pred_check
    _
  $region3: #{_lambda_.60} parent=0 // pred_check_branch
    %9 = sbr.rel (0) target = $region5
  $region4: #{_lambda_.60} parent=0 // pred_region
    _
  $region5: #{_lambda_.60} parent=0 // pred_fallthru
    _
  // Predicated region
  $region6: #{_lambda_.60} parent=0 // pred_check
    _
  $region7: #{_lambda_.60} parent=0 // pred_check_branch
    %11 = sbr.rel (0) target = $region9
  $region8: #{_lambda_.60} parent=0 // pred_region
    _
  $region9: #{_lambda_.60} parent=0 // pred_fallthru
    _
  // Predicated region
  $region10: #{_lambda_.60} parent=0 // pred_check
    _
  $region11: #{_lambda_.60} parent=0 // pred_check_branch
    %13 = sbr.rel (0) target = $region13
  $region12: #{_lambda_.60} parent=0 // pred_region
    _
  $region13: #{_lambda_.60} parent=0 // pred_fallthru
    _
  %v14 = vld [vmem:[%s0] sm:$0xf]
  %v15 = vld [vmem:[%s0 + $0x4] sm:$0xf]
  %v16 = vunpack.c.l.bf16 %v14
  %v17 = vunpack.c.l.bf16 %v15
  %v18 = vld [vmem:[%s1] sm:$0x1]
  %v19 = vld [vmem:[%s2] sm:$0x1]
  %vm20 = vcmask 523264
  %v21 = vsel %vm20, %v16, 0.0
  %22 = vadd.xlane.f32.xlu0 %v21
  %v23 = vpop.xlane.xlu0 %22
  %v24 = vsel %vm20, %v17, 0.0
  %25 = vadd.xlane.f32.xlu0 %v24
  %v26 = vpop.xlane.xlu0 %25
  %v27 = vrcp.pop 64.0
  %v28 = vmul.f32 64.0, %v27
  %v29 = vsub.f32 1.0, %v28
  %v30 = vmul.f32 %v27, %v29
  %v31 = vadd.f32 %v27, %v30
  %vm32 = vweird.f32 %v27
  %v33 = vsel %vm32, %v27, %v31
  %v34 = vmul.f32 %v23, %v33
  %v35 = vmul.f32 %v26, %v33
  %v36 = vsub.f32 %v16, %v34
  %v37 = vsub.f32 %v17, %v35
  %v38 = vmul.f32 %v36, %v36
  %v39 = vmul.f32 %v37, %v37
  %v40 = vsel %vm20, %v38, 0.0
  %41 = vadd.xlane.f32.xlu0 %v40
  %v42 = vpop.xlane.xlu0 %41
  %v43 = vsel %vm20, %v39, 0.0
  %44 = vadd.xlane.f32.xlu0 %v43
  %v45 = vpop.xlane.xlu0 %44
  %v46 = vmul.f32 %v42, %v33
  %v47 = vmul.f32 %v45, %v33
  %v48 = vadd.f32 %v46, 1e-06
  %v49 = vadd.f32 %v47, 1e-06
  %v50 = vrsqrt.pop %v48
  %v51 = vmul.f32 %v50, %v48
  %v52 = vmul.f32 %v51, %v50
  %v53 = vmul.f32 0.5, %v52
  %v54 = vsub.f32 1.5, %v53
  %v55 = vmul.f32 %v50, %v54
  %vm56 = vweird.f32 %v48
  %vm57 = vweird.f32 %v50
  %vm58 = vmor %vm56, %vm57
  %v59 = vsel %vm58, %v50, %v55
  %v60 = vrsqrt.pop %v49
  %v61 = vmul.f32 %v60, %v49
  %v62 = vmul.f32 %v61, %v60
  %v63 = vmul.f32 0.5, %v62
  %v64 = vsub.f32 1.5, %v63
  %v65 = vmul.f32 %v60, %v64
  %vm66 = vweird.f32 %v49
  %vm67 = vweird.f32 %v60
  %vm68 = vmor %vm66, %vm67
  %v69 = vsel %vm68, %v60, %v65
  %v70 = vmul.f32 %v36, %v59
  %v71 = vmul.f32 %v37, %v69
  %v73 = vperm.slane %v18, 0
  %v75 = vmul.f32 %v70, %v73
  %v76 = vmul.f32 %v71, %v73
  %v78 = vperm.slane %v19, 0
  %v80 = vadd.f32 %v75, %v78
  %v81 = vadd.f32 %v76, %v78
  %82 = vst.msk [vmem:[%s3] sm:$0xff] %vm20, %v80
  %83 = vst.msk [vmem:[%s3 + $0x8] sm:$0xff] %vm20, %v81
  // Predicated region
  $region14: #{_lambda_.60} parent=0 // pred_check
    _
  $region15: #{_lambda_.60} parent=0 // pred_check_branch
    %85 = sbr.rel (0) target = $region17
  $region16: #{_lambda_.60} parent=0 // pred_region
    _
  $region17: #{_lambda_.60} parent=0 // pred_fallthru
    _
  // Predicated region
  $region18: #{_lambda_.60} parent=0 // pred_check
    _
  $region19: #{_lambda_.60} parent=0 // pred_check_branch
    %87 = sbr.rel (0) target = $region21
  $region20: #{_lambda_.60} parent=0 // pred_region
    _
  $region21: #{_lambda_.60} parent=0 // pred_fallthru
    _

// kernel: _lambda_.67
$region0: #{_lambda_.67}
  #allocation0 [shape = 'u32[]', space=smem, size = 0x4, offset = 0x4, fixed_abs, tag = 'smem constant byte address 0x4 - core index']
  #allocation1 [shape = 'u32[72,128]{1,0:T(1,128)}', space=vmem, size = 0x9000, scoped, tag = 'internal scratch']
  #allocation2 [shape = 'f32[16,128]{1,0:T(8,128)}', space=vmem, size = 0x2000, scoped, tag = 'scratch operand']
  %s0 = inlined_call_operand.vmem [shape: bf16[16,64], index: 0, kind: input, shape index: {}]
  %s1 = inlined_call_operand.vmem [shape: bf16[64,128], index: 1, kind: input, shape index: {}]
  %s2 = inlined_call_operand.vmem [shape: f32[1,128], index: 2, kind: input, shape index: {}]
  %s3 = inlined_call_operand.vmem [shape: bf16[16,128], index: 3, kind: output, shape index: {}]
  %s4 = sld [smem:[#allocation0]]
  $region30: #{_lambda_.67} parent=0
    _
  %s6 = ssub.s32 1, %s4
  %s7 = scalar_select 0, %s6, %s4
  // Predicated region
  $region2: #{_lambda_.67} parent=0 // pred_check
    _
  $region3: #{_lambda_.67} parent=0 // pred_check_branch
    %9 = sbr.rel (0) target = $region5
  $region4: #{_lambda_.67} parent=0 // pred_region
    _
  $region5: #{_lambda_.67} parent=0 // pred_fallthru
    _
  // Predicated region
  $region6: #{_lambda_.67} parent=0 // pred_check
    _
  $region7: #{_lambda_.67} parent=0 // pred_check_branch
    %11 = sbr.rel (0) target = $region9
  $region8: #{_lambda_.67} parent=0 // pred_region
    _
  $region9: #{_lambda_.67} parent=0 // pred_fallthru
    _
  // Predicated region
  $region10: #{_lambda_.67} parent=0 // pred_check
    _
  $region11: #{_lambda_.67} parent=0 // pred_check_branch
    %13 = sbr.rel (0) target = $region13
  $region12: #{_lambda_.67} parent=0 // pred_region
    _
  $region13: #{_lambda_.67} parent=0 // pred_fallthru
    _
  %p15 = scmp.eq.s32.totalorder 0, 0
  // Predicated region
  $region14: #{_lambda_.67} parent=0 // pred_check
    %p16 = pneg %p15
  $region15: #{_lambda_.67} parent=0 // pred_check_branch
    %18 = sbr.rel (%p16) target = $region17
  $region16: #{_lambda_.67} parent=0 // pred_region
    %19 = vst [vmem:[#allocation2] sm:$0xff] 0.0
    %20 = vst [vmem:[#allocation2 + $0x8] sm:$0xff] 0.0
  $region17: #{_lambda_.67} parent=0 // pred_fallthru
    _
  %v21 = vld [vmem:[#allocation2] sm:$0xff]
  %v22 = vld [vmem:[#allocation2 + $0x8] sm:$0xff]
  %v23 = vld [vmem:[%s0] sm:$0xf]
  %v24 = vld [vmem:[%s0 + $0x4] sm:$0xf]
  %v25 = vld [vmem:[%s1] sm:$0xf]
  %v26 = vld [vmem:[%s1 + $0x4] sm:$0xf]
  %v27 = vld [vmem:[%s1 + $0x8] sm:$0xf]
  %v28 = vld [vmem:[%s1 + $0xc] sm:$0xf]
  %v29 = vld [vmem:[%s1 + $0x10] sm:$0xf]
  %v30 = vld [vmem:[%s1 + $0x14] sm:$0xf]
  %v31 = vld [vmem:[%s1 + $0x18] sm:$0xf]
  %v32 = vld [vmem:[%s1 + $0x1c] sm:$0xf]
  %v35 = vunpack.c.l.b16 %v23
  %v36 = vunpack.c.l.b16 %v24
  %v37 = vpack.c.b16 %v36, %v35
  %v46 = vunpack.c.l.b16 %v25
  %v47 = vunpack.c.l.b16 %v26
  %v48 = vunpack.c.l.b16 %v27
  %v49 = vunpack.c.l.b16 %v28
  %v50 = vunpack.c.l.b16 %v29
  %v51 = vunpack.c.l.b16 %v30
  %v52 = vunpack.c.l.b16 %v31
  %v53 = vunpack.c.l.b16 %v32
  %v54 = vpack.c.b16 %v47, %v46
  %v55 = vpack.c.b16 %v49, %v48
  %v56 = vpack.c.b16 %v51, %v50
  %v57 = vpack.c.b16 %v53, %v52
  %vm62 = vcmask 523264
  %v64 = vsel %vm62, %v37, 0
  %66 = vmatpush.bf16.msra.mxu0 0
  %67 = vmatpush.bf16.msra.mxu0 0
  %68 = vmatpush.bf16.msra.mxu0 0
  %69 = vmatpush.bf16.msra.mxu0 0
  %70 = vmatpush.bf16.msra.mxu0 %v57
  %71 = vmatpush.bf16.msra.mxu0 %v56
  %72 = vmatpush.bf16.msra.mxu0 %v55
  %73 = vmatpush.bf16.msra.mxu0 %v54
  %74 = vmatmul.bf16.gmra.mxu0 %v64
  %v75 = vpop.f32.mrf.mxu0
  %v76 = vadd.f32 0.0, %v75
  %v77 = vpop.f32.mrf.mxu0
  %v78 = vadd.f32 0.0, %v77
  %79 = vdwg.mxu0
  %v80 = vadd.f32 %v21, %v76
  %v81 = vadd.f32 %v22, %v78
  %82 = vst [vmem:[#allocation2] sm:$0xff] %v80
  %83 = vst [vmem:[#allocation2 + $0x8] sm:$0xff] %v81
  // Predicated region
  $region18: #{_lambda_.67} parent=0 // pred_check
    %p84 = pneg %p15
  $region19: #{_lambda_.67} parent=0 // pred_check_branch
    %86 = sbr.rel (%p84) target = $region21
  $region20: #{_lambda_.67} parent=0 // pred_region
    %v87 = vld [vmem:[#allocation2] sm:$0xff]
    %v88 = vld [vmem:[#allocation2 + $0x8] sm:$0xff]
    %v89 = vld [vmem:[%s2] sm:$0x1]
    %v91 = vperm.slane %v89, 0
    %v93 = vadd.f32 %v87, %v91
    %v94 = vadd.f32 %v88, %v91
    %v95 = vpack.c.bf16 %v93, %v93
    %v96 = vpack.c.bf16 %v94, %v94
    %97 = vst [vmem:[%s3] sm:$0xf] %v95
    %98 = vst [vmem:[%s3 + $0x4] sm:$0xf] %v96
  $region21: #{_lambda_.67} parent=0 // pred_fallthru
    _
  // Predicated region
  $region22: #{_lambda_.67} parent=0 // pred_check
    _
  $region23: #{_lambda_.67} parent=0 // pred_check_branch
    %100 = sbr.rel (0) target = $region25
  $region24: #{_lambda_.67} parent=0 // pred_region
    _
  $region25: #{_lambda_.67} parent=0 // pred_fallthru
    _
  // Predicated region
  $region26: #{_lambda_.67} parent=0 // pred_check
    _
  $region27: #{_lambda_.67} parent=0 // pred_check_branch
    %102 = sbr.rel (0) target = $region29
  $region28: #{_lambda_.67} parent=0 // pred_region
    _
  $region29: #{_lambda_.67} parent=0 // pred_fallthru
    _

// kernel: _lambda_.81
$region0: #{_lambda_.81}
  #allocation0 [shape = 'u32[]', space=smem, size = 0x4, offset = 0x4, fixed_abs, tag = 'smem constant byte address 0x4 - core index']
  #allocation1 [shape = 'u32[72,128]{1,0:T(1,128)}', space=vmem, size = 0x9000, scoped, tag = 'internal scratch']
  %s0 = inlined_call_operand.vmem [shape: bf16[16,64], index: 0, kind: input, shape index: {}]
  %s1 = inlined_call_operand.vmem [shape: f32[1,64], index: 1, kind: input, shape index: {}]
  %s2 = inlined_call_operand.vmem [shape: f32[1,64], index: 2, kind: input, shape index: {}]
  %s3 = inlined_call_operand.hbm [shape: f32[16,64], index: 3, kind: output, shape index: {}]
  %s4 = sld [smem:[#allocation0]]
  $region22: #{_lambda_.81} parent=0
    _
  %s6 = ssub.s32 1, %s4
  %s7 = scalar_select 0, %s6, %s4
  $region1: #{_lambda_.81} parent=0
    #allocation2 [shape = 'u8[8192]{0}', space=vmem, size = 0x2000, scoped, tag = 'output window, operand 0, single buffered']
    #allocation3 [shape = 's32[1]{0}', space=sflag, size = 0x4, scoped, tag = 'scoped memory for _lambda_.81']
    %8 = vsyncpa [#allocation3], 0
    // Predicated region
    $region2: #{_lambda_.81} parent=1 // pred_check
      _
    $region3: #{_lambda_.81} parent=1 // pred_check_branch
      %10 = sbr.rel (0) target = $region5
    $region4: #{_lambda_.81} parent=1 // pred_region
      _
    $region5: #{_lambda_.81} parent=1 // pred_fallthru
      _
    // Predicated region
    $region6: #{_lambda_.81} parent=1 // pred_check
      _
    $region7: #{_lambda_.81} parent=1 // pred_check_branch
      %12 = sbr.rel (0) target = $region9
    $region8: #{_lambda_.81} parent=1 // pred_region
      _
    $region9: #{_lambda_.81} parent=1 // pred_fallthru
      _
    // Predicated region
    $region10: #{_lambda_.81} parent=1 // pred_check
      _
    $region11: #{_lambda_.81} parent=1 // pred_check_branch
      %14 = sbr.rel (0) target = $region13
    $region12: #{_lambda_.81} parent=1 // pred_region
      _
    $region13: #{_lambda_.81} parent=1 // pred_fallthru
      _
    %v15 = vld [vmem:[%s0] sm:$0xf]
    %v16 = vld [vmem:[%s0 + $0x4] sm:$0xf]
    %v17 = vunpack.c.l.bf16 %v15
    %v18 = vunpack.c.l.bf16 %v16
    %v19 = vld [vmem:[%s1] sm:$0x1]
    %v20 = vld [vmem:[%s2] sm:$0x1]
    %vm21 = vcmask 523264
    %v22 = vsel %vm21, %v17, 0.0
    %23 = vadd.xlane.f32.xlu0 %v22
    %v24 = vpop.xlane.xlu0 %23
    %v25 = vsel %vm21, %v18, 0.0
    %26 = vadd.xlane.f32.xlu0 %v25
    %v27 = vpop.xlane.xlu0 %26
    %v28 = vrcp.pop 64.0
    %v29 = vmul.f32 64.0, %v28
    %v30 = vsub.f32 1.0, %v29
    %v31 = vmul.f32 %v28, %v30
    %v32 = vadd.f32 %v28, %v31
    %vm33 = vweird.f32 %v28
    %v34 = vsel %vm33, %v28, %v32
    %v35 = vmul.f32 %v24, %v34
    %v36 = vmul.f32 %v27, %v34
    %v37 = vsub.f32 %v17, %v35
    %v38 = vsub.f32 %v18, %v36
    %v39 = vmul.f32 %v37, %v37
    %v40 = vmul.f32 %v38, %v38
    %v41 = vsel %vm21, %v39, 0.0
    %42 = vadd.xlane.f32.xlu0 %v41
    %v43 = vpop.xlane.xlu0 %42
    %v44 = vsel %vm21, %v40, 0.0
    %45 = vadd.xlane.f32.xlu0 %v44
    %v46 = vpop.xlane.xlu0 %45
    %v47 = vmul.f32 %v43, %v34
    %v48 = vmul.f32 %v46, %v34
    %v49 = vadd.f32 %v47, 1e-06
    %v50 = vadd.f32 %v48, 1e-06
    %v51 = vrsqrt.pop %v49
    %v52 = vmul.f32 %v51, %v49
    %v53 = vmul.f32 %v52, %v51
    %v54 = vmul.f32 0.5, %v53
    %v55 = vsub.f32 1.5, %v54
    %v56 = vmul.f32 %v51, %v55
    %vm57 = vweird.f32 %v49
    %vm58 = vweird.f32 %v51
    %vm59 = vmor %vm57, %vm58
    %v60 = vsel %vm59, %v51, %v56
    %v61 = vrsqrt.pop %v50
    %v62 = vmul.f32 %v61, %v50
    %v63 = vmul.f32 %v62, %v61
    %v64 = vmul.f32 0.5, %v63
    %v65 = vsub.f32 1.5, %v64
    %v66 = vmul.f32 %v61, %v65
    %vm67 = vweird.f32 %v50
    %vm68 = vweird.f32 %v61
    %vm69 = vmor %vm67, %vm68
    %v70 = vsel %vm69, %v61, %v66
    %v71 = vmul.f32 %v37, %v60
    %v72 = vmul.f32 %v38, %v70
    %v74 = vperm.slane %v19, 0
    %v76 = vmul.f32 %v71, %v74
    %v77 = vmul.f32 %v72, %v74
    %v79 = vperm.slane %v20, 0
    %v81 = vadd.f32 %v76, %v79
    %v82 = vadd.f32 %v77, %v79
    %83 = vst.msk [vmem:[#allocation2] sm:$0xff] %vm21, %v81
    %84 = vst.msk [vmem:[#allocation2 + $0x8] sm:$0xff] %vm21, %v82
    // Predicated region
    $region14: #{_lambda_.81} parent=1 // pred_check
      _
    $region15: #{_lambda_.81} parent=1 // pred_check_branch
      %86 = sbr.rel (0) target = $region17
    $region16: #{_lambda_.81} parent=1 // pred_region
      %88 = vsyncadd [#allocation3], 0
      %s89 = sshll.u32 [#allocation2], 4
      %s90 = int_to_ptr.vmem [resolvable:$true] %s89
      %s91 = sshll.u32 %s3, 4
      %s92 = int_to_ptr.hbm [resolvable:$true] %s91
      %97 = dma.vmem_to_hbm [thread:$0]  %s90, 256, %s92, [#allocation3], 128, 128, 8
    $region17: #{_lambda_.81} parent=1 // pred_fallthru
      _
    // Predicated region
    $region18: #{_lambda_.81} parent=1 // pred_check
      _
    $region19: #{_lambda_.81} parent=1 // pred_check_branch
      %99 = sbr.rel (0) target = $region21
    $region20: #{_lambda_.81} parent=1 // pred_region
      %101 = dma.done [#allocation3], 256
    $region21: #{_lambda_.81} parent=1 // pred_fallthru
      _
    %102 = vsyncpa [#allocation3], 1

// kernel: _lambda_.61
$region0: #{_lambda_.61}
  #allocation0 [shape = 'u32[]', space=smem, size = 0x4, offset = 0x4, fixed_abs, tag = 'smem constant byte address 0x4 - core index']
  #allocation1 [shape = 'u32[72,128]{1,0:T(1,128)}', space=vmem, size = 0x9000, scoped, tag = 'internal scratch']
  #allocation2 [shape = 'f32[16,64]{1,0:T(8,128)}', space=vmem, size = 0x2000, scoped, tag = 'scratch operand']
  %s0 = inlined_call_operand.vmem [shape: bf16[16,192], index: 0, kind: input, shape index: {}]
  %s1 = inlined_call_operand.vmem [shape: bf16[192,64], index: 1, kind: input, shape index: {}]
  %s2 = inlined_call_operand.vmem [shape: f32[1,64], index: 2, kind: input, shape index: {}]
  %s3 = inlined_call_operand.vmem [shape: f32[1,64], index: 3, kind: input, shape index: {}]
  %s4 = inlined_call_operand.vmem [shape: f32[1,64], index: 4, kind: input, shape index: {}]
  %s5 = inlined_call_operand.vmem [shape: bf16[16,64], index: 5, kind: output, shape index: {}]
  %s6 = sld [smem:[#allocation0]]
  $region38: #{_lambda_.61} parent=0
    _
  %s8 = ssub.s32 1, %s6
  %s9 = scalar_select 0, %s8, %s6
  // Predicated region
  $region2: #{_lambda_.61} parent=0 // pred_check
    _
  $region3: #{_lambda_.61} parent=0 // pred_check_branch
    %11 = sbr.rel (0) target = $region5
  $region4: #{_lambda_.61} parent=0 // pred_region
    _
  $region5: #{_lambda_.61} parent=0 // pred_fallthru
    _
  // Predicated region
  $region6: #{_lambda_.61} parent=0 // pred_check
    _
  $region7: #{_lambda_.61} parent=0 // pred_check_branch
    %13 = sbr.rel (0) target = $region9
  $region8: #{_lambda_.61} parent=0 // pred_region
    _
  $region9: #{_lambda_.61} parent=0 // pred_fallthru
    _
  // Predicated region
  $region10: #{_lambda_.61} parent=0 // pred_check
    _
  $region11: #{_lambda_.61} parent=0 // pred_check_branch
    %15 = sbr.rel (0) target = $region13
  $region12: #{_lambda_.61} parent=0 // pred_region
    _
  $region13: #{_lambda_.61} parent=0 // pred_fallthru
    _
  // Predicated region
  $region14: #{_lambda_.61} parent=0 // pred_check
    _
  $region15: #{_lambda_.61} parent=0 // pred_check_branch
    %17 = sbr.rel (0) target = $region17
  $region16: #{_lambda_.61} parent=0 // pred_region
    _
  $region17: #{_lambda_.61} parent=0 // pred_fallthru
    _
  // Predicated region
  $region18: #{_lambda_.61} parent=0 // pred_check
    _
  $region19: #{_lambda_.61} parent=0 // pred_check_branch
    %19 = sbr.rel (0) target = $region21
  $region20: #{_lambda_.61} parent=0 // pred_region
    _
  $region21: #{_lambda_.61} parent=0 // pred_fallthru
    _
  %p21 = scmp.eq.s32.totalorder 0, 0
  // Predicated region
  $region22: #{_lambda_.61} parent=0 // pred_check
    %p22 = pneg %p21
  $region23: #{_lambda_.61} parent=0 // pred_check_branch
    %24 = sbr.rel (%p22) target = $region25
  $region24: #{_lambda_.61} parent=0 // pred_region
    %vm25 = vcmask 523264
    %26 = vst.msk [vmem:[#allocation2] sm:$0xff] %vm25, 0.0
    %27 = vst.msk [vmem:[#allocation2 + $0x8] sm:$0xff] %vm25, 0.0
  $region25: #{_lambda_.61} parent=0 // pred_fallthru
    _
  %v28 = vld [vmem:[#allocation2] sm:$0xff]
  %v29 = vld [vmem:[#allocation2 + $0x8] sm:$0xff]
  %v30 = vld [vmem:[%s0] sm:$0xff]
  %v31 = vld [vmem:[%s0 + $0x8] sm:$0xff]
  %v32 = vld [vmem:[%s1] sm:$0xf]
  %v33 = vld [vmem:[%s1 + $0x4] sm:$0xf]
  %v34 = vld [vmem:[%s1 + $0x8] sm:$0xf]
  %v35 = vld [vmem:[%s1 + $0xc] sm:$0xf]
  %v36 = vld [vmem:[%s1 + $0x10] sm:$0xf]
  %v37 = vld [vmem:[%s1 + $0x14] sm:$0xf]
  %v38 = vld [vmem:[%s1 + $0x18] sm:$0xf]
  %v39 = vld [vmem:[%s1 + $0x1c] sm:$0xf]
  %v40 = vld [vmem:[%s1 + $0x20] sm:$0xf]
  %v41 = vld [vmem:[%s1 + $0x24] sm:$0xf]
  %v42 = vld [vmem:[%s1 + $0x28] sm:$0xf]
  %v43 = vld [vmem:[%s1 + $0x2c] sm:$0xf]
  %v44 = vld [vmem:[%s1 + $0x30] sm:$0xf]
  %v45 = vld [vmem:[%s1 + $0x34] sm:$0xf]
  %v46 = vld [vmem:[%s1 + $0x38] sm:$0xf]
  %v47 = vld [vmem:[%s1 + $0x3c] sm:$0xf]
  %v48 = vld [vmem:[%s1 + $0x40] sm:$0xf]
  %v49 = vld [vmem:[%s1 + $0x44] sm:$0xf]
  %v50 = vld [vmem:[%s1 + $0x48] sm:$0xf]
  %v51 = vld [vmem:[%s1 + $0x4c] sm:$0xf]
  %v52 = vld [vmem:[%s1 + $0x50] sm:$0xf]
  %v53 = vld [vmem:[%s1 + $0x54] sm:$0xf]
  %v54 = vld [vmem:[%s1 + $0x58] sm:$0xf]
  %v55 = vld [vmem:[%s1 + $0x5c] sm:$0xf]
  %v58 = vunpack.c.l.b16 %v30
  %v59 = vunpack.c.h.b16 %v30
  %v60 = vunpack.c.l.b16 %v31
  %v61 = vunpack.c.h.b16 %v31
  %v62 = vpack.c.b16 %v60, %v58
  %v63 = vpack.c.b16 %v61, %v59
  %v89 = vunpack.c.l.b16 %v32
  %v90 = vunpack.c.l.b16 %v33
  %v91 = vunpack.c.l.b16 %v34
  %v92 = vunpack.c.l.b16 %v35
  %v93 = vunpack.c.l.b16 %v36
  %v94 = vunpack.c.l.b16 %v37
  %v95 = vunpack.c.l.b16 %v38
  %v96 = vunpack.c.l.b16 %v39
  %v97 = vunpack.c.l.b16 %v40
  %v98 = vunpack.c.l.b16 %v41
  %v99 = vunpack.c.l.b16 %v42
  %v100 = vunpack.c.l.b16 %v43
  %v101 = vunpack.c.l.b16 %v44
  %v102 = vunpack.c.l.b16 %v45
  %v103 = vunpack.c.l.b16 %v46
  %v104 = vunpack.c.l.b16 %v47
  %v105 = vunpack.c.l.b16 %v48
  %v106 = vunpack.c.l.b16 %v49
  %v107 = vunpack.c.l.b16 %v50
  %v108 = vunpack.c.l.b16 %v51
  %v109 = vunpack.c.l.b16 %v52
  %v110 = vunpack.c.l.b16 %v53
  %v111 = vunpack.c.l.b16 %v54
  %v112 = vunpack.c.l.b16 %v55
  %v113 = vpack.c.b16 %v90, %v89
  %v114 = vpack.c.b16 %v92, %v91
  %v115 = vpack.c.b16 %v94, %v93
  %v116 = vpack.c.b16 %v96, %v95
  %v117 = vpack.c.b16 %v98, %v97
  %v118 = vpack.c.b16 %v100, %v99
  %v119 = vpack.c.b16 %v102, %v101
  %v120 = vpack.c.b16 %v104, %v103
  %v121 = vpack.c.b16 %v106, %v105
  %v122 = vpack.c.b16 %v108, %v107
  %v123 = vpack.c.b16 %v110, %v109
  %v124 = vpack.c.b16 %v112, %v111
  %vm137 = vcmask 523264
  %v139 = vsel %vm137, %v63, 0
  %141 = vmatpush.bf16.msra.mxu0 %v120
  %142 = vmatpush.bf16.msra.mxu0 %v119
  %143 = vmatpush.bf16.msra.mxu0 %v118
  %144 = vmatpush.bf16.msra.mxu0 %v117
  %145 = vmatpush.bf16.msra.mxu0 %v116
  %146 = vmatpush.bf16.msra.mxu0 %v115
  %147 = vmatpush.bf16.msra.mxu0 %v114
  %148 = vmatpush.bf16.msra.mxu0 %v113
  %149 = vmatmul.bf16.gmra.mxu0 %v62
  %v150 = vpop.f32.mrf.mxu0
  %v151 = vadd.f32 0.0, %v150
  %v152 = vpop.f32.mrf.mxu0
  %v153 = vadd.f32 0.0, %v152
  %154 = vdwg.mxu0
  %155 = vmatpush.bf16.msra.mxu0 0
  %156 = vmatpush.bf16.msra.mxu0 0
  %157 = vmatpush.bf16.msra.mxu0 0
  %158 = vmatpush.bf16.msra.mxu0 0
  %159 = vmatpush.bf16.msra.mxu0 %v124
  %160 = vmatpush.bf16.msra.mxu0 %v123
  %161 = vmatpush.bf16.msra.mxu0 %v122
  %162 = vmatpush.bf16.msra.mxu0 %v121
  %163 = vmatmul.bf16.gmra.mxu0 %v139
  %v164 = vpop.f32.mrf.mxu0
  %v165 = vadd.f32 %v151, %v164
  %v166 = vpop.f32.mrf.mxu0
  %v167 = vadd.f32 %v153, %v166
  %168 = vdwg.mxu0
  %v169 = vadd.f32 %v28, %v165
  %v170 = vadd.f32 %v29, %v167
  %171 = vst.msk [vmem:[#allocation2] sm:$0xff] %vm137, %v169
  %172 = vst.msk [vmem:[#allocation2 + $0x8] sm:$0xff] %vm137, %v170
  // Predicated region
  $region26: #{_lambda_.61} parent=0 // pred_check
    %p173 = pneg %p21
  $region27: #{_lambda_.61} parent=0 // pred_check_branch
    %175 = sbr.rel (%p173) target = $region29
  $region28: #{_lambda_.61} parent=0 // pred_region
    %v176 = vld [vmem:[#allocation2] sm:$0xff]
    %v177 = vld [vmem:[#allocation2 + $0x8] sm:$0xff]
    %v178 = vld [vmem:[%s2] sm:$0x1]
    %v180 = vperm.slane %v178, 0
    %v182 = vadd.f32 %v176, %v180
    %v183 = vadd.f32 %v177, %v180
    %v184 = vld [vmem:[%s3] sm:$0x1]
    %v185 = vld [vmem:[%s4] sm:$0x1]
    %v186 = vsel %vm137, %v182, 0.0
    %187 = vadd.xlane.f32.xlu0 %v186
    %v188 = vpop.xlane.xlu0 %187
    %v189 = vsel %vm137, %v183, 0.0
    %190 = vadd.xlane.f32.xlu0 %v189
    %v191 = vpop.xlane.xlu0 %190
    %v192 = vrcp.pop 64.0
    %v193 = vmul.f32 64.0, %v192
    %v194 = vsub.f32 1.0, %v193
    %v195 = vmul.f32 %v192, %v194
    %v196 = vadd.f32 %v192, %v195
    %vm197 = vweird.f32 %v192
    %v198 = vsel %vm197, %v192, %v196
    %v199 = vmul.f32 %v188, %v198
    %v200 = vmul.f32 %v191, %v198
    %v201 = vsub.f32 %v182, %v199
    %v202 = vsub.f32 %v183, %v200
    %v203 = vmul.f32 %v201, %v201
    %v204 = vmul.f32 %v202, %v202
    %v205 = vsel %vm137, %v203, 0.0
    %206 = vadd.xlane.f32.xlu0 %v205
    %v207 = vpop.xlane.xlu0 %206
    %v208 = vsel %vm137, %v204, 0.0
    %209 = vadd.xlane.f32.xlu0 %v208
    %v210 = vpop.xlane.xlu0 %209
    %v211 = vmul.f32 %v207, %v198
    %v212 = vmul.f32 %v210, %v198
    %v213 = vadd.f32 %v211, 1e-05
    %v214 = vadd.f32 %v212, 1e-05
    %v215 = vrsqrt.pop %v213
    %v216 = vmul.f32 %v215, %v213
    %v217 = vmul.f32 %v216, %v215
    %v218 = vmul.f32 0.5, %v217
    %v219 = vsub.f32 1.5, %v218
    %v220 = vmul.f32 %v215, %v219
    %vm221 = vweird.f32 %v213
    %vm222 = vweird.f32 %v215
    %vm223 = vmor %vm221, %vm222
    %v224 = vsel %vm223, %v215, %v220
    %v225 = vrsqrt.pop %v214
    %v226 = vmul.f32 %v225, %v214
    %v227 = vmul.f32 %v226, %v225
    %v228 = vmul.f32 0.5, %v227
    %v229 = vsub.f32 1.5, %v228
    %v230 = vmul.f32 %v225, %v229
    %vm231 = vweird.f32 %v214
    %vm232 = vweird.f32 %v225
    %vm233 = vmor %vm231, %vm232
    %v234 = vsel %vm233, %v225, %v230
    %v235 = vmul.f32 %v201, %v224
    %v236 = vmul.f32 %v202, %v234
    %v238 = vperm.slane %v184, 0
    %v240 = vmul.f32 %v235, %v238
    %v241 = vmul.f32 %v236, %v238
    %v243 = vperm.slane %v185, 0
    %v245 = vadd.f32 %v240, %v243
    %v246 = vadd.f32 %v241, %v243
    %v247 = vmax.f32 %v245, 0.0
    %v248 = vmax.f32 %v246, 0.0
    %v249 = vpack.c.bf16 %v247, %v247
    %v250 = vpack.c.bf16 %v248, %v248
    %vm251 = vcmask 519168
    %252 = vst.msk [vmem:[%s5] sm:$0xf] %vm251, %v249
    %253 = vst.msk [vmem:[%s5 + $0x4] sm:$0xf] %vm251, %v250
  $region29: #{_lambda_.61} parent=0 // pred_fallthru
    _
  // Predicated region
  $region30: #{_lambda_.61} parent=0 // pred_check
    _
  $region31: #{_lambda_.61} parent=0 // pred_check_branch
    %255 = sbr.rel (0) target = $region33
  $region32: #{_lambda_.61} parent=0 // pred_region
    _
  $region33: #{_lambda_.61} parent=0 // pred_fallthru
    _
  // Predicated region
  $region34: #{_lambda_.61} parent=0 // pred_check
    _
  $region35: #{_lambda_.61} parent=0 // pred_check_branch
    %257 = sbr.rel (0) target = $region37
  $region36: #{_lambda_.61} parent=0 // pred_region
    _
  $region37: #{_lambda_.61} parent=0 // pred_fallthru
    _

// kernel: _lambda_.64
$region0: #{_lambda_.64}
  #allocation0 [shape = 'u32[]', space=smem, size = 0x4, offset = 0x4, fixed_abs, tag = 'smem constant byte address 0x4 - core index']
  #allocation1 [shape = 'u32[72,128]{1,0:T(1,128)}', space=vmem, size = 0x9000, scoped, tag = 'internal scratch']
  %s0 = inlined_call_operand.vmem [shape: bf16[2,4,8,16], index: 0, kind: input, shape index: {}]
  %s1 = inlined_call_operand.vmem [shape: bf16[2,4,8,16], index: 1, kind: input, shape index: {}]
  %s2 = inlined_call_operand.vmem [shape: bf16[2,4,8,16], index: 2, kind: input, shape index: {}]
  %s3 = inlined_call_operand.vmem [shape: f32[2,1,8], index: 3, kind: input, shape index: {}]
  %s4 = inlined_call_operand.vmem [shape: bf16[2,4,8,16], index: 4, kind: output, shape index: {}]
  %s5 = sld [smem:[#allocation0]]
  $region49: #{_lambda_.64} parent=0
    _
  %s7 = ssub.s32 1, %s5
  %s8 = scalar_select 0, %s7, %s5
  loop: start=0, step=1, limit=4
  $region2: #{_lambda_.64} parent=0 // loop_pre_header
    _
  $region3: #{_lambda_.64} parent=0 // loop_header
    %s10 = sphi 0, %s14
    %p11 = scmp.ge.s32.totalorder %s10, 4
    %s20 = sphi 0, %s22
    %s23 = sphi 0, %s20
    %s24 = sphi 0, %s23
    %s40 = sphi 0, %s24
    %s46 = sphi 0, %s48
    %s49 = sphi 0, %s46
    %s50 = sphi 0, %s49
    %s66 = sphi 0, %s50
    %s72 = sphi 0, %s74
    %s75 = sphi 0, %s72
    %s76 = sphi 0, %s75
    %s92 = sphi 0, %s76
    %s98 = sphi 0, %s100
    %s101 = sphi 0, %s98
    %s102 = sphi 0, %s101
    %s118 = sphi 0, %s102
    %s124 = sphi 0, %s126
    %s127 = sphi 0, %s124
    %s128 = sphi 0, %s127
    %s144 = sphi 0, %s128
  $region4: #{_lambda_.64} parent=0 // loop_header_branch
    %13 = sbr.rel (%p11) target = $region8
  $region5: #{_lambda_.64} parent=0 // loop_body
    %s15 = ssub.s32 %s10, 1
    %s16 = ssub.s32 %s10, 2
    %s17 = sadd.s32 %s10, 1
    %s18 = ssub.s32 %s10, %s17
    %p19 = scmp.eq.s32.totalorder %s18, 0
    %s21 = sadd.s32 %s20, 1
    %s22 = scalar_select %p19, %s20, %s21
    %p25 = pneg %p19
    %p26 = scmp.eq.s32.totalorder %s10, 1
    %p27 = por %p25, %p26
    %p28 = scmp.ne.s32.totalorder %s20, %s23
    %p29 = scmp.eq.s32.totalorder %s10, 0
    %p30 = por %p28, %p29
    %p31 = scmp.ne.s32.totalorder %s20, %s23
    %p32 = scmp.eq.s32.totalorder %s15, 1
    %p33 = por %p31, %p32
    %p34 = scmp.ne.s32.totalorder %s23, %s24
    %p35 = scmp.eq.s32.totalorder %s15, 0
    %p36 = por %p34, %p35
    %p37 = scmp.ne.s32.totalorder %s23, %s24
    %p38 = scmp.eq.s32.totalorder %s16, 1
    %p39 = por %p37, %p38
    %p41 = scmp.ne.s32.totalorder %s24, %s40
    %p42 = scmp.eq.s32.totalorder %s16, 0
    %p43 = por %p41, %p42
    %s44 = ssub.s32 %s10, %s17
    %p45 = scmp.eq.s32.totalorder %s44, 0
    %s47 = sadd.s32 %s46, 1
    %s48 = scalar_select %p45, %s46, %s47
    %p51 = pneg %p45
    %p52 = scmp.eq.s32.totalorder %s10, 1
    %p53 = por %p51, %p52
    %p54 = scmp.ne.s32.totalorder %s46, %s49
    %p55 = scmp.eq.s32.totalorder %s10, 0
    %p56 = por %p54, %p55
    %p57 = scmp.ne.s32.totalorder %s46, %s49
    %p58 = scmp.eq.s32.totalorder %s15, 1
    %p59 = por %p57, %p58
    %p60 = scmp.ne.s32.totalorder %s49, %s50
    %p61 = scmp.eq.s32.totalorder %s15, 0
    %p62 = por %p60, %p61
    %p63 = scmp.ne.s32.totalorder %s49, %s50
    %p64 = scmp.eq.s32.totalorder %s16, 1
    %p65 = por %p63, %p64
    %p67 = scmp.ne.s32.totalorder %s50, %s66
    %p68 = scmp.eq.s32.totalorder %s16, 0
    %p69 = por %p67, %p68
    %s70 = ssub.s32 %s10, %s17
    %p71 = scmp.eq.s32.totalorder %s70, 0
    %s73 = sadd.s32 %s72, 1
    %s74 = scalar_select %p71, %s72, %s73
    %p77 = pneg %p71
    %p78 = scmp.eq.s32.totalorder %s10, 1
    %p79 = por %p77, %p78
    %p80 = scmp.ne.s32.totalorder %s72, %s75
    %p81 = scmp.eq.s32.totalorder %s10, 0
    %p82 = por %p80, %p81
    %p83 = scmp.ne.s32.totalorder %s72, %s75
    %p84 = scmp.eq.s32.totalorder %s15, 1
    %p85 = por %p83, %p84
    %p86 = scmp.ne.s32.totalorder %s75, %s76
    %p87 = scmp.eq.s32.totalorder %s15, 0
    %p88 = por %p86, %p87
    %p89 = scmp.ne.s32.totalorder %s75, %s76
    %p90 = scmp.eq.s32.totalorder %s16, 1
    %p91 = por %p89, %p90
    %p93 = scmp.ne.s32.totalorder %s76, %s92
    %p94 = scmp.eq.s32.totalorder %s16, 0
    %p95 = por %p93, %p94
    %s96 = ssub.s32 %s10, %s17
    %p97 = scmp.eq.s32.totalorder %s96, 0
    %s99 = sadd.s32 %s98, 1
    %s100 = scalar_select %p97, %s98, %s99
    %p103 = pneg %p97
    %p104 = scmp.eq.s32.totalorder %s10, 1
    %p105 = por %p103, %p104
    %p106 = scmp.ne.s32.totalorder %s98, %s101
    %p107 = scmp.eq.s32.totalorder %s10, 0
    %p108 = por %p106, %p107
    %p109 = scmp.ne.s32.totalorder %s98, %s101
    %p110 = scmp.eq.s32.totalorder %s15, 1
    %p111 = por %p109, %p110
    %p112 = scmp.ne.s32.totalorder %s101, %s102
    %p113 = scmp.eq.s32.totalorder %s15, 0
    %p114 = por %p112, %p113
    %p115 = scmp.ne.s32.totalorder %s101, %s102
    %p116 = scmp.eq.s32.totalorder %s16, 1
    %p117 = por %p115, %p116
    %p119 = scmp.ne.s32.totalorder %s102, %s118
    %p120 = scmp.eq.s32.totalorder %s16, 0
    %p121 = por %p119, %p120
    %s122 = ssub.s32 %s10, %s17
    %p123 = scmp.eq.s32.totalorder %s122, 0
    %s125 = sadd.s32 %s124, 1
    %s126 = scalar_select %p123, %s124, %s125
    %p129 = pneg %p123
    %p130 = scmp.eq.s32.totalorder %s10, 1
    %p131 = por %p129, %p130
    %p132 = scmp.ne.s32.totalorder %s124, %s127
    %p133 = scmp.eq.s32.totalorder %s10, 0
    %p134 = por %p132, %p133
    %p135 = scmp.ne.s32.totalorder %s124, %s127
    %p136 = scmp.eq.s32.totalorder %s15, 1
    %p137 = por %p135, %p136
    %p138 = scmp.ne.s32.totalorder %s127, %s128
    %p139 = scmp.eq.s32.totalorder %s15, 0
    %p140 = por %p138, %p139
    %p141 = scmp.ne.s32.totalorder %s127, %s128
    %p142 = scmp.eq.s32.totalorder %s16, 1
    %p143 = por %p141, %p142
    %p145 = scmp.ne.s32.totalorder %s128, %s144
    %p146 = scmp.eq.s32.totalorder %s16, 0
    %p147 = por %p145, %p146
    %p148 = scmp.le.s32.totalorder 1, %s10
    %p149 = scmp.lt.s32.totalorder %s10, 3
    %p150 = pnand %p148, %p149
    %p151 = pneg %p150
    // Predicated region
    $region9: #{_lambda_.64} parent=5 // pred_check
      _
    $region10: #{_lambda_.64} parent=5 // pred_check_branch
      %153 = sbr.rel (%p150) target = $region12
    $region11: #{_lambda_.64} parent=5 // pred_region
      %s154 = ssub.s32 %s10, 1
    $region12: #{_lambda_.64} parent=5 // pred_fallthru
      _
    %p155 = scmp.lt.s32.totalorder %s10, 2
    // Predicated region
    $region13: #{_lambda_.64} parent=5 // pred_check
      %p156 = pneg %p155
    $region14: #{_lambda_.64} parent=5 // pred_check_branch
      %158 = sbr.rel (%p156) target = $region16
    $region15: #{_lambda_.64} parent=5 // pred_region
      // Predicated region
      $region17: #{_lambda_.64} parent=15 // pred_check
        %p159 = pneg %p30
      $region18: #{_lambda_.64} parent=15 // pred_check_branch
        %161 = sbr.rel (%p159) target = $region20
      $region19: #{_lambda_.64} parent=15 // pred_region
        %p162 = scmp.lt.s32.totalorder %s10, 1
        %s163 = scalar_select %p162, %s10, 1
        %s164 = smul.addr %s163, 4
        %s165 = smul.addr %s164, 4
        %s166 = scalar_lea.vmem %s0, %s165
      $region20: #{_lambda_.64} parent=15 // pred_fallthru
        _
      // Predicated region
      $region21: #{_lambda_.64} parent=15 // pred_check
        %p167 = pneg %p56
      $region22: #{_lambda_.64} parent=15 // pred_check_branch
        %169 = sbr.rel (%p167) target = $region24
      $region23: #{_lambda_.64} parent=15 // pred_region
        %p170 = scmp.lt.s32.totalorder %s10, 1
        %s171 = scalar_select %p170, %s10, 1
        %s172 = smul.addr %s171, 4
        %s173 = smul.addr %s172, 4
        %s174 = scalar_lea.vmem %s1, %s173
      $region24: #{_lambda_.64} parent=15 // pred_fallthru
        _
      // Predicated region
      $region25: #{_lambda_.64} parent=15 // pred_check
        %p175 = pneg %p82
      $region26: #{_lambda_.64} parent=15 // pred_check_branch
        %177 = sbr.rel (%p175) target = $region28
      $region27: #{_lambda_.64} parent=15 // pred_region
        %p178 = scmp.lt.s32.totalorder %s10, 1
        %s179 = scalar_select %p178, %s10, 1
        %s180 = smul.addr %s179, 4
        %s181 = smul.addr %s180, 4
        %s182 = scalar_lea.vmem %s2, %s181
      $region28: #{_lambda_.64} parent=15 // pred_fallthru
        _
      // Predicated region
      $region29: #{_lambda_.64} parent=15 // pred_check
        %p183 = pneg %p108
      $region30: #{_lambda_.64} parent=15 // pred_check_branch
        %185 = sbr.rel (%p183) target = $region32
      $region31: #{_lambda_.64} parent=15 // pred_region
        %p186 = scmp.lt.s32.totalorder %s10, 1
        %s187 = scalar_select %p186, %s10, 1
        %s188 = scalar_lea.vmem %s3, %s187
      $region32: #{_lambda_.64} parent=15 // pred_fallthru
        _
    $region16: #{_lambda_.64} parent=5 // pred_fallthru
      _
    %p189 = scmp.le.s32.totalorder 1, %s10
    %p190 = scmp.lt.s32.totalorder %s10, 3
    %p191 = pnand %p189, %p190
    %p192 = pneg %p191
    // Predicated region
    $region33: #{_lambda_.64} parent=5 // pred_check
      _
    $region34: #{_lambda_.64} parent=5 // pred_check_branch
      %194 = sbr.rel (%p191) target = $region36
    $region35: #{_lambda_.64} parent=5 // pred_region
      %s195 = ssub.s32 %s10, 1
      %p196 = scmp.lt.s32.totalorder %s15, 1
      %s197 = scalar_select %p196, %s15, 1
      %s198 = smul.addr %s197, 4
      %s199 = smul.addr %s198, 4
      %s200 = scalar_lea.vmem %s0, %s199
      %p201 = pneg %p36
      %p202 = pneg %p33
      %p203 = scmp.lt.s32.totalorder %s15, 1
      %s204 = scalar_select %p203, %s15, 1
      %s205 = smul.addr %s204, 4
      %s206 = smul.addr %s205, 4
      %s207 = scalar_lea.vmem %s1, %s206
      %p208 = pneg %p62
      %p209 = pneg %p59
      %p210 = scmp.lt.s32.totalorder %s15, 1
      %s211 = scalar_select %p210, %s15, 1
      %s212 = smul.addr %s211, 4
      %s213 = smul.addr %s212, 4
      %s214 = scalar_lea.vmem %s2, %s213
      %p215 = pneg %p88
      %p216 = pneg %p85
      %p217 = scmp.lt.s32.totalorder %s15, 1
      %s218 = scalar_select %p217, %s15, 1
      %s219 = scalar_lea.vmem %s3, %s218
      %p220 = pneg %p114
      %p221 = pneg %p111
      %p222 = pneg %p140
      %p223 = pneg %p137
      %p224 = scmp.lt.s32.totalorder %s15, 1
      %s225 = scalar_select %p224, %s15, 1
      %s226 = smul.addr %s225, 4
      %s227 = smul.addr %s226, 4
      %s228 = scalar_lea.vmem %s4, %s227
      %p229 = scmp.lt.s32.totalorder %s15, 1
      %s230 = scalar_select %p229, %s15, 1
      %s231 = smul.addr %s230, 4
      %s232 = smul.addr %s231, 4
      %s233 = scalar_lea.vmem %s0, %s232
      %p234 = scmp.lt.s32.totalorder %s15, 1
      %s235 = scalar_select %p234, %s15, 1
      %s236 = smul.addr %s235, 4
      %s237 = smul.addr %s236, 4
      %s238 = scalar_lea.vmem %s1, %s237
      %p239 = scmp.lt.s32.totalorder %s15, 1
      %s240 = scalar_select %p239, %s15, 1
      %s241 = smul.addr %s240, 4
      %s242 = smul.addr %s241, 4
      %s243 = scalar_lea.vmem %s2, %s242
      %p244 = scmp.lt.s32.totalorder %s15, 1
      %s245 = scalar_select %p244, %s15, 1
      %s246 = scalar_lea.vmem %s3, %s245
      %p247 = scmp.lt.s32.totalorder %s15, 1
      %s248 = scalar_select %p247, %s15, 1
      %s249 = smul.addr %s248, 4
      %s250 = smul.addr %s249, 4
      %s251 = scalar_lea.vmem %s4, %s250
      %v253 = vld [vmem:[%s233] sm:$0xf]
      %v254 = vld [vmem:[%s233 + $0x4] sm:$0xf]
      %v255 = vld [vmem:[%s233 + $0x8] sm:$0xf]
      %v256 = vld [vmem:[%s233 + $0xc] sm:$0xf]
      %v257 = vld [vmem:[%s238] sm:$0xf]
      %v258 = vld [vmem:[%s238 + $0x4] sm:$0xf]
      %v259 = vld [vmem:[%s238 + $0x8] sm:$0xf]
      %v260 = vld [vmem:[%s238 + $0xc] sm:$0xf]
      %v261 = vld [vmem:[%s243] sm:$0xf]
      %v262 = vld [vmem:[%s243 + $0x4] sm:$0xf]
      %v263 = vld [vmem:[%s243 + $0x8] sm:$0xf]
      %v264 = vld [vmem:[%s243 + $0xc] sm:$0xf]
      %vm265 = vcmask 130048
      %v267 = vsel %vm265, %v253, 0
      %v270 = vsel %vm265, %v257, 0
      %272 = vmatpush.bf16.xpose.msra.mxu0 0
      %273 = vmatpush.bf16.xpose.msra.mxu0 0
      %274 = vmatpush.bf16.xpose.msra.mxu0 0
      %275 = vmatpush.bf16.xpose.msra.mxu0 0
      %276 = vmatpush.bf16.xpose.msra.mxu0 0
      %277 = vmatpush.bf16.xpose.msra.mxu0 0
      %278 = vmatpush.bf16.xpose.msra.mxu0 0
      %279 = vmatpush.bf16.xpose.msra.mxu0 %v270
      %280 = vmatmul.bf16.gmra.mxu0 %v267
      %v281 = vpop.f32.mrf.mxu0
      %v282 = vadd.f32 0.0, %v281
      %v283 = vpop.f32.mrf.mxu0
      %284 = vdwg.mxu0
      %v286 = vsel %vm265, %v254, 0
      %v289 = vsel %vm265, %v258, 0
      %291 = vmatpush.bf16.xpose.msra.mxu0 0
      %292 = vmatpush.bf16.xpose.msra.mxu0 0
      %293 = vmatpush.bf16.xpose.msra.mxu0 0
      %294 = vmatpush.bf16.xpose.msra.mxu0 0
      %295 = vmatpush.bf16.xpose.msra.mxu0 0
      %296 = vmatpush.bf16.xpose.msra.mxu0 0
      %297 = vmatpush.bf16.xpose.msra.mxu0 0
      %298 = vmatpush.bf16.xpose.msra.mxu0 %v289
      %299 = vmatmul.bf16.gmra.mxu0 %v286
      %v300 = vpop.f32.mrf.mxu0
      %v301 = vadd.f32 0.0, %v300
      %v302 = vpop.f32.mrf.mxu0
      %303 = vdwg.mxu0
      %v305 = vsel %vm265, %v255, 0
      %v308 = vsel %vm265, %v259, 0
      %310 = vmatpush.bf16.xpose.msra.mxu0 0
      %311 = vmatpush.bf16.xpose.msra.mxu0 0
      %312 = vmatpush.bf16.xpose.msra.mxu0 0
      %313 = vmatpush.bf16.xpose.msra.mxu0 0
      %314 = vmatpush.bf16.xpose.msra.mxu0 0
      %315 = vmatpush.bf16.xpose.msra.mxu0 0
      %316 = vmatpush.bf16.xpose.msra.mxu0 0
      %317 = vmatpush.bf16.xpose.msra.mxu0 %v308
      %318 = vmatmul.bf16.gmra.mxu0 %v305
      %v319 = vpop.f32.mrf.mxu0
      %v320 = vadd.f32 0.0, %v319
      %v321 = vpop.f32.mrf.mxu0
      %322 = vdwg.mxu0
      %v324 = vsel %vm265, %v256, 0
      %v327 = vsel %vm265, %v260, 0
      %329 = vmatpush.bf16.xpose.msra.mxu0 0
      %330 = vmatpush.bf16.xpose.msra.mxu0 0
      %331 = vmatpush.bf16.xpose.msra.mxu0 0
      %332 = vmatpush.bf16.xpose.msra.mxu0 0
      %333 = vmatpush.bf16.xpose.msra.mxu0 0
      %334 = vmatpush.bf16.xpose.msra.mxu0 0
      %335 = vmatpush.bf16.xpose.msra.mxu0 0
      %336 = vmatpush.bf16.xpose.msra.mxu0 %v327
      %337 = vmatmul.bf16.gmra.mxu0 %v324
      %v338 = vpop.f32.mrf.mxu0
      %v339 = vadd.f32 0.0, %v338
      %v340 = vpop.f32.mrf.mxu0
      %341 = vdwg.mxu0
      %v342 = vmul.f32 %v282, 0.25
      %v343 = vmul.f32 %v301, 0.25
      %v344 = vmul.f32 %v320, 0.25
      %v345 = vmul.f32 %v339, 0.25
      %v346 = vld [vmem:[%s246] sm:$0x1]
      %v348 = vperm.slane %v346, 0
      %v350 = vadd.f32 %v342, %v348
      %v351 = vadd.f32 %v343, %v348
      %v352 = vadd.f32 %v344, %v348
      %v353 = vadd.f32 %v345, %v348
      %v354 = vlaneseq
      %v355 = vshrl.u32 %v354, 7
      %v356 = vlaneseq
      %v357 = vand.u32 %v356, 127
      %vm358 = vcmp.gt.s32.totalorder %v357, %v355
      %v359 = vsel %vm358, -1e+09, 0.0
      %v360 = vadd.f32 %v350, %v359
      %v361 = vadd.f32 %v351, %v359
      %v362 = vadd.f32 %v352, %v359
      %v363 = vadd.f32 %v353, %v359
      %vm364 = vcmask 64512
      %v365 = vsel %vm364, %v360, -inf
      %366 = vmax.xlane.f32.xlu0 %v365
      %v367 = vpop.xlane.xlu0 %366
      %v368 = vsel %vm364, %v361, -inf
      %369 = vmax.xlane.f32.xlu0 %v368
      %v370 = vpop.xlane.xlu0 %369
      %v371 = vsel %vm364, %v362, -inf
      %372 = vmax.xlane.f32.xlu0 %v371
      %v373 = vpop.xlane.xlu0 %372
      %v374 = vsel %vm364, %v363, -inf
      %375 = vmax.xlane.f32.xlu0 %v374
      %v376 = vpop.xlane.xlu0 %375
      %v377 = vsub.f32 %v360, %v367
      %v378 = vsub.f32 %v361, %v370
      %v379 = vsub.f32 %v362, %v373
      %v380 = vsub.f32 %v363, %v376
      %v381 = vmul.f32 %v377, 1.442695
      %v382 = vpow.pop %v381
      %v383 = vmul.f32 %v378, 1.442695
      %v384 = vpow.pop %v383
      %v385 = vmul.f32 %v379, 1.442695
      %v386 = vpow.pop %v385
      %v387 = vmul.f32 %v380, 1.442695
      %v388 = vpow.pop %v387
      %v389 = vsel %vm364, %v382, 0.0
      %390 = vadd.xlane.f32.xlu0 %v389
      %v391 = vpop.xlane.xlu0 %390
      %v392 = vsel %vm364, %v384, 0.0
      %393 = vadd.xlane.f32.xlu0 %v392
      %v394 = vpop.xlane.xlu0 %393
      %v395 = vsel %vm364, %v386, 0.0
      %396 = vadd.xlane.f32.xlu0 %v395
      %v397 = vpop.xlane.xlu0 %396
      %v398 = vsel %vm364, %v388, 0.0
      %399 = vadd.xlane.f32.xlu0 %v398
      %v400 = vpop.xlane.xlu0 %399
      %v401 = vrcp.pop %v391
      %v402 = vrcp.pop %v394
      %v403 = vrcp.pop %v397
      %v404 = vrcp.pop %v400
      %v405 = vmul.f32 %v382, %v401
      %v406 = vmul.f32 %v384, %v402
      %v407 = vmul.f32 %v386, %v403
      %v408 = vmul.f32 %v388, %v404
      %v409 = vpack.c.bf16 %v405, %v405
      %v410 = vpack.c.bf16 %v406, %v406
      %v411 = vpack.c.bf16 %v407, %v407
      %v412 = vpack.c.bf16 %v408, %v408
      %v414 = vsel %vm364, %v409, 0
      %vm416 = vcmask 1043456
      %v418 = vsel %vm416, %v261, 0
      %420 = vmatpush.bf16.msra.mxu0 0
      %421 = vmatpush.bf16.msra.mxu0 0
      %422 = vmatpush.bf16.msra.mxu0 0
      %423 = vmatpush.bf16.msra.mxu0 0
      %424 = vmatpush.bf16.msra.mxu0 0
      %425 = vmatpush.bf16.msra.mxu0 0
      %426 = vmatpush.bf16.msra.mxu0 0
      %427 = vmatpush.bf16.msra.mxu0 %v418
      %428 = vmatmul.bf16.gmra.mxu0 %v414
      %v429 = vpop.f32.mrf.mxu0
      %v430 = vadd.f32 0.0, %v429
      %v431 = vpop.f32.mrf.mxu0
      %432 = vdwg.mxu0
      %v434 = vsel %vm364, %v410, 0
      %v437 = vsel %vm416, %v262, 0
      %439 = vmatpush.bf16.msra.mxu0 0
      %440 = vmatpush.bf16.msra.mxu0 0
      %441 = vmatpush.bf16.msra.mxu0 0
      %442 = vmatpush.bf16.msra.mxu0 0
      %443 = vmatpush.bf16.msra.mxu0 0
      %444 = vmatpush.bf16.msra.mxu0 0
      %445 = vmatpush.bf16.msra.mxu0 0
      %446 = vmatpush.bf16.msra.mxu0 %v437
      %447 = vmatmul.bf16.gmra.mxu0 %v434
      %v448 = vpop.f32.mrf.mxu0
      %v449 = vadd.f32 0.0, %v448
      %v450 = vpop.f32.mrf.mxu0
      %451 = vdwg.mxu0
      %v453 = vsel %vm364, %v411, 0
      %v456 = vsel %vm416, %v263, 0
      %458 = vmatpush.bf16.msra.mxu0 0
      %459 = vmatpush.bf16.msra.mxu0 0
      %460 = vmatpush.bf16.msra.mxu0 0
      %461 = vmatpush.bf16.msra.mxu0 0
      %462 = vmatpush.bf16.msra.mxu0 0
      %463 = vmatpush.bf16.msra.mxu0 0
      %464 = vmatpush.bf16.msra.mxu0 0
      %465 = vmatpush.bf16.msra.mxu0 %v456
      %466 = vmatmul.bf16.gmra.mxu0 %v453
      %v467 = vpop.f32.mrf.mxu0
      %v468 = vadd.f32 0.0, %v467
      %v469 = vpop.f32.mrf.mxu0
      %470 = vdwg.mxu0
      %v472 = vsel %vm364, %v412, 0
      %v475 = vsel %vm416, %v264, 0
      %477 = vmatpush.bf16.msra.mxu0 0
      %478 = vmatpush.bf16.msra.mxu0 0
      %479 = vmatpush.bf16.msra.mxu0 0
      %480 = vmatpush.bf16.msra.mxu0 0
      %481 = vmatpush.bf16.msra.mxu0 0
      %482 = vmatpush.bf16.msra.mxu0 0
      %483 = vmatpush.bf16.msra.mxu0 0
      %484 = vmatpush.bf16.msra.mxu0 %v475
      %485 = vmatmul.bf16.gmra.mxu0 %v472
      %v486 = vpop.f32.mrf.mxu0
      %v487 = vadd.f32 0.0, %v486
      %v488 = vpop.f32.mrf.mxu0
      %489 = vdwg.mxu0
      %v490 = vpack.c.bf16 %v430, %v430
      %v491 = vpack.c.bf16 %v449, %v449
      %v492 = vpack.c.bf16 %v468, %v468
      %v493 = vpack.c.bf16 %v487, %v487
      %vm494 = vcmask 125952
      %495 = vst.msk [vmem:[%s251] sm:$0xf] %vm494, %v490
      %496 = vst.msk [vmem:[%s251 + $0x4] sm:$0xf] %vm494, %v491
      %497 = vst.msk [vmem:[%s251 + $0x8] sm:$0xf] %vm494, %v492
      %498 = vst.msk [vmem:[%s251 + $0xc] sm:$0xf] %vm494, %v493
      %p499 = scmp.lt.s32.totalorder %s15, 1
      %s500 = scalar_select %p499, %s15, 1
      %s501 = smul.addr %s500, 4
      %s502 = smul.addr %s501, 4
      %s503 = scalar_lea.vmem %s4, %s502
      // Predicated region
      $region37: #{_lambda_.64} parent=35 // pred_check
        %p504 = pneg %p137
      $region38: #{_lambda_.64} parent=35 // pred_check_branch
        %506 = sbr.rel (%p504) target = $region40
      $region39: #{_lambda_.64} parent=35 // pred_region
        _
      $region40: #{_lambda_.64} parent=35 // pred_fallthru
        _
    $region36: #{_lambda_.64} parent=5 // pred_fallthru
      _
    %p507 = scmp.le.s32.totalorder 2, %s10
    // Predicated region
    $region41: #{_lambda_.64} parent=5 // pred_check
      %p508 = pneg %p507
    $region42: #{_lambda_.64} parent=5 // pred_check_branch
      %510 = sbr.rel (%p508) target = $region44
    $region43: #{_lambda_.64} parent=5 // pred_region
      %s511 = ssub.s32 %s10, 2
      // Predicated region
      $region45: #{_lambda_.64} parent=43 // pred_check
        %p512 = pneg %p143
      $region46: #{_lambda_.64} parent=43 // pred_check_branch
        %514 = sbr.rel (%p512) target = $region48
      $region47: #{_lambda_.64} parent=43 // pred_region
        %p515 = scmp.lt.s32.totalorder %s16, 1
        %s516 = scalar_select %p515, %s16, 1
        %s517 = smul.addr %s516, 4
        %s518 = smul.addr %s517, 4
        %s519 = scalar_lea.vmem %s4, %s518
      $region48: #{_lambda_.64} parent=43 // pred_fallthru
        _
    $region44: #{_lambda_.64} parent=5 // pred_fallthru
      _
  $region6: #{_lambda_.64} parent=0 // loop_footer
    %s14 = sadd.s32 1, %s10
  $region7: #{_lambda_.64} parent=0 // loop_footer_branch
    %9 = sbr.rel target = $region3
  $region8: #{_lambda_.64} parent=0 // loop_exit
    _

</llo_original>
